<compile_context>
chip_gen: v6e
topology: v6e:2x2x1
jax: 0.10.0
libtpu: 0.0.40
codegen_flags: <defaults>
</compile_context>

<pallas_src>
import math

import jax
import jax.numpy as jnp
import numpy as np
from jax.experimental import pallas as pl
from jax.experimental.pallas import tpu as pltpu

LANE = 128  # padded channel width (one full lane group)


def _vmem_spec():
    return pl.BlockSpec(memory_space=pltpu.MemorySpace.VMEM)


# ---------------------------------------------------------------------------
# Geometry for conv(7,4) -> pool(2,2) -> conv(3,1) -> pool(2,2)
# ---------------------------------------------------------------------------
def _geometry(input_shape):
    C, H, W = input_shape
    assert H % 8 == 0 and W % 8 == 0, "kernel assumes H, W divisible by 8"
    GH, GW = H // 8, W // 8                          # 8x8 space-to-depth grid
    OH1, OW1 = (H - 7) // 4 + 1, (W - 7) // 4 + 1    # conv1 output
    PH1, PW1 = OH1 // 2, OW1 // 2                    # pool1 output
    OH2, OW2 = PH1 - 2, PW1 - 2                      # conv2 output
    PH2, PW2 = OH2 // 2, OW2 // 2                    # pool2 output
    assert PH1 + 1 <= GH and PW1 + 1 <= GW
    assert PH2 >= 1 and PW2 >= 1
    return dict(C=C, H=H, W=W, GH=GH, GW=GW, OH1=OH1, OW1=OW1,
                PH1=PH1, PW1=PW1, OH2=OH2, OW2=OW2, PH2=PH2, PW2=PW2,
                K0=C * 64, conv_out=16 * PH2 * PW2)


# ---------------------------------------------------------------------------
# The fused kernel
# ---------------------------------------------------------------------------
def _build_kernel(N, g):
    C, GH, GW = g["C"], g["GH"], g["GW"]
    PH1, PW1 = g["PH1"], g["PW1"]
    OH2, OW2 = g["OH2"], g["OW2"]
    PH2, PW2 = g["PH2"], g["PW2"]
    K0 = g["K0"]
    NP1 = N * PH1 * PW1     # pooled conv1 rows
    NP2 = N * OH2 * OW2     # conv2 rows

    def kernel(s2_ref, w1_ref, b1_ref, w2_ref, b2_ref,
               wf1_ref, bf1_ref, wf2_ref, bf2_ref,
               o_ref, patch1, p1, patch2, c2, fcin):
        # -- stage 1: conv1 im2col, entirely on the VMEM-resident input -----
        #    patch1 row (n, a, b), column block (P, Q) = S2[n, a+P, b+Q, :]
        for n in range(N):
            for a in range(PH1):
                d0 = n * PH1 * PW1 + a * PW1
                for P in range(2):
                    for Q in range(2):
                        s0 = n * GH * GW + (a + P) * GW + Q
                        c0 = (2 * P + Q) * K0
                        patch1[d0:d0 + PW1, c0:c0 + K0] = s2_ref[s0:s0 + PW1, :]

        # -- stage 2: conv1 as 4 pool-parity matmuls + bias + ReLU + pool ---
        pm = patch1[...]
        acc = jnp.dot(pm, w1_ref[0:4 * K0, :],
                      preferred_element_type=jnp.float32)
        for t in range(1, 4):
            acc = jnp.maximum(
                acc,
                jnp.dot(pm, w1_ref[t * 4 * K0:(t + 1) * 4 * K0, :],
                        preferred_element_type=jnp.float32))
        p1[...] = jnp.maximum(acc + b1_ref[...], 0.0)

        # -- stage 3: conv2 im2col from the pooled map (still in VMEM) ------
        for n in range(N):
            for oh in range(OH2):
                d0 = n * OH2 * OW2 + oh * OW2
                for i in range(3):
                    for j in range(3):
                        s0 = n * PH1 * PW1 + (oh + i) * PW1 + j
                        c0 = (i * 3 + j) * LANE
                        patch2[d0:d0 + OW2, c0:c0 + LANE] = p1[s0:s0 + OW2, :]

        # -- stage 4: conv2 matmul + bias + ReLU -----------------------------
        c2[...] = jnp.maximum(
            jnp.dot(patch2[...], w2_ref[...],
                    preferred_element_type=jnp.float32) + b2_ref[...], 0.0)

        # -- stage 5: 2x2/2 max-pool + flatten (PyTorch order folded in wf1) -
        for n in range(N):
            for u in range(PH2):
                for v in range(PW2):
                    b0 = n * OH2 * OW2 + (2 * u) * OW2 + 2 * v
                    top = c2[b0:b0 + 2, :]
                    bot = c2[b0 + OW2:b0 + OW2 + 2, :]
                    m = jnp.max(jnp.maximum(top, bot), axis=0, keepdims=True)
                    k0 = (u * PW2 + v) * LANE
                    fcin[n:n + 1, k0:k0 + LANE] = m

        # -- stage 6: fc1 + ReLU, fc2 (fused, hidden never leaves the core) --
        h = jnp.maximum(
            jnp.dot(fcin[...], wf1_ref[...],
                    preferred_element_type=jnp.float32) + bf1_ref[...], 0.0)
        o_ref[...] = (jnp.dot(h, wf2_ref[...],
                              preferred_element_type=jnp.float32)
                      + bf2_ref[...])

    return kernel, NP1, NP2


def make_dqn_forward(input_shape, num_actions, batch):
    g = _geometry(input_shape)
    N = batch
    kernel, NP1, NP2 = _build_kernel(N, g)
    C, GH, GW, K0 = g["C"], g["GH"], g["GW"], g["K0"]
    PH2, PW2 = g["PH2"], g["PW2"]

    call = pl.pallas_call(
        kernel,
        out_shape=jax.ShapeDtypeStruct((N, num_actions), jnp.float32),
        in_specs=[_vmem_spec()] * 9,
        out_specs=_vmem_spec(),
        scratch_shapes=[
            pltpu.VMEM((NP1, 4 * K0), jnp.float32),          # conv1 patches
            pltpu.VMEM((NP1, LANE), jnp.float32),            # pooled conv1
            pltpu.VMEM((NP2, 9 * LANE), jnp.float32),        # conv2 patches
            pltpu.VMEM((NP2, LANE), jnp.float32),            # conv2 output
            pltpu.VMEM((N, PH2 * PW2 * LANE), jnp.float32),  # flattened fc in
        ],
    )

    def forward(x, kp):
        # Single cheap relayout (one XLA transpose, same size as the input):
        # 8x8 space-to-depth so the stride-4 conv and both 2x2 pools become
        # unit-stride VMEM slices inside the kernel.
        s2 = (x.reshape(N, C, GH, 8, GW, 8)
               .transpose(0, 2, 4, 1, 3, 5)
               .reshape(N * GH * GW, C * 64))
        return call(s2, kp["w1"], kp["b1"], kp["w2"], kp["b2"],
                    kp["wf1"], kp["bf1"], kp["wf2"], kp["bf2"])

    return forward


# ---------------------------------------------------------------------------
# Parameters: PyTorch-layout init + one-time re-layout for the kernel
# ---------------------------------------------------------------------------
def init_params(key, input_shape, num_actions):
    C, _, _ = input_shape
    conv_out = _geometry(input_shape)["conv_out"]

    def unif(k, shape, fan_in):
        bound = 1.0 / math.sqrt(fan_in)
        return jax.random.uniform(k, shape, jnp.float32, -bound, bound)

    ks = jax.random.split(key, 8)
    return {
        "conv1_w": unif(ks[0], (8, C, 7, 7), C * 7 * 7),
        "conv1_b": unif(ks[1], (8,), C * 7 * 7),
        "conv2_w": unif(ks[2], (16, 8, 3, 3), 8 * 3 * 3),
        "conv2_b": unif(ks[3], (16,), 8 * 3 * 3),
        "fc1_w": unif(ks[4], (400, conv_out), conv_out),   # PyTorch (out, in)
        "fc1_b": unif(ks[5], (400,), conv_out),
        "fc2_w": unif(ks[6], (num_actions, 400), 400),
        "fc2_b": unif(ks[7], (num_actions,), 400),
    }


def prepare_params(params, input_shape, num_actions):
    """One-time re-layout of PyTorch-style params into the kernel's matmul
    layouts (128-lane channel padding, pool-parity conv1 weights, PyTorch
    NCHW-flatten order folded into fc1).  Zero per-step cost."""
    g = _geometry(input_shape)
    C, K0 = g["C"], g["K0"]
    PH2, PW2 = g["PH2"], g["PW2"]

    # conv1 -> 4 pool-parity weight blocks over the space-to-depth channels.
    w1 = np.asarray(params["conv1_w"], np.float32)            # (8, C, 7, 7)
    w1g = np.zeros((4 * 4 * K0, LANE), np.float32)
    for di in range(2):
        for dj in range(2):
            t = 2 * di + dj
            for c in range(C):
                for i in range(7):
                    P, e = divmod(4 * di + i, 8)
                    for j in range(7):
                        Q, f = divmod(4 * dj + j, 8)
                        row = t * 4 * K0 + (2 * P + Q) * K0 + c * 64 + e * 8 + f
                        w1g[row, :8] = w1[:, c, i, j]
    b1 = np.zeros((1, LANE), np.float32)
    b1[0, :8] = np.asarray(params["conv1_b"])

    # conv2 -> (9*128, 128) im2col weight, padded channels are zero.
    w2 = np.asarray(params["conv2_w"], np.float32)            # (16, 8, 3, 3)
    w2m = np.zeros((9 * LANE, LANE), np.float32)
    for c1 in range(8):
        for i in range(3):
            for j in range(3):
                w2m[(i * 3 + j) * LANE + c1, :16] = w2[:, c1, i, j]
    b2 = np.zeros((1, LANE), np.float32)
    b2[0, :16] = np.asarray(params["conv2_b"])

    # fc1: fold the PyTorch NCHW flatten order (o2*PH2*PW2 + u*PW2 + v) into
    # the weight; kernel feature index is (u*PW2 + v)*128 + o2.
    fc1 = np.asarray(params["fc1_w"], np.float32)             # (400, 16*PH2*PW2)
    wf1 = np.zeros((PH2 * PW2 * LANE, 400), np.float32)
    for u in range(PH2):
        for v in range(PW2):
            for o2 in range(16):
                wf1[(u * PW2 + v) * LANE + o2, :] = fc1[:, o2 * PH2 * PW2 + u * PW2 + v]
    bf1 = np.asarray(params["fc1_b"], np.float32).reshape(1, 400)

    wf2 = np.asarray(params["fc2_w"], np.float32).T           # (400, A)
    bf2 = np.asarray(params["fc2_b"], np.float32).reshape(1, num_actions)

    out = dict(w1=w1g, b1=b1, w2=w2m, b2=b2, wf1=wf1, bf1=bf1, wf2=wf2, bf2=bf2)
    return {k: jnp.asarray(v) for k, v in out.items()}


# ---------------------------------------------------------------------------
# Pure-JAX reference (PyTorch semantics) for a correctness check
# ---------------------------------------------------------------------------
def dqn_reference(x, params):
    hp = jax.lax.Precision.HIGHEST
    h = jax.lax.conv_general_dilated(
        x, params["conv1_w"], (4, 4), "VALID",
        dimension_numbers=("NCHW", "OIHW", "NCHW"), precision=hp)
    h = jnp.maximum(h + params["conv1_b"][None, :, None, None], 0.0)
    h = jax.lax.reduce_window(h, -jnp.inf, jax.lax.max,
                              (1, 1, 2, 2), (1, 1, 2, 2), "VALID")
    h = jax.lax.conv_general_dilated(
        h, params["conv2_w"], (1, 1), "VALID",
        dimension_numbers=("NCHW", "OIHW", "NCHW"), precision=hp)
    h = jnp.maximum(h + params["conv2_b"][None, :, None, None], 0.0)
    h = jax.lax.reduce_window(h, -jnp.inf, jax.lax.max,
                              (1, 1, 2, 2), (1, 1, 2, 2), "VALID")
    h = h.reshape(x.shape[0], -1)
    h = jnp.maximum(
        jnp.matmul(h, params["fc1_w"].T, precision=hp) + params["fc1_b"], 0.0)
    return jnp.matmul(h, params["fc2_w"].T, precision=hp) + params["fc2_b"]


if __name__ == "__main__":
    input_shape = (4, 64, 64)    # (C, H, W): conv tower output is 16*2*2 = 64
    num_actions = 6
    batch = 2

    key = jax.random.PRNGKey(0)
    k_x, k_p = jax.random.split(key)
    params = init_params(k_p, input_shape, num_actions)
    kparams = prepare_params(params, input_shape, num_actions)
    x = jax.random.normal(k_x, (batch,) + input_shape, dtype=jnp.float32)

    forward = make_dqn_forward(input_shape, num_actions, batch)
    fwd = jax.jit(lambda xx: forward(xx, kparams))
    out = fwd(x)
    jax.block_until_ready(out)

    assert out.shape == (batch, num_actions), out.shape
    assert out.dtype == jnp.float32

    ref = jax.jit(lambda xx: dqn_reference(xx, params))(x)
    jax.block_until_ready(ref)
    err = float(jnp.max(jnp.abs(out - ref)))
    assert err < 5e-3, f"mismatch vs pure-JAX reference: max |diff| = {err}"

    print("KERNEL_OK")
</pallas_src>

<mosaic_0001>
module attributes {stable_mosaic.version = 11 : i64} {
  func.func @kernel(%arg0: memref<128x256xf32, #tpu.memory_space<vmem>>, %arg1: memref<4096x128xf32, #tpu.memory_space<vmem>>, %arg2: memref<1x128xf32, #tpu.memory_space<vmem>>, %arg3: memref<1152x128xf32, #tpu.memory_space<vmem>>, %arg4: memref<1x128xf32, #tpu.memory_space<vmem>>, %arg5: memref<512x400xf32, #tpu.memory_space<vmem>>, %arg6: memref<1x400xf32, #tpu.memory_space<vmem>>, %arg7: memref<400x6xf32, #tpu.memory_space<vmem>>, %arg8: memref<1x6xf32, #tpu.memory_space<vmem>>, %arg9: memref<2x6xf32, #tpu.memory_space<vmem>>, %arg10: memref<98x1024xf32, #tpu.memory_space<vmem>>, %arg11: memref<98x128xf32, #tpu.memory_space<vmem>>, %arg12: memref<50x1152xf32, #tpu.memory_space<vmem>>, %arg13: memref<50x128xf32, #tpu.memory_space<vmem>>, %arg14: memref<2x512xf32, #tpu.memory_space<vmem>>) attributes {dimension_semantics = [], scalar_prefetch = 0 : i64, scratch_operands = 5 : i64, tpu.core_type = #tpu.core_type<tc>} {
    %c0 = arith.constant 0 : index
    %c0_0 = arith.constant 0 : index
    %0 = vector.load %arg0[%c0, %c0_0] : memref<128x256xf32, #tpu.memory_space<vmem>>, vector<7x256xf32>
    %c0_1 = arith.constant 0 : index
    %c0_2 = arith.constant 0 : index
    %1 = vector.load %arg10[%c0_1, %c0_2] : memref<98x1024xf32, #tpu.memory_space<vmem>>, vector<7x256xf32>
    tpu.vector_store %arg10[%c0_1, %c0_2], %0 {strides = array<i32>} : memref<98x1024xf32, #tpu.memory_space<vmem>>, vector<7x256xf32>,
    %c1 = arith.constant 1 : index
    %c0_3 = arith.constant 0 : index
    %2 = vector.load %arg0[%c1, %c0_3] : memref<128x256xf32, #tpu.memory_space<vmem>>, vector<7x256xf32>
    %c0_4 = arith.constant 0 : index
    %c256 = arith.constant 256 : index
    %3 = vector.load %arg10[%c0_4, %c256] : memref<98x1024xf32, #tpu.memory_space<vmem>>, vector<7x256xf32>
    tpu.vector_store %arg10[%c0_4, %c256], %2 {strides = array<i32>} : memref<98x1024xf32, #tpu.memory_space<vmem>>, vector<7x256xf32>,
    %c8 = arith.constant 8 : index
    %c0_5 = arith.constant 0 : index
    %4 = vector.load %arg0[%c8, %c0_5] : memref<128x256xf32, #tpu.memory_space<vmem>>, vector<7x256xf32>
    %c0_6 = arith.constant 0 : index
    %c512 = arith.constant 512 : index
    %5 = vector.load %arg10[%c0_6, %c512] : memref<98x1024xf32, #tpu.memory_space<vmem>>, vector<7x256xf32>
    tpu.vector_store %arg10[%c0_6, %c512], %4 {strides = array<i32>} : memref<98x1024xf32, #tpu.memory_space<vmem>>, vector<7x256xf32>,
    %c9 = arith.constant 9 : index
    %c0_7 = arith.constant 0 : index
    %6 = vector.load %arg0[%c9, %c0_7] : memref<128x256xf32, #tpu.memory_space<vmem>>, vector<7x256xf32>
    %c0_8 = arith.constant 0 : index
    %c768 = arith.constant 768 : index
    %7 = vector.load %arg10[%c0_8, %c768] : memref<98x1024xf32, #tpu.memory_space<vmem>>, vector<7x256xf32>
    tpu.vector_store %arg10[%c0_8, %c768], %6 {strides = array<i32>} : memref<98x1024xf32, #tpu.memory_space<vmem>>, vector<7x256xf32>,
    %c8_9 = arith.constant 8 : index
    %c0_10 = arith.constant 0 : index
    %8 = vector.load %arg0[%c8_9, %c0_10] : memref<128x256xf32, #tpu.memory_space<vmem>>, vector<7x256xf32>
    %c7 = arith.constant 7 : index
    %c0_11 = arith.constant 0 : index
    %9 = vector.load %arg10[%c7, %c0_11] : memref<98x1024xf32, #tpu.memory_space<vmem>>, vector<7x256xf32>
    tpu.vector_store %arg10[%c7, %c0_11], %8 {strides = array<i32>} : memref<98x1024xf32, #tpu.memory_space<vmem>>, vector<7x256xf32>,
    %c9_12 = arith.constant 9 : index
    %c0_13 = arith.constant 0 : index
    %10 = vector.load %arg0[%c9_12, %c0_13] : memref<128x256xf32, #tpu.memory_space<vmem>>, vector<7x256xf32>
    %c7_14 = arith.constant 7 : index
    %c256_15 = arith.constant 256 : index
    %11 = vector.load %arg10[%c7_14, %c256_15] : memref<98x1024xf32, #tpu.memory_space<vmem>>, vector<7x256xf32>
    tpu.vector_store %arg10[%c7_14, %c256_15], %10 {strides = array<i32>} : memref<98x1024xf32, #tpu.memory_space<vmem>>, vector<7x256xf32>,
    %c16 = arith.constant 16 : index
    %c0_16 = arith.constant 0 : index
    %12 = vector.load %arg0[%c16, %c0_16] : memref<128x256xf32, #tpu.memory_space<vmem>>, vector<7x256xf32>
    %c7_17 = arith.constant 7 : index
    %c512_18 = arith.constant 512 : index
    %13 = vector.load %arg10[%c7_17, %c512_18] : memref<98x1024xf32, #tpu.memory_space<vmem>>, vector<7x256xf32>
    tpu.vector_store %arg10[%c7_17, %c512_18], %12 {strides = array<i32>} : memref<98x1024xf32, #tpu.memory_space<vmem>>, vector<7x256xf32>,
    %c17 = arith.constant 17 : index
    %c0_19 = arith.constant 0 : index
    %14 = vector.load %arg0[%c17, %c0_19] : memref<128x256xf32, #tpu.memory_space<vmem>>, vector<7x256xf32>
    %c7_20 = arith.constant 7 : index
    %c768_21 = arith.constant 768 : index
    %15 = vector.load %arg10[%c7_20, %c768_21] : memref<98x1024xf32, #tpu.memory_space<vmem>>, vector<7x256xf32>
    tpu.vector_store %arg10[%c7_20, %c768_21], %14 {strides = array<i32>} : memref<98x1024xf32, #tpu.memory_space<vmem>>, vector<7x256xf32>,
    %c16_22 = arith.constant 16 : index
    %c0_23 = arith.constant 0 : index
    %16 = vector.load %arg0[%c16_22, %c0_23] : memref<128x256xf32, #tpu.memory_space<vmem>>, vector<7x256xf32>
    %c14 = arith.constant 14 : index
    %c0_24 = arith.constant 0 : index
    %17 = vector.load %arg10[%c14, %c0_24] : memref<98x1024xf32, #tpu.memory_space<vmem>>, vector<7x256xf32>
    tpu.vector_store %arg10[%c14, %c0_24], %16 {strides = array<i32>} : memref<98x1024xf32, #tpu.memory_space<vmem>>, vector<7x256xf32>,
    %c17_25 = arith.constant 17 : index
    %c0_26 = arith.constant 0 : index
    %18 = vector.load %arg0[%c17_25, %c0_26] : memref<128x256xf32, #tpu.memory_space<vmem>>, vector<7x256xf32>
    %c14_27 = arith.constant 14 : index
    %c256_28 = arith.constant 256 : index
    %19 = vector.load %arg10[%c14_27, %c256_28] : memref<98x1024xf32, #tpu.memory_space<vmem>>, vector<7x256xf32>
    tpu.vector_store %arg10[%c14_27, %c256_28], %18 {strides = array<i32>} : memref<98x1024xf32, #tpu.memory_space<vmem>>, vector<7x256xf32>,
    %c24 = arith.constant 24 : index
    %c0_29 = arith.constant 0 : index
    %20 = vector.load %arg0[%c24, %c0_29] : memref<128x256xf32, #tpu.memory_space<vmem>>, vector<7x256xf32>
    %c14_30 = arith.constant 14 : index
    %c512_31 = arith.constant 512 : index
    %21 = vector.load %arg10[%c14_30, %c512_31] : memref<98x1024xf32, #tpu.memory_space<vmem>>, vector<7x256xf32>
    tpu.vector_store %arg10[%c14_30, %c512_31], %20 {strides = array<i32>} : memref<98x1024xf32, #tpu.memory_space<vmem>>, vector<7x256xf32>,
    %c25 = arith.constant 25 : index
    %c0_32 = arith.constant 0 : index
    %22 = vector.load %arg0[%c25, %c0_32] : memref<128x256xf32, #tpu.memory_space<vmem>>, vector<7x256xf32>
    %c14_33 = arith.constant 14 : index
    %c768_34 = arith.constant 768 : index
    %23 = vector.load %arg10[%c14_33, %c768_34] : memref<98x1024xf32, #tpu.memory_space<vmem>>, vector<7x256xf32>
    tpu.vector_store %arg10[%c14_33, %c768_34], %22 {strides = array<i32>} : memref<98x1024xf32, #tpu.memory_space<vmem>>, vector<7x256xf32>,
    %c24_35 = arith.constant 24 : index
    %c0_36 = arith.constant 0 : index
    %24 = vector.load %arg0[%c24_35, %c0_36] : memref<128x256xf32, #tpu.memory_space<vmem>>, vector<7x256xf32>
    %c21 = arith.constant 21 : index
    %c0_37 = arith.constant 0 : index
    %25 = vector.load %arg10[%c21, %c0_37] : memref<98x1024xf32, #tpu.memory_space<vmem>>, vector<7x256xf32>
    tpu.vector_store %arg10[%c21, %c0_37], %24 {strides = array<i32>} : memref<98x1024xf32, #tpu.memory_space<vmem>>, vector<7x256xf32>,
    %c25_38 = arith.constant 25 : index
    %c0_39 = arith.constant 0 : index
    %26 = vector.load %arg0[%c25_38, %c0_39] : memref<128x256xf32, #tpu.memory_space<vmem>>, vector<7x256xf32>
    %c21_40 = arith.constant 21 : index
    %c256_41 = arith.constant 256 : index
    %27 = vector.load %arg10[%c21_40, %c256_41] : memref<98x1024xf32, #tpu.memory_space<vmem>>, vector<7x256xf32>
    tpu.vector_store %arg10[%c21_40, %c256_41], %26 {strides = array<i32>} : memref<98x1024xf32, #tpu.memory_space<vmem>>, vector<7x256xf32>,
    %c32 = arith.constant 32 : index
    %c0_42 = arith.constant 0 : index
    %28 = vector.load %arg0[%c32, %c0_42] : memref<128x256xf32, #tpu.memory_space<vmem>>, vector<7x256xf32>
    %c21_43 = arith.constant 21 : index
    %c512_44 = arith.constant 512 : index
    %29 = vector.load %arg10[%c21_43, %c512_44] : memref<98x1024xf32, #tpu.memory_space<vmem>>, vector<7x256xf32>
    tpu.vector_store %arg10[%c21_43, %c512_44], %28 {strides = array<i32>} : memref<98x1024xf32, #tpu.memory_space<vmem>>, vector<7x256xf32>,
    %c33 = arith.constant 33 : index
    %c0_45 = arith.constant 0 : index
    %30 = vector.load %arg0[%c33, %c0_45] : memref<128x256xf32, #tpu.memory_space<vmem>>, vector<7x256xf32>
    %c21_46 = arith.constant 21 : index
    %c768_47 = arith.constant 768 : index
    %31 = vector.load %arg10[%c21_46, %c768_47] : memref<98x1024xf32, #tpu.memory_space<vmem>>, vector<7x256xf32>
    tpu.vector_store %arg10[%c21_46, %c768_47], %30 {strides = array<i32>} : memref<98x1024xf32, #tpu.memory_space<vmem>>, vector<7x256xf32>,
    %c32_48 = arith.constant 32 : index
    %c0_49 = arith.constant 0 : index
    %32 = vector.load %arg0[%c32_48, %c0_49] : memref<128x256xf32, #tpu.memory_space<vmem>>, vector<7x256xf32>
    %c28 = arith.constant 28 : index
    %c0_50 = arith.constant 0 : index
    %33 = vector.load %arg10[%c28, %c0_50] : memref<98x1024xf32, #tpu.memory_space<vmem>>, vector<7x256xf32>
    tpu.vector_store %arg10[%c28, %c0_50], %32 {strides = array<i32>} : memref<98x1024xf32, #tpu.memory_space<vmem>>, vector<7x256xf32>,
    %c33_51 = arith.constant 33 : index
    %c0_52 = arith.constant 0 : index
    %34 = vector.load %arg0[%c33_51, %c0_52] : memref<128x256xf32, #tpu.memory_space<vmem>>, vector<7x256xf32>
    %c28_53 = arith.constant 28 : index
    %c256_54 = arith.constant 256 : index
    %35 = vector.load %arg10[%c28_53, %c256_54] : memref<98x1024xf32, #tpu.memory_space<vmem>>, vector<7x256xf32>
    tpu.vector_store %arg10[%c28_53, %c256_54], %34 {strides = array<i32>} : memref<98x1024xf32, #tpu.memory_space<vmem>>, vector<7x256xf32>,
    %c40 = arith.constant 40 : index
    %c0_55 = arith.constant 0 : index
    %36 = vector.load %arg0[%c40, %c0_55] : memref<128x256xf32, #tpu.memory_space<vmem>>, vector<7x256xf32>
    %c28_56 = arith.constant 28 : index
    %c512_57 = arith.constant 512 : index
    %37 = vector.load %arg10[%c28_56, %c512_57] : memref<98x1024xf32, #tpu.memory_space<vmem>>, vector<7x256xf32>
    tpu.vector_store %arg10[%c28_56, %c512_57], %36 {strides = array<i32>} : memref<98x1024xf32, #tpu.memory_space<vmem>>, vector<7x256xf32>,
    %c41 = arith.constant 41 : index
    %c0_58 = arith.constant 0 : index
    %38 = vector.load %arg0[%c41, %c0_58] : memref<128x256xf32, #tpu.memory_space<vmem>>, vector<7x256xf32>
    %c28_59 = arith.constant 28 : index
    %c768_60 = arith.constant 768 : index
    %39 = vector.load %arg10[%c28_59, %c768_60] : memref<98x1024xf32, #tpu.memory_space<vmem>>, vector<7x256xf32>
    tpu.vector_store %arg10[%c28_59, %c768_60], %38 {strides = array<i32>} : memref<98x1024xf32, #tpu.memory_space<vmem>>, vector<7x256xf32>,
    %c40_61 = arith.constant 40 : index
    %c0_62 = arith.constant 0 : index
    %40 = vector.load %arg0[%c40_61, %c0_62] : memref<128x256xf32, #tpu.memory_space<vmem>>, vector<7x256xf32>
    %c35 = arith.constant 35 : index
    %c0_63 = arith.constant 0 : index
    %41 = vector.load %arg10[%c35, %c0_63] : memref<98x1024xf32, #tpu.memory_space<vmem>>, vector<7x256xf32>
    tpu.vector_store %arg10[%c35, %c0_63], %40 {strides = array<i32>} : memref<98x1024xf32, #tpu.memory_space<vmem>>, vector<7x256xf32>,
    %c41_64 = arith.constant 41 : index
    %c0_65 = arith.constant 0 : index
    %42 = vector.load %arg0[%c41_64, %c0_65] : memref<128x256xf32, #tpu.memory_space<vmem>>, vector<7x256xf32>
    %c35_66 = arith.constant 35 : index
    %c256_67 = arith.constant 256 : index
    %43 = vector.load %arg10[%c35_66, %c256_67] : memref<98x1024xf32, #tpu.memory_space<vmem>>, vector<7x256xf32>
    tpu.vector_store %arg10[%c35_66, %c256_67], %42 {strides = array<i32>} : memref<98x1024xf32, #tpu.memory_space<vmem>>, vector<7x256xf32>,
    %c48 = arith.constant 48 : index
    %c0_68 = arith.constant 0 : index
    %44 = vector.load %arg0[%c48, %c0_68] : memref<128x256xf32, #tpu.memory_space<vmem>>, vector<7x256xf32>
    %c35_69 = arith.constant 35 : index
    %c512_70 = arith.constant 512 : index
    %45 = vector.load %arg10[%c35_69, %c512_70] : memref<98x1024xf32, #tpu.memory_space<vmem>>, vector<7x256xf32>
    tpu.vector_store %arg10[%c35_69, %c512_70], %44 {strides = array<i32>} : memref<98x1024xf32, #tpu.memory_space<vmem>>, vector<7x256xf32>,
    %c49 = arith.constant 49 : index
    %c0_71 = arith.constant 0 : index
    %46 = vector.load %arg0[%c49, %c0_71] : memref<128x256xf32, #tpu.memory_space<vmem>>, vector<7x256xf32>
    %c35_72 = arith.constant 35 : index
    %c768_73 = arith.constant 768 : index
    %47 = vector.load %arg10[%c35_72, %c768_73] : memref<98x1024xf32, #tpu.memory_space<vmem>>, vector<7x256xf32>
    tpu.vector_store %arg10[%c35_72, %c768_73], %46 {strides = array<i32>} : memref<98x1024xf32, #tpu.memory_space<vmem>>, vector<7x256xf32>,
    %c48_74 = arith.constant 48 : index
    %c0_75 = arith.constant 0 : index
    %48 = vector.load %arg0[%c48_74, %c0_75] : memref<128x256xf32, #tpu.memory_space<vmem>>, vector<7x256xf32>
    %c42 = arith.constant 42 : index
    %c0_76 = arith.constant 0 : index
    %49 = vector.load %arg10[%c42, %c0_76] : memref<98x1024xf32, #tpu.memory_space<vmem>>, vector<7x256xf32>
    tpu.vector_store %arg10[%c42, %c0_76], %48 {strides = array<i32>} : memref<98x1024xf32, #tpu.memory_space<vmem>>, vector<7x256xf32>,
    %c49_77 = arith.constant 49 : index
    %c0_78 = arith.constant 0 : index
    %50 = vector.load %arg0[%c49_77, %c0_78] : memref<128x256xf32, #tpu.memory_space<vmem>>, vector<7x256xf32>
    %c42_79 = arith.constant 42 : index
    %c256_80 = arith.constant 256 : index
    %51 = vector.load %arg10[%c42_79, %c256_80] : memref<98x1024xf32, #tpu.memory_space<vmem>>, vector<7x256xf32>
    tpu.vector_store %arg10[%c42_79, %c256_80], %50 {strides = array<i32>} : memref<98x1024xf32, #tpu.memory_space<vmem>>, vector<7x256xf32>,
    %c56 = arith.constant 56 : index
    %c0_81 = arith.constant 0 : index
    %52 = vector.load %arg0[%c56, %c0_81] : memref<128x256xf32, #tpu.memory_space<vmem>>, vector<7x256xf32>
    %c42_82 = arith.constant 42 : index
    %c512_83 = arith.constant 512 : index
    %53 = vector.load %arg10[%c42_82, %c512_83] : memref<98x1024xf32, #tpu.memory_space<vmem>>, vector<7x256xf32>
    tpu.vector_store %arg10[%c42_82, %c512_83], %52 {strides = array<i32>} : memref<98x1024xf32, #tpu.memory_space<vmem>>, vector<7x256xf32>,
    %c57 = arith.constant 57 : index
    %c0_84 = arith.constant 0 : index
    %54 = vector.load %arg0[%c57, %c0_84] : memref<128x256xf32, #tpu.memory_space<vmem>>, vector<7x256xf32>
    %c42_85 = arith.constant 42 : index
    %c768_86 = arith.constant 768 : index
    %55 = vector.load %arg10[%c42_85, %c768_86] : memref<98x1024xf32, #tpu.memory_space<vmem>>, vector<7x256xf32>
    tpu.vector_store %arg10[%c42_85, %c768_86], %54 {strides = array<i32>} : memref<98x1024xf32, #tpu.memory_space<vmem>>, vector<7x256xf32>,
    %c64 = arith.constant 64 : index
    %c0_87 = arith.constant 0 : index
    %56 = vector.load %arg0[%c64, %c0_87] : memref<128x256xf32, #tpu.memory_space<vmem>>, vector<7x256xf32>
    %c49_88 = arith.constant 49 : index
    %c0_89 = arith.constant 0 : index
    %57 = vector.load %arg10[%c49_88, %c0_89] : memref<98x1024xf32, #tpu.memory_space<vmem>>, vector<7x256xf32>
    tpu.vector_store %arg10[%c49_88, %c0_89], %56 {strides = array<i32>} : memref<98x1024xf32, #tpu.memory_space<vmem>>, vector<7x256xf32>,
    %c65 = arith.constant 65 : index
    %c0_90 = arith.constant 0 : index
    %58 = vector.load %arg0[%c65, %c0_90] : memref<128x256xf32, #tpu.memory_space<vmem>>, vector<7x256xf32>
    %c49_91 = arith.constant 49 : index
    %c256_92 = arith.constant 256 : index
    %59 = vector.load %arg10[%c49_91, %c256_92] : memref<98x1024xf32, #tpu.memory_space<vmem>>, vector<7x256xf32>
    tpu.vector_store %arg10[%c49_91, %c256_92], %58 {strides = array<i32>} : memref<98x1024xf32, #tpu.memory_space<vmem>>, vector<7x256xf32>,
    %c72 = arith.constant 72 : index
    %c0_93 = arith.constant 0 : index
    %60 = vector.load %arg0[%c72, %c0_93] : memref<128x256xf32, #tpu.memory_space<vmem>>, vector<7x256xf32>
    %c49_94 = arith.constant 49 : index
    %c512_95 = arith.constant 512 : index
    %61 = vector.load %arg10[%c49_94, %c512_95] : memref<98x1024xf32, #tpu.memory_space<vmem>>, vector<7x256xf32>
    tpu.vector_store %arg10[%c49_94, %c512_95], %60 {strides = array<i32>} : memref<98x1024xf32, #tpu.memory_space<vmem>>, vector<7x256xf32>,
    %c73 = arith.constant 73 : index
    %c0_96 = arith.constant 0 : index
    %62 = vector.load %arg0[%c73, %c0_96] : memref<128x256xf32, #tpu.memory_space<vmem>>, vector<7x256xf32>
    %c49_97 = arith.constant 49 : index
    %c768_98 = arith.constant 768 : index
    %63 = vector.load %arg10[%c49_97, %c768_98] : memref<98x1024xf32, #tpu.memory_space<vmem>>, vector<7x256xf32>
    tpu.vector_store %arg10[%c49_97, %c768_98], %62 {strides = array<i32>} : memref<98x1024xf32, #tpu.memory_space<vmem>>, vector<7x256xf32>,
    %c72_99 = arith.constant 72 : index
    %c0_100 = arith.constant 0 : index
    %64 = vector.load %arg0[%c72_99, %c0_100] : memref<128x256xf32, #tpu.memory_space<vmem>>, vector<7x256xf32>
    %c56_101 = arith.constant 56 : index
    %c0_102 = arith.constant 0 : index
    %65 = vector.load %arg10[%c56_101, %c0_102] : memref<98x1024xf32, #tpu.memory_space<vmem>>, vector<7x256xf32>
    tpu.vector_store %arg10[%c56_101, %c0_102], %64 {strides = array<i32>} : memref<98x1024xf32, #tpu.memory_space<vmem>>, vector<7x256xf32>,
    %c73_103 = arith.constant 73 : index
    %c0_104 = arith.constant 0 : index
    %66 = vector.load %arg0[%c73_103, %c0_104] : memref<128x256xf32, #tpu.memory_space<vmem>>, vector<7x256xf32>
    %c56_105 = arith.constant 56 : index
    %c256_106 = arith.constant 256 : index
    %67 = vector.load %arg10[%c56_105, %c256_106] : memref<98x1024xf32, #tpu.memory_space<vmem>>, vector<7x256xf32>
    tpu.vector_store %arg10[%c56_105, %c256_106], %66 {strides = array<i32>} : memref<98x1024xf32, #tpu.memory_space<vmem>>, vector<7x256xf32>,
    %c80 = arith.constant 80 : index
    %c0_107 = arith.constant 0 : index
    %68 = vector.load %arg0[%c80, %c0_107] : memref<128x256xf32, #tpu.memory_space<vmem>>, vector<7x256xf32>
    %c56_108 = arith.constant 56 : index
    %c512_109 = arith.constant 512 : index
    %69 = vector.load %arg10[%c56_108, %c512_109] : memref<98x1024xf32, #tpu.memory_space<vmem>>, vector<7x256xf32>
    tpu.vector_store %arg10[%c56_108, %c512_109], %68 {strides = array<i32>} : memref<98x1024xf32, #tpu.memory_space<vmem>>, vector<7x256xf32>,
    %c81 = arith.constant 81 : index
    %c0_110 = arith.constant 0 : index
    %70 = vector.load %arg0[%c81, %c0_110] : memref<128x256xf32, #tpu.memory_space<vmem>>, vector<7x256xf32>
    %c56_111 = arith.constant 56 : index
    %c768_112 = arith.constant 768 : index
    %71 = vector.load %arg10[%c56_111, %c768_112] : memref<98x1024xf32, #tpu.memory_space<vmem>>, vector<7x256xf32>
    tpu.vector_store %arg10[%c56_111, %c768_112], %70 {strides = array<i32>} : memref<98x1024xf32, #tpu.memory_space<vmem>>, vector<7x256xf32>,
    %c80_113 = arith.constant 80 : index
    %c0_114 = arith.constant 0 : index
    %72 = vector.load %arg0[%c80_113, %c0_114] : memref<128x256xf32, #tpu.memory_space<vmem>>, vector<7x256xf32>
    %c63 = arith.constant 63 : index
    %c0_115 = arith.constant 0 : index
    %73 = vector.load %arg10[%c63, %c0_115] : memref<98x1024xf32, #tpu.memory_space<vmem>>, vector<7x256xf32>
    tpu.vector_store %arg10[%c63, %c0_115], %72 {strides = array<i32>} : memref<98x1024xf32, #tpu.memory_space<vmem>>, vector<7x256xf32>,
    %c81_116 = arith.constant 81 : index
    %c0_117 = arith.constant 0 : index
    %74 = vector.load %arg0[%c81_116, %c0_117] : memref<128x256xf32, #tpu.memory_space<vmem>>, vector<7x256xf32>
    %c63_118 = arith.constant 63 : index
    %c256_119 = arith.constant 256 : index
    %75 = vector.load %arg10[%c63_118, %c256_119] : memref<98x1024xf32, #tpu.memory_space<vmem>>, vector<7x256xf32>
    tpu.vector_store %arg10[%c63_118, %c256_119], %74 {strides = array<i32>} : memref<98x1024xf32, #tpu.memory_space<vmem>>, vector<7x256xf32>,
    %c88 = arith.constant 88 : index
    %c0_120 = arith.constant 0 : index
    %76 = vector.load %arg0[%c88, %c0_120] : memref<128x256xf32, #tpu.memory_space<vmem>>, vector<7x256xf32>
    %c63_121 = arith.constant 63 : index
    %c512_122 = arith.constant 512 : index
    %77 = vector.load %arg10[%c63_121, %c512_122] : memref<98x1024xf32, #tpu.memory_space<vmem>>, vector<7x256xf32>
    tpu.vector_store %arg10[%c63_121, %c512_122], %76 {strides = array<i32>} : memref<98x1024xf32, #tpu.memory_space<vmem>>, vector<7x256xf32>,
    %c89 = arith.constant 89 : index
    %c0_123 = arith.constant 0 : index
    %78 = vector.load %arg0[%c89, %c0_123] : memref<128x256xf32, #tpu.memory_space<vmem>>, vector<7x256xf32>
    %c63_124 = arith.constant 63 : index
    %c768_125 = arith.constant 768 : index
    %79 = vector.load %arg10[%c63_124, %c768_125] : memref<98x1024xf32, #tpu.memory_space<vmem>>, vector<7x256xf32>
    tpu.vector_store %arg10[%c63_124, %c768_125], %78 {strides = array<i32>} : memref<98x1024xf32, #tpu.memory_space<vmem>>, vector<7x256xf32>,
    %c88_126 = arith.constant 88 : index
    %c0_127 = arith.constant 0 : index
    %80 = vector.load %arg0[%c88_126, %c0_127] : memref<128x256xf32, #tpu.memory_space<vmem>>, vector<7x256xf32>
    %c70 = arith.constant 70 : index
    %c0_128 = arith.constant 0 : index
    %81 = vector.load %arg10[%c70, %c0_128] : memref<98x1024xf32, #tpu.memory_space<vmem>>, vector<7x256xf32>
    tpu.vector_store %arg10[%c70, %c0_128], %80 {strides = array<i32>} : memref<98x1024xf32, #tpu.memory_space<vmem>>, vector<7x256xf32>,
    %c89_129 = arith.constant 89 : index
    %c0_130 = arith.constant 0 : index
    %82 = vector.load %arg0[%c89_129, %c0_130] : memref<128x256xf32, #tpu.memory_space<vmem>>, vector<7x256xf32>
    %c70_131 = arith.constant 70 : index
    %c256_132 = arith.constant 256 : index
    %83 = vector.load %arg10[%c70_131, %c256_132] : memref<98x1024xf32, #tpu.memory_space<vmem>>, vector<7x256xf32>
    tpu.vector_store %arg10[%c70_131, %c256_132], %82 {strides = array<i32>} : memref<98x1024xf32, #tpu.memory_space<vmem>>, vector<7x256xf32>,
    %c96 = arith.constant 96 : index
    %c0_133 = arith.constant 0 : index
    %84 = vector.load %arg0[%c96, %c0_133] : memref<128x256xf32, #tpu.memory_space<vmem>>, vector<7x256xf32>
    %c70_134 = arith.constant 70 : index
    %c512_135 = arith.constant 512 : index
    %85 = vector.load %arg10[%c70_134, %c512_135] : memref<98x1024xf32, #tpu.memory_space<vmem>>, vector<7x256xf32>
    tpu.vector_store %arg10[%c70_134, %c512_135], %84 {strides = array<i32>} : memref<98x1024xf32, #tpu.memory_space<vmem>>, vector<7x256xf32>,
    %c97 = arith.constant 97 : index
    %c0_136 = arith.constant 0 : index
    %86 = vector.load %arg0[%c97, %c0_136] : memref<128x256xf32, #tpu.memory_space<vmem>>, vector<7x256xf32>
    %c70_137 = arith.constant 70 : index
    %c768_138 = arith.constant 768 : index
    %87 = vector.load %arg10[%c70_137, %c768_138] : memref<98x1024xf32, #tpu.memory_space<vmem>>, vector<7x256xf32>
    tpu.vector_store %arg10[%c70_137, %c768_138], %86 {strides = array<i32>} : memref<98x1024xf32, #tpu.memory_space<vmem>>, vector<7x256xf32>,
    %c96_139 = arith.constant 96 : index
    %c0_140 = arith.constant 0 : index
    %88 = vector.load %arg0[%c96_139, %c0_140] : memref<128x256xf32, #tpu.memory_space<vmem>>, vector<7x256xf32>
    %c77 = arith.constant 77 : index
    %c0_141 = arith.constant 0 : index
    %89 = vector.load %arg10[%c77, %c0_141] : memref<98x1024xf32, #tpu.memory_space<vmem>>, vector<7x256xf32>
    tpu.vector_store %arg10[%c77, %c0_141], %88 {strides = array<i32>} : memref<98x1024xf32, #tpu.memory_space<vmem>>, vector<7x256xf32>,
    %c97_142 = arith.constant 97 : index
    %c0_143 = arith.constant 0 : index
    %90 = vector.load %arg0[%c97_142, %c0_143] : memref<128x256xf32, #tpu.memory_space<vmem>>, vector<7x256xf32>
    %c77_144 = arith.constant 77 : index
    %c256_145 = arith.constant 256 : index
    %91 = vector.load %arg10[%c77_144, %c256_145] : memref<98x1024xf32, #tpu.memory_space<vmem>>, vector<7x256xf32>
    tpu.vector_store %arg10[%c77_144, %c256_145], %90 {strides = array<i32>} : memref<98x1024xf32, #tpu.memory_space<vmem>>, vector<7x256xf32>,
    %c104 = arith.constant 104 : index
    %c0_146 = arith.constant 0 : index
    %92 = vector.load %arg0[%c104, %c0_146] : memref<128x256xf32, #tpu.memory_space<vmem>>, vector<7x256xf32>
    %c77_147 = arith.constant 77 : index
    %c512_148 = arith.constant 512 : index
    %93 = vector.load %arg10[%c77_147, %c512_148] : memref<98x1024xf32, #tpu.memory_space<vmem>>, vector<7x256xf32>
    tpu.vector_store %arg10[%c77_147, %c512_148], %92 {strides = array<i32>} : memref<98x1024xf32, #tpu.memory_space<vmem>>, vector<7x256xf32>,
    %c105 = arith.constant 105 : index
    %c0_149 = arith.constant 0 : index
    %94 = vector.load %arg0[%c105, %c0_149] : memref<128x256xf32, #tpu.memory_space<vmem>>, vector<7x256xf32>
    %c77_150 = arith.constant 77 : index
    %c768_151 = arith.constant 768 : index
    %95 = vector.load %arg10[%c77_150, %c768_151] : memref<98x1024xf32, #tpu.memory_space<vmem>>, vector<7x256xf32>
    tpu.vector_store %arg10[%c77_150, %c768_151], %94 {strides = array<i32>} : memref<98x1024xf32, #tpu.memory_space<vmem>>, vector<7x256xf32>,
    %c104_152 = arith.constant 104 : index
    %c0_153 = arith.constant 0 : index
    %96 = vector.load %arg0[%c104_152, %c0_153] : memref<128x256xf32, #tpu.memory_space<vmem>>, vector<7x256xf32>
    %c84 = arith.constant 84 : index
    %c0_154 = arith.constant 0 : index
    %97 = vector.load %arg10[%c84, %c0_154] : memref<98x1024xf32, #tpu.memory_space<vmem>>, vector<7x256xf32>
    tpu.vector_store %arg10[%c84, %c0_154], %96 {strides = array<i32>} : memref<98x1024xf32, #tpu.memory_space<vmem>>, vector<7x256xf32>,
    %c105_155 = arith.constant 105 : index
    %c0_156 = arith.constant 0 : index
    %98 = vector.load %arg0[%c105_155, %c0_156] : memref<128x256xf32, #tpu.memory_space<vmem>>, vector<7x256xf32>
    %c84_157 = arith.constant 84 : index
    %c256_158 = arith.constant 256 : index
    %99 = vector.load %arg10[%c84_157, %c256_158] : memref<98x1024xf32, #tpu.memory_space<vmem>>, vector<7x256xf32>
    tpu.vector_store %arg10[%c84_157, %c256_158], %98 {strides = array<i32>} : memref<98x1024xf32, #tpu.memory_space<vmem>>, vector<7x256xf32>,
    %c112 = arith.constant 112 : index
    %c0_159 = arith.constant 0 : index
    %100 = vector.load %arg0[%c112, %c0_159] : memref<128x256xf32, #tpu.memory_space<vmem>>, vector<7x256xf32>
    %c84_160 = arith.constant 84 : index
    %c512_161 = arith.constant 512 : index
    %101 = vector.load %arg10[%c84_160, %c512_161] : memref<98x1024xf32, #tpu.memory_space<vmem>>, vector<7x256xf32>
    tpu.vector_store %arg10[%c84_160, %c512_161], %100 {strides = array<i32>} : memref<98x1024xf32, #tpu.memory_space<vmem>>, vector<7x256xf32>,
    %c113 = arith.constant 113 : index
    %c0_162 = arith.constant 0 : index
    %102 = vector.load %arg0[%c113, %c0_162] : memref<128x256xf32, #tpu.memory_space<vmem>>, vector<7x256xf32>
    %c84_163 = arith.constant 84 : index
    %c768_164 = arith.constant 768 : index
    %103 = vector.load %arg10[%c84_163, %c768_164] : memref<98x1024xf32, #tpu.memory_space<vmem>>, vector<7x256xf32>
    tpu.vector_store %arg10[%c84_163, %c768_164], %102 {strides = array<i32>} : memref<98x1024xf32, #tpu.memory_space<vmem>>, vector<7x256xf32>,
    %c112_165 = arith.constant 112 : index
    %c0_166 = arith.constant 0 : index
    %104 = vector.load %arg0[%c112_165, %c0_166] : memref<128x256xf32, #tpu.memory_space<vmem>>, vector<7x256xf32>
    %c91 = arith.constant 91 : index
    %c0_167 = arith.constant 0 : index
    %105 = vector.load %arg10[%c91, %c0_167] : memref<98x1024xf32, #tpu.memory_space<vmem>>, vector<7x256xf32>
    tpu.vector_store %arg10[%c91, %c0_167], %104 {strides = array<i32>} : memref<98x1024xf32, #tpu.memory_space<vmem>>, vector<7x256xf32>,
    %c113_168 = arith.constant 113 : index
    %c0_169 = arith.constant 0 : index
    %106 = vector.load %arg0[%c113_168, %c0_169] : memref<128x256xf32, #tpu.memory_space<vmem>>, vector<7x256xf32>
    %c91_170 = arith.constant 91 : index
    %c256_171 = arith.constant 256 : index
    %107 = vector.load %arg10[%c91_170, %c256_171] : memref<98x1024xf32, #tpu.memory_space<vmem>>, vector<7x256xf32>
    tpu.vector_store %arg10[%c91_170, %c256_171], %106 {strides = array<i32>} : memref<98x1024xf32, #tpu.memory_space<vmem>>, vector<7x256xf32>,
    %c120 = arith.constant 120 : index
    %c0_172 = arith.constant 0 : index
    %108 = vector.load %arg0[%c120, %c0_172] : memref<128x256xf32, #tpu.memory_space<vmem>>, vector<7x256xf32>
    %c91_173 = arith.constant 91 : index
    %c512_174 = arith.constant 512 : index
    %109 = vector.load %arg10[%c91_173, %c512_174] : memref<98x1024xf32, #tpu.memory_space<vmem>>, vector<7x256xf32>
    tpu.vector_store %arg10[%c91_173, %c512_174], %108 {strides = array<i32>} : memref<98x1024xf32, #tpu.memory_space<vmem>>, vector<7x256xf32>,
    %c121 = arith.constant 121 : index
    %c0_175 = arith.constant 0 : index
    %110 = vector.load %arg0[%c121, %c0_175] : memref<128x256xf32, #tpu.memory_space<vmem>>, vector<7x256xf32>
    %c91_176 = arith.constant 91 : index
    %c768_177 = arith.constant 768 : index
    %111 = vector.load %arg10[%c91_176, %c768_177] : memref<98x1024xf32, #tpu.memory_space<vmem>>, vector<7x256xf32>
    tpu.vector_store %arg10[%c91_176, %c768_177], %110 {strides = array<i32>} : memref<98x1024xf32, #tpu.memory_space<vmem>>, vector<7x256xf32>,
    %c0_178 = arith.constant 0 : index
    %c0_179 = arith.constant 0 : index
    %112 = vector.load %arg10[%c0_178, %c0_179] : memref<98x1024xf32, #tpu.memory_space<vmem>>, vector<98x1024xf32>
    %c0_180 = arith.constant 0 : index
    %c0_181 = arith.constant 0 : index
    %113 = vector.load %arg1[%c0_180, %c0_181] : memref<4096x128xf32, #tpu.memory_space<vmem>>, vector<1024x128xf32>
    %cst = arith.constant dense<0.000000e+00> : vector<98x128xf32>
    %114 = tpu.matmul %112, %113, %cst {dimension_numbers = #tpu.dot_dimension_numbers<[1], [0], [0], [1], [0, 0, 1, 1], [], []>} : vector<98x1024xf32>, vector<1024x128xf32>, vector<98x128xf32> -> vector<98x128xf32>
    %c1024 = arith.constant 1024 : index
    %c0_182 = arith.constant 0 : index
    %115 = vector.load %arg1[%c1024, %c0_182] : memref<4096x128xf32, #tpu.memory_space<vmem>>, vector<1024x128xf32>
    %cst_183 = arith.constant dense<0.000000e+00> : vector<98x128xf32>
    %116 = tpu.matmul %112, %115, %cst_183 {dimension_numbers = #tpu.dot_dimension_numbers<[1], [0], [0], [1], [0, 0, 1, 1], [], []>} : vector<98x1024xf32>, vector<1024x128xf32>, vector<98x128xf32> -> vector<98x128xf32>
    %117 = arith.maximumf %114, %116 : vector<98x128xf32>
    %c2048 = arith.constant 2048 : index
    %c0_184 = arith.constant 0 : index
    %118 = vector.load %arg1[%c2048, %c0_184] : memref<4096x128xf32, #tpu.memory_space<vmem>>, vector<1024x128xf32>
    %cst_185 = arith.constant dense<0.000000e+00> : vector<98x128xf32>
    %119 = tpu.matmul %112, %118, %cst_185 {dimension_numbers = #tpu.dot_dimension_numbers<[1], [0], [0], [1], [0, 0, 1, 1], [], []>} : vector<98x1024xf32>, vector<1024x128xf32>, vector<98x128xf32> -> vector<98x128xf32>
    %120 = arith.maximumf %117, %119 : vector<98x128xf32>
    %c3072 = arith.constant 3072 : index
    %c0_186 = arith.constant 0 : index
    %121 = vector.load %arg1[%c3072, %c0_186] : memref<4096x128xf32, #tpu.memory_space<vmem>>, vector<1024x128xf32>
    %cst_187 = arith.constant dense<0.000000e+00> : vector<98x128xf32>
    %122 = tpu.matmul %112, %121, %cst_187 {dimension_numbers = #tpu.dot_dimension_numbers<[1], [0], [0], [1], [0, 0, 1, 1], [], []>} : vector<98x1024xf32>, vector<1024x128xf32>, vector<98x128xf32> -> vector<98x128xf32>
    %123 = arith.maximumf %120, %122 : vector<98x128xf32>
    %c0_188 = arith.constant 0 : index
    %c0_189 = arith.constant 0 : index
    %124 = vector.load %arg2[%c0_188, %c0_189] : memref<1x128xf32, #tpu.memory_space<vmem>>, vector<1x128xf32>
    %125 = vector.broadcast %124 : vector<1x128xf32> to vector<98x128xf32>
    %126 = arith.addf %123, %125 : vector<98x128xf32>
    %cst_190 = arith.constant 0.000000e+00 : f32
    %127 = vector.broadcast %cst_190 : f32 to vector<98x128xf32>
    %128 = arith.maximumf %126, %127 : vector<98x128xf32>
    %c0_191 = arith.constant 0 : index
    %c0_192 = arith.constant 0 : index
    %129 = vector.load %arg11[%c0_191, %c0_192] : memref<98x128xf32, #tpu.memory_space<vmem>>, vector<98x128xf32>
    tpu.vector_store %arg11[%c0_191, %c0_192], %128 {strides = array<i32>} : memref<98x128xf32, #tpu.memory_space<vmem>>, vector<98x128xf32>,
    %c0_193 = arith.constant 0 : index
    %c0_194 = arith.constant 0 : index
    %130 = vector.load %arg11[%c0_193, %c0_194] : memref<98x128xf32, #tpu.memory_space<vmem>>, vector<5x128xf32>
    %c0_195 = arith.constant 0 : index
    %c0_196 = arith.constant 0 : index
    %131 = vector.load %arg12[%c0_195, %c0_196] : memref<50x1152xf32, #tpu.memory_space<vmem>>, vector<5x128xf32>
    tpu.vector_store %arg12[%c0_195, %c0_196], %130 {strides = array<i32>} : memref<50x1152xf32, #tpu.memory_space<vmem>>, vector<5x128xf32>,
    %c1_197 = arith.constant 1 : index
    %c0_198 = arith.constant 0 : index
    %132 = vector.load %arg11[%c1_197, %c0_198] : memref<98x128xf32, #tpu.memory_space<vmem>>, vector<5x128xf32>
    %c0_199 = arith.constant 0 : index
    %c128 = arith.constant 128 : index
    %133 = vector.load %arg12[%c0_199, %c128] : memref<50x1152xf32, #tpu.memory_space<vmem>>, vector<5x128xf32>
    tpu.vector_store %arg12[%c0_199, %c128], %132 {strides = array<i32>} : memref<50x1152xf32, #tpu.memory_space<vmem>>, vector<5x128xf32>,
    %c2 = arith.constant 2 : index
    %c0_200 = arith.constant 0 : index
    %134 = vector.load %arg11[%c2, %c0_200] : memref<98x128xf32, #tpu.memory_space<vmem>>, vector<5x128xf32>
    %c0_201 = arith.constant 0 : index
    %c256_202 = arith.constant 256 : index
    %135 = vector.load %arg12[%c0_201, %c256_202] : memref<50x1152xf32, #tpu.memory_space<vmem>>, vector<5x128xf32>
    tpu.vector_store %arg12[%c0_201, %c256_202], %134 {strides = array<i32>} : memref<50x1152xf32, #tpu.memory_space<vmem>>, vector<5x128xf32>,
    %c7_203 = arith.constant 7 : index
    %c0_204 = arith.constant 0 : index
    %136 = vector.load %arg11[%c7_203, %c0_204] : memref<98x128xf32, #tpu.memory_space<vmem>>, vector<5x128xf32>
    %c0_205 = arith.constant 0 : index
    %c384 = arith.constant 384 : index
    %137 = vector.load %arg12[%c0_205, %c384] : memref<50x1152xf32, #tpu.memory_space<vmem>>, vector<5x128xf32>
    tpu.vector_store %arg12[%c0_205, %c384], %136 {strides = array<i32>} : memref<50x1152xf32, #tpu.memory_space<vmem>>, vector<5x128xf32>,
    %c8_206 = arith.constant 8 : index
    %c0_207 = arith.constant 0 : index
    %138 = vector.load %arg11[%c8_206, %c0_207] : memref<98x128xf32, #tpu.memory_space<vmem>>, vector<5x128xf32>
    %c0_208 = arith.constant 0 : index
    %c512_209 = arith.constant 512 : index
    %139 = vector.load %arg12[%c0_208, %c512_209] : memref<50x1152xf32, #tpu.memory_space<vmem>>, vector<5x128xf32>
    tpu.vector_store %arg12[%c0_208, %c512_209], %138 {strides = array<i32>} : memref<50x1152xf32, #tpu.memory_space<vmem>>, vector<5x128xf32>,
    %c9_210 = arith.constant 9 : index
    %c0_211 = arith.constant 0 : index
    %140 = vector.load %arg11[%c9_210, %c0_211] : memref<98x128xf32, #tpu.memory_space<vmem>>, vector<5x128xf32>
    %c0_212 = arith.constant 0 : index
    %c640 = arith.constant 640 : index
    %141 = vector.load %arg12[%c0_212, %c640] : memref<50x1152xf32, #tpu.memory_space<vmem>>, vector<5x128xf32>
    tpu.vector_store %arg12[%c0_212, %c640], %140 {strides = array<i32>} : memref<50x1152xf32, #tpu.memory_space<vmem>>, vector<5x128xf32>,
    %c14_213 = arith.constant 14 : index
    %c0_214 = arith.constant 0 : index
    %142 = vector.load %arg11[%c14_213, %c0_214] : memref<98x128xf32, #tpu.memory_space<vmem>>, vector<5x128xf32>
    %c0_215 = arith.constant 0 : index
    %c768_216 = arith.constant 768 : index
    %143 = vector.load %arg12[%c0_215, %c768_216] : memref<50x1152xf32, #tpu.memory_space<vmem>>, vector<5x128xf32>
    tpu.vector_store %arg12[%c0_215, %c768_216], %142 {strides = array<i32>} : memref<50x1152xf32, #tpu.memory_space<vmem>>, vector<5x128xf32>,
    %c15 = arith.constant 15 : index
    %c0_217 = arith.constant 0 : index
    %144 = vector.load %arg11[%c15, %c0_217] : memref<98x128xf32, #tpu.memory_space<vmem>>, vector<5x128xf32>
    %c0_218 = arith.constant 0 : index
    %c896 = arith.constant 896 : index
    %145 = vector.load %arg12[%c0_218, %c896] : memref<50x1152xf32, #tpu.memory_space<vmem>>, vector<5x128xf32>
    tpu.vector_store %arg12[%c0_218, %c896], %144 {strides = array<i32>} : memref<50x1152xf32, #tpu.memory_space<vmem>>, vector<5x128xf32>,
    %c16_219 = arith.constant 16 : index
    %c0_220 = arith.constant 0 : index
    %146 = vector.load %arg11[%c16_219, %c0_220] : memref<98x128xf32, #tpu.memory_space<vmem>>, vector<5x128xf32>
    %c0_221 = arith.constant 0 : index
    %c1024_222 = arith.constant 1024 : index
    %147 = vector.load %arg12[%c0_221, %c1024_222] : memref<50x1152xf32, #tpu.memory_space<vmem>>, vector<5x128xf32>
    tpu.vector_store %arg12[%c0_221, %c1024_222], %146 {strides = array<i32>} : memref<50x1152xf32, #tpu.memory_space<vmem>>, vector<5x128xf32>,
    %c7_223 = arith.constant 7 : index
    %c0_224 = arith.constant 0 : index
    %148 = vector.load %arg11[%c7_223, %c0_224] : memref<98x128xf32, #tpu.memory_space<vmem>>, vector<5x128xf32>
    %c5 = arith.constant 5 : index
    %c0_225 = arith.constant 0 : index
    %149 = vector.load %arg12[%c5, %c0_225] : memref<50x1152xf32, #tpu.memory_space<vmem>>, vector<5x128xf32>
    tpu.vector_store %arg12[%c5, %c0_225], %148 {strides = array<i32>} : memref<50x1152xf32, #tpu.memory_space<vmem>>, vector<5x128xf32>,
    %c8_226 = arith.constant 8 : index
    %c0_227 = arith.constant 0 : index
    %150 = vector.load %arg11[%c8_226, %c0_227] : memref<98x128xf32, #tpu.memory_space<vmem>>, vector<5x128xf32>
    %c5_228 = arith.constant 5 : index
    %c128_229 = arith.constant 128 : index
    %151 = vector.load %arg12[%c5_228, %c128_229] : memref<50x1152xf32, #tpu.memory_space<vmem>>, vector<5x128xf32>
    tpu.vector_store %arg12[%c5_228, %c128_229], %150 {strides = array<i32>} : memref<50x1152xf32, #tpu.memory_space<vmem>>, vector<5x128xf32>,
    %c9_230 = arith.constant 9 : index
    %c0_231 = arith.constant 0 : index
    %152 = vector.load %arg11[%c9_230, %c0_231] : memref<98x128xf32, #tpu.memory_space<vmem>>, vector<5x128xf32>
    %c5_232 = arith.constant 5 : index
    %c256_233 = arith.constant 256 : index
    %153 = vector.load %arg12[%c5_232, %c256_233] : memref<50x1152xf32, #tpu.memory_space<vmem>>, vector<5x128xf32>
    tpu.vector_store %arg12[%c5_232, %c256_233], %152 {strides = array<i32>} : memref<50x1152xf32, #tpu.memory_space<vmem>>, vector<5x128xf32>,
    %c14_234 = arith.constant 14 : index
    %c0_235 = arith.constant 0 : index
    %154 = vector.load %arg11[%c14_234, %c0_235] : memref<98x128xf32, #tpu.memory_space<vmem>>, vector<5x128xf32>
    %c5_236 = arith.constant 5 : index
    %c384_237 = arith.constant 384 : index
    %155 = vector.load %arg12[%c5_236, %c384_237] : memref<50x1152xf32, #tpu.memory_space<vmem>>, vector<5x128xf32>
    tpu.vector_store %arg12[%c5_236, %c384_237], %154 {strides = array<i32>} : memref<50x1152xf32, #tpu.memory_space<vmem>>, vector<5x128xf32>,
    %c15_238 = arith.constant 15 : index
    %c0_239 = arith.constant 0 : index
    %156 = vector.load %arg11[%c15_238, %c0_239] : memref<98x128xf32, #tpu.memory_space<vmem>>, vector<5x128xf32>
    %c5_240 = arith.constant 5 : index
    %c512_241 = arith.constant 512 : index
    %157 = vector.load %arg12[%c5_240, %c512_241] : memref<50x1152xf32, #tpu.memory_space<vmem>>, vector<5x128xf32>
    tpu.vector_store %arg12[%c5_240, %c512_241], %156 {strides = array<i32>} : memref<50x1152xf32, #tpu.memory_space<vmem>>, vector<5x128xf32>,
    %c16_242 = arith.constant 16 : index
    %c0_243 = arith.constant 0 : index
    %158 = vector.load %arg11[%c16_242, %c0_243] : memref<98x128xf32, #tpu.memory_space<vmem>>, vector<5x128xf32>
    %c5_244 = arith.constant 5 : index
    %c640_245 = arith.constant 640 : index
    %159 = vector.load %arg12[%c5_244, %c640_245] : memref<50x1152xf32, #tpu.memory_space<vmem>>, vector<5x128xf32>
    tpu.vector_store %arg12[%c5_244, %c640_245], %158 {strides = array<i32>} : memref<50x1152xf32, #tpu.memory_space<vmem>>, vector<5x128xf32>,
    %c21_246 = arith.constant 21 : index
    %c0_247 = arith.constant 0 : index
    %160 = vector.load %arg11[%c21_246, %c0_247] : memref<98x128xf32, #tpu.memory_space<vmem>>, vector<5x128xf32>
    %c5_248 = arith.constant 5 : index
    %c768_249 = arith.constant 768 : index
    %161 = vector.load %arg12[%c5_248, %c768_249] : memref<50x1152xf32, #tpu.memory_space<vmem>>, vector<5x128xf32>
    tpu.vector_store %arg12[%c5_248, %c768_249], %160 {strides = array<i32>} : memref<50x1152xf32, #tpu.memory_space<vmem>>, vector<5x128xf32>,
    %c22 = arith.constant 22 : index
    %c0_250 = arith.constant 0 : index
    %162 = vector.load %arg11[%c22, %c0_250] : memref<98x128xf32, #tpu.memory_space<vmem>>, vector<5x128xf32>
    %c5_251 = arith.constant 5 : index
    %c896_252 = arith.constant 896 : index
    %163 = vector.load %arg12[%c5_251, %c896_252] : memref<50x1152xf32, #tpu.memory_space<vmem>>, vector<5x128xf32>
    tpu.vector_store %arg12[%c5_251, %c896_252], %162 {strides = array<i32>} : memref<50x1152xf32, #tpu.memory_space<vmem>>, vector<5x128xf32>,
    %c23 = arith.constant 23 : index
    %c0_253 = arith.constant 0 : index
    %164 = vector.load %arg11[%c23, %c0_253] : memref<98x128xf32, #tpu.memory_space<vmem>>, vector<5x128xf32>
    %c5_254 = arith.constant 5 : index
    %c1024_255 = arith.constant 1024 : index
    %165 = vector.load %arg12[%c5_254, %c1024_255] : memref<50x1152xf32, #tpu.memory_space<vmem>>, vector<5x128xf32>
    tpu.vector_store %arg12[%c5_254, %c1024_255], %164 {strides = array<i32>} : memref<50x1152xf32, #tpu.memory_space<vmem>>, vector<5x128xf32>,
    %c14_256 = arith.constant 14 : index
    %c0_257 = arith.constant 0 : index
    %166 = vector.load %arg11[%c14_256, %c0_257] : memref<98x128xf32, #tpu.memory_space<vmem>>, vector<5x128xf32>
    %c10 = arith.constant 10 : index
    %c0_258 = arith.constant 0 : index
    %167 = vector.load %arg12[%c10, %c0_258] : memref<50x1152xf32, #tpu.memory_space<vmem>>, vector<5x128xf32>
    tpu.vector_store %arg12[%c10, %c0_258], %166 {strides = array<i32>} : memref<50x1152xf32, #tpu.memory_space<vmem>>, vector<5x128xf32>,
    %c15_259 = arith.constant 15 : index
    %c0_260 = arith.constant 0 : index
    %168 = vector.load %arg11[%c15_259, %c0_260] : memref<98x128xf32, #tpu.memory_space<vmem>>, vector<5x128xf32>
    %c10_261 = arith.constant 10 : index
    %c128_262 = arith.constant 128 : index
    %169 = vector.load %arg12[%c10_261, %c128_262] : memref<50x1152xf32, #tpu.memory_space<vmem>>, vector<5x128xf32>
    tpu.vector_store %arg12[%c10_261, %c128_262], %168 {strides = array<i32>} : memref<50x1152xf32, #tpu.memory_space<vmem>>, vector<5x128xf32>,
    %c16_263 = arith.constant 16 : index
    %c0_264 = arith.constant 0 : index
    %170 = vector.load %arg11[%c16_263, %c0_264] : memref<98x128xf32, #tpu.memory_space<vmem>>, vector<5x128xf32>
    %c10_265 = arith.constant 10 : index
    %c256_266 = arith.constant 256 : index
    %171 = vector.load %arg12[%c10_265, %c256_266] : memref<50x1152xf32, #tpu.memory_space<vmem>>, vector<5x128xf32>
    tpu.vector_store %arg12[%c10_265, %c256_266], %170 {strides = array<i32>} : memref<50x1152xf32, #tpu.memory_space<vmem>>, vector<5x128xf32>,
    %c21_267 = arith.constant 21 : index
    %c0_268 = arith.constant 0 : index
    %172 = vector.load %arg11[%c21_267, %c0_268] : memref<98x128xf32, #tpu.memory_space<vmem>>, vector<5x128xf32>
    %c10_269 = arith.constant 10 : index
    %c384_270 = arith.constant 384 : index
    %173 = vector.load %arg12[%c10_269, %c384_270] : memref<50x1152xf32, #tpu.memory_space<vmem>>, vector<5x128xf32>
    tpu.vector_store %arg12[%c10_269, %c384_270], %172 {strides = array<i32>} : memref<50x1152xf32, #tpu.memory_space<vmem>>, vector<5x128xf32>,
    %c22_271 = arith.constant 22 : index
    %c0_272 = arith.constant 0 : index
    %174 = vector.load %arg11[%c22_271, %c0_272] : memref<98x128xf32, #tpu.memory_space<vmem>>, vector<5x128xf32>
    %c10_273 = arith.constant 10 : index
    %c512_274 = arith.constant 512 : index
    %175 = vector.load %arg12[%c10_273, %c512_274] : memref<50x1152xf32, #tpu.memory_space<vmem>>, vector<5x128xf32>
    tpu.vector_store %arg12[%c10_273, %c512_274], %174 {strides = array<i32>} : memref<50x1152xf32, #tpu.memory_space<vmem>>, vector<5x128xf32>,
    %c23_275 = arith.constant 23 : index
    %c0_276 = arith.constant 0 : index
    %176 = vector.load %arg11[%c23_275, %c0_276] : memref<98x128xf32, #tpu.memory_space<vmem>>, vector<5x128xf32>
    %c10_277 = arith.constant 10 : index
    %c640_278 = arith.constant 640 : index
    %177 = vector.load %arg12[%c10_277, %c640_278] : memref<50x1152xf32, #tpu.memory_space<vmem>>, vector<5x128xf32>
    tpu.vector_store %arg12[%c10_277, %c640_278], %176 {strides = array<i32>} : memref<50x1152xf32, #tpu.memory_space<vmem>>, vector<5x128xf32>,
    %c28_279 = arith.constant 28 : index
    %c0_280 = arith.constant 0 : index
    %178 = vector.load %arg11[%c28_279, %c0_280] : memref<98x128xf32, #tpu.memory_space<vmem>>, vector<5x128xf32>
    %c10_281 = arith.constant 10 : index
    %c768_282 = arith.constant 768 : index
    %179 = vector.load %arg12[%c10_281, %c768_282] : memref<50x1152xf32, #tpu.memory_space<vmem>>, vector<5x128xf32>
    tpu.vector_store %arg12[%c10_281, %c768_282], %178 {strides = array<i32>} : memref<50x1152xf32, #tpu.memory_space<vmem>>, vector<5x128xf32>,
    %c29 = arith.constant 29 : index
    %c0_283 = arith.constant 0 : index
    %180 = vector.load %arg11[%c29, %c0_283] : memref<98x128xf32, #tpu.memory_space<vmem>>, vector<5x128xf32>
    %c10_284 = arith.constant 10 : index
    %c896_285 = arith.constant 896 : index
    %181 = vector.load %arg12[%c10_284, %c896_285] : memref<50x1152xf32, #tpu.memory_space<vmem>>, vector<5x128xf32>
    tpu.vector_store %arg12[%c10_284, %c896_285], %180 {strides = array<i32>} : memref<50x1152xf32, #tpu.memory_space<vmem>>, vector<5x128xf32>,
    %c30 = arith.constant 30 : index
    %c0_286 = arith.constant 0 : index
    %182 = vector.load %arg11[%c30, %c0_286] : memref<98x128xf32, #tpu.memory_space<vmem>>, vector<5x128xf32>
    %c10_287 = arith.constant 10 : index
    %c1024_288 = arith.constant 1024 : index
    %183 = vector.load %arg12[%c10_287, %c1024_288] : memref<50x1152xf32, #tpu.memory_space<vmem>>, vector<5x128xf32>
    tpu.vector_store %arg12[%c10_287, %c1024_288], %182 {strides = array<i32>} : memref<50x1152xf32, #tpu.memory_space<vmem>>, vector<5x128xf32>,
    %c21_289 = arith.constant 21 : index
    %c0_290 = arith.constant 0 : index
    %184 = vector.load %arg11[%c21_289, %c0_290] : memref<98x128xf32, #tpu.memory_space<vmem>>, vector<5x128xf32>
    %c15_291 = arith.constant 15 : index
    %c0_292 = arith.constant 0 : index
    %185 = vector.load %arg12[%c15_291, %c0_292] : memref<50x1152xf32, #tpu.memory_space<vmem>>, vector<5x128xf32>
    tpu.vector_store %arg12[%c15_291, %c0_292], %184 {strides = array<i32>} : memref<50x1152xf32, #tpu.memory_space<vmem>>, vector<5x128xf32>,
    %c22_293 = arith.constant 22 : index
    %c0_294 = arith.constant 0 : index
    %186 = vector.load %arg11[%c22_293, %c0_294] : memref<98x128xf32, #tpu.memory_space<vmem>>, vector<5x128xf32>
    %c15_295 = arith.constant 15 : index
    %c128_296 = arith.constant 128 : index
    %187 = vector.load %arg12[%c15_295, %c128_296] : memref<50x1152xf32, #tpu.memory_space<vmem>>, vector<5x128xf32>
    tpu.vector_store %arg12[%c15_295, %c128_296], %186 {strides = array<i32>} : memref<50x1152xf32, #tpu.memory_space<vmem>>, vector<5x128xf32>,
    %c23_297 = arith.constant 23 : index
    %c0_298 = arith.constant 0 : index
    %188 = vector.load %arg11[%c23_297, %c0_298] : memref<98x128xf32, #tpu.memory_space<vmem>>, vector<5x128xf32>
    %c15_299 = arith.constant 15 : index
    %c256_300 = arith.constant 256 : index
    %189 = vector.load %arg12[%c15_299, %c256_300] : memref<50x1152xf32, #tpu.memory_space<vmem>>, vector<5x128xf32>
    tpu.vector_store %arg12[%c15_299, %c256_300], %188 {strides = array<i32>} : memref<50x1152xf32, #tpu.memory_space<vmem>>, vector<5x128xf32>,
    %c28_301 = arith.constant 28 : index
    %c0_302 = arith.constant 0 : index
    %190 = vector.load %arg11[%c28_301, %c0_302] : memref<98x128xf32, #tpu.memory_space<vmem>>, vector<5x128xf32>
    %c15_303 = arith.constant 15 : index
    %c384_304 = arith.constant 384 : index
    %191 = vector.load %arg12[%c15_303, %c384_304] : memref<50x1152xf32, #tpu.memory_space<vmem>>, vector<5x128xf32>
    tpu.vector_store %arg12[%c15_303, %c384_304], %190 {strides = array<i32>} : memref<50x1152xf32, #tpu.memory_space<vmem>>, vector<5x128xf32>,
    %c29_305 = arith.constant 29 : index
    %c0_306 = arith.constant 0 : index
    %192 = vector.load %arg11[%c29_305, %c0_306] : memref<98x128xf32, #tpu.memory_space<vmem>>, vector<5x128xf32>
    %c15_307 = arith.constant 15 : index
    %c512_308 = arith.constant 512 : index
    %193 = vector.load %arg12[%c15_307, %c512_308] : memref<50x1152xf32, #tpu.memory_space<vmem>>, vector<5x128xf32>
    tpu.vector_store %arg12[%c15_307, %c512_308], %192 {strides = array<i32>} : memref<50x1152xf32, #tpu.memory_space<vmem>>, vector<5x128xf32>,
    %c30_309 = arith.constant 30 : index
    %c0_310 = arith.constant 0 : index
    %194 = vector.load %arg11[%c30_309, %c0_310] : memref<98x128xf32, #tpu.memory_space<vmem>>, vector<5x128xf32>
    %c15_311 = arith.constant 15 : index
    %c640_312 = arith.constant 640 : index
    %195 = vector.load %arg12[%c15_311, %c640_312] : memref<50x1152xf32, #tpu.memory_space<vmem>>, vector<5x128xf32>
    tpu.vector_store %arg12[%c15_311, %c640_312], %194 {strides = array<i32>} : memref<50x1152xf32, #tpu.memory_space<vmem>>, vector<5x128xf32>,
    %c35_313 = arith.constant 35 : index
    %c0_314 = arith.constant 0 : index
    %196 = vector.load %arg11[%c35_313, %c0_314] : memref<98x128xf32, #tpu.memory_space<vmem>>, vector<5x128xf32>
    %c15_315 = arith.constant 15 : index
    %c768_316 = arith.constant 768 : index
    %197 = vector.load %arg12[%c15_315, %c768_316] : memref<50x1152xf32, #tpu.memory_space<vmem>>, vector<5x128xf32>
    tpu.vector_store %arg12[%c15_315, %c768_316], %196 {strides = array<i32>} : memref<50x1152xf32, #tpu.memory_space<vmem>>, vector<5x128xf32>,
    %c36 = arith.constant 36 : index
    %c0_317 = arith.constant 0 : index
    %198 = vector.load %arg11[%c36, %c0_317] : memref<98x128xf32, #tpu.memory_space<vmem>>, vector<5x128xf32>
    %c15_318 = arith.constant 15 : index
    %c896_319 = arith.constant 896 : index
    %199 = vector.load %arg12[%c15_318, %c896_319] : memref<50x1152xf32, #tpu.memory_space<vmem>>, vector<5x128xf32>
    tpu.vector_store %arg12[%c15_318, %c896_319], %198 {strides = array<i32>} : memref<50x1152xf32, #tpu.memory_space<vmem>>, vector<5x128xf32>,
    %c37 = arith.constant 37 : index
    %c0_320 = arith.constant 0 : index
    %200 = vector.load %arg11[%c37, %c0_320] : memref<98x128xf32, #tpu.memory_space<vmem>>, vector<5x128xf32>
    %c15_321 = arith.constant 15 : index
    %c1024_322 = arith.constant 1024 : index
    %201 = vector.load %arg12[%c15_321, %c1024_322] : memref<50x1152xf32, #tpu.memory_space<vmem>>, vector<5x128xf32>
    tpu.vector_store %arg12[%c15_321, %c1024_322], %200 {strides = array<i32>} : memref<50x1152xf32, #tpu.memory_space<vmem>>, vector<5x128xf32>,
    %c28_323 = arith.constant 28 : index
    %c0_324 = arith.constant 0 : index
    %202 = vector.load %arg11[%c28_323, %c0_324] : memref<98x128xf32, #tpu.memory_space<vmem>>, vector<5x128xf32>
    %c20 = arith.constant 20 : index
    %c0_325 = arith.constant 0 : index
    %203 = vector.load %arg12[%c20, %c0_325] : memref<50x1152xf32, #tpu.memory_space<vmem>>, vector<5x128xf32>
    tpu.vector_store %arg12[%c20, %c0_325], %202 {strides = array<i32>} : memref<50x1152xf32, #tpu.memory_space<vmem>>, vector<5x128xf32>,
    %c29_326 = arith.constant 29 : index
    %c0_327 = arith.constant 0 : index
    %204 = vector.load %arg11[%c29_326, %c0_327] : memref<98x128xf32, #tpu.memory_space<vmem>>, vector<5x128xf32>
    %c20_328 = arith.constant 20 : index
    %c128_329 = arith.constant 128 : index
    %205 = vector.load %arg12[%c20_328, %c128_329] : memref<50x1152xf32, #tpu.memory_space<vmem>>, vector<5x128xf32>
    tpu.vector_store %arg12[%c20_328, %c128_329], %204 {strides = array<i32>} : memref<50x1152xf32, #tpu.memory_space<vmem>>, vector<5x128xf32>,
    %c30_330 = arith.constant 30 : index
    %c0_331 = arith.constant 0 : index
    %206 = vector.load %arg11[%c30_330, %c0_331] : memref<98x128xf32, #tpu.memory_space<vmem>>, vector<5x128xf32>
    %c20_332 = arith.constant 20 : index
    %c256_333 = arith.constant 256 : index
    %207 = vector.load %arg12[%c20_332, %c256_333] : memref<50x1152xf32, #tpu.memory_space<vmem>>, vector<5x128xf32>
    tpu.vector_store %arg12[%c20_332, %c256_333], %206 {strides = array<i32>} : memref<50x1152xf32, #tpu.memory_space<vmem>>, vector<5x128xf32>,
    %c35_334 = arith.constant 35 : index
    %c0_335 = arith.constant 0 : index
    %208 = vector.load %arg11[%c35_334, %c0_335] : memref<98x128xf32, #tpu.memory_space<vmem>>, vector<5x128xf32>
    %c20_336 = arith.constant 20 : index
    %c384_337 = arith.constant 384 : index
    %209 = vector.load %arg12[%c20_336, %c384_337] : memref<50x1152xf32, #tpu.memory_space<vmem>>, vector<5x128xf32>
    tpu.vector_store %arg12[%c20_336, %c384_337], %208 {strides = array<i32>} : memref<50x1152xf32, #tpu.memory_space<vmem>>, vector<5x128xf32>,
    %c36_338 = arith.constant 36 : index
    %c0_339 = arith.constant 0 : index
    %210 = vector.load %arg11[%c36_338, %c0_339] : memref<98x128xf32, #tpu.memory_space<vmem>>, vector<5x128xf32>
    %c20_340 = arith.constant 20 : index
    %c512_341 = arith.constant 512 : index
    %211 = vector.load %arg12[%c20_340, %c512_341] : memref<50x1152xf32, #tpu.memory_space<vmem>>, vector<5x128xf32>
    tpu.vector_store %arg12[%c20_340, %c512_341], %210 {strides = array<i32>} : memref<50x1152xf32, #tpu.memory_space<vmem>>, vector<5x128xf32>,
    %c37_342 = arith.constant 37 : index
    %c0_343 = arith.constant 0 : index
    %212 = vector.load %arg11[%c37_342, %c0_343] : memref<98x128xf32, #tpu.memory_space<vmem>>, vector<5x128xf32>
    %c20_344 = arith.constant 20 : index
    %c640_345 = arith.constant 640 : index
    %213 = vector.load %arg12[%c20_344, %c640_345] : memref<50x1152xf32, #tpu.memory_space<vmem>>, vector<5x128xf32>
    tpu.vector_store %arg12[%c20_344, %c640_345], %212 {strides = array<i32>} : memref<50x1152xf32, #tpu.memory_space<vmem>>, vector<5x128xf32>,
    %c42_346 = arith.constant 42 : index
    %c0_347 = arith.constant 0 : index
    %214 = vector.load %arg11[%c42_346, %c0_347] : memref<98x128xf32, #tpu.memory_space<vmem>>, vector<5x128xf32>
    %c20_348 = arith.constant 20 : index
    %c768_349 = arith.constant 768 : index
    %215 = vector.load %arg12[%c20_348, %c768_349] : memref<50x1152xf32, #tpu.memory_space<vmem>>, vector<5x128xf32>
    tpu.vector_store %arg12[%c20_348, %c768_349], %214 {strides = array<i32>} : memref<50x1152xf32, #tpu.memory_space<vmem>>, vector<5x128xf32>,
    %c43 = arith.constant 43 : index
    %c0_350 = arith.constant 0 : index
    %216 = vector.load %arg11[%c43, %c0_350] : memref<98x128xf32, #tpu.memory_space<vmem>>, vector<5x128xf32>
    %c20_351 = arith.constant 20 : index
    %c896_352 = arith.constant 896 : index
    %217 = vector.load %arg12[%c20_351, %c896_352] : memref<50x1152xf32, #tpu.memory_space<vmem>>, vector<5x128xf32>
    tpu.vector_store %arg12[%c20_351, %c896_352], %216 {strides = array<i32>} : memref<50x1152xf32, #tpu.memory_space<vmem>>, vector<5x128xf32>,
    %c44 = arith.constant 44 : index
    %c0_353 = arith.constant 0 : index
    %218 = vector.load %arg11[%c44, %c0_353] : memref<98x128xf32, #tpu.memory_space<vmem>>, vector<5x128xf32>
    %c20_354 = arith.constant 20 : index
    %c1024_355 = arith.constant 1024 : index
    %219 = vector.load %arg12[%c20_354, %c1024_355] : memref<50x1152xf32, #tpu.memory_space<vmem>>, vector<5x128xf32>
    tpu.vector_store %arg12[%c20_354, %c1024_355], %218 {strides = array<i32>} : memref<50x1152xf32, #tpu.memory_space<vmem>>, vector<5x128xf32>,
    %c49_356 = arith.constant 49 : index
    %c0_357 = arith.constant 0 : index
    %220 = vector.load %arg11[%c49_356, %c0_357] : memref<98x128xf32, #tpu.memory_space<vmem>>, vector<5x128xf32>
    %c25_358 = arith.constant 25 : index
    %c0_359 = arith.constant 0 : index
    %221 = vector.load %arg12[%c25_358, %c0_359] : memref<50x1152xf32, #tpu.memory_space<vmem>>, vector<5x128xf32>
    tpu.vector_store %arg12[%c25_358, %c0_359], %220 {strides = array<i32>} : memref<50x1152xf32, #tpu.memory_space<vmem>>, vector<5x128xf32>,
    %c50 = arith.constant 50 : index
    %c0_360 = arith.constant 0 : index
    %222 = vector.load %arg11[%c50, %c0_360] : memref<98x128xf32, #tpu.memory_space<vmem>>, vector<5x128xf32>
    %c25_361 = arith.constant 25 : index
    %c128_362 = arith.constant 128 : index
    %223 = vector.load %arg12[%c25_361, %c128_362] : memref<50x1152xf32, #tpu.memory_space<vmem>>, vector<5x128xf32>
    tpu.vector_store %arg12[%c25_361, %c128_362], %222 {strides = array<i32>} : memref<50x1152xf32, #tpu.memory_space<vmem>>, vector<5x128xf32>,
    %c51 = arith.constant 51 : index
    %c0_363 = arith.constant 0 : index
    %224 = vector.load %arg11[%c51, %c0_363] : memref<98x128xf32, #tpu.memory_space<vmem>>, vector<5x128xf32>
    %c25_364 = arith.constant 25 : index
    %c256_365 = arith.constant 256 : index
    %225 = vector.load %arg12[%c25_364, %c256_365] : memref<50x1152xf32, #tpu.memory_space<vmem>>, vector<5x128xf32>
    tpu.vector_store %arg12[%c25_364, %c256_365], %224 {strides = array<i32>} : memref<50x1152xf32, #tpu.memory_space<vmem>>, vector<5x128xf32>,
    %c56_366 = arith.constant 56 : index
    %c0_367 = arith.constant 0 : index
    %226 = vector.load %arg11[%c56_366, %c0_367] : memref<98x128xf32, #tpu.memory_space<vmem>>, vector<5x128xf32>
    %c25_368 = arith.constant 25 : index
    %c384_369 = arith.constant 384 : index
    %227 = vector.load %arg12[%c25_368, %c384_369] : memref<50x1152xf32, #tpu.memory_space<vmem>>, vector<5x128xf32>
    tpu.vector_store %arg12[%c25_368, %c384_369], %226 {strides = array<i32>} : memref<50x1152xf32, #tpu.memory_space<vmem>>, vector<5x128xf32>,
    %c57_370 = arith.constant 57 : index
    %c0_371 = arith.constant 0 : index
    %228 = vector.load %arg11[%c57_370, %c0_371] : memref<98x128xf32, #tpu.memory_space<vmem>>, vector<5x128xf32>
    %c25_372 = arith.constant 25 : index
    %c512_373 = arith.constant 512 : index
    %229 = vector.load %arg12[%c25_372, %c512_373] : memref<50x1152xf32, #tpu.memory_space<vmem>>, vector<5x128xf32>
    tpu.vector_store %arg12[%c25_372, %c512_373], %228 {strides = array<i32>} : memref<50x1152xf32, #tpu.memory_space<vmem>>, vector<5x128xf32>,
    %c58 = arith.constant 58 : index
    %c0_374 = arith.constant 0 : index
    %230 = vector.load %arg11[%c58, %c0_374] : memref<98x128xf32, #tpu.memory_space<vmem>>, vector<5x128xf32>
    %c25_375 = arith.constant 25 : index
    %c640_376 = arith.constant 640 : index
    %231 = vector.load %arg12[%c25_375, %c640_376] : memref<50x1152xf32, #tpu.memory_space<vmem>>, vector<5x128xf32>
    tpu.vector_store %arg12[%c25_375, %c640_376], %230 {strides = array<i32>} : memref<50x1152xf32, #tpu.memory_space<vmem>>, vector<5x128xf32>,
    %c63_377 = arith.constant 63 : index
    %c0_378 = arith.constant 0 : index
    %232 = vector.load %arg11[%c63_377, %c0_378] : memref<98x128xf32, #tpu.memory_space<vmem>>, vector<5x128xf32>
    %c25_379 = arith.constant 25 : index
    %c768_380 = arith.constant 768 : index
    %233 = vector.load %arg12[%c25_379, %c768_380] : memref<50x1152xf32, #tpu.memory_space<vmem>>, vector<5x128xf32>
    tpu.vector_store %arg12[%c25_379, %c768_380], %232 {strides = array<i32>} : memref<50x1152xf32, #tpu.memory_space<vmem>>, vector<5x128xf32>,
    %c64_381 = arith.constant 64 : index
    %c0_382 = arith.constant 0 : index
    %234 = vector.load %arg11[%c64_381, %c0_382] : memref<98x128xf32, #tpu.memory_space<vmem>>, vector<5x128xf32>
    %c25_383 = arith.constant 25 : index
    %c896_384 = arith.constant 896 : index
    %235 = vector.load %arg12[%c25_383, %c896_384] : memref<50x1152xf32, #tpu.memory_space<vmem>>, vector<5x128xf32>
    tpu.vector_store %arg12[%c25_383, %c896_384], %234 {strides = array<i32>} : memref<50x1152xf32, #tpu.memory_space<vmem>>, vector<5x128xf32>,
    %c65_385 = arith.constant 65 : index
    %c0_386 = arith.constant 0 : index
    %236 = vector.load %arg11[%c65_385, %c0_386] : memref<98x128xf32, #tpu.memory_space<vmem>>, vector<5x128xf32>
    %c25_387 = arith.constant 25 : index
    %c1024_388 = arith.constant 1024 : index
    %237 = vector.load %arg12[%c25_387, %c1024_388] : memref<50x1152xf32, #tpu.memory_space<vmem>>, vector<5x128xf32>
    tpu.vector_store %arg12[%c25_387, %c1024_388], %236 {strides = array<i32>} : memref<50x1152xf32, #tpu.memory_space<vmem>>, vector<5x128xf32>,
    %c56_389 = arith.constant 56 : index
    %c0_390 = arith.constant 0 : index
    %238 = vector.load %arg11[%c56_389, %c0_390] : memref<98x128xf32, #tpu.memory_space<vmem>>, vector<5x128xf32>
    %c30_391 = arith.constant 30 : index
    %c0_392 = arith.constant 0 : index
    %239 = vector.load %arg12[%c30_391, %c0_392] : memref<50x1152xf32, #tpu.memory_space<vmem>>, vector<5x128xf32>
    tpu.vector_store %arg12[%c30_391, %c0_392], %238 {strides = array<i32>} : memref<50x1152xf32, #tpu.memory_space<vmem>>, vector<5x128xf32>,
    %c57_393 = arith.constant 57 : index
    %c0_394 = arith.constant 0 : index
    %240 = vector.load %arg11[%c57_393, %c0_394] : memref<98x128xf32, #tpu.memory_space<vmem>>, vector<5x128xf32>
    %c30_395 = arith.constant 30 : index
    %c128_396 = arith.constant 128 : index
    %241 = vector.load %arg12[%c30_395, %c128_396] : memref<50x1152xf32, #tpu.memory_space<vmem>>, vector<5x128xf32>
    tpu.vector_store %arg12[%c30_395, %c128_396], %240 {strides = array<i32>} : memref<50x1152xf32, #tpu.memory_space<vmem>>, vector<5x128xf32>,
    %c58_397 = arith.constant 58 : index
    %c0_398 = arith.constant 0 : index
    %242 = vector.load %arg11[%c58_397, %c0_398] : memref<98x128xf32, #tpu.memory_space<vmem>>, vector<5x128xf32>
    %c30_399 = arith.constant 30 : index
    %c256_400 = arith.constant 256 : index
    %243 = vector.load %arg12[%c30_399, %c256_400] : memref<50x1152xf32, #tpu.memory_space<vmem>>, vector<5x128xf32>
    tpu.vector_store %arg12[%c30_399, %c256_400], %242 {strides = array<i32>} : memref<50x1152xf32, #tpu.memory_space<vmem>>, vector<5x128xf32>,
    %c63_401 = arith.constant 63 : index
    %c0_402 = arith.constant 0 : index
    %244 = vector.load %arg11[%c63_401, %c0_402] : memref<98x128xf32, #tpu.memory_space<vmem>>, vector<5x128xf32>
    %c30_403 = arith.constant 30 : index
    %c384_404 = arith.constant 384 : index
    %245 = vector.load %arg12[%c30_403, %c384_404] : memref<50x1152xf32, #tpu.memory_space<vmem>>, vector<5x128xf32>
    tpu.vector_store %arg12[%c30_403, %c384_404], %244 {strides = array<i32>} : memref<50x1152xf32, #tpu.memory_space<vmem>>, vector<5x128xf32>,
    %c64_405 = arith.constant 64 : index
    %c0_406 = arith.constant 0 : index
    %246 = vector.load %arg11[%c64_405, %c0_406] : memref<98x128xf32, #tpu.memory_space<vmem>>, vector<5x128xf32>
    %c30_407 = arith.constant 30 : index
    %c512_408 = arith.constant 512 : index
    %247 = vector.load %arg12[%c30_407, %c512_408] : memref<50x1152xf32, #tpu.memory_space<vmem>>, vector<5x128xf32>
    tpu.vector_store %arg12[%c30_407, %c512_408], %246 {strides = array<i32>} : memref<50x1152xf32, #tpu.memory_space<vmem>>, vector<5x128xf32>,
    %c65_409 = arith.constant 65 : index
    %c0_410 = arith.constant 0 : index
    %248 = vector.load %arg11[%c65_409, %c0_410] : memref<98x128xf32, #tpu.memory_space<vmem>>, vector<5x128xf32>
    %c30_411 = arith.constant 30 : index
    %c640_412 = arith.constant 640 : index
    %249 = vector.load %arg12[%c30_411, %c640_412] : memref<50x1152xf32, #tpu.memory_space<vmem>>, vector<5x128xf32>
    tpu.vector_store %arg12[%c30_411, %c640_412], %248 {strides = array<i32>} : memref<50x1152xf32, #tpu.memory_space<vmem>>, vector<5x128xf32>,
    %c70_413 = arith.constant 70 : index
    %c0_414 = arith.constant 0 : index
    %250 = vector.load %arg11[%c70_413, %c0_414] : memref<98x128xf32, #tpu.memory_space<vmem>>, vector<5x128xf32>
    %c30_415 = arith.constant 30 : index
    %c768_416 = arith.constant 768 : index
    %251 = vector.load %arg12[%c30_415, %c768_416] : memref<50x1152xf32, #tpu.memory_space<vmem>>, vector<5x128xf32>
    tpu.vector_store %arg12[%c30_415, %c768_416], %250 {strides = array<i32>} : memref<50x1152xf32, #tpu.memory_space<vmem>>, vector<5x128xf32>,
    %c71 = arith.constant 71 : index
    %c0_417 = arith.constant 0 : index
    %252 = vector.load %arg11[%c71, %c0_417] : memref<98x128xf32, #tpu.memory_space<vmem>>, vector<5x128xf32>
    %c30_418 = arith.constant 30 : index
    %c896_419 = arith.constant 896 : index
    %253 = vector.load %arg12[%c30_418, %c896_419] : memref<50x1152xf32, #tpu.memory_space<vmem>>, vector<5x128xf32>
    tpu.vector_store %arg12[%c30_418, %c896_419], %252 {strides = array<i32>} : memref<50x1152xf32, #tpu.memory_space<vmem>>, vector<5x128xf32>,
    %c72_420 = arith.constant 72 : index
    %c0_421 = arith.constant 0 : index
    %254 = vector.load %arg11[%c72_420, %c0_421] : memref<98x128xf32, #tpu.memory_space<vmem>>, vector<5x128xf32>
    %c30_422 = arith.constant 30 : index
    %c1024_423 = arith.constant 1024 : index
    %255 = vector.load %arg12[%c30_422, %c1024_423] : memref<50x1152xf32, #tpu.memory_space<vmem>>, vector<5x128xf32>
    tpu.vector_store %arg12[%c30_422, %c1024_423], %254 {strides = array<i32>} : memref<50x1152xf32, #tpu.memory_space<vmem>>, vector<5x128xf32>,
    %c63_424 = arith.constant 63 : index
    %c0_425 = arith.constant 0 : index
    %256 = vector.load %arg11[%c63_424, %c0_425] : memref<98x128xf32, #tpu.memory_space<vmem>>, vector<5x128xf32>
    %c35_426 = arith.constant 35 : index
    %c0_427 = arith.constant 0 : index
    %257 = vector.load %arg12[%c35_426, %c0_427] : memref<50x1152xf32, #tpu.memory_space<vmem>>, vector<5x128xf32>
    tpu.vector_store %arg12[%c35_426, %c0_427], %256 {strides = array<i32>} : memref<50x1152xf32, #tpu.memory_space<vmem>>, vector<5x128xf32>,
    %c64_428 = arith.constant 64 : index
    %c0_429 = arith.constant 0 : index
    %258 = vector.load %arg11[%c64_428, %c0_429] : memref<98x128xf32, #tpu.memory_space<vmem>>, vector<5x128xf32>
    %c35_430 = arith.constant 35 : index
    %c128_431 = arith.constant 128 : index
    %259 = vector.load %arg12[%c35_430, %c128_431] : memref<50x1152xf32, #tpu.memory_space<vmem>>, vector<5x128xf32>
    tpu.vector_store %arg12[%c35_430, %c128_431], %258 {strides = array<i32>} : memref<50x1152xf32, #tpu.memory_space<vmem>>, vector<5x128xf32>,
    %c65_432 = arith.constant 65 : index
    %c0_433 = arith.constant 0 : index
    %260 = vector.load %arg11[%c65_432, %c0_433] : memref<98x128xf32, #tpu.memory_space<vmem>>, vector<5x128xf32>
    %c35_434 = arith.constant 35 : index
    %c256_435 = arith.constant 256 : index
    %261 = vector.load %arg12[%c35_434, %c256_435] : memref<50x1152xf32, #tpu.memory_space<vmem>>, vector<5x128xf32>
    tpu.vector_store %arg12[%c35_434, %c256_435], %260 {strides = array<i32>} : memref<50x1152xf32, #tpu.memory_space<vmem>>, vector<5x128xf32>,
    %c70_436 = arith.constant 70 : index
    %c0_437 = arith.constant 0 : index
    %262 = vector.load %arg11[%c70_436, %c0_437] : memref<98x128xf32, #tpu.memory_space<vmem>>, vector<5x128xf32>
    %c35_438 = arith.constant 35 : index
    %c384_439 = arith.constant 384 : index
    %263 = vector.load %arg12[%c35_438, %c384_439] : memref<50x1152xf32, #tpu.memory_space<vmem>>, vector<5x128xf32>
    tpu.vector_store %arg12[%c35_438, %c384_439], %262 {strides = array<i32>} : memref<50x1152xf32, #tpu.memory_space<vmem>>, vector<5x128xf32>,
    %c71_440 = arith.constant 71 : index
    %c0_441 = arith.constant 0 : index
    %264 = vector.load %arg11[%c71_440, %c0_441] : memref<98x128xf32, #tpu.memory_space<vmem>>, vector<5x128xf32>
    %c35_442 = arith.constant 35 : index
    %c512_443 = arith.constant 512 : index
    %265 = vector.load %arg12[%c35_442, %c512_443] : memref<50x1152xf32, #tpu.memory_space<vmem>>, vector<5x128xf32>
    tpu.vector_store %arg12[%c35_442, %c512_443], %264 {strides = array<i32>} : memref<50x1152xf32, #tpu.memory_space<vmem>>, vector<5x128xf32>,
    %c72_444 = arith.constant 72 : index
    %c0_445 = arith.constant 0 : index
    %266 = vector.load %arg11[%c72_444, %c0_445] : memref<98x128xf32, #tpu.memory_space<vmem>>, vector<5x128xf32>
    %c35_446 = arith.constant 35 : index
    %c640_447 = arith.constant 640 : index
    %267 = vector.load %arg12[%c35_446, %c640_447] : memref<50x1152xf32, #tpu.memory_space<vmem>>, vector<5x128xf32>
    tpu.vector_store %arg12[%c35_446, %c640_447], %266 {strides = array<i32>} : memref<50x1152xf32, #tpu.memory_space<vmem>>, vector<5x128xf32>,
    %c77_448 = arith.constant 77 : index
    %c0_449 = arith.constant 0 : index
    %268 = vector.load %arg11[%c77_448, %c0_449] : memref<98x128xf32, #tpu.memory_space<vmem>>, vector<5x128xf32>
    %c35_450 = arith.constant 35 : index
    %c768_451 = arith.constant 768 : index
    %269 = vector.load %arg12[%c35_450, %c768_451] : memref<50x1152xf32, #tpu.memory_space<vmem>>, vector<5x128xf32>
    tpu.vector_store %arg12[%c35_450, %c768_451], %268 {strides = array<i32>} : memref<50x1152xf32, #tpu.memory_space<vmem>>, vector<5x128xf32>,
    %c78 = arith.constant 78 : index
    %c0_452 = arith.constant 0 : index
    %270 = vector.load %arg11[%c78, %c0_452] : memref<98x128xf32, #tpu.memory_space<vmem>>, vector<5x128xf32>
    %c35_453 = arith.constant 35 : index
    %c896_454 = arith.constant 896 : index
    %271 = vector.load %arg12[%c35_453, %c896_454] : memref<50x1152xf32, #tpu.memory_space<vmem>>, vector<5x128xf32>
    tpu.vector_store %arg12[%c35_453, %c896_454], %270 {strides = array<i32>} : memref<50x1152xf32, #tpu.memory_space<vmem>>, vector<5x128xf32>,
    %c79 = arith.constant 79 : index
    %c0_455 = arith.constant 0 : index
    %272 = vector.load %arg11[%c79, %c0_455] : memref<98x128xf32, #tpu.memory_space<vmem>>, vector<5x128xf32>
    %c35_456 = arith.constant 35 : index
    %c1024_457 = arith.constant 1024 : index
    %273 = vector.load %arg12[%c35_456, %c1024_457] : memref<50x1152xf32, #tpu.memory_space<vmem>>, vector<5x128xf32>
    tpu.vector_store %arg12[%c35_456, %c1024_457], %272 {strides = array<i32>} : memref<50x1152xf32, #tpu.memory_space<vmem>>, vector<5x128xf32>,
    %c70_458 = arith.constant 70 : index
    %c0_459 = arith.constant 0 : index
    %274 = vector.load %arg11[%c70_458, %c0_459] : memref<98x128xf32, #tpu.memory_space<vmem>>, vector<5x128xf32>
    %c40_460 = arith.constant 40 : index
    %c0_461 = arith.constant 0 : index
    %275 = vector.load %arg12[%c40_460, %c0_461] : memref<50x1152xf32, #tpu.memory_space<vmem>>, vector<5x128xf32>
    tpu.vector_store %arg12[%c40_460, %c0_461], %274 {strides = array<i32>} : memref<50x1152xf32, #tpu.memory_space<vmem>>, vector<5x128xf32>,
    %c71_462 = arith.constant 71 : index
    %c0_463 = arith.constant 0 : index
    %276 = vector.load %arg11[%c71_462, %c0_463] : memref<98x128xf32, #tpu.memory_space<vmem>>, vector<5x128xf32>
    %c40_464 = arith.constant 40 : index
    %c128_465 = arith.constant 128 : index
    %277 = vector.load %arg12[%c40_464, %c128_465] : memref<50x1152xf32, #tpu.memory_space<vmem>>, vector<5x128xf32>
    tpu.vector_store %arg12[%c40_464, %c128_465], %276 {strides = array<i32>} : memref<50x1152xf32, #tpu.memory_space<vmem>>, vector<5x128xf32>,
    %c72_466 = arith.constant 72 : index
    %c0_467 = arith.constant 0 : index
    %278 = vector.load %arg11[%c72_466, %c0_467] : memref<98x128xf32, #tpu.memory_space<vmem>>, vector<5x128xf32>
    %c40_468 = arith.constant 40 : index
    %c256_469 = arith.constant 256 : index
    %279 = vector.load %arg12[%c40_468, %c256_469] : memref<50x1152xf32, #tpu.memory_space<vmem>>, vector<5x128xf32>
    tpu.vector_store %arg12[%c40_468, %c256_469], %278 {strides = array<i32>} : memref<50x1152xf32, #tpu.memory_space<vmem>>, vector<5x128xf32>,
    %c77_470 = arith.constant 77 : index
    %c0_471 = arith.constant 0 : index
    %280 = vector.load %arg11[%c77_470, %c0_471] : memref<98x128xf32, #tpu.memory_space<vmem>>, vector<5x128xf32>
    %c40_472 = arith.constant 40 : index
    %c384_473 = arith.constant 384 : index
    %281 = vector.load %arg12[%c40_472, %c384_473] : memref<50x1152xf32, #tpu.memory_space<vmem>>, vector<5x128xf32>
    tpu.vector_store %arg12[%c40_472, %c384_473], %280 {strides = array<i32>} : memref<50x1152xf32, #tpu.memory_space<vmem>>, vector<5x128xf32>,
    %c78_474 = arith.constant 78 : index
    %c0_475 = arith.constant 0 : index
    %282 = vector.load %arg11[%c78_474, %c0_475] : memref<98x128xf32, #tpu.memory_space<vmem>>, vector<5x128xf32>
    %c40_476 = arith.constant 40 : index
    %c512_477 = arith.constant 512 : index
    %283 = vector.load %arg12[%c40_476, %c512_477] : memref<50x1152xf32, #tpu.memory_space<vmem>>, vector<5x128xf32>
    tpu.vector_store %arg12[%c40_476, %c512_477], %282 {strides = array<i32>} : memref<50x1152xf32, #tpu.memory_space<vmem>>, vector<5x128xf32>,
    %c79_478 = arith.constant 79 : index
    %c0_479 = arith.constant 0 : index
    %284 = vector.load %arg11[%c79_478, %c0_479] : memref<98x128xf32, #tpu.memory_space<vmem>>, vector<5x128xf32>
    %c40_480 = arith.constant 40 : index
    %c640_481 = arith.constant 640 : index
    %285 = vector.load %arg12[%c40_480, %c640_481] : memref<50x1152xf32, #tpu.memory_space<vmem>>, vector<5x128xf32>
    tpu.vector_store %arg12[%c40_480, %c640_481], %284 {strides = array<i32>} : memref<50x1152xf32, #tpu.memory_space<vmem>>, vector<5x128xf32>,
    %c84_482 = arith.constant 84 : index
    %c0_483 = arith.constant 0 : index
    %286 = vector.load %arg11[%c84_482, %c0_483] : memref<98x128xf32, #tpu.memory_space<vmem>>, vector<5x128xf32>
    %c40_484 = arith.constant 40 : index
    %c768_485 = arith.constant 768 : index
    %287 = vector.load %arg12[%c40_484, %c768_485] : memref<50x1152xf32, #tpu.memory_space<vmem>>, vector<5x128xf32>
    tpu.vector_store %arg12[%c40_484, %c768_485], %286 {strides = array<i32>} : memref<50x1152xf32, #tpu.memory_space<vmem>>, vector<5x128xf32>,
    %c85 = arith.constant 85 : index
    %c0_486 = arith.constant 0 : index
    %288 = vector.load %arg11[%c85, %c0_486] : memref<98x128xf32, #tpu.memory_space<vmem>>, vector<5x128xf32>
    %c40_487 = arith.constant 40 : index
    %c896_488 = arith.constant 896 : index
    %289 = vector.load %arg12[%c40_487, %c896_488] : memref<50x1152xf32, #tpu.memory_space<vmem>>, vector<5x128xf32>
    tpu.vector_store %arg12[%c40_487, %c896_488], %288 {strides = array<i32>} : memref<50x1152xf32, #tpu.memory_space<vmem>>, vector<5x128xf32>,
    %c86 = arith.constant 86 : index
    %c0_489 = arith.constant 0 : index
    %290 = vector.load %arg11[%c86, %c0_489] : memref<98x128xf32, #tpu.memory_space<vmem>>, vector<5x128xf32>
    %c40_490 = arith.constant 40 : index
    %c1024_491 = arith.constant 1024 : index
    %291 = vector.load %arg12[%c40_490, %c1024_491] : memref<50x1152xf32, #tpu.memory_space<vmem>>, vector<5x128xf32>
    tpu.vector_store %arg12[%c40_490, %c1024_491], %290 {strides = array<i32>} : memref<50x1152xf32, #tpu.memory_space<vmem>>, vector<5x128xf32>,
    %c77_492 = arith.constant 77 : index
    %c0_493 = arith.constant 0 : index
    %292 = vector.load %arg11[%c77_492, %c0_493] : memref<98x128xf32, #tpu.memory_space<vmem>>, vector<5x128xf32>
    %c45 = arith.constant 45 : index
    %c0_494 = arith.constant 0 : index
    %293 = vector.load %arg12[%c45, %c0_494] : memref<50x1152xf32, #tpu.memory_space<vmem>>, vector<5x128xf32>
    tpu.vector_store %arg12[%c45, %c0_494], %292 {strides = array<i32>} : memref<50x1152xf32, #tpu.memory_space<vmem>>, vector<5x128xf32>,
    %c78_495 = arith.constant 78 : index
    %c0_496 = arith.constant 0 : index
    %294 = vector.load %arg11[%c78_495, %c0_496] : memref<98x128xf32, #tpu.memory_space<vmem>>, vector<5x128xf32>
    %c45_497 = arith.constant 45 : index
    %c128_498 = arith.constant 128 : index
    %295 = vector.load %arg12[%c45_497, %c128_498] : memref<50x1152xf32, #tpu.memory_space<vmem>>, vector<5x128xf32>
    tpu.vector_store %arg12[%c45_497, %c128_498], %294 {strides = array<i32>} : memref<50x1152xf32, #tpu.memory_space<vmem>>, vector<5x128xf32>,
    %c79_499 = arith.constant 79 : index
    %c0_500 = arith.constant 0 : index
    %296 = vector.load %arg11[%c79_499, %c0_500] : memref<98x128xf32, #tpu.memory_space<vmem>>, vector<5x128xf32>
    %c45_501 = arith.constant 45 : index
    %c256_502 = arith.constant 256 : index
    %297 = vector.load %arg12[%c45_501, %c256_502] : memref<50x1152xf32, #tpu.memory_space<vmem>>, vector<5x128xf32>
    tpu.vector_store %arg12[%c45_501, %c256_502], %296 {strides = array<i32>} : memref<50x1152xf32, #tpu.memory_space<vmem>>, vector<5x128xf32>,
    %c84_503 = arith.constant 84 : index
    %c0_504 = arith.constant 0 : index
    %298 = vector.load %arg11[%c84_503, %c0_504] : memref<98x128xf32, #tpu.memory_space<vmem>>, vector<5x128xf32>
    %c45_505 = arith.constant 45 : index
    %c384_506 = arith.constant 384 : index
    %299 = vector.load %arg12[%c45_505, %c384_506] : memref<50x1152xf32, #tpu.memory_space<vmem>>, vector<5x128xf32>
    tpu.vector_store %arg12[%c45_505, %c384_506], %298 {strides = array<i32>} : memref<50x1152xf32, #tpu.memory_space<vmem>>, vector<5x128xf32>,
    %c85_507 = arith.constant 85 : index
    %c0_508 = arith.constant 0 : index
    %300 = vector.load %arg11[%c85_507, %c0_508] : memref<98x128xf32, #tpu.memory_space<vmem>>, vector<5x128xf32>
    %c45_509 = arith.constant 45 : index
    %c512_510 = arith.constant 512 : index
    %301 = vector.load %arg12[%c45_509, %c512_510] : memref<50x1152xf32, #tpu.memory_space<vmem>>, vector<5x128xf32>
    tpu.vector_store %arg12[%c45_509, %c512_510], %300 {strides = array<i32>} : memref<50x1152xf32, #tpu.memory_space<vmem>>, vector<5x128xf32>,
    %c86_511 = arith.constant 86 : index
    %c0_512 = arith.constant 0 : index
    %302 = vector.load %arg11[%c86_511, %c0_512] : memref<98x128xf32, #tpu.memory_space<vmem>>, vector<5x128xf32>
    %c45_513 = arith.constant 45 : index
    %c640_514 = arith.constant 640 : index
    %303 = vector.load %arg12[%c45_513, %c640_514] : memref<50x1152xf32, #tpu.memory_space<vmem>>, vector<5x128xf32>
    tpu.vector_store %arg12[%c45_513, %c640_514], %302 {strides = array<i32>} : memref<50x1152xf32, #tpu.memory_space<vmem>>, vector<5x128xf32>,
    %c91_515 = arith.constant 91 : index
    %c0_516 = arith.constant 0 : index
    %304 = vector.load %arg11[%c91_515, %c0_516] : memref<98x128xf32, #tpu.memory_space<vmem>>, vector<5x128xf32>
    %c45_517 = arith.constant 45 : index
    %c768_518 = arith.constant 768 : index
    %305 = vector.load %arg12[%c45_517, %c768_518] : memref<50x1152xf32, #tpu.memory_space<vmem>>, vector<5x128xf32>
    tpu.vector_store %arg12[%c45_517, %c768_518], %304 {strides = array<i32>} : memref<50x1152xf32, #tpu.memory_space<vmem>>, vector<5x128xf32>,
    %c92 = arith.constant 92 : index
    %c0_519 = arith.constant 0 : index
    %306 = vector.load %arg11[%c92, %c0_519] : memref<98x128xf32, #tpu.memory_space<vmem>>, vector<5x128xf32>
    %c45_520 = arith.constant 45 : index
    %c896_521 = arith.constant 896 : index
    %307 = vector.load %arg12[%c45_520, %c896_521] : memref<50x1152xf32, #tpu.memory_space<vmem>>, vector<5x128xf32>
    tpu.vector_store %arg12[%c45_520, %c896_521], %306 {strides = array<i32>} : memref<50x1152xf32, #tpu.memory_space<vmem>>, vector<5x128xf32>,
    %c93 = arith.constant 93 : index
    %c0_522 = arith.constant 0 : index
    %308 = vector.load %arg11[%c93, %c0_522] : memref<98x128xf32, #tpu.memory_space<vmem>>, vector<5x128xf32>
    %c45_523 = arith.constant 45 : index
    %c1024_524 = arith.constant 1024 : index
    %309 = vector.load %arg12[%c45_523, %c1024_524] : memref<50x1152xf32, #tpu.memory_space<vmem>>, vector<5x128xf32>
    tpu.vector_store %arg12[%c45_523, %c1024_524], %308 {strides = array<i32>} : memref<50x1152xf32, #tpu.memory_space<vmem>>, vector<5x128xf32>,
    %c0_525 = arith.constant 0 : index
    %c0_526 = arith.constant 0 : index
    %310 = vector.load %arg12[%c0_525, %c0_526] : memref<50x1152xf32, #tpu.memory_space<vmem>>, vector<50x1152xf32>
    %c0_527 = arith.constant 0 : index
    %c0_528 = arith.constant 0 : index
    %311 = vector.load %arg3[%c0_527, %c0_528] : memref<1152x128xf32, #tpu.memory_space<vmem>>, vector<1152x128xf32>
    %cst_529 = arith.constant dense<0.000000e+00> : vector<50x128xf32>
    %312 = tpu.matmul %310, %311, %cst_529 {dimension_numbers = #tpu.dot_dimension_numbers<[1], [0], [0], [1], [0, 0, 1, 1], [], []>} : vector<50x1152xf32>, vector<1152x128xf32>, vector<50x128xf32> -> vector<50x128xf32>
    %c0_530 = arith.constant 0 : index
    %c0_531 = arith.constant 0 : index
    %313 = vector.load %arg4[%c0_530, %c0_531] : memref<1x128xf32, #tpu.memory_space<vmem>>, vector<1x128xf32>
    %314 = vector.broadcast %313 : vector<1x128xf32> to vector<50x128xf32>
    %315 = arith.addf %312, %314 : vector<50x128xf32>
    %cst_532 = arith.constant 0.000000e+00 : f32
    %316 = vector.broadcast %cst_532 : f32 to vector<50x128xf32>
    %317 = arith.maximumf %315, %316 : vector<50x128xf32>
    %c0_533 = arith.constant 0 : index
    %c0_534 = arith.constant 0 : index
    %318 = vector.load %arg13[%c0_533, %c0_534] : memref<50x128xf32, #tpu.memory_space<vmem>>, vector<50x128xf32>
    tpu.vector_store %arg13[%c0_533, %c0_534], %317 {strides = array<i32>} : memref<50x128xf32, #tpu.memory_space<vmem>>, vector<50x128xf32>,
    %c0_535 = arith.constant 0 : index
    %c0_536 = arith.constant 0 : index
    %319 = vector.load %arg13[%c0_535, %c0_536] : memref<50x128xf32, #tpu.memory_space<vmem>>, vector<2x128xf32>
    %c5_537 = arith.constant 5 : index
    %c0_538 = arith.constant 0 : index
    %320 = vector.load %arg13[%c5_537, %c0_538] : memref<50x128xf32, #tpu.memory_space<vmem>>, vector<2x128xf32>
    %321 = arith.maximumf %319, %320 : vector<2x128xf32>
    %cst_539 = arith.constant dense<0xFF800000> : vector<128xf32>
    %322 = vector.multi_reduction <maximumf>, %321, %cst_539 [0] : vector<2x128xf32> to vector<128xf32>
    %323 = vector.shape_cast %322 : vector<128xf32> to vector<1x128xf32>
    %c0_540 = arith.constant 0 : index
    %c0_541 = arith.constant 0 : index
    %324 = vector.load %arg14[%c0_540, %c0_541] : memref<2x512xf32, #tpu.memory_space<vmem>>, vector<1x128xf32>
    tpu.vector_store %arg14[%c0_540, %c0_541], %323 {strides = array<i32>} : memref<2x512xf32, #tpu.memory_space<vmem>>, vector<1x128xf32>,
    %c2_542 = arith.constant 2 : index
    %c0_543 = arith.constant 0 : index
    %325 = vector.load %arg13[%c2_542, %c0_543] : memref<50x128xf32, #tpu.memory_space<vmem>>, vector<2x128xf32>
    %c7_544 = arith.constant 7 : index
    %c0_545 = arith.constant 0 : index
    %326 = vector.load %arg13[%c7_544, %c0_545] : memref<50x128xf32, #tpu.memory_space<vmem>>, vector<2x128xf32>
    %327 = arith.maximumf %325, %326 : vector<2x128xf32>
    %cst_546 = arith.constant dense<0xFF800000> : vector<128xf32>
    %328 = vector.multi_reduction <maximumf>, %327, %cst_546 [0] : vector<2x128xf32> to vector<128xf32>
    %329 = vector.shape_cast %328 : vector<128xf32> to vector<1x128xf32>
    %c0_547 = arith.constant 0 : index
    %c128_548 = arith.constant 128 : index
    %330 = vector.load %arg14[%c0_547, %c128_548] : memref<2x512xf32, #tpu.memory_space<vmem>>, vector<1x128xf32>
    tpu.vector_store %arg14[%c0_547, %c128_548], %329 {strides = array<i32>} : memref<2x512xf32, #tpu.memory_space<vmem>>, vector<1x128xf32>,
    %c10_549 = arith.constant 10 : index
    %c0_550 = arith.constant 0 : index
    %331 = vector.load %arg13[%c10_549, %c0_550] : memref<50x128xf32, #tpu.memory_space<vmem>>, vector<2x128xf32>
    %c15_551 = arith.constant 15 : index
    %c0_552 = arith.constant 0 : index
    %332 = vector.load %arg13[%c15_551, %c0_552] : memref<50x128xf32, #tpu.memory_space<vmem>>, vector<2x128xf32>
    %333 = arith.maximumf %331, %332 : vector<2x128xf32>
    %cst_553 = arith.constant dense<0xFF800000> : vector<128xf32>
    %334 = vector.multi_reduction <maximumf>, %333, %cst_553 [0] : vector<2x128xf32> to vector<128xf32>
    %335 = vector.shape_cast %334 : vector<128xf32> to vector<1x128xf32>
    %c0_554 = arith.constant 0 : index
    %c256_555 = arith.constant 256 : index
    %336 = vector.load %arg14[%c0_554, %c256_555] : memref<2x512xf32, #tpu.memory_space<vmem>>, vector<1x128xf32>
    tpu.vector_store %arg14[%c0_554, %c256_555], %335 {strides = array<i32>} : memref<2x512xf32, #tpu.memory_space<vmem>>, vector<1x128xf32>,
    %c12 = arith.constant 12 : index
    %c0_556 = arith.constant 0 : index
    %337 = vector.load %arg13[%c12, %c0_556] : memref<50x128xf32, #tpu.memory_space<vmem>>, vector<2x128xf32>
    %c17_557 = arith.constant 17 : index
    %c0_558 = arith.constant 0 : index
    %338 = vector.load %arg13[%c17_557, %c0_558] : memref<50x128xf32, #tpu.memory_space<vmem>>, vector<2x128xf32>
    %339 = arith.maximumf %337, %338 : vector<2x128xf32>
    %cst_559 = arith.constant dense<0xFF800000> : vector<128xf32>
    %340 = vector.multi_reduction <maximumf>, %339, %cst_559 [0] : vector<2x128xf32> to vector<128xf32>
    %341 = vector.shape_cast %340 : vector<128xf32> to vector<1x128xf32>
    %c0_560 = arith.constant 0 : index
    %c384_561 = arith.constant 384 : index
    %342 = vector.load %arg14[%c0_560, %c384_561] : memref<2x512xf32, #tpu.memory_space<vmem>>, vector<1x128xf32>
    tpu.vector_store %arg14[%c0_560, %c384_561], %341 {strides = array<i32>} : memref<2x512xf32, #tpu.memory_space<vmem>>, vector<1x128xf32>,
    %c25_562 = arith.constant 25 : index
    %c0_563 = arith.constant 0 : index
    %343 = vector.load %arg13[%c25_562, %c0_563] : memref<50x128xf32, #tpu.memory_space<vmem>>, vector<2x128xf32>
    %c30_564 = arith.constant 30 : index
    %c0_565 = arith.constant 0 : index
    %344 = vector.load %arg13[%c30_564, %c0_565] : memref<50x128xf32, #tpu.memory_space<vmem>>, vector<2x128xf32>
    %345 = arith.maximumf %343, %344 : vector<2x128xf32>
    %cst_566 = arith.constant dense<0xFF800000> : vector<128xf32>
    %346 = vector.multi_reduction <maximumf>, %345, %cst_566 [0] : vector<2x128xf32> to vector<128xf32>
    %347 = vector.shape_cast %346 : vector<128xf32> to vector<1x128xf32>
    %c1_567 = arith.constant 1 : index
    %c0_568 = arith.constant 0 : index
    %348 = vector.load %arg14[%c1_567, %c0_568] : memref<2x512xf32, #tpu.memory_space<vmem>>, vector<1x128xf32>
    tpu.vector_store %arg14[%c1_567, %c0_568], %347 {strides = array<i32>} : memref<2x512xf32, #tpu.memory_space<vmem>>, vector<1x128xf32>,
    %c27 = arith.constant 27 : index
    %c0_569 = arith.constant 0 : index
    %349 = vector.load %arg13[%c27, %c0_569] : memref<50x128xf32, #tpu.memory_space<vmem>>, vector<2x128xf32>
    %c32_570 = arith.constant 32 : index
    %c0_571 = arith.constant 0 : index
    %350 = vector.load %arg13[%c32_570, %c0_571] : memref<50x128xf32, #tpu.memory_space<vmem>>, vector<2x128xf32>
    %351 = arith.maximumf %349, %350 : vector<2x128xf32>
    %cst_572 = arith.constant dense<0xFF800000> : vector<128xf32>
    %352 = vector.multi_reduction <maximumf>, %351, %cst_572 [0] : vector<2x128xf32> to vector<128xf32>
    %353 = vector.shape_cast %352 : vector<128xf32> to vector<1x128xf32>
    %c1_573 = arith.constant 1 : index
    %c128_574 = arith.constant 128 : index
    %354 = vector.load %arg14[%c1_573, %c128_574] : memref<2x512xf32, #tpu.memory_space<vmem>>, vector<1x128xf32>
    tpu.vector_store %arg14[%c1_573, %c128_574], %353 {strides = array<i32>} : memref<2x512xf32, #tpu.memory_space<vmem>>, vector<1x128xf32>,
    %c35_575 = arith.constant 35 : index
    %c0_576 = arith.constant 0 : index
    %355 = vector.load %arg13[%c35_575, %c0_576] : memref<50x128xf32, #tpu.memory_space<vmem>>, vector<2x128xf32>
    %c40_577 = arith.constant 40 : index
    %c0_578 = arith.constant 0 : index
    %356 = vector.load %arg13[%c40_577, %c0_578] : memref<50x128xf32, #tpu.memory_space<vmem>>, vector<2x128xf32>
    %357 = arith.maximumf %355, %356 : vector<2x128xf32>
    %cst_579 = arith.constant dense<0xFF800000> : vector<128xf32>
    %358 = vector.multi_reduction <maximumf>, %357, %cst_579 [0] : vector<2x128xf32> to vector<128xf32>
    %359 = vector.shape_cast %358 : vector<128xf32> to vector<1x128xf32>
    %c1_580 = arith.constant 1 : index
    %c256_581 = arith.constant 256 : index
    %360 = vector.load %arg14[%c1_580, %c256_581] : memref<2x512xf32, #tpu.memory_space<vmem>>, vector<1x128xf32>
    tpu.vector_store %arg14[%c1_580, %c256_581], %359 {strides = array<i32>} : memref<2x512xf32, #tpu.memory_space<vmem>>, vector<1x128xf32>,
    %c37_582 = arith.constant 37 : index
    %c0_583 = arith.constant 0 : index
    %361 = vector.load %arg13[%c37_582, %c0_583] : memref<50x128xf32, #tpu.memory_space<vmem>>, vector<2x128xf32>
    %c42_584 = arith.constant 42 : index
    %c0_585 = arith.constant 0 : index
    %362 = vector.load %arg13[%c42_584, %c0_585] : memref<50x128xf32, #tpu.memory_space<vmem>>, vector<2x128xf32>
    %363 = arith.maximumf %361, %362 : vector<2x128xf32>
    %cst_586 = arith.constant dense<0xFF800000> : vector<128xf32>
    %364 = vector.multi_reduction <maximumf>, %363, %cst_586 [0] : vector<2x128xf32> to vector<128xf32>
    %365 = vector.shape_cast %364 : vector<128xf32> to vector<1x128xf32>
    %c1_587 = arith.constant 1 : index
    %c384_588 = arith.constant 384 : index
    %366 = vector.load %arg14[%c1_587, %c384_588] : memref<2x512xf32, #tpu.memory_space<vmem>>, vector<1x128xf32>
    tpu.vector_store %arg14[%c1_587, %c384_588], %365 {strides = array<i32>} : memref<2x512xf32, #tpu.memory_space<vmem>>, vector<1x128xf32>,
    %c0_589 = arith.constant 0 : index
    %c0_590 = arith.constant 0 : index
    %367 = vector.load %arg14[%c0_589, %c0_590] : memref<2x512xf32, #tpu.memory_space<vmem>>, vector<2x512xf32>
    %c0_591 = arith.constant 0 : index
    %c0_592 = arith.constant 0 : index
    %368 = vector.load %arg5[%c0_591, %c0_592] : memref<512x400xf32, #tpu.memory_space<vmem>>, vector<512x400xf32>
    %cst_593 = arith.constant dense<0.000000e+00> : vector<2x400xf32>
    %369 = tpu.matmul %367, %368, %cst_593 {dimension_numbers = #tpu.dot_dimension_numbers<[1], [0], [0], [1], [0, 0, 1, 1], [], []>} : vector<2x512xf32>, vector<512x400xf32>, vector<2x400xf32> -> vector<2x400xf32>
    %c0_594 = arith.constant 0 : index
    %c0_595 = arith.constant 0 : index
    %370 = vector.load %arg6[%c0_594, %c0_595] : memref<1x400xf32, #tpu.memory_space<vmem>>, vector<1x400xf32>
    %371 = vector.broadcast %370 : vector<1x400xf32> to vector<2x400xf32>
    %372 = arith.addf %369, %371 : vector<2x400xf32>
    %cst_596 = arith.constant 0.000000e+00 : f32
    %373 = vector.broadcast %cst_596 : f32 to vector<2x400xf32>
    %374 = arith.maximumf %372, %373 : vector<2x400xf32>
    %c0_597 = arith.constant 0 : index
    %c0_598 = arith.constant 0 : index
    %375 = vector.load %arg7[%c0_597, %c0_598] : memref<400x6xf32, #tpu.memory_space<vmem>>, vector<400x6xf32>
    %cst_599 = arith.constant dense<0.000000e+00> : vector<2x6xf32>
    %376 = tpu.matmul %374, %375, %cst_599 {dimension_numbers = #tpu.dot_dimension_numbers<[1], [0], [0], [1], [0, 0, 1, 1], [], []>} : vector<2x400xf32>, vector<400x6xf32>, vector<2x6xf32> -> vector<2x6xf32>
    %c0_600 = arith.constant 0 : index
    %c0_601 = arith.constant 0 : index
    %377 = vector.load %arg8[%c0_600, %c0_601] : memref<1x6xf32, #tpu.memory_space<vmem>>, vector<1x6xf32>
    %378 = vector.broadcast %377 : vector<1x6xf32> to vector<2x6xf32>
    %379 = arith.addf %376, %378 : vector<2x6xf32>
    %c0_602 = arith.constant 0 : index
    %c0_603 = arith.constant 0 : index
    %380 = vector.load %arg9[%c0_602, %c0_603] : memref<2x6xf32, #tpu.memory_space<vmem>>, vector<2x6xf32>
    tpu.vector_store %arg9[%c0_602, %c0_603], %379 {strides = array<i32>} : memref<2x6xf32, #tpu.memory_space<vmem>>, vector<2x6xf32>,
    return
  }
}

</mosaic_0001>

<llo_original>
// kernel: _lambda_.1
$region0: #{_lambda_.1}
  #allocation0 [shape = 'u32[]', space=smem, size = 0x4, offset = 0x4, fixed_abs, tag = 'smem constant byte address 0x4 - core index']
  #allocation1 [shape = 'u32[144,128]{1,0:T(1,128)}', space=vmem, size = 0x12000, scoped, tag = 'internal scratch']
  #allocation2 [shape = 'f32[98,1024]{1,0:T(8,128)}', space=vmem, size = 0x68000, scoped, tag = 'scratch operand']
  #allocation3 [shape = 'f32[98,128]{1,0:T(8,128)}', space=vmem, size = 0xd000, scoped, tag = 'scratch operand']
  #allocation4 [shape = 'f32[50,1152]{1,0:T(8,128)}', space=vmem, size = 0x3f000, scoped, tag = 'scratch operand']
  #allocation5 [shape = 'f32[50,128]{1,0:T(8,128)}', space=vmem, size = 0x7000, scoped, tag = 'scratch operand']
  #allocation6 [shape = 'f32[2,512]{1,0:T(2,128)}', space=vmem, size = 0x1000, scoped, tag = 'scratch operand']
  %s0 = inlined_call_operand.vmem [shape: f32[128,256], index: 0, kind: input, shape index: {}]
  %s1 = inlined_call_operand.vmem [shape: f32[4096,128], index: 1, kind: input, shape index: {}]
  %s2 = inlined_call_operand.vmem [shape: f32[1,128], index: 2, kind: input, shape index: {}]
  %s3 = inlined_call_operand.vmem [shape: f32[1152,128], index: 3, kind: input, shape index: {}]
  %s4 = inlined_call_operand.vmem [shape: f32[1,128], index: 4, kind: input, shape index: {}]
  %s5 = inlined_call_operand.vmem [shape: f32[512,400], index: 5, kind: input, shape index: {}]
  %s6 = inlined_call_operand.vmem [shape: f32[1,400], index: 6, kind: input, shape index: {}]
  %s7 = inlined_call_operand.vmem [shape: f32[400,6], index: 7, kind: input, shape index: {}]
  %s8 = inlined_call_operand.vmem [shape: f32[1,6], index: 8, kind: input, shape index: {}]
  %s9 = inlined_call_operand.hbm [shape: f32[2,6], index: 9, kind: output, shape index: {}]
  %s10 = sld [smem:[#allocation0]]
  $region46: #{_lambda_.1} parent=0
    _
  %s12 = ssub.s32 1, %s10
  %s13 = scalar_select 0, %s12, %s10
  $region1: #{_lambda_.1} parent=0
    #allocation7 [shape = 'u8[1024]{0}', space=vmem, size = 0x400, scoped, tag = 'output window, operand 0, single buffered']
    #allocation8 [shape = 's32[1]{0}', space=sflag, size = 0x4, scoped, tag = 'scoped memory for _lambda_.1']
    %14 = vsyncpa [#allocation8], 0
    // Predicated region
    $region2: #{_lambda_.1} parent=1 // pred_check
      _
    $region3: #{_lambda_.1} parent=1 // pred_check_branch
      %16 = sbr.rel (0) target = $region5
    $region4: #{_lambda_.1} parent=1 // pred_region
      _
    $region5: #{_lambda_.1} parent=1 // pred_fallthru
      _
    // Predicated region
    $region6: #{_lambda_.1} parent=1 // pred_check
      _
    $region7: #{_lambda_.1} parent=1 // pred_check_branch
      %18 = sbr.rel (0) target = $region9
    $region8: #{_lambda_.1} parent=1 // pred_region
      _
    $region9: #{_lambda_.1} parent=1 // pred_fallthru
      _
    // Predicated region
    $region10: #{_lambda_.1} parent=1 // pred_check
      _
    $region11: #{_lambda_.1} parent=1 // pred_check_branch
      %20 = sbr.rel (0) target = $region13
    $region12: #{_lambda_.1} parent=1 // pred_region
      _
    $region13: #{_lambda_.1} parent=1 // pred_fallthru
      _
    // Predicated region
    $region14: #{_lambda_.1} parent=1 // pred_check
      _
    $region15: #{_lambda_.1} parent=1 // pred_check_branch
      %22 = sbr.rel (0) target = $region17
    $region16: #{_lambda_.1} parent=1 // pred_region
      _
    $region17: #{_lambda_.1} parent=1 // pred_fallthru
      _
    // Predicated region
    $region18: #{_lambda_.1} parent=1 // pred_check
      _
    $region19: #{_lambda_.1} parent=1 // pred_check_branch
      %24 = sbr.rel (0) target = $region21
    $region20: #{_lambda_.1} parent=1 // pred_region
      _
    $region21: #{_lambda_.1} parent=1 // pred_fallthru
      _
    // Predicated region
    $region22: #{_lambda_.1} parent=1 // pred_check
      _
    $region23: #{_lambda_.1} parent=1 // pred_check_branch
      %26 = sbr.rel (0) target = $region25
    $region24: #{_lambda_.1} parent=1 // pred_region
      _
    $region25: #{_lambda_.1} parent=1 // pred_fallthru
      _
    // Predicated region
    $region26: #{_lambda_.1} parent=1 // pred_check
      _
    $region27: #{_lambda_.1} parent=1 // pred_check_branch
      %28 = sbr.rel (0) target = $region29
    $region28: #{_lambda_.1} parent=1 // pred_region
      _
    $region29: #{_lambda_.1} parent=1 // pred_fallthru
      _
    // Predicated region
    $region30: #{_lambda_.1} parent=1 // pred_check
      _
    $region31: #{_lambda_.1} parent=1 // pred_check_branch
      %30 = sbr.rel (0) target = $region33
    $region32: #{_lambda_.1} parent=1 // pred_region
      _
    $region33: #{_lambda_.1} parent=1 // pred_fallthru
      _
    // Predicated region
    $region34: #{_lambda_.1} parent=1 // pred_check
      _
    $region35: #{_lambda_.1} parent=1 // pred_check_branch
      %32 = sbr.rel (0) target = $region37
    $region36: #{_lambda_.1} parent=1 // pred_region
      _
    $region37: #{_lambda_.1} parent=1 // pred_fallthru
      _
    %v33 = vld [vmem:[%s0] sm:$0x7f]
    %v34 = vld [vmem:[%s0 + $0x8] sm:$0x7f]
    %35 = vst [vmem:[#allocation2] sm:$0x7f] %v33
    %36 = vst [vmem:[#allocation2 + $0x8] sm:$0x7f] %v34
    %v37 = vld [vmem:[%s0] sm:$0xfe]
    %v38 = vld [vmem:[%s0 + $0x8] sm:$0xfe]
    %v41 = vrot.slane %v37, 1
    %v42 = vrot.slane %v38, 1
    %45 = vst [vmem:[#allocation2 + $0x10] sm:$0x7f] %v41
    %46 = vst [vmem:[#allocation2 + $0x18] sm:$0x7f] %v42
    %v47 = vld [vmem:[%s0 + $0x10] sm:$0x7f]
    %v48 = vld [vmem:[%s0 + $0x18] sm:$0x7f]
    %49 = vst [vmem:[#allocation2 + $0x20] sm:$0x7f] %v47
    %50 = vst [vmem:[#allocation2 + $0x28] sm:$0x7f] %v48
    %v51 = vld [vmem:[%s0 + $0x10] sm:$0xfe]
    %v52 = vld [vmem:[%s0 + $0x18] sm:$0xfe]
    %v55 = vrot.slane %v51, 1
    %v56 = vrot.slane %v52, 1
    %59 = vst [vmem:[#allocation2 + $0x30] sm:$0x7f] %v55
    %60 = vst [vmem:[#allocation2 + $0x38] sm:$0x7f] %v56
    %v61 = vld [vmem:[%s0 + $0x10] sm:$0x7f]
    %v62 = vld [vmem:[%s0 + $0x18] sm:$0x7f]
    %v65 = vrot.slane %v61, 1
    %v66 = vrot.slane %v62, 1
    %69 = vst [vmem:[#allocation2] sm:$0x80] %v65
    %70 = vst [vmem:[#allocation2 + $0x8] sm:$0x80] %v66
    %71 = vst [vmem:[#allocation2 + $0x40] sm:$0x3f] %v65
    %72 = vst [vmem:[#allocation2 + $0x48] sm:$0x3f] %v66
    %v73 = vld [vmem:[%s0 + $0x10] sm:$0xfe]
    %v74 = vld [vmem:[%s0 + $0x18] sm:$0xfe]
    %v77 = vrot.slane %v73, 2
    %v78 = vrot.slane %v74, 2
    %81 = vst [vmem:[#allocation2 + $0x10] sm:$0x80] %v77
    %82 = vst [vmem:[#allocation2 + $0x18] sm:$0x80] %v78
    %83 = vst [vmem:[#allocation2 + $0x50] sm:$0x3f] %v77
    %84 = vst [vmem:[#allocation2 + $0x58] sm:$0x3f] %v78
    %v85 = vld [vmem:[%s0 + $0x20] sm:$0x7f]
    %v86 = vld [vmem:[%s0 + $0x28] sm:$0x7f]
    %v89 = vrot.slane %v85, 1
    %v90 = vrot.slane %v86, 1
    %93 = vst [vmem:[#allocation2 + $0x20] sm:$0x80] %v89
    %94 = vst [vmem:[#allocation2 + $0x28] sm:$0x80] %v90
    %95 = vst [vmem:[#allocation2 + $0x60] sm:$0x3f] %v89
    %96 = vst [vmem:[#allocation2 + $0x68] sm:$0x3f] %v90
    %v97 = vld [vmem:[%s0 + $0x20] sm:$0xfe]
    %v98 = vld [vmem:[%s0 + $0x28] sm:$0xfe]
    %v101 = vrot.slane %v97, 2
    %v102 = vrot.slane %v98, 2
    %105 = vst [vmem:[#allocation2 + $0x30] sm:$0x80] %v101
    %106 = vst [vmem:[#allocation2 + $0x38] sm:$0x80] %v102
    %107 = vst [vmem:[#allocation2 + $0x70] sm:$0x3f] %v101
    %108 = vst [vmem:[#allocation2 + $0x78] sm:$0x3f] %v102
    %v109 = vld [vmem:[%s0 + $0x20] sm:$0x7f]
    %v110 = vld [vmem:[%s0 + $0x28] sm:$0x7f]
    %v113 = vrot.slane %v109, 2
    %v114 = vrot.slane %v110, 2
    %117 = vst [vmem:[#allocation2 + $0x40] sm:$0xc0] %v113
    %118 = vst [vmem:[#allocation2 + $0x48] sm:$0xc0] %v114
    %119 = vst [vmem:[#allocation2 + $0x80] sm:$0x1f] %v113
    %120 = vst [vmem:[#allocation2 + $0x88] sm:$0x1f] %v114
    %v121 = vld [vmem:[%s0 + $0x20] sm:$0xfe]
    %v122 = vld [vmem:[%s0 + $0x28] sm:$0xfe]
    %v125 = vrot.slane %v121, 3
    %v126 = vrot.slane %v122, 3
    %129 = vst [vmem:[#allocation2 + $0x50] sm:$0xc0] %v125
    %130 = vst [vmem:[#allocation2 + $0x58] sm:$0xc0] %v126
    %131 = vst [vmem:[#allocation2 + $0x90] sm:$0x1f] %v125
    %132 = vst [vmem:[#allocation2 + $0x98] sm:$0x1f] %v126
    %v133 = vld [vmem:[%s0 + $0x30] sm:$0x7f]
    %v134 = vld [vmem:[%s0 + $0x38] sm:$0x7f]
    %v137 = vrot.slane %v133, 2
    %v138 = vrot.slane %v134, 2
    %141 = vst [vmem:[#allocation2 + $0x60] sm:$0xc0] %v137
    %142 = vst [vmem:[#allocation2 + $0x68] sm:$0xc0] %v138
    %143 = vst [vmem:[#allocation2 + $0xa0] sm:$0x1f] %v137
    %144 = vst [vmem:[#allocation2 + $0xa8] sm:$0x1f] %v138
    %v145 = vld [vmem:[%s0 + $0x30] sm:$0xfe]
    %v146 = vld [vmem:[%s0 + $0x38] sm:$0xfe]
    %v149 = vrot.slane %v145, 3
    %v150 = vrot.slane %v146, 3
    %153 = vst [vmem:[#allocation2 + $0x70] sm:$0xc0] %v149
    %154 = vst [vmem:[#allocation2 + $0x78] sm:$0xc0] %v150
    %155 = vst [vmem:[#allocation2 + $0xb0] sm:$0x1f] %v149
    %156 = vst [vmem:[#allocation2 + $0xb8] sm:$0x1f] %v150
    %v157 = vld [vmem:[%s0 + $0x30] sm:$0x7f]
    %v158 = vld [vmem:[%s0 + $0x38] sm:$0x7f]
    %v161 = vrot.slane %v157, 3
    %v162 = vrot.slane %v158, 3
    %165 = vst [vmem:[#allocation2 + $0x80] sm:$0xe0] %v161
    %166 = vst [vmem:[#allocation2 + $0x88] sm:$0xe0] %v162
    %167 = vst [vmem:[#allocation2 + $0xc0] sm:$0xf] %v161
    %168 = vst [vmem:[#allocation2 + $0xc8] sm:$0xf] %v162
    %v169 = vld [vmem:[%s0 + $0x30] sm:$0xfe]
    %v170 = vld [vmem:[%s0 + $0x38] sm:$0xfe]
    %v173 = vrot.slane %v169, 4
    %v174 = vrot.slane %v170, 4
    %177 = vst [vmem:[#allocation2 + $0x90] sm:$0xe0] %v173
    %178 = vst [vmem:[#allocation2 + $0x98] sm:$0xe0] %v174
    %179 = vst [vmem:[#allocation2 + $0xd0] sm:$0xf] %v173
    %180 = vst [vmem:[#allocation2 + $0xd8] sm:$0xf] %v174
    %v181 = vld [vmem:[%s0 + $0x40] sm:$0x7f]
    %v182 = vld [vmem:[%s0 + $0x48] sm:$0x7f]
    %v185 = vrot.slane %v181, 3
    %v186 = vrot.slane %v182, 3
    %189 = vst [vmem:[#allocation2 + $0xa0] sm:$0xe0] %v185
    %190 = vst [vmem:[#allocation2 + $0xa8] sm:$0xe0] %v186
    %191 = vst [vmem:[#allocation2 + $0xe0] sm:$0xf] %v185
    %192 = vst [vmem:[#allocation2 + $0xe8] sm:$0xf] %v186
    %v193 = vld [vmem:[%s0 + $0x40] sm:$0xfe]
    %v194 = vld [vmem:[%s0 + $0x48] sm:$0xfe]
    %v197 = vrot.slane %v193, 4
    %v198 = vrot.slane %v194, 4
    %201 = vst [vmem:[#allocation2 + $0xb0] sm:$0xe0] %v197
    %202 = vst [vmem:[#allocation2 + $0xb8] sm:$0xe0] %v198
    %203 = vst [vmem:[#allocation2 + $0xf0] sm:$0xf] %v197
    %204 = vst [vmem:[#allocation2 + $0xf8] sm:$0xf] %v198
    %v205 = vld [vmem:[%s0 + $0x40] sm:$0x7f]
    %v206 = vld [vmem:[%s0 + $0x48] sm:$0x7f]
    %v209 = vrot.slane %v205, 4
    %v210 = vrot.slane %v206, 4
    %213 = vst [vmem:[#allocation2 + $0xc0] sm:$0xf0] %v209
    %214 = vst [vmem:[#allocation2 + $0xc8] sm:$0xf0] %v210
    %215 = vst [vmem:[#allocation2 + $0x100] sm:$0x7] %v209
    %216 = vst [vmem:[#allocation2 + $0x108] sm:$0x7] %v210
    %v217 = vld [vmem:[%s0 + $0x40] sm:$0xfe]
    %v218 = vld [vmem:[%s0 + $0x48] sm:$0xfe]
    %v221 = vrot.slane %v217, 5
    %v222 = vrot.slane %v218, 5
    %225 = vst [vmem:[#allocation2 + $0xd0] sm:$0xf0] %v221
    %226 = vst [vmem:[#allocation2 + $0xd8] sm:$0xf0] %v222
    %227 = vst [vmem:[#allocation2 + $0x110] sm:$0x7] %v221
    %228 = vst [vmem:[#allocation2 + $0x118] sm:$0x7] %v222
    %v229 = vld [vmem:[%s0 + $0x50] sm:$0x7f]
    %v230 = vld [vmem:[%s0 + $0x58] sm:$0x7f]
    %v233 = vrot.slane %v229, 4
    %v234 = vrot.slane %v230, 4
    %237 = vst [vmem:[#allocation2 + $0xe0] sm:$0xf0] %v233
    %238 = vst [vmem:[#allocation2 + $0xe8] sm:$0xf0] %v234
    %239 = vst [vmem:[#allocation2 + $0x120] sm:$0x7] %v233
    %240 = vst [vmem:[#allocation2 + $0x128] sm:$0x7] %v234
    %v241 = vld [vmem:[%s0 + $0x50] sm:$0xfe]
    %v242 = vld [vmem:[%s0 + $0x58] sm:$0xfe]
    %v245 = vrot.slane %v241, 5
    %v246 = vrot.slane %v242, 5
    %249 = vst [vmem:[#allocation2 + $0xf0] sm:$0xf0] %v245
    %250 = vst [vmem:[#allocation2 + $0xf8] sm:$0xf0] %v246
    %251 = vst [vmem:[#allocation2 + $0x130] sm:$0x7] %v245
    %252 = vst [vmem:[#allocation2 + $0x138] sm:$0x7] %v246
    %v253 = vld [vmem:[%s0 + $0x50] sm:$0x7f]
    %v254 = vld [vmem:[%s0 + $0x58] sm:$0x7f]
    %v257 = vrot.slane %v253, 5
    %v258 = vrot.slane %v254, 5
    %261 = vst [vmem:[#allocation2 + $0x100] sm:$0xf8] %v257
    %262 = vst [vmem:[#allocation2 + $0x108] sm:$0xf8] %v258
    %263 = vst [vmem:[#allocation2 + $0x140] sm:$0x3] %v257
    %264 = vst [vmem:[#allocation2 + $0x148] sm:$0x3] %v258
    %v265 = vld [vmem:[%s0 + $0x50] sm:$0xfe]
    %v266 = vld [vmem:[%s0 + $0x58] sm:$0xfe]
    %v269 = vrot.slane %v265, 6
    %v270 = vrot.slane %v266, 6
    %273 = vst [vmem:[#allocation2 + $0x110] sm:$0xf8] %v269
    %274 = vst [vmem:[#allocation2 + $0x118] sm:$0xf8] %v270
    %275 = vst [vmem:[#allocation2 + $0x150] sm:$0x3] %v269
    %276 = vst [vmem:[#allocation2 + $0x158] sm:$0x3] %v270
    %v277 = vld [vmem:[%s0 + $0x60] sm:$0x7f]
    %v278 = vld [vmem:[%s0 + $0x68] sm:$0x7f]
    %v281 = vrot.slane %v277, 5
    %v282 = vrot.slane %v278, 5
    %285 = vst [vmem:[#allocation2 + $0x120] sm:$0xf8] %v281
    %286 = vst [vmem:[#allocation2 + $0x128] sm:$0xf8] %v282
    %287 = vst [vmem:[#allocation2 + $0x160] sm:$0x3] %v281
    %288 = vst [vmem:[#allocation2 + $0x168] sm:$0x3] %v282
    %v289 = vld [vmem:[%s0 + $0x60] sm:$0xfe]
    %v290 = vld [vmem:[%s0 + $0x68] sm:$0xfe]
    %v293 = vrot.slane %v289, 6
    %v294 = vrot.slane %v290, 6
    %297 = vst [vmem:[#allocation2 + $0x130] sm:$0xf8] %v293
    %298 = vst [vmem:[#allocation2 + $0x138] sm:$0xf8] %v294
    %299 = vst [vmem:[#allocation2 + $0x170] sm:$0x3] %v293
    %300 = vst [vmem:[#allocation2 + $0x178] sm:$0x3] %v294
    %v301 = vld [vmem:[%s0 + $0x60] sm:$0x7f]
    %v302 = vld [vmem:[%s0 + $0x68] sm:$0x7f]
    %v305 = vrot.slane %v301, 6
    %v306 = vrot.slane %v302, 6
    %309 = vst [vmem:[#allocation2 + $0x140] sm:$0xfc] %v305
    %310 = vst [vmem:[#allocation2 + $0x148] sm:$0xfc] %v306
    %311 = vst [vmem:[#allocation2 + $0x180] sm:$0x1] %v305
    %312 = vst [vmem:[#allocation2 + $0x188] sm:$0x1] %v306
    %v313 = vld [vmem:[%s0 + $0x60] sm:$0xfe]
    %v314 = vld [vmem:[%s0 + $0x68] sm:$0xfe]
    %v317 = vrot.slane %v313, 7
    %v318 = vrot.slane %v314, 7
    %321 = vst [vmem:[#allocation2 + $0x150] sm:$0xfc] %v317
    %322 = vst [vmem:[#allocation2 + $0x158] sm:$0xfc] %v318
    %323 = vst [vmem:[#allocation2 + $0x190] sm:$0x1] %v317
    %324 = vst [vmem:[#allocation2 + $0x198] sm:$0x1] %v318
    %v325 = vld [vmem:[%s0 + $0x70] sm:$0x7f]
    %v326 = vld [vmem:[%s0 + $0x78] sm:$0x7f]
    %v329 = vrot.slane %v325, 6
    %v330 = vrot.slane %v326, 6
    %333 = vst [vmem:[#allocation2 + $0x160] sm:$0xfc] %v329
    %334 = vst [vmem:[#allocation2 + $0x168] sm:$0xfc] %v330
    %335 = vst [vmem:[#allocation2 + $0x1a0] sm:$0x1] %v329
    %336 = vst [vmem:[#allocation2 + $0x1a8] sm:$0x1] %v330
    %v337 = vld [vmem:[%s0 + $0x70] sm:$0xfe]
    %v338 = vld [vmem:[%s0 + $0x78] sm:$0xfe]
    %v341 = vrot.slane %v337, 7
    %v342 = vrot.slane %v338, 7
    %345 = vst [vmem:[#allocation2 + $0x170] sm:$0xfc] %v341
    %346 = vst [vmem:[#allocation2 + $0x178] sm:$0xfc] %v342
    %347 = vst [vmem:[#allocation2 + $0x1b0] sm:$0x1] %v341
    %348 = vst [vmem:[#allocation2 + $0x1b8] sm:$0x1] %v342
    %v349 = vld [vmem:[%s0 + $0x80] sm:$0x7f]
    %v350 = vld [vmem:[%s0 + $0x88] sm:$0x7f]
    %v353 = vrot.slane %v349, 7
    %v354 = vrot.slane %v350, 7
    %357 = vst [vmem:[#allocation2 + $0x180] sm:$0xfe] %v353
    %358 = vst [vmem:[#allocation2 + $0x188] sm:$0xfe] %v354
    %v359 = vld [vmem:[%s0 + $0x80] sm:$0xfe]
    %v360 = vld [vmem:[%s0 + $0x88] sm:$0xfe]
    %361 = vst [vmem:[#allocation2 + $0x190] sm:$0xfe] %v359
    %362 = vst [vmem:[#allocation2 + $0x198] sm:$0xfe] %v360
    %v363 = vld [vmem:[%s0 + $0x90] sm:$0x7f]
    %v364 = vld [vmem:[%s0 + $0x98] sm:$0x7f]
    %v367 = vrot.slane %v363, 7
    %v368 = vrot.slane %v364, 7
    %371 = vst [vmem:[#allocation2 + $0x1a0] sm:$0xfe] %v367
    %372 = vst [vmem:[#allocation2 + $0x1a8] sm:$0xfe] %v368
    %v373 = vld [vmem:[%s0 + $0x90] sm:$0xfe]
    %v374 = vld [vmem:[%s0 + $0x98] sm:$0xfe]
    %375 = vst [vmem:[#allocation2 + $0x1b0] sm:$0xfe] %v373
    %376 = vst [vmem:[#allocation2 + $0x1b8] sm:$0xfe] %v374
    %v377 = vld [vmem:[%s0 + $0x90] sm:$0x7f]
    %v378 = vld [vmem:[%s0 + $0x98] sm:$0x7f]
    %379 = vst [vmem:[#allocation2 + $0x1c0] sm:$0x7f] %v377
    %380 = vst [vmem:[#allocation2 + $0x1c8] sm:$0x7f] %v378
    %v381 = vld [vmem:[%s0 + $0x90] sm:$0xfe]
    %v382 = vld [vmem:[%s0 + $0x98] sm:$0xfe]
    %v385 = vrot.slane %v381, 1
    %v386 = vrot.slane %v382, 1
    %389 = vst [vmem:[#allocation2 + $0x1d0] sm:$0x7f] %v385
    %390 = vst [vmem:[#allocation2 + $0x1d8] sm:$0x7f] %v386
    %v391 = vld [vmem:[%s0 + $0xa0] sm:$0x7f]
    %v392 = vld [vmem:[%s0 + $0xa8] sm:$0x7f]
    %393 = vst [vmem:[#allocation2 + $0x1e0] sm:$0x7f] %v391
    %394 = vst [vmem:[#allocation2 + $0x1e8] sm:$0x7f] %v392
    %v395 = vld [vmem:[%s0 + $0xa0] sm:$0xfe]
    %v396 = vld [vmem:[%s0 + $0xa8] sm:$0xfe]
    %v399 = vrot.slane %v395, 1
    %v400 = vrot.slane %v396, 1
    %403 = vst [vmem:[#allocation2 + $0x1f0] sm:$0x7f] %v399
    %404 = vst [vmem:[#allocation2 + $0x1f8] sm:$0x7f] %v400
    %v405 = vld [vmem:[%s0 + $0xa0] sm:$0x7f]
    %v406 = vld [vmem:[%s0 + $0xa8] sm:$0x7f]
    %v409 = vrot.slane %v405, 1
    %v410 = vrot.slane %v406, 1
    %413 = vst [vmem:[#allocation2 + $0x1c0] sm:$0x80] %v409
    %414 = vst [vmem:[#allocation2 + $0x1c8] sm:$0x80] %v410
    %415 = vst [vmem:[#allocation2 + $0x200] sm:$0x3f] %v409
    %416 = vst [vmem:[#allocation2 + $0x208] sm:$0x3f] %v410
    %v417 = vld [vmem:[%s0 + $0xa0] sm:$0xfe]
    %v418 = vld [vmem:[%s0 + $0xa8] sm:$0xfe]
    %v421 = vrot.slane %v417, 2
    %v422 = vrot.slane %v418, 2
    %425 = vst [vmem:[#allocation2 + $0x1d0] sm:$0x80] %v421
    %426 = vst [vmem:[#allocation2 + $0x1d8] sm:$0x80] %v422
    %427 = vst [vmem:[#allocation2 + $0x210] sm:$0x3f] %v421
    %428 = vst [vmem:[#allocation2 + $0x218] sm:$0x3f] %v422
    %v429 = vld [vmem:[%s0 + $0xb0] sm:$0x7f]
    %v430 = vld [vmem:[%s0 + $0xb8] sm:$0x7f]
    %v433 = vrot.slane %v429, 1
    %v434 = vrot.slane %v430, 1
    %437 = vst [vmem:[#allocation2 + $0x1e0] sm:$0x80] %v433
    %438 = vst [vmem:[#allocation2 + $0x1e8] sm:$0x80] %v434
    %439 = vst [vmem:[#allocation2 + $0x220] sm:$0x3f] %v433
    %440 = vst [vmem:[#allocation2 + $0x228] sm:$0x3f] %v434
    %v441 = vld [vmem:[%s0 + $0xb0] sm:$0xfe]
    %v442 = vld [vmem:[%s0 + $0xb8] sm:$0xfe]
    %v445 = vrot.slane %v441, 2
    %v446 = vrot.slane %v442, 2
    %449 = vst [vmem:[#allocation2 + $0x1f0] sm:$0x80] %v445
    %450 = vst [vmem:[#allocation2 + $0x1f8] sm:$0x80] %v446
    %451 = vst [vmem:[#allocation2 + $0x230] sm:$0x3f] %v445
    %452 = vst [vmem:[#allocation2 + $0x238] sm:$0x3f] %v446
    %v453 = vld [vmem:[%s0 + $0xb0] sm:$0x7f]
    %v454 = vld [vmem:[%s0 + $0xb8] sm:$0x7f]
    %v457 = vrot.slane %v453, 2
    %v458 = vrot.slane %v454, 2
    %461 = vst [vmem:[#allocation2 + $0x200] sm:$0xc0] %v457
    %462 = vst [vmem:[#allocation2 + $0x208] sm:$0xc0] %v458
    %463 = vst [vmem:[#allocation2 + $0x240] sm:$0x1f] %v457
    %464 = vst [vmem:[#allocation2 + $0x248] sm:$0x1f] %v458
    %v465 = vld [vmem:[%s0 + $0xb0] sm:$0xfe]
    %v466 = vld [vmem:[%s0 + $0xb8] sm:$0xfe]
    %v469 = vrot.slane %v465, 3
    %v470 = vrot.slane %v466, 3
    %473 = vst [vmem:[#allocation2 + $0x210] sm:$0xc0] %v469
    %474 = vst [vmem:[#allocation2 + $0x218] sm:$0xc0] %v470
    %475 = vst [vmem:[#allocation2 + $0x250] sm:$0x1f] %v469
    %476 = vst [vmem:[#allocation2 + $0x258] sm:$0x1f] %v470
    %v477 = vld [vmem:[%s0 + $0xc0] sm:$0x7f]
    %v478 = vld [vmem:[%s0 + $0xc8] sm:$0x7f]
    %v481 = vrot.slane %v477, 2
    %v482 = vrot.slane %v478, 2
    %485 = vst [vmem:[#allocation2 + $0x220] sm:$0xc0] %v481
    %486 = vst [vmem:[#allocation2 + $0x228] sm:$0xc0] %v482
    %487 = vst [vmem:[#allocation2 + $0x260] sm:$0x1f] %v481
    %488 = vst [vmem:[#allocation2 + $0x268] sm:$0x1f] %v482
    %v489 = vld [vmem:[%s0 + $0xc0] sm:$0xfe]
    %v490 = vld [vmem:[%s0 + $0xc8] sm:$0xfe]
    %v493 = vrot.slane %v489, 3
    %v494 = vrot.slane %v490, 3
    %497 = vst [vmem:[#allocation2 + $0x230] sm:$0xc0] %v493
    %498 = vst [vmem:[#allocation2 + $0x238] sm:$0xc0] %v494
    %499 = vst [vmem:[#allocation2 + $0x270] sm:$0x1f] %v493
    %500 = vst [vmem:[#allocation2 + $0x278] sm:$0x1f] %v494
    %v501 = vld [vmem:[%s0 + $0xc0] sm:$0x7f]
    %v502 = vld [vmem:[%s0 + $0xc8] sm:$0x7f]
    %v505 = vrot.slane %v501, 3
    %v506 = vrot.slane %v502, 3
    %509 = vst [vmem:[#allocation2 + $0x240] sm:$0xe0] %v505
    %510 = vst [vmem:[#allocation2 + $0x248] sm:$0xe0] %v506
    %511 = vst [vmem:[#allocation2 + $0x280] sm:$0xf] %v505
    %512 = vst [vmem:[#allocation2 + $0x288] sm:$0xf] %v506
    %v513 = vld [vmem:[%s0 + $0xc0] sm:$0xfe]
    %v514 = vld [vmem:[%s0 + $0xc8] sm:$0xfe]
    %v517 = vrot.slane %v513, 4
    %v518 = vrot.slane %v514, 4
    %521 = vst [vmem:[#allocation2 + $0x250] sm:$0xe0] %v517
    %522 = vst [vmem:[#allocation2 + $0x258] sm:$0xe0] %v518
    %523 = vst [vmem:[#allocation2 + $0x290] sm:$0xf] %v517
    %524 = vst [vmem:[#allocation2 + $0x298] sm:$0xf] %v518
    %v525 = vld [vmem:[%s0 + $0xd0] sm:$0x7f]
    %v526 = vld [vmem:[%s0 + $0xd8] sm:$0x7f]
    %v529 = vrot.slane %v525, 3
    %v530 = vrot.slane %v526, 3
    %533 = vst [vmem:[#allocation2 + $0x260] sm:$0xe0] %v529
    %534 = vst [vmem:[#allocation2 + $0x268] sm:$0xe0] %v530
    %535 = vst [vmem:[#allocation2 + $0x2a0] sm:$0xf] %v529
    %536 = vst [vmem:[#allocation2 + $0x2a8] sm:$0xf] %v530
    %v537 = vld [vmem:[%s0 + $0xd0] sm:$0xfe]
    %v538 = vld [vmem:[%s0 + $0xd8] sm:$0xfe]
    %v541 = vrot.slane %v537, 4
    %v542 = vrot.slane %v538, 4
    %545 = vst [vmem:[#allocation2 + $0x270] sm:$0xe0] %v541
    %546 = vst [vmem:[#allocation2 + $0x278] sm:$0xe0] %v542
    %547 = vst [vmem:[#allocation2 + $0x2b0] sm:$0xf] %v541
    %548 = vst [vmem:[#allocation2 + $0x2b8] sm:$0xf] %v542
    %v549 = vld [vmem:[%s0 + $0xd0] sm:$0x7f]
    %v550 = vld [vmem:[%s0 + $0xd8] sm:$0x7f]
    %v553 = vrot.slane %v549, 4
    %v554 = vrot.slane %v550, 4
    %557 = vst [vmem:[#allocation2 + $0x280] sm:$0xf0] %v553
    %558 = vst [vmem:[#allocation2 + $0x288] sm:$0xf0] %v554
    %559 = vst [vmem:[#allocation2 + $0x2c0] sm:$0x7] %v553
    %560 = vst [vmem:[#allocation2 + $0x2c8] sm:$0x7] %v554
    %v561 = vld [vmem:[%s0 + $0xd0] sm:$0xfe]
    %v562 = vld [vmem:[%s0 + $0xd8] sm:$0xfe]
    %v565 = vrot.slane %v561, 5
    %v566 = vrot.slane %v562, 5
    %569 = vst [vmem:[#allocation2 + $0x290] sm:$0xf0] %v565
    %570 = vst [vmem:[#allocation2 + $0x298] sm:$0xf0] %v566
    %571 = vst [vmem:[#allocation2 + $0x2d0] sm:$0x7] %v565
    %572 = vst [vmem:[#allocation2 + $0x2d8] sm:$0x7] %v566
    %v573 = vld [vmem:[%s0 + $0xe0] sm:$0x7f]
    %v574 = vld [vmem:[%s0 + $0xe8] sm:$0x7f]
    %v577 = vrot.slane %v573, 4
    %v578 = vrot.slane %v574, 4
    %581 = vst [vmem:[#allocation2 + $0x2a0] sm:$0xf0] %v577
    %582 = vst [vmem:[#allocation2 + $0x2a8] sm:$0xf0] %v578
    %583 = vst [vmem:[#allocation2 + $0x2e0] sm:$0x7] %v577
    %584 = vst [vmem:[#allocation2 + $0x2e8] sm:$0x7] %v578
    %v585 = vld [vmem:[%s0 + $0xe0] sm:$0xfe]
    %v586 = vld [vmem:[%s0 + $0xe8] sm:$0xfe]
    %v589 = vrot.slane %v585, 5
    %v590 = vrot.slane %v586, 5
    %593 = vst [vmem:[#allocation2 + $0x2b0] sm:$0xf0] %v589
    %594 = vst [vmem:[#allocation2 + $0x2b8] sm:$0xf0] %v590
    %595 = vst [vmem:[#allocation2 + $0x2f0] sm:$0x7] %v589
    %596 = vst [vmem:[#allocation2 + $0x2f8] sm:$0x7] %v590
    %v597 = vld [vmem:[%s0 + $0xe0] sm:$0x7f]
    %v598 = vld [vmem:[%s0 + $0xe8] sm:$0x7f]
    %v601 = vrot.slane %v597, 5
    %v602 = vrot.slane %v598, 5
    %605 = vst [vmem:[#allocation2 + $0x2c0] sm:$0xf8] %v601
    %606 = vst [vmem:[#allocation2 + $0x2c8] sm:$0xf8] %v602
    %607 = vst [vmem:[#allocation2 + $0x300] sm:$0x3] %v601
    %608 = vst [vmem:[#allocation2 + $0x308] sm:$0x3] %v602
    %v609 = vld [vmem:[%s0 + $0xe0] sm:$0xfe]
    %v610 = vld [vmem:[%s0 + $0xe8] sm:$0xfe]
    %v613 = vrot.slane %v609, 6
    %v614 = vrot.slane %v610, 6
    %617 = vst [vmem:[#allocation2 + $0x2d0] sm:$0xf8] %v613
    %618 = vst [vmem:[#allocation2 + $0x2d8] sm:$0xf8] %v614
    %619 = vst [vmem:[#allocation2 + $0x310] sm:$0x3] %v613
    %620 = vst [vmem:[#allocation2 + $0x318] sm:$0x3] %v614
    %v621 = vld [vmem:[%s0 + $0xf0] sm:$0x7f]
    %v622 = vld [vmem:[%s0 + $0xf8] sm:$0x7f]
    %v625 = vrot.slane %v621, 5
    %v626 = vrot.slane %v622, 5
    %629 = vst [vmem:[#allocation2 + $0x2e0] sm:$0xf8] %v625
    %630 = vst [vmem:[#allocation2 + $0x2e8] sm:$0xf8] %v626
    %631 = vst [vmem:[#allocation2 + $0x320] sm:$0x3] %v625
    %632 = vst [vmem:[#allocation2 + $0x328] sm:$0x3] %v626
    %v633 = vld [vmem:[%s0 + $0xf0] sm:$0xfe]
    %v634 = vld [vmem:[%s0 + $0xf8] sm:$0xfe]
    %v637 = vrot.slane %v633, 6
    %v638 = vrot.slane %v634, 6
    %641 = vst [vmem:[#allocation2 + $0x2f0] sm:$0xf8] %v637
    %642 = vst [vmem:[#allocation2 + $0x2f8] sm:$0xf8] %v638
    %643 = vst [vmem:[#allocation2 + $0x330] sm:$0x3] %v637
    %644 = vst [vmem:[#allocation2 + $0x338] sm:$0x3] %v638
    %v645 = vld [vmem:[#allocation2] sm:$0xff]
    %v646 = vld [vmem:[#allocation2 + $0x8] sm:$0xff]
    %v647 = vld [vmem:[#allocation2 + $0x10] sm:$0xff]
    %v648 = vld [vmem:[#allocation2 + $0x18] sm:$0xff]
    %v649 = vld [vmem:[#allocation2 + $0x20] sm:$0xff]
    %v650 = vld [vmem:[#allocation2 + $0x28] sm:$0xff]
    %v651 = vld [vmem:[#allocation2 + $0x30] sm:$0xff]
    %v652 = vld [vmem:[#allocation2 + $0x38] sm:$0xff]
    %v653 = vld [vmem:[#allocation2 + $0x40] sm:$0xff]
    %v654 = vld [vmem:[#allocation2 + $0x48] sm:$0xff]
    %v655 = vld [vmem:[#allocation2 + $0x50] sm:$0xff]
    %v656 = vld [vmem:[#allocation2 + $0x58] sm:$0xff]
    %v657 = vld [vmem:[#allocation2 + $0x60] sm:$0xff]
    %v658 = vld [vmem:[#allocation2 + $0x68] sm:$0xff]
    %v659 = vld [vmem:[#allocation2 + $0x70] sm:$0xff]
    %v660 = vld [vmem:[#allocation2 + $0x78] sm:$0xff]
    %v661 = vld [vmem:[#allocation2 + $0x80] sm:$0xff]
    %v662 = vld [vmem:[#allocation2 + $0x88] sm:$0xff]
    %v663 = vld [vmem:[#allocation2 + $0x90] sm:$0xff]
    %v664 = vld [vmem:[#allocation2 + $0x98] sm:$0xff]
    %v665 = vld [vmem:[#allocation2 + $0xa0] sm:$0xff]
    %v666 = vld [vmem:[#allocation2 + $0xa8] sm:$0xff]
    %v667 = vld [vmem:[#allocation2 + $0xb0] sm:$0xff]
    %v668 = vld [vmem:[#allocation2 + $0xb8] sm:$0xff]
    %v669 = vld [vmem:[#allocation2 + $0xc0] sm:$0xff]
    %v670 = vld [vmem:[#allocation2 + $0xc8] sm:$0xff]
    %v671 = vld [vmem:[#allocation2 + $0xd0] sm:$0xff]
    %v672 = vld [vmem:[#allocation2 + $0xd8] sm:$0xff]
    %v673 = vld [vmem:[#allocation2 + $0xe0] sm:$0xff]
    %v674 = vld [vmem:[#allocation2 + $0xe8] sm:$0xff]
    %v675 = vld [vmem:[#allocation2 + $0xf0] sm:$0xff]
    %v676 = vld [vmem:[#allocation2 + $0xf8] sm:$0xff]
    %v677 = vld [vmem:[#allocation2 + $0x100] sm:$0xff]
    %v678 = vld [vmem:[#allocation2 + $0x108] sm:$0xff]
    %v679 = vld [vmem:[#allocation2 + $0x110] sm:$0xff]
    %v680 = vld [vmem:[#allocation2 + $0x118] sm:$0xff]
    %v681 = vld [vmem:[#allocation2 + $0x120] sm:$0xff]
    %v682 = vld [vmem:[#allocation2 + $0x128] sm:$0xff]
    %v683 = vld [vmem:[#allocation2 + $0x130] sm:$0xff]
    %v684 = vld [vmem:[#allocation2 + $0x138] sm:$0xff]
    %v685 = vld [vmem:[#allocation2 + $0x140] sm:$0xff]
    %v686 = vld [vmem:[#allocation2 + $0x148] sm:$0xff]
    %v687 = vld [vmem:[#allocation2 + $0x150] sm:$0xff]
    %v688 = vld [vmem:[#allocation2 + $0x158] sm:$0xff]
    %v689 = vld [vmem:[#allocation2 + $0x160] sm:$0xff]
    %v690 = vld [vmem:[#allocation2 + $0x168] sm:$0xff]
    %v691 = vld [vmem:[#allocation2 + $0x170] sm:$0xff]
    %v692 = vld [vmem:[#allocation2 + $0x178] sm:$0xff]
    %v693 = vld [vmem:[#allocation2 + $0x180] sm:$0xff]
    %v694 = vld [vmem:[#allocation2 + $0x188] sm:$0xff]
    %v695 = vld [vmem:[#allocation2 + $0x190] sm:$0xff]
    %v696 = vld [vmem:[#allocation2 + $0x198] sm:$0xff]
    %v697 = vld [vmem:[#allocation2 + $0x1a0] sm:$0xff]
    %v698 = vld [vmem:[#allocation2 + $0x1a8] sm:$0xff]
    %v699 = vld [vmem:[#allocation2 + $0x1b0] sm:$0xff]
    %v700 = vld [vmem:[#allocation2 + $0x1b8] sm:$0xff]
    %v701 = vld [vmem:[#allocation2 + $0x1c0] sm:$0xff]
    %v702 = vld [vmem:[#allocation2 + $0x1c8] sm:$0xff]
    %v703 = vld [vmem:[#allocation2 + $0x1d0] sm:$0xff]
    %v704 = vld [vmem:[#allocation2 + $0x1d8] sm:$0xff]
    %v705 = vld [vmem:[#allocation2 + $0x1e0] sm:$0xff]
    %v706 = vld [vmem:[#allocation2 + $0x1e8] sm:$0xff]
    %v707 = vld [vmem:[#allocation2 + $0x1f0] sm:$0xff]
    %v708 = vld [vmem:[#allocation2 + $0x1f8] sm:$0xff]
    %v709 = vld [vmem:[#allocation2 + $0x200] sm:$0xff]
    %v710 = vld [vmem:[#allocation2 + $0x208] sm:$0xff]
    %v711 = vld [vmem:[#allocation2 + $0x210] sm:$0xff]
    %v712 = vld [vmem:[#allocation2 + $0x218] sm:$0xff]
    %v713 = vld [vmem:[#allocation2 + $0x220] sm:$0xff]
    %v714 = vld [vmem:[#allocation2 + $0x228] sm:$0xff]
    %v715 = vld [vmem:[#allocation2 + $0x230] sm:$0xff]
    %v716 = vld [vmem:[#allocation2 + $0x238] sm:$0xff]
    %v717 = vld [vmem:[#allocation2 + $0x240] sm:$0xff]
    %v718 = vld [vmem:[#allocation2 + $0x248] sm:$0xff]
    %v719 = vld [vmem:[#allocation2 + $0x250] sm:$0xff]
    %v720 = vld [vmem:[#allocation2 + $0x258] sm:$0xff]
    %v721 = vld [vmem:[#allocation2 + $0x260] sm:$0xff]
    %v722 = vld [vmem:[#allocation2 + $0x268] sm:$0xff]
    %v723 = vld [vmem:[#allocation2 + $0x270] sm:$0xff]
    %v724 = vld [vmem:[#allocation2 + $0x278] sm:$0xff]
    %v725 = vld [vmem:[#allocation2 + $0x280] sm:$0xff]
    %v726 = vld [vmem:[#allocation2 + $0x288] sm:$0xff]
    %v727 = vld [vmem:[#allocation2 + $0x290] sm:$0xff]
    %v728 = vld [vmem:[#allocation2 + $0x298] sm:$0xff]
    %v729 = vld [vmem:[#allocation2 + $0x2a0] sm:$0xff]
    %v730 = vld [vmem:[#allocation2 + $0x2a8] sm:$0xff]
    %v731 = vld [vmem:[#allocation2 + $0x2b0] sm:$0xff]
    %v732 = vld [vmem:[#allocation2 + $0x2b8] sm:$0xff]
    %v733 = vld [vmem:[#allocation2 + $0x2c0] sm:$0xff]
    %v734 = vld [vmem:[#allocation2 + $0x2c8] sm:$0xff]
    %v735 = vld [vmem:[#allocation2 + $0x2d0] sm:$0xff]
    %v736 = vld [vmem:[#allocation2 + $0x2d8] sm:$0xff]
    %v737 = vld [vmem:[#allocation2 + $0x2e0] sm:$0xff]
    %v738 = vld [vmem:[#allocation2 + $0x2e8] sm:$0xff]
    %v739 = vld [vmem:[#allocation2 + $0x2f0] sm:$0xff]
    %v740 = vld [vmem:[#allocation2 + $0x2f8] sm:$0xff]
    %v741 = vld [vmem:[#allocation2 + $0x300] sm:$0x3]
    %v742 = vld [vmem:[#allocation2 + $0x308] sm:$0x3]
    %v743 = vld [vmem:[#allocation2 + $0x310] sm:$0x3]
    %v744 = vld [vmem:[#allocation2 + $0x318] sm:$0x3]
    %v745 = vld [vmem:[#allocation2 + $0x320] sm:$0x3]
    %v746 = vld [vmem:[#allocation2 + $0x328] sm:$0x3]
    %v747 = vld [vmem:[#allocation2 + $0x330] sm:$0x3]
    %v748 = vld [vmem:[#allocation2 + $0x338] sm:$0x3]
    %v749 = vld [vmem:[%s1] sm:$0xff]
    %v750 = vld [vmem:[%s1 + $0x8] sm:$0xff]
    %v751 = vld [vmem:[%s1 + $0x10] sm:$0xff]
    %v752 = vld [vmem:[%s1 + $0x18] sm:$0xff]
    %v753 = vld [vmem:[%s1 + $0x20] sm:$0xff]
    %v754 = vld [vmem:[%s1 + $0x28] sm:$0xff]
    %v755 = vld [vmem:[%s1 + $0x30] sm:$0xff]
    %v756 = vld [vmem:[%s1 + $0x38] sm:$0xff]
    %v757 = vld [vmem:[%s1 + $0x40] sm:$0xff]
    %v758 = vld [vmem:[%s1 + $0x48] sm:$0xff]
    %v759 = vld [vmem:[%s1 + $0x50] sm:$0xff]
    %v760 = vld [vmem:[%s1 + $0x58] sm:$0xff]
    %v761 = vld [vmem:[%s1 + $0x60] sm:$0xff]
    %v762 = vld [vmem:[%s1 + $0x68] sm:$0xff]
    %v763 = vld [vmem:[%s1 + $0x70] sm:$0xff]
    %v764 = vld [vmem:[%s1 + $0x78] sm:$0xff]
    %v765 = vld [vmem:[%s1 + $0x80] sm:$0xff]
    %v766 = vld [vmem:[%s1 + $0x88] sm:$0xff]
    %v767 = vld [vmem:[%s1 + $0x90] sm:$0xff]
    %v768 = vld [vmem:[%s1 + $0x98] sm:$0xff]
    %v769 = vld [vmem:[%s1 + $0xa0] sm:$0xff]
    %v770 = vld [vmem:[%s1 + $0xa8] sm:$0xff]
    %v771 = vld [vmem:[%s1 + $0xb0] sm:$0xff]
    %v772 = vld [vmem:[%s1 + $0xb8] sm:$0xff]
    %v773 = vld [vmem:[%s1 + $0xc0] sm:$0xff]
    %v774 = vld [vmem:[%s1 + $0xc8] sm:$0xff]
    %v775 = vld [vmem:[%s1 + $0xd0] sm:$0xff]
    %v776 = vld [vmem:[%s1 + $0xd8] sm:$0xff]
    %v777 = vld [vmem:[%s1 + $0xe0] sm:$0xff]
    %v778 = vld [vmem:[%s1 + $0xe8] sm:$0xff]
    %v779 = vld [vmem:[%s1 + $0xf0] sm:$0xff]
    %v780 = vld [vmem:[%s1 + $0xf8] sm:$0xff]
    %v781 = vld [vmem:[%s1 + $0x100] sm:$0xff]
    %v782 = vld [vmem:[%s1 + $0x108] sm:$0xff]
    %v783 = vld [vmem:[%s1 + $0x110] sm:$0xff]
    %v784 = vld [vmem:[%s1 + $0x118] sm:$0xff]
    %v785 = vld [vmem:[%s1 + $0x120] sm:$0xff]
    %v786 = vld [vmem:[%s1 + $0x128] sm:$0xff]
    %v787 = vld [vmem:[%s1 + $0x130] sm:$0xff]
    %v788 = vld [vmem:[%s1 + $0x138] sm:$0xff]
    %v789 = vld [vmem:[%s1 + $0x140] sm:$0xff]
    %v790 = vld [vmem:[%s1 + $0x148] sm:$0xff]
    %v791 = vld [vmem:[%s1 + $0x150] sm:$0xff]
    %v792 = vld [vmem:[%s1 + $0x158] sm:$0xff]
    %v793 = vld [vmem:[%s1 + $0x160] sm:$0xff]
    %v794 = vld [vmem:[%s1 + $0x168] sm:$0xff]
    %v795 = vld [vmem:[%s1 + $0x170] sm:$0xff]
    %v796 = vld [vmem:[%s1 + $0x178] sm:$0xff]
    %v797 = vld [vmem:[%s1 + $0x180] sm:$0xff]
    %v798 = vld [vmem:[%s1 + $0x188] sm:$0xff]
    %v799 = vld [vmem:[%s1 + $0x190] sm:$0xff]
    %v800 = vld [vmem:[%s1 + $0x198] sm:$0xff]
    %v801 = vld [vmem:[%s1 + $0x1a0] sm:$0xff]
    %v802 = vld [vmem:[%s1 + $0x1a8] sm:$0xff]
    %v803 = vld [vmem:[%s1 + $0x1b0] sm:$0xff]
    %v804 = vld [vmem:[%s1 + $0x1b8] sm:$0xff]
    %v805 = vld [vmem:[%s1 + $0x1c0] sm:$0xff]
    %v806 = vld [vmem:[%s1 + $0x1c8] sm:$0xff]
    %v807 = vld [vmem:[%s1 + $0x1d0] sm:$0xff]
    %v808 = vld [vmem:[%s1 + $0x1d8] sm:$0xff]
    %v809 = vld [vmem:[%s1 + $0x1e0] sm:$0xff]
    %v810 = vld [vmem:[%s1 + $0x1e8] sm:$0xff]
    %v811 = vld [vmem:[%s1 + $0x1f0] sm:$0xff]
    %v812 = vld [vmem:[%s1 + $0x1f8] sm:$0xff]
    %v813 = vld [vmem:[%s1 + $0x200] sm:$0xff]
    %v814 = vld [vmem:[%s1 + $0x208] sm:$0xff]
    %v815 = vld [vmem:[%s1 + $0x210] sm:$0xff]
    %v816 = vld [vmem:[%s1 + $0x218] sm:$0xff]
    %v817 = vld [vmem:[%s1 + $0x220] sm:$0xff]
    %v818 = vld [vmem:[%s1 + $0x228] sm:$0xff]
    %v819 = vld [vmem:[%s1 + $0x230] sm:$0xff]
    %v820 = vld [vmem:[%s1 + $0x238] sm:$0xff]
    %v821 = vld [vmem:[%s1 + $0x240] sm:$0xff]
    %v822 = vld [vmem:[%s1 + $0x248] sm:$0xff]
    %v823 = vld [vmem:[%s1 + $0x250] sm:$0xff]
    %v824 = vld [vmem:[%s1 + $0x258] sm:$0xff]
    %v825 = vld [vmem:[%s1 + $0x260] sm:$0xff]
    %v826 = vld [vmem:[%s1 + $0x268] sm:$0xff]
    %v827 = vld [vmem:[%s1 + $0x270] sm:$0xff]
    %v828 = vld [vmem:[%s1 + $0x278] sm:$0xff]
    %v829 = vld [vmem:[%s1 + $0x280] sm:$0xff]
    %v830 = vld [vmem:[%s1 + $0x288] sm:$0xff]
    %v831 = vld [vmem:[%s1 + $0x290] sm:$0xff]
    %v832 = vld [vmem:[%s1 + $0x298] sm:$0xff]
    %v833 = vld [vmem:[%s1 + $0x2a0] sm:$0xff]
    %v834 = vld [vmem:[%s1 + $0x2a8] sm:$0xff]
    %v835 = vld [vmem:[%s1 + $0x2b0] sm:$0xff]
    %v836 = vld [vmem:[%s1 + $0x2b8] sm:$0xff]
    %v837 = vld [vmem:[%s1 + $0x2c0] sm:$0xff]
    %v838 = vld [vmem:[%s1 + $0x2c8] sm:$0xff]
    %v839 = vld [vmem:[%s1 + $0x2d0] sm:$0xff]
    %v840 = vld [vmem:[%s1 + $0x2d8] sm:$0xff]
    %v841 = vld [vmem:[%s1 + $0x2e0] sm:$0xff]
    %v842 = vld [vmem:[%s1 + $0x2e8] sm:$0xff]
    %v843 = vld [vmem:[%s1 + $0x2f0] sm:$0xff]
    %v844 = vld [vmem:[%s1 + $0x2f8] sm:$0xff]
    %v845 = vld [vmem:[%s1 + $0x300] sm:$0xff]
    %v846 = vld [vmem:[%s1 + $0x308] sm:$0xff]
    %v847 = vld [vmem:[%s1 + $0x310] sm:$0xff]
    %v848 = vld [vmem:[%s1 + $0x318] sm:$0xff]
    %v849 = vld [vmem:[%s1 + $0x320] sm:$0xff]
    %v850 = vld [vmem:[%s1 + $0x328] sm:$0xff]
    %v851 = vld [vmem:[%s1 + $0x330] sm:$0xff]
    %v852 = vld [vmem:[%s1 + $0x338] sm:$0xff]
    %v853 = vld [vmem:[%s1 + $0x340] sm:$0xff]
    %v854 = vld [vmem:[%s1 + $0x348] sm:$0xff]
    %v855 = vld [vmem:[%s1 + $0x350] sm:$0xff]
    %v856 = vld [vmem:[%s1 + $0x358] sm:$0xff]
    %v857 = vld [vmem:[%s1 + $0x360] sm:$0xff]
    %v858 = vld [vmem:[%s1 + $0x368] sm:$0xff]
    %v859 = vld [vmem:[%s1 + $0x370] sm:$0xff]
    %v860 = vld [vmem:[%s1 + $0x378] sm:$0xff]
    %v861 = vld [vmem:[%s1 + $0x380] sm:$0xff]
    %v862 = vld [vmem:[%s1 + $0x388] sm:$0xff]
    %v863 = vld [vmem:[%s1 + $0x390] sm:$0xff]
    %v864 = vld [vmem:[%s1 + $0x398] sm:$0xff]
    %v865 = vld [vmem:[%s1 + $0x3a0] sm:$0xff]
    %v866 = vld [vmem:[%s1 + $0x3a8] sm:$0xff]
    %v867 = vld [vmem:[%s1 + $0x3b0] sm:$0xff]
    %v868 = vld [vmem:[%s1 + $0x3b8] sm:$0xff]
    %v869 = vld [vmem:[%s1 + $0x3c0] sm:$0xff]
    %v870 = vld [vmem:[%s1 + $0x3c8] sm:$0xff]
    %v871 = vld [vmem:[%s1 + $0x3d0] sm:$0xff]
    %v872 = vld [vmem:[%s1 + $0x3d8] sm:$0xff]
    %v873 = vld [vmem:[%s1 + $0x3e0] sm:$0xff]
    %v874 = vld [vmem:[%s1 + $0x3e8] sm:$0xff]
    %v875 = vld [vmem:[%s1 + $0x3f0] sm:$0xff]
    %v876 = vld [vmem:[%s1 + $0x3f8] sm:$0xff]
    %877 = vmatprep.subr.mxu0 0.0
    %878 = vmatpush1.msra.mxu0 %v764
    %879 = vmatprep.subr.mxu0 0.0
    %880 = vmatpush1.msra.mxu0 %v763
    %881 = vmatprep.subr.mxu0 0.0
    %882 = vmatpush1.msra.mxu0 %v762
    %883 = vmatprep.subr.mxu0 0.0
    %884 = vmatpush1.msra.mxu0 %v761
    %885 = vmatprep.subr.mxu0 0.0
    %886 = vmatpush1.msra.mxu0 %v760
    %887 = vmatprep.subr.mxu0 0.0
    %888 = vmatpush1.msra.mxu0 %v759
    %889 = vmatprep.subr.mxu0 0.0
    %890 = vmatpush1.msra.mxu0 %v758
    %891 = vmatprep.subr.mxu0 0.0
    %892 = vmatpush1.msra.mxu0 %v757
    %893 = vmatprep.subr.mxu0 0.0
    %894 = vmatpush1.msra.mxu0 %v756
    %895 = vmatprep.subr.mxu0 0.0
    %896 = vmatpush1.msra.mxu0 %v755
    %897 = vmatprep.subr.mxu0 0.0
    %898 = vmatpush1.msra.mxu0 %v754
    %899 = vmatprep.subr.mxu0 0.0
    %900 = vmatpush1.msra.mxu0 %v753
    %901 = vmatprep.subr.mxu0 0.0
    %902 = vmatpush1.msra.mxu0 %v752
    %903 = vmatprep.subr.mxu0 0.0
    %904 = vmatpush1.msra.mxu0 %v751
    %905 = vmatprep.subr.mxu0 0.0
    %906 = vmatpush1.msra.mxu0 %v750
    %907 = vmatprep.subr.mxu0 0.0
    %908 = vmatpush1.msra.mxu0 %v749
    %909 = vmatprep.subr.mxu0 0.0
    %910 = vmatpush2.msra.mxu0 %v780
    %911 = vmatprep.subr.mxu0 0.0
    %912 = vmatpush2.msra.mxu0 %v779
    %913 = vmatprep.subr.mxu0 0.0
    %914 = vmatpush2.msra.mxu0 %v778
    %915 = vmatprep.subr.mxu0 0.0
    %916 = vmatpush2.msra.mxu0 %v777
    %917 = vmatprep.subr.mxu0 0.0
    %918 = vmatpush2.msra.mxu0 %v776
    %919 = vmatprep.subr.mxu0 0.0
    %920 = vmatpush2.msra.mxu0 %v775
    %921 = vmatprep.subr.mxu0 0.0
    %922 = vmatpush2.msra.mxu0 %v774
    %923 = vmatprep.subr.mxu0 0.0
    %924 = vmatpush2.msra.mxu0 %v773
    %925 = vmatprep.subr.mxu0 0.0
    %926 = vmatpush2.msra.mxu0 %v772
    %927 = vmatprep.subr.mxu0 0.0
    %928 = vmatpush2.msra.mxu0 %v771
    %929 = vmatprep.subr.mxu0 0.0
    %930 = vmatpush2.msra.mxu0 %v770
    %931 = vmatprep.subr.mxu0 0.0
    %932 = vmatpush2.msra.mxu0 %v769
    %933 = vmatprep.subr.mxu0 0.0
    %934 = vmatpush2.msra.mxu0 %v768
    %935 = vmatprep.subr.mxu0 0.0
    %936 = vmatpush2.msra.mxu0 %v767
    %937 = vmatprep.subr.mxu0 0.0
    %938 = vmatpush2.msra.mxu0 %v766
    %939 = vmatprep.subr.mxu0 0.0
    %940 = vmatpush2.msra.mxu0 %v765
    %941 = vmatprep.mubr.f32.mxu0 %v646
    %942 = vmatmul.mubr.f32.gmra.mxu0 %v645
    %v943 = vpop.f32.mrf.mxu0
    %v944 = vadd.f32 0.0, %v943
    %v945 = vpop.f32.mrf.mxu0
    %946 = vmatprep.mubr.f32.mxu0 %v654
    %947 = vmatmul.mubr.f32.gmra.mxu0 %v653
    %v948 = vpop.f32.mrf.mxu0
    %v949 = vadd.f32 0.0, %v948
    %v950 = vpop.f32.mrf.mxu0
    %951 = vmatprep.mubr.f32.mxu0 %v662
    %952 = vmatmul.mubr.f32.gmra.mxu0 %v661
    %v953 = vpop.f32.mrf.mxu0
    %v954 = vadd.f32 0.0, %v953
    %v955 = vpop.f32.mrf.mxu0
    %956 = vmatprep.mubr.f32.mxu0 %v670
    %957 = vmatmul.mubr.f32.gmra.mxu0 %v669
    %v958 = vpop.f32.mrf.mxu0
    %v959 = vadd.f32 0.0, %v958
    %v960 = vpop.f32.mrf.mxu0
    %961 = vmatprep.mubr.f32.mxu0 %v678
    %962 = vmatmul.mubr.f32.gmra.mxu0 %v677
    %v963 = vpop.f32.mrf.mxu0
    %v964 = vadd.f32 0.0, %v963
    %v965 = vpop.f32.mrf.mxu0
    %966 = vmatprep.mubr.f32.mxu0 %v686
    %967 = vmatmul.mubr.f32.gmra.mxu0 %v685
    %v968 = vpop.f32.mrf.mxu0
    %v969 = vadd.f32 0.0, %v968
    %v970 = vpop.f32.mrf.mxu0
    %971 = vmatprep.mubr.f32.mxu0 %v694
    %972 = vmatmul.mubr.f32.gmra.mxu0 %v693
    %v973 = vpop.f32.mrf.mxu0
    %v974 = vadd.f32 0.0, %v973
    %v975 = vpop.f32.mrf.mxu0
    %976 = vmatprep.mubr.f32.mxu0 %v702
    %977 = vmatmul.mubr.f32.gmra.mxu0 %v701
    %v978 = vpop.f32.mrf.mxu0
    %v979 = vadd.f32 0.0, %v978
    %v980 = vpop.f32.mrf.mxu0
    %981 = vmatprep.mubr.f32.mxu0 %v710
    %982 = vmatmul.mubr.f32.gmra.mxu0 %v709
    %v983 = vpop.f32.mrf.mxu0
    %v984 = vadd.f32 0.0, %v983
    %v985 = vpop.f32.mrf.mxu0
    %986 = vmatprep.mubr.f32.mxu0 %v718
    %987 = vmatmul.mubr.f32.gmra.mxu0 %v717
    %v988 = vpop.f32.mrf.mxu0
    %v989 = vadd.f32 0.0, %v988
    %v990 = vpop.f32.mrf.mxu0
    %991 = vmatprep.mubr.f32.mxu0 %v726
    %992 = vmatmul.mubr.f32.gmra.mxu0 %v725
    %v993 = vpop.f32.mrf.mxu0
    %v994 = vadd.f32 0.0, %v993
    %v995 = vpop.f32.mrf.mxu0
    %996 = vmatprep.mubr.f32.mxu0 %v734
    %997 = vmatmul.mubr.f32.gmra.mxu0 %v733
    %v998 = vpop.f32.mrf.mxu0
    %v999 = vadd.f32 0.0, %v998
    %v1000 = vpop.f32.mrf.mxu0
    %1001 = vmatprep.mubr.f32.mxu0 %v742
    %1002 = vmatmul.mubr.f32.gmra.mxu0 %v741
    %v1003 = vpop.f32.mrf.mxu0
    %v1004 = vadd.f32 0.0, %v1003
    %v1005 = vpop.f32.mrf.mxu0
    %1006 = vdwg.mxu0
    %1007 = vmatprep.subr.mxu0 0.0
    %1008 = vmatpush1.msra.mxu0 %v796
    %1009 = vmatprep.subr.mxu0 0.0
    %1010 = vmatpush1.msra.mxu0 %v795
    %1011 = vmatprep.subr.mxu0 0.0
    %1012 = vmatpush1.msra.mxu0 %v794
    %1013 = vmatprep.subr.mxu0 0.0
    %1014 = vmatpush1.msra.mxu0 %v793
    %1015 = vmatprep.subr.mxu0 0.0
    %1016 = vmatpush1.msra.mxu0 %v792
    %1017 = vmatprep.subr.mxu0 0.0
    %1018 = vmatpush1.msra.mxu0 %v791
    %1019 = vmatprep.subr.mxu0 0.0
    %1020 = vmatpush1.msra.mxu0 %v790
    %1021 = vmatprep.subr.mxu0 0.0
    %1022 = vmatpush1.msra.mxu0 %v789
    %1023 = vmatprep.subr.mxu0 0.0
    %1024 = vmatpush1.msra.mxu0 %v788
    %1025 = vmatprep.subr.mxu0 0.0
    %1026 = vmatpush1.msra.mxu0 %v787
    %1027 = vmatprep.subr.mxu0 0.0
    %1028 = vmatpush1.msra.mxu0 %v786
    %1029 = vmatprep.subr.mxu0 0.0
    %1030 = vmatpush1.msra.mxu0 %v785
    %1031 = vmatprep.subr.mxu0 0.0
    %1032 = vmatpush1.msra.mxu0 %v784
    %1033 = vmatprep.subr.mxu0 0.0
    %1034 = vmatpush1.msra.mxu0 %v783
    %1035 = vmatprep.subr.mxu0 0.0
    %1036 = vmatpush1.msra.mxu0 %v782
    %1037 = vmatprep.subr.mxu0 0.0
    %1038 = vmatpush1.msra.mxu0 %v781
    %1039 = vmatprep.subr.mxu0 0.0
    %1040 = vmatpush2.msra.mxu0 %v812
    %1041 = vmatprep.subr.mxu0 0.0
    %1042 = vmatpush2.msra.mxu0 %v811
    %1043 = vmatprep.subr.mxu0 0.0
    %1044 = vmatpush2.msra.mxu0 %v810
    %1045 = vmatprep.subr.mxu0 0.0
    %1046 = vmatpush2.msra.mxu0 %v809
    %1047 = vmatprep.subr.mxu0 0.0
    %1048 = vmatpush2.msra.mxu0 %v808
    %1049 = vmatprep.subr.mxu0 0.0
    %1050 = vmatpush2.msra.mxu0 %v807
    %1051 = vmatprep.subr.mxu0 0.0
    %1052 = vmatpush2.msra.mxu0 %v806
    %1053 = vmatprep.subr.mxu0 0.0
    %1054 = vmatpush2.msra.mxu0 %v805
    %1055 = vmatprep.subr.mxu0 0.0
    %1056 = vmatpush2.msra.mxu0 %v804
    %1057 = vmatprep.subr.mxu0 0.0
    %1058 = vmatpush2.msra.mxu0 %v803
    %1059 = vmatprep.subr.mxu0 0.0
    %1060 = vmatpush2.msra.mxu0 %v802
    %1061 = vmatprep.subr.mxu0 0.0
    %1062 = vmatpush2.msra.mxu0 %v801
    %1063 = vmatprep.subr.mxu0 0.0
    %1064 = vmatpush2.msra.mxu0 %v800
    %1065 = vmatprep.subr.mxu0 0.0
    %1066 = vmatpush2.msra.mxu0 %v799
    %1067 = vmatprep.subr.mxu0 0.0
    %1068 = vmatpush2.msra.mxu0 %v798
    %1069 = vmatprep.subr.mxu0 0.0
    %1070 = vmatpush2.msra.mxu0 %v797
    %1071 = vmatprep.mubr.f32.mxu0 %v648
    %1072 = vmatmul.mubr.f32.gmra.mxu0 %v647
    %v1073 = vpop.f32.mrf.mxu0
    %v1074 = vadd.f32 %v944, %v1073
    %v1075 = vpop.f32.mrf.mxu0
    %1076 = vmatprep.mubr.f32.mxu0 %v656
    %1077 = vmatmul.mubr.f32.gmra.mxu0 %v655
    %v1078 = vpop.f32.mrf.mxu0
    %v1079 = vadd.f32 %v949, %v1078
    %v1080 = vpop.f32.mrf.mxu0
    %1081 = vmatprep.mubr.f32.mxu0 %v664
    %1082 = vmatmul.mubr.f32.gmra.mxu0 %v663
    %v1083 = vpop.f32.mrf.mxu0
    %v1084 = vadd.f32 %v954, %v1083
    %v1085 = vpop.f32.mrf.mxu0
    %1086 = vmatprep.mubr.f32.mxu0 %v672
    %1087 = vmatmul.mubr.f32.gmra.mxu0 %v671
    %v1088 = vpop.f32.mrf.mxu0
    %v1089 = vadd.f32 %v959, %v1088
    %v1090 = vpop.f32.mrf.mxu0
    %1091 = vmatprep.mubr.f32.mxu0 %v680
    %1092 = vmatmul.mubr.f32.gmra.mxu0 %v679
    %v1093 = vpop.f32.mrf.mxu0
    %v1094 = vadd.f32 %v964, %v1093
    %v1095 = vpop.f32.mrf.mxu0
    %1096 = vmatprep.mubr.f32.mxu0 %v688
    %1097 = vmatmul.mubr.f32.gmra.mxu0 %v687
    %v1098 = vpop.f32.mrf.mxu0
    %v1099 = vadd.f32 %v969, %v1098
    %v1100 = vpop.f32.mrf.mxu0
    %1101 = vmatprep.mubr.f32.mxu0 %v696
    %1102 = vmatmul.mubr.f32.gmra.mxu0 %v695
    %v1103 = vpop.f32.mrf.mxu0
    %v1104 = vadd.f32 %v974, %v1103
    %v1105 = vpop.f32.mrf.mxu0
    %1106 = vmatprep.mubr.f32.mxu0 %v704
    %1107 = vmatmul.mubr.f32.gmra.mxu0 %v703
    %v1108 = vpop.f32.mrf.mxu0
    %v1109 = vadd.f32 %v979, %v1108
    %v1110 = vpop.f32.mrf.mxu0
    %1111 = vmatprep.mubr.f32.mxu0 %v712
    %1112 = vmatmul.mubr.f32.gmra.mxu0 %v711
    %v1113 = vpop.f32.mrf.mxu0
    %v1114 = vadd.f32 %v984, %v1113
    %v1115 = vpop.f32.mrf.mxu0
    %1116 = vmatprep.mubr.f32.mxu0 %v720
    %1117 = vmatmul.mubr.f32.gmra.mxu0 %v719
    %v1118 = vpop.f32.mrf.mxu0
    %v1119 = vadd.f32 %v989, %v1118
    %v1120 = vpop.f32.mrf.mxu0
    %1121 = vmatprep.mubr.f32.mxu0 %v728
    %1122 = vmatmul.mubr.f32.gmra.mxu0 %v727
    %v1123 = vpop.f32.mrf.mxu0
    %v1124 = vadd.f32 %v994, %v1123
    %v1125 = vpop.f32.mrf.mxu0
    %1126 = vmatprep.mubr.f32.mxu0 %v736
    %1127 = vmatmul.mubr.f32.gmra.mxu0 %v735
    %v1128 = vpop.f32.mrf.mxu0
    %v1129 = vadd.f32 %v999, %v1128
    %v1130 = vpop.f32.mrf.mxu0
    %1131 = vmatprep.mubr.f32.mxu0 %v744
    %1132 = vmatmul.mubr.f32.gmra.mxu0 %v743
    %v1133 = vpop.f32.mrf.mxu0
    %v1134 = vadd.f32 %v1004, %v1133
    %v1135 = vpop.f32.mrf.mxu0
    %1136 = vdwg.mxu0
    %1137 = vmatprep.subr.mxu0 0.0
    %1138 = vmatpush1.msra.mxu0 %v828
    %1139 = vmatprep.subr.mxu0 0.0
    %1140 = vmatpush1.msra.mxu0 %v827
    %1141 = vmatprep.subr.mxu0 0.0
    %1142 = vmatpush1.msra.mxu0 %v826
    %1143 = vmatprep.subr.mxu0 0.0
    %1144 = vmatpush1.msra.mxu0 %v825
    %1145 = vmatprep.subr.mxu0 0.0
    %1146 = vmatpush1.msra.mxu0 %v824
    %1147 = vmatprep.subr.mxu0 0.0
    %1148 = vmatpush1.msra.mxu0 %v823
    %1149 = vmatprep.subr.mxu0 0.0
    %1150 = vmatpush1.msra.mxu0 %v822
    %1151 = vmatprep.subr.mxu0 0.0
    %1152 = vmatpush1.msra.mxu0 %v821
    %1153 = vmatprep.subr.mxu0 0.0
    %1154 = vmatpush1.msra.mxu0 %v820
    %1155 = vmatprep.subr.mxu0 0.0
    %1156 = vmatpush1.msra.mxu0 %v819
    %1157 = vmatprep.subr.mxu0 0.0
    %1158 = vmatpush1.msra.mxu0 %v818
    %1159 = vmatprep.subr.mxu0 0.0
    %1160 = vmatpush1.msra.mxu0 %v817
    %1161 = vmatprep.subr.mxu0 0.0
    %1162 = vmatpush1.msra.mxu0 %v816
    %1163 = vmatprep.subr.mxu0 0.0
    %1164 = vmatpush1.msra.mxu0 %v815
    %1165 = vmatprep.subr.mxu0 0.0
    %1166 = vmatpush1.msra.mxu0 %v814
    %1167 = vmatprep.subr.mxu0 0.0
    %1168 = vmatpush1.msra.mxu0 %v813
    %1169 = vmatprep.subr.mxu0 0.0
    %1170 = vmatpush2.msra.mxu0 %v844
    %1171 = vmatprep.subr.mxu0 0.0
    %1172 = vmatpush2.msra.mxu0 %v843
    %1173 = vmatprep.subr.mxu0 0.0
    %1174 = vmatpush2.msra.mxu0 %v842
    %1175 = vmatprep.subr.mxu0 0.0
    %1176 = vmatpush2.msra.mxu0 %v841
    %1177 = vmatprep.subr.mxu0 0.0
    %1178 = vmatpush2.msra.mxu0 %v840
    %1179 = vmatprep.subr.mxu0 0.0
    %1180 = vmatpush2.msra.mxu0 %v839
    %1181 = vmatprep.subr.mxu0 0.0
    %1182 = vmatpush2.msra.mxu0 %v838
    %1183 = vmatprep.subr.mxu0 0.0
    %1184 = vmatpush2.msra.mxu0 %v837
    %1185 = vmatprep.subr.mxu0 0.0
    %1186 = vmatpush2.msra.mxu0 %v836
    %1187 = vmatprep.subr.mxu0 0.0
    %1188 = vmatpush2.msra.mxu0 %v835
    %1189 = vmatprep.subr.mxu0 0.0
    %1190 = vmatpush2.msra.mxu0 %v834
    %1191 = vmatprep.subr.mxu0 0.0
    %1192 = vmatpush2.msra.mxu0 %v833
    %1193 = vmatprep.subr.mxu0 0.0
    %1194 = vmatpush2.msra.mxu0 %v832
    %1195 = vmatprep.subr.mxu0 0.0
    %1196 = vmatpush2.msra.mxu0 %v831
    %1197 = vmatprep.subr.mxu0 0.0
    %1198 = vmatpush2.msra.mxu0 %v830
    %1199 = vmatprep.subr.mxu0 0.0
    %1200 = vmatpush2.msra.mxu0 %v829
    %1201 = vmatprep.mubr.f32.mxu0 %v650
    %1202 = vmatmul.mubr.f32.gmra.mxu0 %v649
    %v1203 = vpop.f32.mrf.mxu0
    %v1204 = vadd.f32 %v1074, %v1203
    %v1205 = vpop.f32.mrf.mxu0
    %1206 = vmatprep.mubr.f32.mxu0 %v658
    %1207 = vmatmul.mubr.f32.gmra.mxu0 %v657
    %v1208 = vpop.f32.mrf.mxu0
    %v1209 = vadd.f32 %v1079, %v1208
    %v1210 = vpop.f32.mrf.mxu0
    %1211 = vmatprep.mubr.f32.mxu0 %v666
    %1212 = vmatmul.mubr.f32.gmra.mxu0 %v665
    %v1213 = vpop.f32.mrf.mxu0
    %v1214 = vadd.f32 %v1084, %v1213
    %v1215 = vpop.f32.mrf.mxu0
    %1216 = vmatprep.mubr.f32.mxu0 %v674
    %1217 = vmatmul.mubr.f32.gmra.mxu0 %v673
    %v1218 = vpop.f32.mrf.mxu0
    %v1219 = vadd.f32 %v1089, %v1218
    %v1220 = vpop.f32.mrf.mxu0
    %1221 = vmatprep.mubr.f32.mxu0 %v682
    %1222 = vmatmul.mubr.f32.gmra.mxu0 %v681
    %v1223 = vpop.f32.mrf.mxu0
    %v1224 = vadd.f32 %v1094, %v1223
    %v1225 = vpop.f32.mrf.mxu0
    %1226 = vmatprep.mubr.f32.mxu0 %v690
    %1227 = vmatmul.mubr.f32.gmra.mxu0 %v689
    %v1228 = vpop.f32.mrf.mxu0
    %v1229 = vadd.f32 %v1099, %v1228
    %v1230 = vpop.f32.mrf.mxu0
    %1231 = vmatprep.mubr.f32.mxu0 %v698
    %1232 = vmatmul.mubr.f32.gmra.mxu0 %v697
    %v1233 = vpop.f32.mrf.mxu0
    %v1234 = vadd.f32 %v1104, %v1233
    %v1235 = vpop.f32.mrf.mxu0
    %1236 = vmatprep.mubr.f32.mxu0 %v706
    %1237 = vmatmul.mubr.f32.gmra.mxu0 %v705
    %v1238 = vpop.f32.mrf.mxu0
    %v1239 = vadd.f32 %v1109, %v1238
    %v1240 = vpop.f32.mrf.mxu0
    %1241 = vmatprep.mubr.f32.mxu0 %v714
    %1242 = vmatmul.mubr.f32.gmra.mxu0 %v713
    %v1243 = vpop.f32.mrf.mxu0
    %v1244 = vadd.f32 %v1114, %v1243
    %v1245 = vpop.f32.mrf.mxu0
    %1246 = vmatprep.mubr.f32.mxu0 %v722
    %1247 = vmatmul.mubr.f32.gmra.mxu0 %v721
    %v1248 = vpop.f32.mrf.mxu0
    %v1249 = vadd.f32 %v1119, %v1248
    %v1250 = vpop.f32.mrf.mxu0
    %1251 = vmatprep.mubr.f32.mxu0 %v730
    %1252 = vmatmul.mubr.f32.gmra.mxu0 %v729
    %v1253 = vpop.f32.mrf.mxu0
    %v1254 = vadd.f32 %v1124, %v1253
    %v1255 = vpop.f32.mrf.mxu0
    %1256 = vmatprep.mubr.f32.mxu0 %v738
    %1257 = vmatmul.mubr.f32.gmra.mxu0 %v737
    %v1258 = vpop.f32.mrf.mxu0
    %v1259 = vadd.f32 %v1129, %v1258
    %v1260 = vpop.f32.mrf.mxu0
    %1261 = vmatprep.mubr.f32.mxu0 %v746
    %1262 = vmatmul.mubr.f32.gmra.mxu0 %v745
    %v1263 = vpop.f32.mrf.mxu0
    %v1264 = vadd.f32 %v1134, %v1263
    %v1265 = vpop.f32.mrf.mxu0
    %1266 = vdwg.mxu0
    %1267 = vmatprep.subr.mxu0 0.0
    %1268 = vmatpush1.msra.mxu0 %v860
    %1269 = vmatprep.subr.mxu0 0.0
    %1270 = vmatpush1.msra.mxu0 %v859
    %1271 = vmatprep.subr.mxu0 0.0
    %1272 = vmatpush1.msra.mxu0 %v858
    %1273 = vmatprep.subr.mxu0 0.0
    %1274 = vmatpush1.msra.mxu0 %v857
    %1275 = vmatprep.subr.mxu0 0.0
    %1276 = vmatpush1.msra.mxu0 %v856
    %1277 = vmatprep.subr.mxu0 0.0
    %1278 = vmatpush1.msra.mxu0 %v855
    %1279 = vmatprep.subr.mxu0 0.0
    %1280 = vmatpush1.msra.mxu0 %v854
    %1281 = vmatprep.subr.mxu0 0.0
    %1282 = vmatpush1.msra.mxu0 %v853
    %1283 = vmatprep.subr.mxu0 0.0
    %1284 = vmatpush1.msra.mxu0 %v852
    %1285 = vmatprep.subr.mxu0 0.0
    %1286 = vmatpush1.msra.mxu0 %v851
    %1287 = vmatprep.subr.mxu0 0.0
    %1288 = vmatpush1.msra.mxu0 %v850
    %1289 = vmatprep.subr.mxu0 0.0
    %1290 = vmatpush1.msra.mxu0 %v849
    %1291 = vmatprep.subr.mxu0 0.0
    %1292 = vmatpush1.msra.mxu0 %v848
    %1293 = vmatprep.subr.mxu0 0.0
    %1294 = vmatpush1.msra.mxu0 %v847
    %1295 = vmatprep.subr.mxu0 0.0
    %1296 = vmatpush1.msra.mxu0 %v846
    %1297 = vmatprep.subr.mxu0 0.0
    %1298 = vmatpush1.msra.mxu0 %v845
    %1299 = vmatprep.subr.mxu0 0.0
    %1300 = vmatpush2.msra.mxu0 %v876
    %1301 = vmatprep.subr.mxu0 0.0
    %1302 = vmatpush2.msra.mxu0 %v875
    %1303 = vmatprep.subr.mxu0 0.0
    %1304 = vmatpush2.msra.mxu0 %v874
    %1305 = vmatprep.subr.mxu0 0.0
    %1306 = vmatpush2.msra.mxu0 %v873
    %1307 = vmatprep.subr.mxu0 0.0
    %1308 = vmatpush2.msra.mxu0 %v872
    %1309 = vmatprep.subr.mxu0 0.0
    %1310 = vmatpush2.msra.mxu0 %v871
    %1311 = vmatprep.subr.mxu0 0.0
    %1312 = vmatpush2.msra.mxu0 %v870
    %1313 = vmatprep.subr.mxu0 0.0
    %1314 = vmatpush2.msra.mxu0 %v869
    %1315 = vmatprep.subr.mxu0 0.0
    %1316 = vmatpush2.msra.mxu0 %v868
    %1317 = vmatprep.subr.mxu0 0.0
    %1318 = vmatpush2.msra.mxu0 %v867
    %1319 = vmatprep.subr.mxu0 0.0
    %1320 = vmatpush2.msra.mxu0 %v866
    %1321 = vmatprep.subr.mxu0 0.0
    %1322 = vmatpush2.msra.mxu0 %v865
    %1323 = vmatprep.subr.mxu0 0.0
    %1324 = vmatpush2.msra.mxu0 %v864
    %1325 = vmatprep.subr.mxu0 0.0
    %1326 = vmatpush2.msra.mxu0 %v863
    %1327 = vmatprep.subr.mxu0 0.0
    %1328 = vmatpush2.msra.mxu0 %v862
    %1329 = vmatprep.subr.mxu0 0.0
    %1330 = vmatpush2.msra.mxu0 %v861
    %1331 = vmatprep.mubr.f32.mxu0 %v652
    %1332 = vmatmul.mubr.f32.gmra.mxu0 %v651
    %v1333 = vpop.f32.mrf.mxu0
    %v1334 = vadd.f32 %v1204, %v1333
    %v1335 = vpop.f32.mrf.mxu0
    %1336 = vmatprep.mubr.f32.mxu0 %v660
    %1337 = vmatmul.mubr.f32.gmra.mxu0 %v659
    %v1338 = vpop.f32.mrf.mxu0
    %v1339 = vadd.f32 %v1209, %v1338
    %v1340 = vpop.f32.mrf.mxu0
    %1341 = vmatprep.mubr.f32.mxu0 %v668
    %1342 = vmatmul.mubr.f32.gmra.mxu0 %v667
    %v1343 = vpop.f32.mrf.mxu0
    %v1344 = vadd.f32 %v1214, %v1343
    %v1345 = vpop.f32.mrf.mxu0
    %1346 = vmatprep.mubr.f32.mxu0 %v676
    %1347 = vmatmul.mubr.f32.gmra.mxu0 %v675
    %v1348 = vpop.f32.mrf.mxu0
    %v1349 = vadd.f32 %v1219, %v1348
    %v1350 = vpop.f32.mrf.mxu0
    %1351 = vmatprep.mubr.f32.mxu0 %v684
    %1352 = vmatmul.mubr.f32.gmra.mxu0 %v683
    %v1353 = vpop.f32.mrf.mxu0
    %v1354 = vadd.f32 %v1224, %v1353
    %v1355 = vpop.f32.mrf.mxu0
    %1356 = vmatprep.mubr.f32.mxu0 %v692
    %1357 = vmatmul.mubr.f32.gmra.mxu0 %v691
    %v1358 = vpop.f32.mrf.mxu0
    %v1359 = vadd.f32 %v1229, %v1358
    %v1360 = vpop.f32.mrf.mxu0
    %1361 = vmatprep.mubr.f32.mxu0 %v700
    %1362 = vmatmul.mubr.f32.gmra.mxu0 %v699
    %v1363 = vpop.f32.mrf.mxu0
    %v1364 = vadd.f32 %v1234, %v1363
    %v1365 = vpop.f32.mrf.mxu0
    %1366 = vmatprep.mubr.f32.mxu0 %v708
    %1367 = vmatmul.mubr.f32.gmra.mxu0 %v707
    %v1368 = vpop.f32.mrf.mxu0
    %v1369 = vadd.f32 %v1239, %v1368
    %v1370 = vpop.f32.mrf.mxu0
    %1371 = vmatprep.mubr.f32.mxu0 %v716
    %1372 = vmatmul.mubr.f32.gmra.mxu0 %v715
    %v1373 = vpop.f32.mrf.mxu0
    %v1374 = vadd.f32 %v1244, %v1373
    %v1375 = vpop.f32.mrf.mxu0
    %1376 = vmatprep.mubr.f32.mxu0 %v724
    %1377 = vmatmul.mubr.f32.gmra.mxu0 %v723
    %v1378 = vpop.f32.mrf.mxu0
    %v1379 = vadd.f32 %v1249, %v1378
    %v1380 = vpop.f32.mrf.mxu0
    %1381 = vmatprep.mubr.f32.mxu0 %v732
    %1382 = vmatmul.mubr.f32.gmra.mxu0 %v731
    %v1383 = vpop.f32.mrf.mxu0
    %v1384 = vadd.f32 %v1254, %v1383
    %v1385 = vpop.f32.mrf.mxu0
    %1386 = vmatprep.mubr.f32.mxu0 %v740
    %1387 = vmatmul.mubr.f32.gmra.mxu0 %v739
    %v1388 = vpop.f32.mrf.mxu0
    %v1389 = vadd.f32 %v1259, %v1388
    %v1390 = vpop.f32.mrf.mxu0
    %1391 = vmatprep.mubr.f32.mxu0 %v748
    %1392 = vmatmul.mubr.f32.gmra.mxu0 %v747
    %v1393 = vpop.f32.mrf.mxu0
    %v1394 = vadd.f32 %v1264, %v1393
    %v1395 = vpop.f32.mrf.mxu0
    %1396 = vdwg.mxu0
    %v1397 = vld [vmem:[%s1 + $0x400] sm:$0xff]
    %v1398 = vld [vmem:[%s1 + $0x408] sm:$0xff]
    %v1399 = vld [vmem:[%s1 + $0x410] sm:$0xff]
    %v1400 = vld [vmem:[%s1 + $0x418] sm:$0xff]
    %v1401 = vld [vmem:[%s1 + $0x420] sm:$0xff]
    %v1402 = vld [vmem:[%s1 + $0x428] sm:$0xff]
    %v1403 = vld [vmem:[%s1 + $0x430] sm:$0xff]
    %v1404 = vld [vmem:[%s1 + $0x438] sm:$0xff]
    %v1405 = vld [vmem:[%s1 + $0x440] sm:$0xff]
    %v1406 = vld [vmem:[%s1 + $0x448] sm:$0xff]
    %v1407 = vld [vmem:[%s1 + $0x450] sm:$0xff]
    %v1408 = vld [vmem:[%s1 + $0x458] sm:$0xff]
    %v1409 = vld [vmem:[%s1 + $0x460] sm:$0xff]
    %v1410 = vld [vmem:[%s1 + $0x468] sm:$0xff]
    %v1411 = vld [vmem:[%s1 + $0x470] sm:$0xff]
    %v1412 = vld [vmem:[%s1 + $0x478] sm:$0xff]
    %v1413 = vld [vmem:[%s1 + $0x480] sm:$0xff]
    %v1414 = vld [vmem:[%s1 + $0x488] sm:$0xff]
    %v1415 = vld [vmem:[%s1 + $0x490] sm:$0xff]
    %v1416 = vld [vmem:[%s1 + $0x498] sm:$0xff]
    %v1417 = vld [vmem:[%s1 + $0x4a0] sm:$0xff]
    %v1418 = vld [vmem:[%s1 + $0x4a8] sm:$0xff]
    %v1419 = vld [vmem:[%s1 + $0x4b0] sm:$0xff]
    %v1420 = vld [vmem:[%s1 + $0x4b8] sm:$0xff]
    %v1421 = vld [vmem:[%s1 + $0x4c0] sm:$0xff]
    %v1422 = vld [vmem:[%s1 + $0x4c8] sm:$0xff]
    %v1423 = vld [vmem:[%s1 + $0x4d0] sm:$0xff]
    %v1424 = vld [vmem:[%s1 + $0x4d8] sm:$0xff]
    %v1425 = vld [vmem:[%s1 + $0x4e0] sm:$0xff]
    %v1426 = vld [vmem:[%s1 + $0x4e8] sm:$0xff]
    %v1427 = vld [vmem:[%s1 + $0x4f0] sm:$0xff]
    %v1428 = vld [vmem:[%s1 + $0x4f8] sm:$0xff]
    %v1429 = vld [vmem:[%s1 + $0x500] sm:$0xff]
    %v1430 = vld [vmem:[%s1 + $0x508] sm:$0xff]
    %v1431 = vld [vmem:[%s1 + $0x510] sm:$0xff]
    %v1432 = vld [vmem:[%s1 + $0x518] sm:$0xff]
    %v1433 = vld [vmem:[%s1 + $0x520] sm:$0xff]
    %v1434 = vld [vmem:[%s1 + $0x528] sm:$0xff]
    %v1435 = vld [vmem:[%s1 + $0x530] sm:$0xff]
    %v1436 = vld [vmem:[%s1 + $0x538] sm:$0xff]
    %v1437 = vld [vmem:[%s1 + $0x540] sm:$0xff]
    %v1438 = vld [vmem:[%s1 + $0x548] sm:$0xff]
    %v1439 = vld [vmem:[%s1 + $0x550] sm:$0xff]
    %v1440 = vld [vmem:[%s1 + $0x558] sm:$0xff]
    %v1441 = vld [vmem:[%s1 + $0x560] sm:$0xff]
    %v1442 = vld [vmem:[%s1 + $0x568] sm:$0xff]
    %v1443 = vld [vmem:[%s1 + $0x570] sm:$0xff]
    %v1444 = vld [vmem:[%s1 + $0x578] sm:$0xff]
    %v1445 = vld [vmem:[%s1 + $0x580] sm:$0xff]
    %v1446 = vld [vmem:[%s1 + $0x588] sm:$0xff]
    %v1447 = vld [vmem:[%s1 + $0x590] sm:$0xff]
    %v1448 = vld [vmem:[%s1 + $0x598] sm:$0xff]
    %v1449 = vld [vmem:[%s1 + $0x5a0] sm:$0xff]
    %v1450 = vld [vmem:[%s1 + $0x5a8] sm:$0xff]
    %v1451 = vld [vmem:[%s1 + $0x5b0] sm:$0xff]
    %v1452 = vld [vmem:[%s1 + $0x5b8] sm:$0xff]
    %v1453 = vld [vmem:[%s1 + $0x5c0] sm:$0xff]
    %v1454 = vld [vmem:[%s1 + $0x5c8] sm:$0xff]
    %v1455 = vld [vmem:[%s1 + $0x5d0] sm:$0xff]
    %v1456 = vld [vmem:[%s1 + $0x5d8] sm:$0xff]
    %v1457 = vld [vmem:[%s1 + $0x5e0] sm:$0xff]
    %v1458 = vld [vmem:[%s1 + $0x5e8] sm:$0xff]
    %v1459 = vld [vmem:[%s1 + $0x5f0] sm:$0xff]
    %v1460 = vld [vmem:[%s1 + $0x5f8] sm:$0xff]
    %v1461 = vld [vmem:[%s1 + $0x600] sm:$0xff]
    %v1462 = vld [vmem:[%s1 + $0x608] sm:$0xff]
    %v1463 = vld [vmem:[%s1 + $0x610] sm:$0xff]
    %v1464 = vld [vmem:[%s1 + $0x618] sm:$0xff]
    %v1465 = vld [vmem:[%s1 + $0x620] sm:$0xff]
    %v1466 = vld [vmem:[%s1 + $0x628] sm:$0xff]
    %v1467 = vld [vmem:[%s1 + $0x630] sm:$0xff]
    %v1468 = vld [vmem:[%s1 + $0x638] sm:$0xff]
    %v1469 = vld [vmem:[%s1 + $0x640] sm:$0xff]
    %v1470 = vld [vmem:[%s1 + $0x648] sm:$0xff]
    %v1471 = vld [vmem:[%s1 + $0x650] sm:$0xff]
    %v1472 = vld [vmem:[%s1 + $0x658] sm:$0xff]
    %v1473 = vld [vmem:[%s1 + $0x660] sm:$0xff]
    %v1474 = vld [vmem:[%s1 + $0x668] sm:$0xff]
    %v1475 = vld [vmem:[%s1 + $0x670] sm:$0xff]
    %v1476 = vld [vmem:[%s1 + $0x678] sm:$0xff]
    %v1477 = vld [vmem:[%s1 + $0x680] sm:$0xff]
    %v1478 = vld [vmem:[%s1 + $0x688] sm:$0xff]
    %v1479 = vld [vmem:[%s1 + $0x690] sm:$0xff]
    %v1480 = vld [vmem:[%s1 + $0x698] sm:$0xff]
    %v1481 = vld [vmem:[%s1 + $0x6a0] sm:$0xff]
    %v1482 = vld [vmem:[%s1 + $0x6a8] sm:$0xff]
    %v1483 = vld [vmem:[%s1 + $0x6b0] sm:$0xff]
    %v1484 = vld [vmem:[%s1 + $0x6b8] sm:$0xff]
    %v1485 = vld [vmem:[%s1 + $0x6c0] sm:$0xff]
    %v1486 = vld [vmem:[%s1 + $0x6c8] sm:$0xff]
    %v1487 = vld [vmem:[%s1 + $0x6d0] sm:$0xff]
    %v1488 = vld [vmem:[%s1 + $0x6d8] sm:$0xff]
    %v1489 = vld [vmem:[%s1 + $0x6e0] sm:$0xff]
    %v1490 = vld [vmem:[%s1 + $0x6e8] sm:$0xff]
    %v1491 = vld [vmem:[%s1 + $0x6f0] sm:$0xff]
    %v1492 = vld [vmem:[%s1 + $0x6f8] sm:$0xff]
    %v1493 = vld [vmem:[%s1 + $0x700] sm:$0xff]
    %v1494 = vld [vmem:[%s1 + $0x708] sm:$0xff]
    %v1495 = vld [vmem:[%s1 + $0x710] sm:$0xff]
    %v1496 = vld [vmem:[%s1 + $0x718] sm:$0xff]
    %v1497 = vld [vmem:[%s1 + $0x720] sm:$0xff]
    %v1498 = vld [vmem:[%s1 + $0x728] sm:$0xff]
    %v1499 = vld [vmem:[%s1 + $0x730] sm:$0xff]
    %v1500 = vld [vmem:[%s1 + $0x738] sm:$0xff]
    %v1501 = vld [vmem:[%s1 + $0x740] sm:$0xff]
    %v1502 = vld [vmem:[%s1 + $0x748] sm:$0xff]
    %v1503 = vld [vmem:[%s1 + $0x750] sm:$0xff]
    %v1504 = vld [vmem:[%s1 + $0x758] sm:$0xff]
    %v1505 = vld [vmem:[%s1 + $0x760] sm:$0xff]
    %v1506 = vld [vmem:[%s1 + $0x768] sm:$0xff]
    %v1507 = vld [vmem:[%s1 + $0x770] sm:$0xff]
    %v1508 = vld [vmem:[%s1 + $0x778] sm:$0xff]
    %v1509 = vld [vmem:[%s1 + $0x780] sm:$0xff]
    %v1510 = vld [vmem:[%s1 + $0x788] sm:$0xff]
    %v1511 = vld [vmem:[%s1 + $0x790] sm:$0xff]
    %v1512 = vld [vmem:[%s1 + $0x798] sm:$0xff]
    %v1513 = vld [vmem:[%s1 + $0x7a0] sm:$0xff]
    %v1514 = vld [vmem:[%s1 + $0x7a8] sm:$0xff]
    %v1515 = vld [vmem:[%s1 + $0x7b0] sm:$0xff]
    %v1516 = vld [vmem:[%s1 + $0x7b8] sm:$0xff]
    %v1517 = vld [vmem:[%s1 + $0x7c0] sm:$0xff]
    %v1518 = vld [vmem:[%s1 + $0x7c8] sm:$0xff]
    %v1519 = vld [vmem:[%s1 + $0x7d0] sm:$0xff]
    %v1520 = vld [vmem:[%s1 + $0x7d8] sm:$0xff]
    %v1521 = vld [vmem:[%s1 + $0x7e0] sm:$0xff]
    %v1522 = vld [vmem:[%s1 + $0x7e8] sm:$0xff]
    %v1523 = vld [vmem:[%s1 + $0x7f0] sm:$0xff]
    %v1524 = vld [vmem:[%s1 + $0x7f8] sm:$0xff]
    %1525 = vmatprep.subr.mxu0 0.0
    %1526 = vmatpush1.msra.mxu0 %v1412
    %1527 = vmatprep.subr.mxu0 0.0
    %1528 = vmatpush1.msra.mxu0 %v1411
    %1529 = vmatprep.subr.mxu0 0.0
    %1530 = vmatpush1.msra.mxu0 %v1410
    %1531 = vmatprep.subr.mxu0 0.0
    %1532 = vmatpush1.msra.mxu0 %v1409
    %1533 = vmatprep.subr.mxu0 0.0
    %1534 = vmatpush1.msra.mxu0 %v1408
    %1535 = vmatprep.subr.mxu0 0.0
    %1536 = vmatpush1.msra.mxu0 %v1407
    %1537 = vmatprep.subr.mxu0 0.0
    %1538 = vmatpush1.msra.mxu0 %v1406
    %1539 = vmatprep.subr.mxu0 0.0
    %1540 = vmatpush1.msra.mxu0 %v1405
    %1541 = vmatprep.subr.mxu0 0.0
    %1542 = vmatpush1.msra.mxu0 %v1404
    %1543 = vmatprep.subr.mxu0 0.0
    %1544 = vmatpush1.msra.mxu0 %v1403
    %1545 = vmatprep.subr.mxu0 0.0
    %1546 = vmatpush1.msra.mxu0 %v1402
    %1547 = vmatprep.subr.mxu0 0.0
    %1548 = vmatpush1.msra.mxu0 %v1401
    %1549 = vmatprep.subr.mxu0 0.0
    %1550 = vmatpush1.msra.mxu0 %v1400
    %1551 = vmatprep.subr.mxu0 0.0
    %1552 = vmatpush1.msra.mxu0 %v1399
    %1553 = vmatprep.subr.mxu0 0.0
    %1554 = vmatpush1.msra.mxu0 %v1398
    %1555 = vmatprep.subr.mxu0 0.0
    %1556 = vmatpush1.msra.mxu0 %v1397
    %1557 = vmatprep.subr.mxu0 0.0
    %1558 = vmatpush2.msra.mxu0 %v1428
    %1559 = vmatprep.subr.mxu0 0.0
    %1560 = vmatpush2.msra.mxu0 %v1427
    %1561 = vmatprep.subr.mxu0 0.0
    %1562 = vmatpush2.msra.mxu0 %v1426
    %1563 = vmatprep.subr.mxu0 0.0
    %1564 = vmatpush2.msra.mxu0 %v1425
    %1565 = vmatprep.subr.mxu0 0.0
    %1566 = vmatpush2.msra.mxu0 %v1424
    %1567 = vmatprep.subr.mxu0 0.0
    %1568 = vmatpush2.msra.mxu0 %v1423
    %1569 = vmatprep.subr.mxu0 0.0
    %1570 = vmatpush2.msra.mxu0 %v1422
    %1571 = vmatprep.subr.mxu0 0.0
    %1572 = vmatpush2.msra.mxu0 %v1421
    %1573 = vmatprep.subr.mxu0 0.0
    %1574 = vmatpush2.msra.mxu0 %v1420
    %1575 = vmatprep.subr.mxu0 0.0
    %1576 = vmatpush2.msra.mxu0 %v1419
    %1577 = vmatprep.subr.mxu0 0.0
    %1578 = vmatpush2.msra.mxu0 %v1418
    %1579 = vmatprep.subr.mxu0 0.0
    %1580 = vmatpush2.msra.mxu0 %v1417
    %1581 = vmatprep.subr.mxu0 0.0
    %1582 = vmatpush2.msra.mxu0 %v1416
    %1583 = vmatprep.subr.mxu0 0.0
    %1584 = vmatpush2.msra.mxu0 %v1415
    %1585 = vmatprep.subr.mxu0 0.0
    %1586 = vmatpush2.msra.mxu0 %v1414
    %1587 = vmatprep.subr.mxu0 0.0
    %1588 = vmatpush2.msra.mxu0 %v1413
    %1589 = vmatprep.mubr.f32.mxu0 %v646
    %1590 = vmatmul.mubr.f32.gmra.mxu0 %v645
    %v1591 = vpop.f32.mrf.mxu0
    %v1592 = vadd.f32 0.0, %v1591
    %v1593 = vpop.f32.mrf.mxu0
    %1594 = vmatprep.mubr.f32.mxu0 %v654
    %1595 = vmatmul.mubr.f32.gmra.mxu0 %v653
    %v1596 = vpop.f32.mrf.mxu0
    %v1597 = vadd.f32 0.0, %v1596
    %v1598 = vpop.f32.mrf.mxu0
    %1599 = vmatprep.mubr.f32.mxu0 %v662
    %1600 = vmatmul.mubr.f32.gmra.mxu0 %v661
    %v1601 = vpop.f32.mrf.mxu0
    %v1602 = vadd.f32 0.0, %v1601
    %v1603 = vpop.f32.mrf.mxu0
    %1604 = vmatprep.mubr.f32.mxu0 %v670
    %1605 = vmatmul.mubr.f32.gmra.mxu0 %v669
    %v1606 = vpop.f32.mrf.mxu0
    %v1607 = vadd.f32 0.0, %v1606
    %v1608 = vpop.f32.mrf.mxu0
    %1609 = vmatprep.mubr.f32.mxu0 %v678
    %1610 = vmatmul.mubr.f32.gmra.mxu0 %v677
    %v1611 = vpop.f32.mrf.mxu0
    %v1612 = vadd.f32 0.0, %v1611
    %v1613 = vpop.f32.mrf.mxu0
    %1614 = vmatprep.mubr.f32.mxu0 %v686
    %1615 = vmatmul.mubr.f32.gmra.mxu0 %v685
    %v1616 = vpop.f32.mrf.mxu0
    %v1617 = vadd.f32 0.0, %v1616
    %v1618 = vpop.f32.mrf.mxu0
    %1619 = vmatprep.mubr.f32.mxu0 %v694
    %1620 = vmatmul.mubr.f32.gmra.mxu0 %v693
    %v1621 = vpop.f32.mrf.mxu0
    %v1622 = vadd.f32 0.0, %v1621
    %v1623 = vpop.f32.mrf.mxu0
    %1624 = vmatprep.mubr.f32.mxu0 %v702
    %1625 = vmatmul.mubr.f32.gmra.mxu0 %v701
    %v1626 = vpop.f32.mrf.mxu0
    %v1627 = vadd.f32 0.0, %v1626
    %v1628 = vpop.f32.mrf.mxu0
    %1629 = vmatprep.mubr.f32.mxu0 %v710
    %1630 = vmatmul.mubr.f32.gmra.mxu0 %v709
    %v1631 = vpop.f32.mrf.mxu0
    %v1632 = vadd.f32 0.0, %v1631
    %v1633 = vpop.f32.mrf.mxu0
    %1634 = vmatprep.mubr.f32.mxu0 %v718
    %1635 = vmatmul.mubr.f32.gmra.mxu0 %v717
    %v1636 = vpop.f32.mrf.mxu0
    %v1637 = vadd.f32 0.0, %v1636
    %v1638 = vpop.f32.mrf.mxu0
    %1639 = vmatprep.mubr.f32.mxu0 %v726
    %1640 = vmatmul.mubr.f32.gmra.mxu0 %v725
    %v1641 = vpop.f32.mrf.mxu0
    %v1642 = vadd.f32 0.0, %v1641
    %v1643 = vpop.f32.mrf.mxu0
    %1644 = vmatprep.mubr.f32.mxu0 %v734
    %1645 = vmatmul.mubr.f32.gmra.mxu0 %v733
    %v1646 = vpop.f32.mrf.mxu0
    %v1647 = vadd.f32 0.0, %v1646
    %v1648 = vpop.f32.mrf.mxu0
    %1649 = vmatprep.mubr.f32.mxu0 %v742
    %1650 = vmatmul.mubr.f32.gmra.mxu0 %v741
    %v1651 = vpop.f32.mrf.mxu0
    %v1652 = vadd.f32 0.0, %v1651
    %v1653 = vpop.f32.mrf.mxu0
    %1654 = vdwg.mxu0
    %1655 = vmatprep.subr.mxu0 0.0
    %1656 = vmatpush1.msra.mxu0 %v1444
    %1657 = vmatprep.subr.mxu0 0.0
    %1658 = vmatpush1.msra.mxu0 %v1443
    %1659 = vmatprep.subr.mxu0 0.0
    %1660 = vmatpush1.msra.mxu0 %v1442
    %1661 = vmatprep.subr.mxu0 0.0
    %1662 = vmatpush1.msra.mxu0 %v1441
    %1663 = vmatprep.subr.mxu0 0.0
    %1664 = vmatpush1.msra.mxu0 %v1440
    %1665 = vmatprep.subr.mxu0 0.0
    %1666 = vmatpush1.msra.mxu0 %v1439
    %1667 = vmatprep.subr.mxu0 0.0
    %1668 = vmatpush1.msra.mxu0 %v1438
    %1669 = vmatprep.subr.mxu0 0.0
    %1670 = vmatpush1.msra.mxu0 %v1437
    %1671 = vmatprep.subr.mxu0 0.0
    %1672 = vmatpush1.msra.mxu0 %v1436
    %1673 = vmatprep.subr.mxu0 0.0
    %1674 = vmatpush1.msra.mxu0 %v1435
    %1675 = vmatprep.subr.mxu0 0.0
    %1676 = vmatpush1.msra.mxu0 %v1434
    %1677 = vmatprep.subr.mxu0 0.0
    %1678 = vmatpush1.msra.mxu0 %v1433
    %1679 = vmatprep.subr.mxu0 0.0
    %1680 = vmatpush1.msra.mxu0 %v1432
    %1681 = vmatprep.subr.mxu0 0.0
    %1682 = vmatpush1.msra.mxu0 %v1431
    %1683 = vmatprep.subr.mxu0 0.0
    %1684 = vmatpush1.msra.mxu0 %v1430
    %1685 = vmatprep.subr.mxu0 0.0
    %1686 = vmatpush1.msra.mxu0 %v1429
    %1687 = vmatprep.subr.mxu0 0.0
    %1688 = vmatpush2.msra.mxu0 %v1460
    %1689 = vmatprep.subr.mxu0 0.0
    %1690 = vmatpush2.msra.mxu0 %v1459
    %1691 = vmatprep.subr.mxu0 0.0
    %1692 = vmatpush2.msra.mxu0 %v1458
    %1693 = vmatprep.subr.mxu0 0.0
    %1694 = vmatpush2.msra.mxu0 %v1457
    %1695 = vmatprep.subr.mxu0 0.0
    %1696 = vmatpush2.msra.mxu0 %v1456
    %1697 = vmatprep.subr.mxu0 0.0
    %1698 = vmatpush2.msra.mxu0 %v1455
    %1699 = vmatprep.subr.mxu0 0.0
    %1700 = vmatpush2.msra.mxu0 %v1454
    %1701 = vmatprep.subr.mxu0 0.0
    %1702 = vmatpush2.msra.mxu0 %v1453
    %1703 = vmatprep.subr.mxu0 0.0
    %1704 = vmatpush2.msra.mxu0 %v1452
    %1705 = vmatprep.subr.mxu0 0.0
    %1706 = vmatpush2.msra.mxu0 %v1451
    %1707 = vmatprep.subr.mxu0 0.0
    %1708 = vmatpush2.msra.mxu0 %v1450
    %1709 = vmatprep.subr.mxu0 0.0
    %1710 = vmatpush2.msra.mxu0 %v1449
    %1711 = vmatprep.subr.mxu0 0.0
    %1712 = vmatpush2.msra.mxu0 %v1448
    %1713 = vmatprep.subr.mxu0 0.0
    %1714 = vmatpush2.msra.mxu0 %v1447
    %1715 = vmatprep.subr.mxu0 0.0
    %1716 = vmatpush2.msra.mxu0 %v1446
    %1717 = vmatprep.subr.mxu0 0.0
    %1718 = vmatpush2.msra.mxu0 %v1445
    %1719 = vmatprep.mubr.f32.mxu0 %v648
    %1720 = vmatmul.mubr.f32.gmra.mxu0 %v647
    %v1721 = vpop.f32.mrf.mxu0
    %v1722 = vadd.f32 %v1592, %v1721
    %v1723 = vpop.f32.mrf.mxu0
    %1724 = vmatprep.mubr.f32.mxu0 %v656
    %1725 = vmatmul.mubr.f32.gmra.mxu0 %v655
    %v1726 = vpop.f32.mrf.mxu0
    %v1727 = vadd.f32 %v1597, %v1726
    %v1728 = vpop.f32.mrf.mxu0
    %1729 = vmatprep.mubr.f32.mxu0 %v664
    %1730 = vmatmul.mubr.f32.gmra.mxu0 %v663
    %v1731 = vpop.f32.mrf.mxu0
    %v1732 = vadd.f32 %v1602, %v1731
    %v1733 = vpop.f32.mrf.mxu0
    %1734 = vmatprep.mubr.f32.mxu0 %v672
    %1735 = vmatmul.mubr.f32.gmra.mxu0 %v671
    %v1736 = vpop.f32.mrf.mxu0
    %v1737 = vadd.f32 %v1607, %v1736
    %v1738 = vpop.f32.mrf.mxu0
    %1739 = vmatprep.mubr.f32.mxu0 %v680
    %1740 = vmatmul.mubr.f32.gmra.mxu0 %v679
    %v1741 = vpop.f32.mrf.mxu0
    %v1742 = vadd.f32 %v1612, %v1741
    %v1743 = vpop.f32.mrf.mxu0
    %1744 = vmatprep.mubr.f32.mxu0 %v688
    %1745 = vmatmul.mubr.f32.gmra.mxu0 %v687
    %v1746 = vpop.f32.mrf.mxu0
    %v1747 = vadd.f32 %v1617, %v1746
    %v1748 = vpop.f32.mrf.mxu0
    %1749 = vmatprep.mubr.f32.mxu0 %v696
    %1750 = vmatmul.mubr.f32.gmra.mxu0 %v695
    %v1751 = vpop.f32.mrf.mxu0
    %v1752 = vadd.f32 %v1622, %v1751
    %v1753 = vpop.f32.mrf.mxu0
    %1754 = vmatprep.mubr.f32.mxu0 %v704
    %1755 = vmatmul.mubr.f32.gmra.mxu0 %v703
    %v1756 = vpop.f32.mrf.mxu0
    %v1757 = vadd.f32 %v1627, %v1756
    %v1758 = vpop.f32.mrf.mxu0
    %1759 = vmatprep.mubr.f32.mxu0 %v712
    %1760 = vmatmul.mubr.f32.gmra.mxu0 %v711
    %v1761 = vpop.f32.mrf.mxu0
    %v1762 = vadd.f32 %v1632, %v1761
    %v1763 = vpop.f32.mrf.mxu0
    %1764 = vmatprep.mubr.f32.mxu0 %v720
    %1765 = vmatmul.mubr.f32.gmra.mxu0 %v719
    %v1766 = vpop.f32.mrf.mxu0
    %v1767 = vadd.f32 %v1637, %v1766
    %v1768 = vpop.f32.mrf.mxu0
    %1769 = vmatprep.mubr.f32.mxu0 %v728
    %1770 = vmatmul.mubr.f32.gmra.mxu0 %v727
    %v1771 = vpop.f32.mrf.mxu0
    %v1772 = vadd.f32 %v1642, %v1771
    %v1773 = vpop.f32.mrf.mxu0
    %1774 = vmatprep.mubr.f32.mxu0 %v736
    %1775 = vmatmul.mubr.f32.gmra.mxu0 %v735
    %v1776 = vpop.f32.mrf.mxu0
    %v1777 = vadd.f32 %v1647, %v1776
    %v1778 = vpop.f32.mrf.mxu0
    %1779 = vmatprep.mubr.f32.mxu0 %v744
    %1780 = vmatmul.mubr.f32.gmra.mxu0 %v743
    %v1781 = vpop.f32.mrf.mxu0
    %v1782 = vadd.f32 %v1652, %v1781
    %v1783 = vpop.f32.mrf.mxu0
    %1784 = vdwg.mxu0
    %1785 = vmatprep.subr.mxu0 0.0
    %1786 = vmatpush1.msra.mxu0 %v1476
    %1787 = vmatprep.subr.mxu0 0.0
    %1788 = vmatpush1.msra.mxu0 %v1475
    %1789 = vmatprep.subr.mxu0 0.0
    %1790 = vmatpush1.msra.mxu0 %v1474
    %1791 = vmatprep.subr.mxu0 0.0
    %1792 = vmatpush1.msra.mxu0 %v1473
    %1793 = vmatprep.subr.mxu0 0.0
    %1794 = vmatpush1.msra.mxu0 %v1472
    %1795 = vmatprep.subr.mxu0 0.0
    %1796 = vmatpush1.msra.mxu0 %v1471
    %1797 = vmatprep.subr.mxu0 0.0
    %1798 = vmatpush1.msra.mxu0 %v1470
    %1799 = vmatprep.subr.mxu0 0.0
    %1800 = vmatpush1.msra.mxu0 %v1469
    %1801 = vmatprep.subr.mxu0 0.0
    %1802 = vmatpush1.msra.mxu0 %v1468
    %1803 = vmatprep.subr.mxu0 0.0
    %1804 = vmatpush1.msra.mxu0 %v1467
    %1805 = vmatprep.subr.mxu0 0.0
    %1806 = vmatpush1.msra.mxu0 %v1466
    %1807 = vmatprep.subr.mxu0 0.0
    %1808 = vmatpush1.msra.mxu0 %v1465
    %1809 = vmatprep.subr.mxu0 0.0
    %1810 = vmatpush1.msra.mxu0 %v1464
    %1811 = vmatprep.subr.mxu0 0.0
    %1812 = vmatpush1.msra.mxu0 %v1463
    %1813 = vmatprep.subr.mxu0 0.0
    %1814 = vmatpush1.msra.mxu0 %v1462
    %1815 = vmatprep.subr.mxu0 0.0
    %1816 = vmatpush1.msra.mxu0 %v1461
    %1817 = vmatprep.subr.mxu0 0.0
    %1818 = vmatpush2.msra.mxu0 %v1492
    %1819 = vmatprep.subr.mxu0 0.0
    %1820 = vmatpush2.msra.mxu0 %v1491
    %1821 = vmatprep.subr.mxu0 0.0
    %1822 = vmatpush2.msra.mxu0 %v1490
    %1823 = vmatprep.subr.mxu0 0.0
    %1824 = vmatpush2.msra.mxu0 %v1489
    %1825 = vmatprep.subr.mxu0 0.0
    %1826 = vmatpush2.msra.mxu0 %v1488
    %1827 = vmatprep.subr.mxu0 0.0
    %1828 = vmatpush2.msra.mxu0 %v1487
    %1829 = vmatprep.subr.mxu0 0.0
    %1830 = vmatpush2.msra.mxu0 %v1486
    %1831 = vmatprep.subr.mxu0 0.0
    %1832 = vmatpush2.msra.mxu0 %v1485
    %1833 = vmatprep.subr.mxu0 0.0
    %1834 = vmatpush2.msra.mxu0 %v1484
    %1835 = vmatprep.subr.mxu0 0.0
    %1836 = vmatpush2.msra.mxu0 %v1483
    %1837 = vmatprep.subr.mxu0 0.0
    %1838 = vmatpush2.msra.mxu0 %v1482
    %1839 = vmatprep.subr.mxu0 0.0
    %1840 = vmatpush2.msra.mxu0 %v1481
    %1841 = vmatprep.subr.mxu0 0.0
    %1842 = vmatpush2.msra.mxu0 %v1480
    %1843 = vmatprep.subr.mxu0 0.0
    %1844 = vmatpush2.msra.mxu0 %v1479
    %1845 = vmatprep.subr.mxu0 0.0
    %1846 = vmatpush2.msra.mxu0 %v1478
    %1847 = vmatprep.subr.mxu0 0.0
    %1848 = vmatpush2.msra.mxu0 %v1477
    %1849 = vmatprep.mubr.f32.mxu0 %v650
    %1850 = vmatmul.mubr.f32.gmra.mxu0 %v649
    %v1851 = vpop.f32.mrf.mxu0
    %v1852 = vadd.f32 %v1722, %v1851
    %v1853 = vpop.f32.mrf.mxu0
    %1854 = vmatprep.mubr.f32.mxu0 %v658
    %1855 = vmatmul.mubr.f32.gmra.mxu0 %v657
    %v1856 = vpop.f32.mrf.mxu0
    %v1857 = vadd.f32 %v1727, %v1856
    %v1858 = vpop.f32.mrf.mxu0
    %1859 = vmatprep.mubr.f32.mxu0 %v666
    %1860 = vmatmul.mubr.f32.gmra.mxu0 %v665
    %v1861 = vpop.f32.mrf.mxu0
    %v1862 = vadd.f32 %v1732, %v1861
    %v1863 = vpop.f32.mrf.mxu0
    %1864 = vmatprep.mubr.f32.mxu0 %v674
    %1865 = vmatmul.mubr.f32.gmra.mxu0 %v673
    %v1866 = vpop.f32.mrf.mxu0
    %v1867 = vadd.f32 %v1737, %v1866
    %v1868 = vpop.f32.mrf.mxu0
    %1869 = vmatprep.mubr.f32.mxu0 %v682
    %1870 = vmatmul.mubr.f32.gmra.mxu0 %v681
    %v1871 = vpop.f32.mrf.mxu0
    %v1872 = vadd.f32 %v1742, %v1871
    %v1873 = vpop.f32.mrf.mxu0
    %1874 = vmatprep.mubr.f32.mxu0 %v690
    %1875 = vmatmul.mubr.f32.gmra.mxu0 %v689
    %v1876 = vpop.f32.mrf.mxu0
    %v1877 = vadd.f32 %v1747, %v1876
    %v1878 = vpop.f32.mrf.mxu0
    %1879 = vmatprep.mubr.f32.mxu0 %v698
    %1880 = vmatmul.mubr.f32.gmra.mxu0 %v697
    %v1881 = vpop.f32.mrf.mxu0
    %v1882 = vadd.f32 %v1752, %v1881
    %v1883 = vpop.f32.mrf.mxu0
    %1884 = vmatprep.mubr.f32.mxu0 %v706
    %1885 = vmatmul.mubr.f32.gmra.mxu0 %v705
    %v1886 = vpop.f32.mrf.mxu0
    %v1887 = vadd.f32 %v1757, %v1886
    %v1888 = vpop.f32.mrf.mxu0
    %1889 = vmatprep.mubr.f32.mxu0 %v714
    %1890 = vmatmul.mubr.f32.gmra.mxu0 %v713
    %v1891 = vpop.f32.mrf.mxu0
    %v1892 = vadd.f32 %v1762, %v1891
    %v1893 = vpop.f32.mrf.mxu0
    %1894 = vmatprep.mubr.f32.mxu0 %v722
    %1895 = vmatmul.mubr.f32.gmra.mxu0 %v721
    %v1896 = vpop.f32.mrf.mxu0
    %v1897 = vadd.f32 %v1767, %v1896
    %v1898 = vpop.f32.mrf.mxu0
    %1899 = vmatprep.mubr.f32.mxu0 %v730
    %1900 = vmatmul.mubr.f32.gmra.mxu0 %v729
    %v1901 = vpop.f32.mrf.mxu0
    %v1902 = vadd.f32 %v1772, %v1901
    %v1903 = vpop.f32.mrf.mxu0
    %1904 = vmatprep.mubr.f32.mxu0 %v738
    %1905 = vmatmul.mubr.f32.gmra.mxu0 %v737
    %v1906 = vpop.f32.mrf.mxu0
    %v1907 = vadd.f32 %v1777, %v1906
    %v1908 = vpop.f32.mrf.mxu0
    %1909 = vmatprep.mubr.f32.mxu0 %v746
    %1910 = vmatmul.mubr.f32.gmra.mxu0 %v745
    %v1911 = vpop.f32.mrf.mxu0
    %v1912 = vadd.f32 %v1782, %v1911
    %v1913 = vpop.f32.mrf.mxu0
    %1914 = vdwg.mxu0
    %1915 = vmatprep.subr.mxu0 0.0
    %1916 = vmatpush1.msra.mxu0 %v1508
    %1917 = vmatprep.subr.mxu0 0.0
    %1918 = vmatpush1.msra.mxu0 %v1507
    %1919 = vmatprep.subr.mxu0 0.0
    %1920 = vmatpush1.msra.mxu0 %v1506
    %1921 = vmatprep.subr.mxu0 0.0
    %1922 = vmatpush1.msra.mxu0 %v1505
    %1923 = vmatprep.subr.mxu0 0.0
    %1924 = vmatpush1.msra.mxu0 %v1504
    %1925 = vmatprep.subr.mxu0 0.0
    %1926 = vmatpush1.msra.mxu0 %v1503
    %1927 = vmatprep.subr.mxu0 0.0
    %1928 = vmatpush1.msra.mxu0 %v1502
    %1929 = vmatprep.subr.mxu0 0.0
    %1930 = vmatpush1.msra.mxu0 %v1501
    %1931 = vmatprep.subr.mxu0 0.0
    %1932 = vmatpush1.msra.mxu0 %v1500
    %1933 = vmatprep.subr.mxu0 0.0
    %1934 = vmatpush1.msra.mxu0 %v1499
    %1935 = vmatprep.subr.mxu0 0.0
    %1936 = vmatpush1.msra.mxu0 %v1498
    %1937 = vmatprep.subr.mxu0 0.0
    %1938 = vmatpush1.msra.mxu0 %v1497
    %1939 = vmatprep.subr.mxu0 0.0
    %1940 = vmatpush1.msra.mxu0 %v1496
    %1941 = vmatprep.subr.mxu0 0.0
    %1942 = vmatpush1.msra.mxu0 %v1495
    %1943 = vmatprep.subr.mxu0 0.0
    %1944 = vmatpush1.msra.mxu0 %v1494
    %1945 = vmatprep.subr.mxu0 0.0
    %1946 = vmatpush1.msra.mxu0 %v1493
    %1947 = vmatprep.subr.mxu0 0.0
    %1948 = vmatpush2.msra.mxu0 %v1524
    %1949 = vmatprep.subr.mxu0 0.0
    %1950 = vmatpush2.msra.mxu0 %v1523
    %1951 = vmatprep.subr.mxu0 0.0
    %1952 = vmatpush2.msra.mxu0 %v1522
    %1953 = vmatprep.subr.mxu0 0.0
    %1954 = vmatpush2.msra.mxu0 %v1521
    %1955 = vmatprep.subr.mxu0 0.0
    %1956 = vmatpush2.msra.mxu0 %v1520
    %1957 = vmatprep.subr.mxu0 0.0
    %1958 = vmatpush2.msra.mxu0 %v1519
    %1959 = vmatprep.subr.mxu0 0.0
    %1960 = vmatpush2.msra.mxu0 %v1518
    %1961 = vmatprep.subr.mxu0 0.0
    %1962 = vmatpush2.msra.mxu0 %v1517
    %1963 = vmatprep.subr.mxu0 0.0
    %1964 = vmatpush2.msra.mxu0 %v1516
    %1965 = vmatprep.subr.mxu0 0.0
    %1966 = vmatpush2.msra.mxu0 %v1515
    %1967 = vmatprep.subr.mxu0 0.0
    %1968 = vmatpush2.msra.mxu0 %v1514
    %1969 = vmatprep.subr.mxu0 0.0
    %1970 = vmatpush2.msra.mxu0 %v1513
    %1971 = vmatprep.subr.mxu0 0.0
    %1972 = vmatpush2.msra.mxu0 %v1512
    %1973 = vmatprep.subr.mxu0 0.0
    %1974 = vmatpush2.msra.mxu0 %v1511
    %1975 = vmatprep.subr.mxu0 0.0
    %1976 = vmatpush2.msra.mxu0 %v1510
    %1977 = vmatprep.subr.mxu0 0.0
    %1978 = vmatpush2.msra.mxu0 %v1509
    %1979 = vmatprep.mubr.f32.mxu0 %v652
    %1980 = vmatmul.mubr.f32.gmra.mxu0 %v651
    %v1981 = vpop.f32.mrf.mxu0
    %v1982 = vadd.f32 %v1852, %v1981
    %v1983 = vpop.f32.mrf.mxu0
    %1984 = vmatprep.mubr.f32.mxu0 %v660
    %1985 = vmatmul.mubr.f32.gmra.mxu0 %v659
    %v1986 = vpop.f32.mrf.mxu0
    %v1987 = vadd.f32 %v1857, %v1986
    %v1988 = vpop.f32.mrf.mxu0
    %1989 = vmatprep.mubr.f32.mxu0 %v668
    %1990 = vmatmul.mubr.f32.gmra.mxu0 %v667
    %v1991 = vpop.f32.mrf.mxu0
    %v1992 = vadd.f32 %v1862, %v1991
    %v1993 = vpop.f32.mrf.mxu0
    %1994 = vmatprep.mubr.f32.mxu0 %v676
    %1995 = vmatmul.mubr.f32.gmra.mxu0 %v675
    %v1996 = vpop.f32.mrf.mxu0
    %v1997 = vadd.f32 %v1867, %v1996
    %v1998 = vpop.f32.mrf.mxu0
    %1999 = vmatprep.mubr.f32.mxu0 %v684
    %2000 = vmatmul.mubr.f32.gmra.mxu0 %v683
    %v2001 = vpop.f32.mrf.mxu0
    %v2002 = vadd.f32 %v1872, %v2001
    %v2003 = vpop.f32.mrf.mxu0
    %2004 = vmatprep.mubr.f32.mxu0 %v692
    %2005 = vmatmul.mubr.f32.gmra.mxu0 %v691
    %v2006 = vpop.f32.mrf.mxu0
    %v2007 = vadd.f32 %v1877, %v2006
    %v2008 = vpop.f32.mrf.mxu0
    %2009 = vmatprep.mubr.f32.mxu0 %v700
    %2010 = vmatmul.mubr.f32.gmra.mxu0 %v699
    %v2011 = vpop.f32.mrf.mxu0
    %v2012 = vadd.f32 %v1882, %v2011
    %v2013 = vpop.f32.mrf.mxu0
    %2014 = vmatprep.mubr.f32.mxu0 %v708
    %2015 = vmatmul.mubr.f32.gmra.mxu0 %v707
    %v2016 = vpop.f32.mrf.mxu0
    %v2017 = vadd.f32 %v1887, %v2016
    %v2018 = vpop.f32.mrf.mxu0
    %2019 = vmatprep.mubr.f32.mxu0 %v716
    %2020 = vmatmul.mubr.f32.gmra.mxu0 %v715
    %v2021 = vpop.f32.mrf.mxu0
    %v2022 = vadd.f32 %v1892, %v2021
    %v2023 = vpop.f32.mrf.mxu0
    %2024 = vmatprep.mubr.f32.mxu0 %v724
    %2025 = vmatmul.mubr.f32.gmra.mxu0 %v723
    %v2026 = vpop.f32.mrf.mxu0
    %v2027 = vadd.f32 %v1897, %v2026
    %v2028 = vpop.f32.mrf.mxu0
    %2029 = vmatprep.mubr.f32.mxu0 %v732
    %2030 = vmatmul.mubr.f32.gmra.mxu0 %v731
    %v2031 = vpop.f32.mrf.mxu0
    %v2032 = vadd.f32 %v1902, %v2031
    %v2033 = vpop.f32.mrf.mxu0
    %2034 = vmatprep.mubr.f32.mxu0 %v740
    %2035 = vmatmul.mubr.f32.gmra.mxu0 %v739
    %v2036 = vpop.f32.mrf.mxu0
    %v2037 = vadd.f32 %v1907, %v2036
    %v2038 = vpop.f32.mrf.mxu0
    %2039 = vmatprep.mubr.f32.mxu0 %v748
    %2040 = vmatmul.mubr.f32.gmra.mxu0 %v747
    %v2041 = vpop.f32.mrf.mxu0
    %v2042 = vadd.f32 %v1912, %v2041
    %v2043 = vpop.f32.mrf.mxu0
    %2044 = vdwg.mxu0
    %v2045 = vmax.f32 %v1334, %v1982
    %v2046 = vmax.f32 %v1339, %v1987
    %v2047 = vmax.f32 %v1344, %v1992
    %v2048 = vmax.f32 %v1349, %v1997
    %v2049 = vmax.f32 %v1354, %v2002
    %v2050 = vmax.f32 %v1359, %v2007
    %v2051 = vmax.f32 %v1364, %v2012
    %v2052 = vmax.f32 %v1369, %v2017
    %v2053 = vmax.f32 %v1374, %v2022
    %v2054 = vmax.f32 %v1379, %v2027
    %v2055 = vmax.f32 %v1384, %v2032
    %v2056 = vmax.f32 %v1389, %v2037
    %v2057 = vmax.f32 %v1394, %v2042
    %v2058 = vld [vmem:[%s1 + $0x800] sm:$0xff]
    %v2059 = vld [vmem:[%s1 + $0x808] sm:$0xff]
    %v2060 = vld [vmem:[%s1 + $0x810] sm:$0xff]
    %v2061 = vld [vmem:[%s1 + $0x818] sm:$0xff]
    %v2062 = vld [vmem:[%s1 + $0x820] sm:$0xff]
    %v2063 = vld [vmem:[%s1 + $0x828] sm:$0xff]
    %v2064 = vld [vmem:[%s1 + $0x830] sm:$0xff]
    %v2065 = vld [vmem:[%s1 + $0x838] sm:$0xff]
    %v2066 = vld [vmem:[%s1 + $0x840] sm:$0xff]
    %v2067 = vld [vmem:[%s1 + $0x848] sm:$0xff]
    %v2068 = vld [vmem:[%s1 + $0x850] sm:$0xff]
    %v2069 = vld [vmem:[%s1 + $0x858] sm:$0xff]
    %v2070 = vld [vmem:[%s1 + $0x860] sm:$0xff]
    %v2071 = vld [vmem:[%s1 + $0x868] sm:$0xff]
    %v2072 = vld [vmem:[%s1 + $0x870] sm:$0xff]
    %v2073 = vld [vmem:[%s1 + $0x878] sm:$0xff]
    %v2074 = vld [vmem:[%s1 + $0x880] sm:$0xff]
    %v2075 = vld [vmem:[%s1 + $0x888] sm:$0xff]
    %v2076 = vld [vmem:[%s1 + $0x890] sm:$0xff]
    %v2077 = vld [vmem:[%s1 + $0x898] sm:$0xff]
    %v2078 = vld [vmem:[%s1 + $0x8a0] sm:$0xff]
    %v2079 = vld [vmem:[%s1 + $0x8a8] sm:$0xff]
    %v2080 = vld [vmem:[%s1 + $0x8b0] sm:$0xff]
    %v2081 = vld [vmem:[%s1 + $0x8b8] sm:$0xff]
    %v2082 = vld [vmem:[%s1 + $0x8c0] sm:$0xff]
    %v2083 = vld [vmem:[%s1 + $0x8c8] sm:$0xff]
    %v2084 = vld [vmem:[%s1 + $0x8d0] sm:$0xff]
    %v2085 = vld [vmem:[%s1 + $0x8d8] sm:$0xff]
    %v2086 = vld [vmem:[%s1 + $0x8e0] sm:$0xff]
    %v2087 = vld [vmem:[%s1 + $0x8e8] sm:$0xff]
    %v2088 = vld [vmem:[%s1 + $0x8f0] sm:$0xff]
    %v2089 = vld [vmem:[%s1 + $0x8f8] sm:$0xff]
    %v2090 = vld [vmem:[%s1 + $0x900] sm:$0xff]
    %v2091 = vld [vmem:[%s1 + $0x908] sm:$0xff]
    %v2092 = vld [vmem:[%s1 + $0x910] sm:$0xff]
    %v2093 = vld [vmem:[%s1 + $0x918] sm:$0xff]
    %v2094 = vld [vmem:[%s1 + $0x920] sm:$0xff]
    %v2095 = vld [vmem:[%s1 + $0x928] sm:$0xff]
    %v2096 = vld [vmem:[%s1 + $0x930] sm:$0xff]
    %v2097 = vld [vmem:[%s1 + $0x938] sm:$0xff]
    %v2098 = vld [vmem:[%s1 + $0x940] sm:$0xff]
    %v2099 = vld [vmem:[%s1 + $0x948] sm:$0xff]
    %v2100 = vld [vmem:[%s1 + $0x950] sm:$0xff]
    %v2101 = vld [vmem:[%s1 + $0x958] sm:$0xff]
    %v2102 = vld [vmem:[%s1 + $0x960] sm:$0xff]
    %v2103 = vld [vmem:[%s1 + $0x968] sm:$0xff]
    %v2104 = vld [vmem:[%s1 + $0x970] sm:$0xff]
    %v2105 = vld [vmem:[%s1 + $0x978] sm:$0xff]
    %v2106 = vld [vmem:[%s1 + $0x980] sm:$0xff]
    %v2107 = vld [vmem:[%s1 + $0x988] sm:$0xff]
    %v2108 = vld [vmem:[%s1 + $0x990] sm:$0xff]
    %v2109 = vld [vmem:[%s1 + $0x998] sm:$0xff]
    %v2110 = vld [vmem:[%s1 + $0x9a0] sm:$0xff]
    %v2111 = vld [vmem:[%s1 + $0x9a8] sm:$0xff]
    %v2112 = vld [vmem:[%s1 + $0x9b0] sm:$0xff]
    %v2113 = vld [vmem:[%s1 + $0x9b8] sm:$0xff]
    %v2114 = vld [vmem:[%s1 + $0x9c0] sm:$0xff]
    %v2115 = vld [vmem:[%s1 + $0x9c8] sm:$0xff]
    %v2116 = vld [vmem:[%s1 + $0x9d0] sm:$0xff]
    %v2117 = vld [vmem:[%s1 + $0x9d8] sm:$0xff]
    %v2118 = vld [vmem:[%s1 + $0x9e0] sm:$0xff]
    %v2119 = vld [vmem:[%s1 + $0x9e8] sm:$0xff]
    %v2120 = vld [vmem:[%s1 + $0x9f0] sm:$0xff]
    %v2121 = vld [vmem:[%s1 + $0x9f8] sm:$0xff]
    %v2122 = vld [vmem:[%s1 + $0xa00] sm:$0xff]
    %v2123 = vld [vmem:[%s1 + $0xa08] sm:$0xff]
    %v2124 = vld [vmem:[%s1 + $0xa10] sm:$0xff]
    %v2125 = vld [vmem:[%s1 + $0xa18] sm:$0xff]
    %v2126 = vld [vmem:[%s1 + $0xa20] sm:$0xff]
    %v2127 = vld [vmem:[%s1 + $0xa28] sm:$0xff]
    %v2128 = vld [vmem:[%s1 + $0xa30] sm:$0xff]
    %v2129 = vld [vmem:[%s1 + $0xa38] sm:$0xff]
    %v2130 = vld [vmem:[%s1 + $0xa40] sm:$0xff]
    %v2131 = vld [vmem:[%s1 + $0xa48] sm:$0xff]
    %v2132 = vld [vmem:[%s1 + $0xa50] sm:$0xff]
    %v2133 = vld [vmem:[%s1 + $0xa58] sm:$0xff]
    %v2134 = vld [vmem:[%s1 + $0xa60] sm:$0xff]
    %v2135 = vld [vmem:[%s1 + $0xa68] sm:$0xff]
    %v2136 = vld [vmem:[%s1 + $0xa70] sm:$0xff]
    %v2137 = vld [vmem:[%s1 + $0xa78] sm:$0xff]
    %v2138 = vld [vmem:[%s1 + $0xa80] sm:$0xff]
    %v2139 = vld [vmem:[%s1 + $0xa88] sm:$0xff]
    %v2140 = vld [vmem:[%s1 + $0xa90] sm:$0xff]
    %v2141 = vld [vmem:[%s1 + $0xa98] sm:$0xff]
    %v2142 = vld [vmem:[%s1 + $0xaa0] sm:$0xff]
    %v2143 = vld [vmem:[%s1 + $0xaa8] sm:$0xff]
    %v2144 = vld [vmem:[%s1 + $0xab0] sm:$0xff]
    %v2145 = vld [vmem:[%s1 + $0xab8] sm:$0xff]
    %v2146 = vld [vmem:[%s1 + $0xac0] sm:$0xff]
    %v2147 = vld [vmem:[%s1 + $0xac8] sm:$0xff]
    %v2148 = vld [vmem:[%s1 + $0xad0] sm:$0xff]
    %v2149 = vld [vmem:[%s1 + $0xad8] sm:$0xff]
    %v2150 = vld [vmem:[%s1 + $0xae0] sm:$0xff]
    %v2151 = vld [vmem:[%s1 + $0xae8] sm:$0xff]
    %v2152 = vld [vmem:[%s1 + $0xaf0] sm:$0xff]
    %v2153 = vld [vmem:[%s1 + $0xaf8] sm:$0xff]
    %v2154 = vld [vmem:[%s1 + $0xb00] sm:$0xff]
    %v2155 = vld [vmem:[%s1 + $0xb08] sm:$0xff]
    %v2156 = vld [vmem:[%s1 + $0xb10] sm:$0xff]
    %v2157 = vld [vmem:[%s1 + $0xb18] sm:$0xff]
    %v2158 = vld [vmem:[%s1 + $0xb20] sm:$0xff]
    %v2159 = vld [vmem:[%s1 + $0xb28] sm:$0xff]
    %v2160 = vld [vmem:[%s1 + $0xb30] sm:$0xff]
    %v2161 = vld [vmem:[%s1 + $0xb38] sm:$0xff]
    %v2162 = vld [vmem:[%s1 + $0xb40] sm:$0xff]
    %v2163 = vld [vmem:[%s1 + $0xb48] sm:$0xff]
    %v2164 = vld [vmem:[%s1 + $0xb50] sm:$0xff]
    %v2165 = vld [vmem:[%s1 + $0xb58] sm:$0xff]
    %v2166 = vld [vmem:[%s1 + $0xb60] sm:$0xff]
    %v2167 = vld [vmem:[%s1 + $0xb68] sm:$0xff]
    %v2168 = vld [vmem:[%s1 + $0xb70] sm:$0xff]
    %v2169 = vld [vmem:[%s1 + $0xb78] sm:$0xff]
    %v2170 = vld [vmem:[%s1 + $0xb80] sm:$0xff]
    %v2171 = vld [vmem:[%s1 + $0xb88] sm:$0xff]
    %v2172 = vld [vmem:[%s1 + $0xb90] sm:$0xff]
    %v2173 = vld [vmem:[%s1 + $0xb98] sm:$0xff]
    %v2174 = vld [vmem:[%s1 + $0xba0] sm:$0xff]
    %v2175 = vld [vmem:[%s1 + $0xba8] sm:$0xff]
    %v2176 = vld [vmem:[%s1 + $0xbb0] sm:$0xff]
    %v2177 = vld [vmem:[%s1 + $0xbb8] sm:$0xff]
    %v2178 = vld [vmem:[%s1 + $0xbc0] sm:$0xff]
    %v2179 = vld [vmem:[%s1 + $0xbc8] sm:$0xff]
    %v2180 = vld [vmem:[%s1 + $0xbd0] sm:$0xff]
    %v2181 = vld [vmem:[%s1 + $0xbd8] sm:$0xff]
    %v2182 = vld [vmem:[%s1 + $0xbe0] sm:$0xff]
    %v2183 = vld [vmem:[%s1 + $0xbe8] sm:$0xff]
    %v2184 = vld [vmem:[%s1 + $0xbf0] sm:$0xff]
    %v2185 = vld [vmem:[%s1 + $0xbf8] sm:$0xff]
    %2186 = vmatprep.subr.mxu0 0.0
    %2187 = vmatpush1.msra.mxu0 %v2073
    %2188 = vmatprep.subr.mxu0 0.0
    %2189 = vmatpush1.msra.mxu0 %v2072
    %2190 = vmatprep.subr.mxu0 0.0
    %2191 = vmatpush1.msra.mxu0 %v2071
    %2192 = vmatprep.subr.mxu0 0.0
    %2193 = vmatpush1.msra.mxu0 %v2070
    %2194 = vmatprep.subr.mxu0 0.0
    %2195 = vmatpush1.msra.mxu0 %v2069
    %2196 = vmatprep.subr.mxu0 0.0
    %2197 = vmatpush1.msra.mxu0 %v2068
    %2198 = vmatprep.subr.mxu0 0.0
    %2199 = vmatpush1.msra.mxu0 %v2067
    %2200 = vmatprep.subr.mxu0 0.0
    %2201 = vmatpush1.msra.mxu0 %v2066
    %2202 = vmatprep.subr.mxu0 0.0
    %2203 = vmatpush1.msra.mxu0 %v2065
    %2204 = vmatprep.subr.mxu0 0.0
    %2205 = vmatpush1.msra.mxu0 %v2064
    %2206 = vmatprep.subr.mxu0 0.0
    %2207 = vmatpush1.msra.mxu0 %v2063
    %2208 = vmatprep.subr.mxu0 0.0
    %2209 = vmatpush1.msra.mxu0 %v2062
    %2210 = vmatprep.subr.mxu0 0.0
    %2211 = vmatpush1.msra.mxu0 %v2061
    %2212 = vmatprep.subr.mxu0 0.0
    %2213 = vmatpush1.msra.mxu0 %v2060
    %2214 = vmatprep.subr.mxu0 0.0
    %2215 = vmatpush1.msra.mxu0 %v2059
    %2216 = vmatprep.subr.mxu0 0.0
    %2217 = vmatpush1.msra.mxu0 %v2058
    %2218 = vmatprep.subr.mxu0 0.0
    %2219 = vmatpush2.msra.mxu0 %v2089
    %2220 = vmatprep.subr.mxu0 0.0
    %2221 = vmatpush2.msra.mxu0 %v2088
    %2222 = vmatprep.subr.mxu0 0.0
    %2223 = vmatpush2.msra.mxu0 %v2087
    %2224 = vmatprep.subr.mxu0 0.0
    %2225 = vmatpush2.msra.mxu0 %v2086
    %2226 = vmatprep.subr.mxu0 0.0
    %2227 = vmatpush2.msra.mxu0 %v2085
    %2228 = vmatprep.subr.mxu0 0.0
    %2229 = vmatpush2.msra.mxu0 %v2084
    %2230 = vmatprep.subr.mxu0 0.0
    %2231 = vmatpush2.msra.mxu0 %v2083
    %2232 = vmatprep.subr.mxu0 0.0
    %2233 = vmatpush2.msra.mxu0 %v2082
    %2234 = vmatprep.subr.mxu0 0.0
    %2235 = vmatpush2.msra.mxu0 %v2081
    %2236 = vmatprep.subr.mxu0 0.0
    %2237 = vmatpush2.msra.mxu0 %v2080
    %2238 = vmatprep.subr.mxu0 0.0
    %2239 = vmatpush2.msra.mxu0 %v2079
    %2240 = vmatprep.subr.mxu0 0.0
    %2241 = vmatpush2.msra.mxu0 %v2078
    %2242 = vmatprep.subr.mxu0 0.0
    %2243 = vmatpush2.msra.mxu0 %v2077
    %2244 = vmatprep.subr.mxu0 0.0
    %2245 = vmatpush2.msra.mxu0 %v2076
    %2246 = vmatprep.subr.mxu0 0.0
    %2247 = vmatpush2.msra.mxu0 %v2075
    %2248 = vmatprep.subr.mxu0 0.0
    %2249 = vmatpush2.msra.mxu0 %v2074
    %2250 = vmatprep.mubr.f32.mxu0 %v646
    %2251 = vmatmul.mubr.f32.gmra.mxu0 %v645
    %v2252 = vpop.f32.mrf.mxu0
    %v2253 = vadd.f32 0.0, %v2252
    %v2254 = vpop.f32.mrf.mxu0
    %2255 = vmatprep.mubr.f32.mxu0 %v654
    %2256 = vmatmul.mubr.f32.gmra.mxu0 %v653
    %v2257 = vpop.f32.mrf.mxu0
    %v2258 = vadd.f32 0.0, %v2257
    %v2259 = vpop.f32.mrf.mxu0
    %2260 = vmatprep.mubr.f32.mxu0 %v662
    %2261 = vmatmul.mubr.f32.gmra.mxu0 %v661
    %v2262 = vpop.f32.mrf.mxu0
    %v2263 = vadd.f32 0.0, %v2262
    %v2264 = vpop.f32.mrf.mxu0
    %2265 = vmatprep.mubr.f32.mxu0 %v670
    %2266 = vmatmul.mubr.f32.gmra.mxu0 %v669
    %v2267 = vpop.f32.mrf.mxu0
    %v2268 = vadd.f32 0.0, %v2267
    %v2269 = vpop.f32.mrf.mxu0
    %2270 = vmatprep.mubr.f32.mxu0 %v678
    %2271 = vmatmul.mubr.f32.gmra.mxu0 %v677
    %v2272 = vpop.f32.mrf.mxu0
    %v2273 = vadd.f32 0.0, %v2272
    %v2274 = vpop.f32.mrf.mxu0
    %2275 = vmatprep.mubr.f32.mxu0 %v686
    %2276 = vmatmul.mubr.f32.gmra.mxu0 %v685
    %v2277 = vpop.f32.mrf.mxu0
    %v2278 = vadd.f32 0.0, %v2277
    %v2279 = vpop.f32.mrf.mxu0
    %2280 = vmatprep.mubr.f32.mxu0 %v694
    %2281 = vmatmul.mubr.f32.gmra.mxu0 %v693
    %v2282 = vpop.f32.mrf.mxu0
    %v2283 = vadd.f32 0.0, %v2282
    %v2284 = vpop.f32.mrf.mxu0
    %2285 = vmatprep.mubr.f32.mxu0 %v702
    %2286 = vmatmul.mubr.f32.gmra.mxu0 %v701
    %v2287 = vpop.f32.mrf.mxu0
    %v2288 = vadd.f32 0.0, %v2287
    %v2289 = vpop.f32.mrf.mxu0
    %2290 = vmatprep.mubr.f32.mxu0 %v710
    %2291 = vmatmul.mubr.f32.gmra.mxu0 %v709
    %v2292 = vpop.f32.mrf.mxu0
    %v2293 = vadd.f32 0.0, %v2292
    %v2294 = vpop.f32.mrf.mxu0
    %2295 = vmatprep.mubr.f32.mxu0 %v718
    %2296 = vmatmul.mubr.f32.gmra.mxu0 %v717
    %v2297 = vpop.f32.mrf.mxu0
    %v2298 = vadd.f32 0.0, %v2297
    %v2299 = vpop.f32.mrf.mxu0
    %2300 = vmatprep.mubr.f32.mxu0 %v726
    %2301 = vmatmul.mubr.f32.gmra.mxu0 %v725
    %v2302 = vpop.f32.mrf.mxu0
    %v2303 = vadd.f32 0.0, %v2302
    %v2304 = vpop.f32.mrf.mxu0
    %2305 = vmatprep.mubr.f32.mxu0 %v734
    %2306 = vmatmul.mubr.f32.gmra.mxu0 %v733
    %v2307 = vpop.f32.mrf.mxu0
    %v2308 = vadd.f32 0.0, %v2307
    %v2309 = vpop.f32.mrf.mxu0
    %2310 = vmatprep.mubr.f32.mxu0 %v742
    %2311 = vmatmul.mubr.f32.gmra.mxu0 %v741
    %v2312 = vpop.f32.mrf.mxu0
    %v2313 = vadd.f32 0.0, %v2312
    %v2314 = vpop.f32.mrf.mxu0
    %2315 = vdwg.mxu0
    %2316 = vmatprep.subr.mxu0 0.0
    %2317 = vmatpush1.msra.mxu0 %v2105
    %2318 = vmatprep.subr.mxu0 0.0
    %2319 = vmatpush1.msra.mxu0 %v2104
    %2320 = vmatprep.subr.mxu0 0.0
    %2321 = vmatpush1.msra.mxu0 %v2103
    %2322 = vmatprep.subr.mxu0 0.0
    %2323 = vmatpush1.msra.mxu0 %v2102
    %2324 = vmatprep.subr.mxu0 0.0
    %2325 = vmatpush1.msra.mxu0 %v2101
    %2326 = vmatprep.subr.mxu0 0.0
    %2327 = vmatpush1.msra.mxu0 %v2100
    %2328 = vmatprep.subr.mxu0 0.0
    %2329 = vmatpush1.msra.mxu0 %v2099
    %2330 = vmatprep.subr.mxu0 0.0
    %2331 = vmatpush1.msra.mxu0 %v2098
    %2332 = vmatprep.subr.mxu0 0.0
    %2333 = vmatpush1.msra.mxu0 %v2097
    %2334 = vmatprep.subr.mxu0 0.0
    %2335 = vmatpush1.msra.mxu0 %v2096
    %2336 = vmatprep.subr.mxu0 0.0
    %2337 = vmatpush1.msra.mxu0 %v2095
    %2338 = vmatprep.subr.mxu0 0.0
    %2339 = vmatpush1.msra.mxu0 %v2094
    %2340 = vmatprep.subr.mxu0 0.0
    %2341 = vmatpush1.msra.mxu0 %v2093
    %2342 = vmatprep.subr.mxu0 0.0
    %2343 = vmatpush1.msra.mxu0 %v2092
    %2344 = vmatprep.subr.mxu0 0.0
    %2345 = vmatpush1.msra.mxu0 %v2091
    %2346 = vmatprep.subr.mxu0 0.0
    %2347 = vmatpush1.msra.mxu0 %v2090
    %2348 = vmatprep.subr.mxu0 0.0
    %2349 = vmatpush2.msra.mxu0 %v2121
    %2350 = vmatprep.subr.mxu0 0.0
    %2351 = vmatpush2.msra.mxu0 %v2120
    %2352 = vmatprep.subr.mxu0 0.0
    %2353 = vmatpush2.msra.mxu0 %v2119
    %2354 = vmatprep.subr.mxu0 0.0
    %2355 = vmatpush2.msra.mxu0 %v2118
    %2356 = vmatprep.subr.mxu0 0.0
    %2357 = vmatpush2.msra.mxu0 %v2117
    %2358 = vmatprep.subr.mxu0 0.0
    %2359 = vmatpush2.msra.mxu0 %v2116
    %2360 = vmatprep.subr.mxu0 0.0
    %2361 = vmatpush2.msra.mxu0 %v2115
    %2362 = vmatprep.subr.mxu0 0.0
    %2363 = vmatpush2.msra.mxu0 %v2114
    %2364 = vmatprep.subr.mxu0 0.0
    %2365 = vmatpush2.msra.mxu0 %v2113
    %2366 = vmatprep.subr.mxu0 0.0
    %2367 = vmatpush2.msra.mxu0 %v2112
    %2368 = vmatprep.subr.mxu0 0.0
    %2369 = vmatpush2.msra.mxu0 %v2111
    %2370 = vmatprep.subr.mxu0 0.0
    %2371 = vmatpush2.msra.mxu0 %v2110
    %2372 = vmatprep.subr.mxu0 0.0
    %2373 = vmatpush2.msra.mxu0 %v2109
    %2374 = vmatprep.subr.mxu0 0.0
    %2375 = vmatpush2.msra.mxu0 %v2108
    %2376 = vmatprep.subr.mxu0 0.0
    %2377 = vmatpush2.msra.mxu0 %v2107
    %2378 = vmatprep.subr.mxu0 0.0
    %2379 = vmatpush2.msra.mxu0 %v2106
    %2380 = vmatprep.mubr.f32.mxu0 %v648
    %2381 = vmatmul.mubr.f32.gmra.mxu0 %v647
    %v2382 = vpop.f32.mrf.mxu0
    %v2383 = vadd.f32 %v2253, %v2382
    %v2384 = vpop.f32.mrf.mxu0
    %2385 = vmatprep.mubr.f32.mxu0 %v656
    %2386 = vmatmul.mubr.f32.gmra.mxu0 %v655
    %v2387 = vpop.f32.mrf.mxu0
    %v2388 = vadd.f32 %v2258, %v2387
    %v2389 = vpop.f32.mrf.mxu0
    %2390 = vmatprep.mubr.f32.mxu0 %v664
    %2391 = vmatmul.mubr.f32.gmra.mxu0 %v663
    %v2392 = vpop.f32.mrf.mxu0
    %v2393 = vadd.f32 %v2263, %v2392
    %v2394 = vpop.f32.mrf.mxu0
    %2395 = vmatprep.mubr.f32.mxu0 %v672
    %2396 = vmatmul.mubr.f32.gmra.mxu0 %v671
    %v2397 = vpop.f32.mrf.mxu0
    %v2398 = vadd.f32 %v2268, %v2397
    %v2399 = vpop.f32.mrf.mxu0
    %2400 = vmatprep.mubr.f32.mxu0 %v680
    %2401 = vmatmul.mubr.f32.gmra.mxu0 %v679
    %v2402 = vpop.f32.mrf.mxu0
    %v2403 = vadd.f32 %v2273, %v2402
    %v2404 = vpop.f32.mrf.mxu0
    %2405 = vmatprep.mubr.f32.mxu0 %v688
    %2406 = vmatmul.mubr.f32.gmra.mxu0 %v687
    %v2407 = vpop.f32.mrf.mxu0
    %v2408 = vadd.f32 %v2278, %v2407
    %v2409 = vpop.f32.mrf.mxu0
    %2410 = vmatprep.mubr.f32.mxu0 %v696
    %2411 = vmatmul.mubr.f32.gmra.mxu0 %v695
    %v2412 = vpop.f32.mrf.mxu0
    %v2413 = vadd.f32 %v2283, %v2412
    %v2414 = vpop.f32.mrf.mxu0
    %2415 = vmatprep.mubr.f32.mxu0 %v704
    %2416 = vmatmul.mubr.f32.gmra.mxu0 %v703
    %v2417 = vpop.f32.mrf.mxu0
    %v2418 = vadd.f32 %v2288, %v2417
    %v2419 = vpop.f32.mrf.mxu0
    %2420 = vmatprep.mubr.f32.mxu0 %v712
    %2421 = vmatmul.mubr.f32.gmra.mxu0 %v711
    %v2422 = vpop.f32.mrf.mxu0
    %v2423 = vadd.f32 %v2293, %v2422
    %v2424 = vpop.f32.mrf.mxu0
    %2425 = vmatprep.mubr.f32.mxu0 %v720
    %2426 = vmatmul.mubr.f32.gmra.mxu0 %v719
    %v2427 = vpop.f32.mrf.mxu0
    %v2428 = vadd.f32 %v2298, %v2427
    %v2429 = vpop.f32.mrf.mxu0
    %2430 = vmatprep.mubr.f32.mxu0 %v728
    %2431 = vmatmul.mubr.f32.gmra.mxu0 %v727
    %v2432 = vpop.f32.mrf.mxu0
    %v2433 = vadd.f32 %v2303, %v2432
    %v2434 = vpop.f32.mrf.mxu0
    %2435 = vmatprep.mubr.f32.mxu0 %v736
    %2436 = vmatmul.mubr.f32.gmra.mxu0 %v735
    %v2437 = vpop.f32.mrf.mxu0
    %v2438 = vadd.f32 %v2308, %v2437
    %v2439 = vpop.f32.mrf.mxu0
    %2440 = vmatprep.mubr.f32.mxu0 %v744
    %2441 = vmatmul.mubr.f32.gmra.mxu0 %v743
    %v2442 = vpop.f32.mrf.mxu0
    %v2443 = vadd.f32 %v2313, %v2442
    %v2444 = vpop.f32.mrf.mxu0
    %2445 = vdwg.mxu0
    %2446 = vmatprep.subr.mxu0 0.0
    %2447 = vmatpush1.msra.mxu0 %v2137
    %2448 = vmatprep.subr.mxu0 0.0
    %2449 = vmatpush1.msra.mxu0 %v2136
    %2450 = vmatprep.subr.mxu0 0.0
    %2451 = vmatpush1.msra.mxu0 %v2135
    %2452 = vmatprep.subr.mxu0 0.0
    %2453 = vmatpush1.msra.mxu0 %v2134
    %2454 = vmatprep.subr.mxu0 0.0
    %2455 = vmatpush1.msra.mxu0 %v2133
    %2456 = vmatprep.subr.mxu0 0.0
    %2457 = vmatpush1.msra.mxu0 %v2132
    %2458 = vmatprep.subr.mxu0 0.0
    %2459 = vmatpush1.msra.mxu0 %v2131
    %2460 = vmatprep.subr.mxu0 0.0
    %2461 = vmatpush1.msra.mxu0 %v2130
    %2462 = vmatprep.subr.mxu0 0.0
    %2463 = vmatpush1.msra.mxu0 %v2129
    %2464 = vmatprep.subr.mxu0 0.0
    %2465 = vmatpush1.msra.mxu0 %v2128
    %2466 = vmatprep.subr.mxu0 0.0
    %2467 = vmatpush1.msra.mxu0 %v2127
    %2468 = vmatprep.subr.mxu0 0.0
    %2469 = vmatpush1.msra.mxu0 %v2126
    %2470 = vmatprep.subr.mxu0 0.0
    %2471 = vmatpush1.msra.mxu0 %v2125
    %2472 = vmatprep.subr.mxu0 0.0
    %2473 = vmatpush1.msra.mxu0 %v2124
    %2474 = vmatprep.subr.mxu0 0.0
    %2475 = vmatpush1.msra.mxu0 %v2123
    %2476 = vmatprep.subr.mxu0 0.0
    %2477 = vmatpush1.msra.mxu0 %v2122
    %2478 = vmatprep.subr.mxu0 0.0
    %2479 = vmatpush2.msra.mxu0 %v2153
    %2480 = vmatprep.subr.mxu0 0.0
    %2481 = vmatpush2.msra.mxu0 %v2152
    %2482 = vmatprep.subr.mxu0 0.0
    %2483 = vmatpush2.msra.mxu0 %v2151
    %2484 = vmatprep.subr.mxu0 0.0
    %2485 = vmatpush2.msra.mxu0 %v2150
    %2486 = vmatprep.subr.mxu0 0.0
    %2487 = vmatpush2.msra.mxu0 %v2149
    %2488 = vmatprep.subr.mxu0 0.0
    %2489 = vmatpush2.msra.mxu0 %v2148
    %2490 = vmatprep.subr.mxu0 0.0
    %2491 = vmatpush2.msra.mxu0 %v2147
    %2492 = vmatprep.subr.mxu0 0.0
    %2493 = vmatpush2.msra.mxu0 %v2146
    %2494 = vmatprep.subr.mxu0 0.0
    %2495 = vmatpush2.msra.mxu0 %v2145
    %2496 = vmatprep.subr.mxu0 0.0
    %2497 = vmatpush2.msra.mxu0 %v2144
    %2498 = vmatprep.subr.mxu0 0.0
    %2499 = vmatpush2.msra.mxu0 %v2143
    %2500 = vmatprep.subr.mxu0 0.0
    %2501 = vmatpush2.msra.mxu0 %v2142
    %2502 = vmatprep.subr.mxu0 0.0
    %2503 = vmatpush2.msra.mxu0 %v2141
    %2504 = vmatprep.subr.mxu0 0.0
    %2505 = vmatpush2.msra.mxu0 %v2140
    %2506 = vmatprep.subr.mxu0 0.0
    %2507 = vmatpush2.msra.mxu0 %v2139
    %2508 = vmatprep.subr.mxu0 0.0
    %2509 = vmatpush2.msra.mxu0 %v2138
    %2510 = vmatprep.mubr.f32.mxu0 %v650
    %2511 = vmatmul.mubr.f32.gmra.mxu0 %v649
    %v2512 = vpop.f32.mrf.mxu0
    %v2513 = vadd.f32 %v2383, %v2512
    %v2514 = vpop.f32.mrf.mxu0
    %2515 = vmatprep.mubr.f32.mxu0 %v658
    %2516 = vmatmul.mubr.f32.gmra.mxu0 %v657
    %v2517 = vpop.f32.mrf.mxu0
    %v2518 = vadd.f32 %v2388, %v2517
    %v2519 = vpop.f32.mrf.mxu0
    %2520 = vmatprep.mubr.f32.mxu0 %v666
    %2521 = vmatmul.mubr.f32.gmra.mxu0 %v665
    %v2522 = vpop.f32.mrf.mxu0
    %v2523 = vadd.f32 %v2393, %v2522
    %v2524 = vpop.f32.mrf.mxu0
    %2525 = vmatprep.mubr.f32.mxu0 %v674
    %2526 = vmatmul.mubr.f32.gmra.mxu0 %v673
    %v2527 = vpop.f32.mrf.mxu0
    %v2528 = vadd.f32 %v2398, %v2527
    %v2529 = vpop.f32.mrf.mxu0
    %2530 = vmatprep.mubr.f32.mxu0 %v682
    %2531 = vmatmul.mubr.f32.gmra.mxu0 %v681
    %v2532 = vpop.f32.mrf.mxu0
    %v2533 = vadd.f32 %v2403, %v2532
    %v2534 = vpop.f32.mrf.mxu0
    %2535 = vmatprep.mubr.f32.mxu0 %v690
    %2536 = vmatmul.mubr.f32.gmra.mxu0 %v689
    %v2537 = vpop.f32.mrf.mxu0
    %v2538 = vadd.f32 %v2408, %v2537
    %v2539 = vpop.f32.mrf.mxu0
    %2540 = vmatprep.mubr.f32.mxu0 %v698
    %2541 = vmatmul.mubr.f32.gmra.mxu0 %v697
    %v2542 = vpop.f32.mrf.mxu0
    %v2543 = vadd.f32 %v2413, %v2542
    %v2544 = vpop.f32.mrf.mxu0
    %2545 = vmatprep.mubr.f32.mxu0 %v706
    %2546 = vmatmul.mubr.f32.gmra.mxu0 %v705
    %v2547 = vpop.f32.mrf.mxu0
    %v2548 = vadd.f32 %v2418, %v2547
    %v2549 = vpop.f32.mrf.mxu0
    %2550 = vmatprep.mubr.f32.mxu0 %v714
    %2551 = vmatmul.mubr.f32.gmra.mxu0 %v713
    %v2552 = vpop.f32.mrf.mxu0
    %v2553 = vadd.f32 %v2423, %v2552
    %v2554 = vpop.f32.mrf.mxu0
    %2555 = vmatprep.mubr.f32.mxu0 %v722
    %2556 = vmatmul.mubr.f32.gmra.mxu0 %v721
    %v2557 = vpop.f32.mrf.mxu0
    %v2558 = vadd.f32 %v2428, %v2557
    %v2559 = vpop.f32.mrf.mxu0
    %2560 = vmatprep.mubr.f32.mxu0 %v730
    %2561 = vmatmul.mubr.f32.gmra.mxu0 %v729
    %v2562 = vpop.f32.mrf.mxu0
    %v2563 = vadd.f32 %v2433, %v2562
    %v2564 = vpop.f32.mrf.mxu0
    %2565 = vmatprep.mubr.f32.mxu0 %v738
    %2566 = vmatmul.mubr.f32.gmra.mxu0 %v737
    %v2567 = vpop.f32.mrf.mxu0
    %v2568 = vadd.f32 %v2438, %v2567
    %v2569 = vpop.f32.mrf.mxu0
    %2570 = vmatprep.mubr.f32.mxu0 %v746
    %2571 = vmatmul.mubr.f32.gmra.mxu0 %v745
    %v2572 = vpop.f32.mrf.mxu0
    %v2573 = vadd.f32 %v2443, %v2572
    %v2574 = vpop.f32.mrf.mxu0
    %2575 = vdwg.mxu0
    %2576 = vmatprep.subr.mxu0 0.0
    %2577 = vmatpush1.msra.mxu0 %v2169
    %2578 = vmatprep.subr.mxu0 0.0
    %2579 = vmatpush1.msra.mxu0 %v2168
    %2580 = vmatprep.subr.mxu0 0.0
    %2581 = vmatpush1.msra.mxu0 %v2167
    %2582 = vmatprep.subr.mxu0 0.0
    %2583 = vmatpush1.msra.mxu0 %v2166
    %2584 = vmatprep.subr.mxu0 0.0
    %2585 = vmatpush1.msra.mxu0 %v2165
    %2586 = vmatprep.subr.mxu0 0.0
    %2587 = vmatpush1.msra.mxu0 %v2164
    %2588 = vmatprep.subr.mxu0 0.0
    %2589 = vmatpush1.msra.mxu0 %v2163
    %2590 = vmatprep.subr.mxu0 0.0
    %2591 = vmatpush1.msra.mxu0 %v2162
    %2592 = vmatprep.subr.mxu0 0.0
    %2593 = vmatpush1.msra.mxu0 %v2161
    %2594 = vmatprep.subr.mxu0 0.0
    %2595 = vmatpush1.msra.mxu0 %v2160
    %2596 = vmatprep.subr.mxu0 0.0
    %2597 = vmatpush1.msra.mxu0 %v2159
    %2598 = vmatprep.subr.mxu0 0.0
    %2599 = vmatpush1.msra.mxu0 %v2158
    %2600 = vmatprep.subr.mxu0 0.0
    %2601 = vmatpush1.msra.mxu0 %v2157
    %2602 = vmatprep.subr.mxu0 0.0
    %2603 = vmatpush1.msra.mxu0 %v2156
    %2604 = vmatprep.subr.mxu0 0.0
    %2605 = vmatpush1.msra.mxu0 %v2155
    %2606 = vmatprep.subr.mxu0 0.0
    %2607 = vmatpush1.msra.mxu0 %v2154
    %2608 = vmatprep.subr.mxu0 0.0
    %2609 = vmatpush2.msra.mxu0 %v2185
    %2610 = vmatprep.subr.mxu0 0.0
    %2611 = vmatpush2.msra.mxu0 %v2184
    %2612 = vmatprep.subr.mxu0 0.0
    %2613 = vmatpush2.msra.mxu0 %v2183
    %2614 = vmatprep.subr.mxu0 0.0
    %2615 = vmatpush2.msra.mxu0 %v2182
    %2616 = vmatprep.subr.mxu0 0.0
    %2617 = vmatpush2.msra.mxu0 %v2181
    %2618 = vmatprep.subr.mxu0 0.0
    %2619 = vmatpush2.msra.mxu0 %v2180
    %2620 = vmatprep.subr.mxu0 0.0
    %2621 = vmatpush2.msra.mxu0 %v2179
    %2622 = vmatprep.subr.mxu0 0.0
    %2623 = vmatpush2.msra.mxu0 %v2178
    %2624 = vmatprep.subr.mxu0 0.0
    %2625 = vmatpush2.msra.mxu0 %v2177
    %2626 = vmatprep.subr.mxu0 0.0
    %2627 = vmatpush2.msra.mxu0 %v2176
    %2628 = vmatprep.subr.mxu0 0.0
    %2629 = vmatpush2.msra.mxu0 %v2175
    %2630 = vmatprep.subr.mxu0 0.0
    %2631 = vmatpush2.msra.mxu0 %v2174
    %2632 = vmatprep.subr.mxu0 0.0
    %2633 = vmatpush2.msra.mxu0 %v2173
    %2634 = vmatprep.subr.mxu0 0.0
    %2635 = vmatpush2.msra.mxu0 %v2172
    %2636 = vmatprep.subr.mxu0 0.0
    %2637 = vmatpush2.msra.mxu0 %v2171
    %2638 = vmatprep.subr.mxu0 0.0
    %2639 = vmatpush2.msra.mxu0 %v2170
    %2640 = vmatprep.mubr.f32.mxu0 %v652
    %2641 = vmatmul.mubr.f32.gmra.mxu0 %v651
    %v2642 = vpop.f32.mrf.mxu0
    %v2643 = vadd.f32 %v2513, %v2642
    %v2644 = vpop.f32.mrf.mxu0
    %2645 = vmatprep.mubr.f32.mxu0 %v660
    %2646 = vmatmul.mubr.f32.gmra.mxu0 %v659
    %v2647 = vpop.f32.mrf.mxu0
    %v2648 = vadd.f32 %v2518, %v2647
    %v2649 = vpop.f32.mrf.mxu0
    %2650 = vmatprep.mubr.f32.mxu0 %v668
    %2651 = vmatmul.mubr.f32.gmra.mxu0 %v667
    %v2652 = vpop.f32.mrf.mxu0
    %v2653 = vadd.f32 %v2523, %v2652
    %v2654 = vpop.f32.mrf.mxu0
    %2655 = vmatprep.mubr.f32.mxu0 %v676
    %2656 = vmatmul.mubr.f32.gmra.mxu0 %v675
    %v2657 = vpop.f32.mrf.mxu0
    %v2658 = vadd.f32 %v2528, %v2657
    %v2659 = vpop.f32.mrf.mxu0
    %2660 = vmatprep.mubr.f32.mxu0 %v684
    %2661 = vmatmul.mubr.f32.gmra.mxu0 %v683
    %v2662 = vpop.f32.mrf.mxu0
    %v2663 = vadd.f32 %v2533, %v2662
    %v2664 = vpop.f32.mrf.mxu0
    %2665 = vmatprep.mubr.f32.mxu0 %v692
    %2666 = vmatmul.mubr.f32.gmra.mxu0 %v691
    %v2667 = vpop.f32.mrf.mxu0
    %v2668 = vadd.f32 %v2538, %v2667
    %v2669 = vpop.f32.mrf.mxu0
    %2670 = vmatprep.mubr.f32.mxu0 %v700
    %2671 = vmatmul.mubr.f32.gmra.mxu0 %v699
    %v2672 = vpop.f32.mrf.mxu0
    %v2673 = vadd.f32 %v2543, %v2672
    %v2674 = vpop.f32.mrf.mxu0
    %2675 = vmatprep.mubr.f32.mxu0 %v708
    %2676 = vmatmul.mubr.f32.gmra.mxu0 %v707
    %v2677 = vpop.f32.mrf.mxu0
    %v2678 = vadd.f32 %v2548, %v2677
    %v2679 = vpop.f32.mrf.mxu0
    %2680 = vmatprep.mubr.f32.mxu0 %v716
    %2681 = vmatmul.mubr.f32.gmra.mxu0 %v715
    %v2682 = vpop.f32.mrf.mxu0
    %v2683 = vadd.f32 %v2553, %v2682
    %v2684 = vpop.f32.mrf.mxu0
    %2685 = vmatprep.mubr.f32.mxu0 %v724
    %2686 = vmatmul.mubr.f32.gmra.mxu0 %v723
    %v2687 = vpop.f32.mrf.mxu0
    %v2688 = vadd.f32 %v2558, %v2687
    %v2689 = vpop.f32.mrf.mxu0
    %2690 = vmatprep.mubr.f32.mxu0 %v732
    %2691 = vmatmul.mubr.f32.gmra.mxu0 %v731
    %v2692 = vpop.f32.mrf.mxu0
    %v2693 = vadd.f32 %v2563, %v2692
    %v2694 = vpop.f32.mrf.mxu0
    %2695 = vmatprep.mubr.f32.mxu0 %v740
    %2696 = vmatmul.mubr.f32.gmra.mxu0 %v739
    %v2697 = vpop.f32.mrf.mxu0
    %v2698 = vadd.f32 %v2568, %v2697
    %v2699 = vpop.f32.mrf.mxu0
    %2700 = vmatprep.mubr.f32.mxu0 %v748
    %2701 = vmatmul.mubr.f32.gmra.mxu0 %v747
    %v2702 = vpop.f32.mrf.mxu0
    %v2703 = vadd.f32 %v2573, %v2702
    %v2704 = vpop.f32.mrf.mxu0
    %2705 = vdwg.mxu0
    %v2706 = vmax.f32 %v2045, %v2643
    %v2707 = vmax.f32 %v2046, %v2648
    %v2708 = vmax.f32 %v2047, %v2653
    %v2709 = vmax.f32 %v2048, %v2658
    %v2710 = vmax.f32 %v2049, %v2663
    %v2711 = vmax.f32 %v2050, %v2668
    %v2712 = vmax.f32 %v2051, %v2673
    %v2713 = vmax.f32 %v2052, %v2678
    %v2714 = vmax.f32 %v2053, %v2683
    %v2715 = vmax.f32 %v2054, %v2688
    %v2716 = vmax.f32 %v2055, %v2693
    %v2717 = vmax.f32 %v2056, %v2698
    %v2718 = vmax.f32 %v2057, %v2703
    %v2719 = vld [vmem:[%s1 + $0xc00] sm:$0xff]
    %v2720 = vld [vmem:[%s1 + $0xc08] sm:$0xff]
    %v2721 = vld [vmem:[%s1 + $0xc10] sm:$0xff]
    %v2722 = vld [vmem:[%s1 + $0xc18] sm:$0xff]
    %v2723 = vld [vmem:[%s1 + $0xc20] sm:$0xff]
    %v2724 = vld [vmem:[%s1 + $0xc28] sm:$0xff]
    %v2725 = vld [vmem:[%s1 + $0xc30] sm:$0xff]
    %v2726 = vld [vmem:[%s1 + $0xc38] sm:$0xff]
    %v2727 = vld [vmem:[%s1 + $0xc40] sm:$0xff]
    %v2728 = vld [vmem:[%s1 + $0xc48] sm:$0xff]
    %v2729 = vld [vmem:[%s1 + $0xc50] sm:$0xff]
    %v2730 = vld [vmem:[%s1 + $0xc58] sm:$0xff]
    %v2731 = vld [vmem:[%s1 + $0xc60] sm:$0xff]
    %v2732 = vld [vmem:[%s1 + $0xc68] sm:$0xff]
    %v2733 = vld [vmem:[%s1 + $0xc70] sm:$0xff]
    %v2734 = vld [vmem:[%s1 + $0xc78] sm:$0xff]
    %v2735 = vld [vmem:[%s1 + $0xc80] sm:$0xff]
    %v2736 = vld [vmem:[%s1 + $0xc88] sm:$0xff]
    %v2737 = vld [vmem:[%s1 + $0xc90] sm:$0xff]
    %v2738 = vld [vmem:[%s1 + $0xc98] sm:$0xff]
    %v2739 = vld [vmem:[%s1 + $0xca0] sm:$0xff]
    %v2740 = vld [vmem:[%s1 + $0xca8] sm:$0xff]
    %v2741 = vld [vmem:[%s1 + $0xcb0] sm:$0xff]
    %v2742 = vld [vmem:[%s1 + $0xcb8] sm:$0xff]
    %v2743 = vld [vmem:[%s1 + $0xcc0] sm:$0xff]
    %v2744 = vld [vmem:[%s1 + $0xcc8] sm:$0xff]
    %v2745 = vld [vmem:[%s1 + $0xcd0] sm:$0xff]
    %v2746 = vld [vmem:[%s1 + $0xcd8] sm:$0xff]
    %v2747 = vld [vmem:[%s1 + $0xce0] sm:$0xff]
    %v2748 = vld [vmem:[%s1 + $0xce8] sm:$0xff]
    %v2749 = vld [vmem:[%s1 + $0xcf0] sm:$0xff]
    %v2750 = vld [vmem:[%s1 + $0xcf8] sm:$0xff]
    %v2751 = vld [vmem:[%s1 + $0xd00] sm:$0xff]
    %v2752 = vld [vmem:[%s1 + $0xd08] sm:$0xff]
    %v2753 = vld [vmem:[%s1 + $0xd10] sm:$0xff]
    %v2754 = vld [vmem:[%s1 + $0xd18] sm:$0xff]
    %v2755 = vld [vmem:[%s1 + $0xd20] sm:$0xff]
    %v2756 = vld [vmem:[%s1 + $0xd28] sm:$0xff]
    %v2757 = vld [vmem:[%s1 + $0xd30] sm:$0xff]
    %v2758 = vld [vmem:[%s1 + $0xd38] sm:$0xff]
    %v2759 = vld [vmem:[%s1 + $0xd40] sm:$0xff]
    %v2760 = vld [vmem:[%s1 + $0xd48] sm:$0xff]
    %v2761 = vld [vmem:[%s1 + $0xd50] sm:$0xff]
    %v2762 = vld [vmem:[%s1 + $0xd58] sm:$0xff]
    %v2763 = vld [vmem:[%s1 + $0xd60] sm:$0xff]
    %v2764 = vld [vmem:[%s1 + $0xd68] sm:$0xff]
    %v2765 = vld [vmem:[%s1 + $0xd70] sm:$0xff]
    %v2766 = vld [vmem:[%s1 + $0xd78] sm:$0xff]
    %v2767 = vld [vmem:[%s1 + $0xd80] sm:$0xff]
    %v2768 = vld [vmem:[%s1 + $0xd88] sm:$0xff]
    %v2769 = vld [vmem:[%s1 + $0xd90] sm:$0xff]
    %v2770 = vld [vmem:[%s1 + $0xd98] sm:$0xff]
    %v2771 = vld [vmem:[%s1 + $0xda0] sm:$0xff]
    %v2772 = vld [vmem:[%s1 + $0xda8] sm:$0xff]
    %v2773 = vld [vmem:[%s1 + $0xdb0] sm:$0xff]
    %v2774 = vld [vmem:[%s1 + $0xdb8] sm:$0xff]
    %v2775 = vld [vmem:[%s1 + $0xdc0] sm:$0xff]
    %v2776 = vld [vmem:[%s1 + $0xdc8] sm:$0xff]
    %v2777 = vld [vmem:[%s1 + $0xdd0] sm:$0xff]
    %v2778 = vld [vmem:[%s1 + $0xdd8] sm:$0xff]
    %v2779 = vld [vmem:[%s1 + $0xde0] sm:$0xff]
    %v2780 = vld [vmem:[%s1 + $0xde8] sm:$0xff]
    %v2781 = vld [vmem:[%s1 + $0xdf0] sm:$0xff]
    %v2782 = vld [vmem:[%s1 + $0xdf8] sm:$0xff]
    %v2783 = vld [vmem:[%s1 + $0xe00] sm:$0xff]
    %v2784 = vld [vmem:[%s1 + $0xe08] sm:$0xff]
    %v2785 = vld [vmem:[%s1 + $0xe10] sm:$0xff]
    %v2786 = vld [vmem:[%s1 + $0xe18] sm:$0xff]
    %v2787 = vld [vmem:[%s1 + $0xe20] sm:$0xff]
    %v2788 = vld [vmem:[%s1 + $0xe28] sm:$0xff]
    %v2789 = vld [vmem:[%s1 + $0xe30] sm:$0xff]
    %v2790 = vld [vmem:[%s1 + $0xe38] sm:$0xff]
    %v2791 = vld [vmem:[%s1 + $0xe40] sm:$0xff]
    %v2792 = vld [vmem:[%s1 + $0xe48] sm:$0xff]
    %v2793 = vld [vmem:[%s1 + $0xe50] sm:$0xff]
    %v2794 = vld [vmem:[%s1 + $0xe58] sm:$0xff]
    %v2795 = vld [vmem:[%s1 + $0xe60] sm:$0xff]
    %v2796 = vld [vmem:[%s1 + $0xe68] sm:$0xff]
    %v2797 = vld [vmem:[%s1 + $0xe70] sm:$0xff]
    %v2798 = vld [vmem:[%s1 + $0xe78] sm:$0xff]
    %v2799 = vld [vmem:[%s1 + $0xe80] sm:$0xff]
    %v2800 = vld [vmem:[%s1 + $0xe88] sm:$0xff]
    %v2801 = vld [vmem:[%s1 + $0xe90] sm:$0xff]
    %v2802 = vld [vmem:[%s1 + $0xe98] sm:$0xff]
    %v2803 = vld [vmem:[%s1 + $0xea0] sm:$0xff]
    %v2804 = vld [vmem:[%s1 + $0xea8] sm:$0xff]
    %v2805 = vld [vmem:[%s1 + $0xeb0] sm:$0xff]
    %v2806 = vld [vmem:[%s1 + $0xeb8] sm:$0xff]
    %v2807 = vld [vmem:[%s1 + $0xec0] sm:$0xff]
    %v2808 = vld [vmem:[%s1 + $0xec8] sm:$0xff]
    %v2809 = vld [vmem:[%s1 + $0xed0] sm:$0xff]
    %v2810 = vld [vmem:[%s1 + $0xed8] sm:$0xff]
    %v2811 = vld [vmem:[%s1 + $0xee0] sm:$0xff]
    %v2812 = vld [vmem:[%s1 + $0xee8] sm:$0xff]
    %v2813 = vld [vmem:[%s1 + $0xef0] sm:$0xff]
    %v2814 = vld [vmem:[%s1 + $0xef8] sm:$0xff]
    %v2815 = vld [vmem:[%s1 + $0xf00] sm:$0xff]
    %v2816 = vld [vmem:[%s1 + $0xf08] sm:$0xff]
    %v2817 = vld [vmem:[%s1 + $0xf10] sm:$0xff]
    %v2818 = vld [vmem:[%s1 + $0xf18] sm:$0xff]
    %v2819 = vld [vmem:[%s1 + $0xf20] sm:$0xff]
    %v2820 = vld [vmem:[%s1 + $0xf28] sm:$0xff]
    %v2821 = vld [vmem:[%s1 + $0xf30] sm:$0xff]
    %v2822 = vld [vmem:[%s1 + $0xf38] sm:$0xff]
    %v2823 = vld [vmem:[%s1 + $0xf40] sm:$0xff]
    %v2824 = vld [vmem:[%s1 + $0xf48] sm:$0xff]
    %v2825 = vld [vmem:[%s1 + $0xf50] sm:$0xff]
    %v2826 = vld [vmem:[%s1 + $0xf58] sm:$0xff]
    %v2827 = vld [vmem:[%s1 + $0xf60] sm:$0xff]
    %v2828 = vld [vmem:[%s1 + $0xf68] sm:$0xff]
    %v2829 = vld [vmem:[%s1 + $0xf70] sm:$0xff]
    %v2830 = vld [vmem:[%s1 + $0xf78] sm:$0xff]
    %v2831 = vld [vmem:[%s1 + $0xf80] sm:$0xff]
    %v2832 = vld [vmem:[%s1 + $0xf88] sm:$0xff]
    %v2833 = vld [vmem:[%s1 + $0xf90] sm:$0xff]
    %v2834 = vld [vmem:[%s1 + $0xf98] sm:$0xff]
    %v2835 = vld [vmem:[%s1 + $0xfa0] sm:$0xff]
    %v2836 = vld [vmem:[%s1 + $0xfa8] sm:$0xff]
    %v2837 = vld [vmem:[%s1 + $0xfb0] sm:$0xff]
    %v2838 = vld [vmem:[%s1 + $0xfb8] sm:$0xff]
    %v2839 = vld [vmem:[%s1 + $0xfc0] sm:$0xff]
    %v2840 = vld [vmem:[%s1 + $0xfc8] sm:$0xff]
    %v2841 = vld [vmem:[%s1 + $0xfd0] sm:$0xff]
    %v2842 = vld [vmem:[%s1 + $0xfd8] sm:$0xff]
    %v2843 = vld [vmem:[%s1 + $0xfe0] sm:$0xff]
    %v2844 = vld [vmem:[%s1 + $0xfe8] sm:$0xff]
    %v2845 = vld [vmem:[%s1 + $0xff0] sm:$0xff]
    %v2846 = vld [vmem:[%s1 + $0xff8] sm:$0xff]
    %2847 = vmatprep.subr.mxu0 0.0
    %2848 = vmatpush1.msra.mxu0 %v2734
    %2849 = vmatprep.subr.mxu0 0.0
    %2850 = vmatpush1.msra.mxu0 %v2733
    %2851 = vmatprep.subr.mxu0 0.0
    %2852 = vmatpush1.msra.mxu0 %v2732
    %2853 = vmatprep.subr.mxu0 0.0
    %2854 = vmatpush1.msra.mxu0 %v2731
    %2855 = vmatprep.subr.mxu0 0.0
    %2856 = vmatpush1.msra.mxu0 %v2730
    %2857 = vmatprep.subr.mxu0 0.0
    %2858 = vmatpush1.msra.mxu0 %v2729
    %2859 = vmatprep.subr.mxu0 0.0
    %2860 = vmatpush1.msra.mxu0 %v2728
    %2861 = vmatprep.subr.mxu0 0.0
    %2862 = vmatpush1.msra.mxu0 %v2727
    %2863 = vmatprep.subr.mxu0 0.0
    %2864 = vmatpush1.msra.mxu0 %v2726
    %2865 = vmatprep.subr.mxu0 0.0
    %2866 = vmatpush1.msra.mxu0 %v2725
    %2867 = vmatprep.subr.mxu0 0.0
    %2868 = vmatpush1.msra.mxu0 %v2724
    %2869 = vmatprep.subr.mxu0 0.0
    %2870 = vmatpush1.msra.mxu0 %v2723
    %2871 = vmatprep.subr.mxu0 0.0
    %2872 = vmatpush1.msra.mxu0 %v2722
    %2873 = vmatprep.subr.mxu0 0.0
    %2874 = vmatpush1.msra.mxu0 %v2721
    %2875 = vmatprep.subr.mxu0 0.0
    %2876 = vmatpush1.msra.mxu0 %v2720
    %2877 = vmatprep.subr.mxu0 0.0
    %2878 = vmatpush1.msra.mxu0 %v2719
    %2879 = vmatprep.subr.mxu0 0.0
    %2880 = vmatpush2.msra.mxu0 %v2750
    %2881 = vmatprep.subr.mxu0 0.0
    %2882 = vmatpush2.msra.mxu0 %v2749
    %2883 = vmatprep.subr.mxu0 0.0
    %2884 = vmatpush2.msra.mxu0 %v2748
    %2885 = vmatprep.subr.mxu0 0.0
    %2886 = vmatpush2.msra.mxu0 %v2747
    %2887 = vmatprep.subr.mxu0 0.0
    %2888 = vmatpush2.msra.mxu0 %v2746
    %2889 = vmatprep.subr.mxu0 0.0
    %2890 = vmatpush2.msra.mxu0 %v2745
    %2891 = vmatprep.subr.mxu0 0.0
    %2892 = vmatpush2.msra.mxu0 %v2744
    %2893 = vmatprep.subr.mxu0 0.0
    %2894 = vmatpush2.msra.mxu0 %v2743
    %2895 = vmatprep.subr.mxu0 0.0
    %2896 = vmatpush2.msra.mxu0 %v2742
    %2897 = vmatprep.subr.mxu0 0.0
    %2898 = vmatpush2.msra.mxu0 %v2741
    %2899 = vmatprep.subr.mxu0 0.0
    %2900 = vmatpush2.msra.mxu0 %v2740
    %2901 = vmatprep.subr.mxu0 0.0
    %2902 = vmatpush2.msra.mxu0 %v2739
    %2903 = vmatprep.subr.mxu0 0.0
    %2904 = vmatpush2.msra.mxu0 %v2738
    %2905 = vmatprep.subr.mxu0 0.0
    %2906 = vmatpush2.msra.mxu0 %v2737
    %2907 = vmatprep.subr.mxu0 0.0
    %2908 = vmatpush2.msra.mxu0 %v2736
    %2909 = vmatprep.subr.mxu0 0.0
    %2910 = vmatpush2.msra.mxu0 %v2735
    %2911 = vmatprep.mubr.f32.mxu0 %v646
    %2912 = vmatmul.mubr.f32.gmra.mxu0 %v645
    %v2913 = vpop.f32.mrf.mxu0
    %v2914 = vadd.f32 0.0, %v2913
    %v2915 = vpop.f32.mrf.mxu0
    %2916 = vmatprep.mubr.f32.mxu0 %v654
    %2917 = vmatmul.mubr.f32.gmra.mxu0 %v653
    %v2918 = vpop.f32.mrf.mxu0
    %v2919 = vadd.f32 0.0, %v2918
    %v2920 = vpop.f32.mrf.mxu0
    %2921 = vmatprep.mubr.f32.mxu0 %v662
    %2922 = vmatmul.mubr.f32.gmra.mxu0 %v661
    %v2923 = vpop.f32.mrf.mxu0
    %v2924 = vadd.f32 0.0, %v2923
    %v2925 = vpop.f32.mrf.mxu0
    %2926 = vmatprep.mubr.f32.mxu0 %v670
    %2927 = vmatmul.mubr.f32.gmra.mxu0 %v669
    %v2928 = vpop.f32.mrf.mxu0
    %v2929 = vadd.f32 0.0, %v2928
    %v2930 = vpop.f32.mrf.mxu0
    %2931 = vmatprep.mubr.f32.mxu0 %v678
    %2932 = vmatmul.mubr.f32.gmra.mxu0 %v677
    %v2933 = vpop.f32.mrf.mxu0
    %v2934 = vadd.f32 0.0, %v2933
    %v2935 = vpop.f32.mrf.mxu0
    %2936 = vmatprep.mubr.f32.mxu0 %v686
    %2937 = vmatmul.mubr.f32.gmra.mxu0 %v685
    %v2938 = vpop.f32.mrf.mxu0
    %v2939 = vadd.f32 0.0, %v2938
    %v2940 = vpop.f32.mrf.mxu0
    %2941 = vmatprep.mubr.f32.mxu0 %v694
    %2942 = vmatmul.mubr.f32.gmra.mxu0 %v693
    %v2943 = vpop.f32.mrf.mxu0
    %v2944 = vadd.f32 0.0, %v2943
    %v2945 = vpop.f32.mrf.mxu0
    %2946 = vmatprep.mubr.f32.mxu0 %v702
    %2947 = vmatmul.mubr.f32.gmra.mxu0 %v701
    %v2948 = vpop.f32.mrf.mxu0
    %v2949 = vadd.f32 0.0, %v2948
    %v2950 = vpop.f32.mrf.mxu0
    %2951 = vmatprep.mubr.f32.mxu0 %v710
    %2952 = vmatmul.mubr.f32.gmra.mxu0 %v709
    %v2953 = vpop.f32.mrf.mxu0
    %v2954 = vadd.f32 0.0, %v2953
    %v2955 = vpop.f32.mrf.mxu0
    %2956 = vmatprep.mubr.f32.mxu0 %v718
    %2957 = vmatmul.mubr.f32.gmra.mxu0 %v717
    %v2958 = vpop.f32.mrf.mxu0
    %v2959 = vadd.f32 0.0, %v2958
    %v2960 = vpop.f32.mrf.mxu0
    %2961 = vmatprep.mubr.f32.mxu0 %v726
    %2962 = vmatmul.mubr.f32.gmra.mxu0 %v725
    %v2963 = vpop.f32.mrf.mxu0
    %v2964 = vadd.f32 0.0, %v2963
    %v2965 = vpop.f32.mrf.mxu0
    %2966 = vmatprep.mubr.f32.mxu0 %v734
    %2967 = vmatmul.mubr.f32.gmra.mxu0 %v733
    %v2968 = vpop.f32.mrf.mxu0
    %v2969 = vadd.f32 0.0, %v2968
    %v2970 = vpop.f32.mrf.mxu0
    %2971 = vmatprep.mubr.f32.mxu0 %v742
    %2972 = vmatmul.mubr.f32.gmra.mxu0 %v741
    %v2973 = vpop.f32.mrf.mxu0
    %v2974 = vadd.f32 0.0, %v2973
    %v2975 = vpop.f32.mrf.mxu0
    %2976 = vdwg.mxu0
    %2977 = vmatprep.subr.mxu0 0.0
    %2978 = vmatpush1.msra.mxu0 %v2766
    %2979 = vmatprep.subr.mxu0 0.0
    %2980 = vmatpush1.msra.mxu0 %v2765
    %2981 = vmatprep.subr.mxu0 0.0
    %2982 = vmatpush1.msra.mxu0 %v2764
    %2983 = vmatprep.subr.mxu0 0.0
    %2984 = vmatpush1.msra.mxu0 %v2763
    %2985 = vmatprep.subr.mxu0 0.0
    %2986 = vmatpush1.msra.mxu0 %v2762
    %2987 = vmatprep.subr.mxu0 0.0
    %2988 = vmatpush1.msra.mxu0 %v2761
    %2989 = vmatprep.subr.mxu0 0.0
    %2990 = vmatpush1.msra.mxu0 %v2760
    %2991 = vmatprep.subr.mxu0 0.0
    %2992 = vmatpush1.msra.mxu0 %v2759
    %2993 = vmatprep.subr.mxu0 0.0
    %2994 = vmatpush1.msra.mxu0 %v2758
    %2995 = vmatprep.subr.mxu0 0.0
    %2996 = vmatpush1.msra.mxu0 %v2757
    %2997 = vmatprep.subr.mxu0 0.0
    %2998 = vmatpush1.msra.mxu0 %v2756
    %2999 = vmatprep.subr.mxu0 0.0
    %3000 = vmatpush1.msra.mxu0 %v2755
    %3001 = vmatprep.subr.mxu0 0.0
    %3002 = vmatpush1.msra.mxu0 %v2754
    %3003 = vmatprep.subr.mxu0 0.0
    %3004 = vmatpush1.msra.mxu0 %v2753
    %3005 = vmatprep.subr.mxu0 0.0
    %3006 = vmatpush1.msra.mxu0 %v2752
    %3007 = vmatprep.subr.mxu0 0.0
    %3008 = vmatpush1.msra.mxu0 %v2751
    %3009 = vmatprep.subr.mxu0 0.0
    %3010 = vmatpush2.msra.mxu0 %v2782
    %3011 = vmatprep.subr.mxu0 0.0
    %3012 = vmatpush2.msra.mxu0 %v2781
    %3013 = vmatprep.subr.mxu0 0.0
    %3014 = vmatpush2.msra.mxu0 %v2780
    %3015 = vmatprep.subr.mxu0 0.0
    %3016 = vmatpush2.msra.mxu0 %v2779
    %3017 = vmatprep.subr.mxu0 0.0
    %3018 = vmatpush2.msra.mxu0 %v2778
    %3019 = vmatprep.subr.mxu0 0.0
    %3020 = vmatpush2.msra.mxu0 %v2777
    %3021 = vmatprep.subr.mxu0 0.0
    %3022 = vmatpush2.msra.mxu0 %v2776
    %3023 = vmatprep.subr.mxu0 0.0
    %3024 = vmatpush2.msra.mxu0 %v2775
    %3025 = vmatprep.subr.mxu0 0.0
    %3026 = vmatpush2.msra.mxu0 %v2774
    %3027 = vmatprep.subr.mxu0 0.0
    %3028 = vmatpush2.msra.mxu0 %v2773
    %3029 = vmatprep.subr.mxu0 0.0
    %3030 = vmatpush2.msra.mxu0 %v2772
    %3031 = vmatprep.subr.mxu0 0.0
    %3032 = vmatpush2.msra.mxu0 %v2771
    %3033 = vmatprep.subr.mxu0 0.0
    %3034 = vmatpush2.msra.mxu0 %v2770
    %3035 = vmatprep.subr.mxu0 0.0
    %3036 = vmatpush2.msra.mxu0 %v2769
    %3037 = vmatprep.subr.mxu0 0.0
    %3038 = vmatpush2.msra.mxu0 %v2768
    %3039 = vmatprep.subr.mxu0 0.0
    %3040 = vmatpush2.msra.mxu0 %v2767
    %3041 = vmatprep.mubr.f32.mxu0 %v648
    %3042 = vmatmul.mubr.f32.gmra.mxu0 %v647
    %v3043 = vpop.f32.mrf.mxu0
    %v3044 = vadd.f32 %v2914, %v3043
    %v3045 = vpop.f32.mrf.mxu0
    %3046 = vmatprep.mubr.f32.mxu0 %v656
    %3047 = vmatmul.mubr.f32.gmra.mxu0 %v655
    %v3048 = vpop.f32.mrf.mxu0
    %v3049 = vadd.f32 %v2919, %v3048
    %v3050 = vpop.f32.mrf.mxu0
    %3051 = vmatprep.mubr.f32.mxu0 %v664
    %3052 = vmatmul.mubr.f32.gmra.mxu0 %v663
    %v3053 = vpop.f32.mrf.mxu0
    %v3054 = vadd.f32 %v2924, %v3053
    %v3055 = vpop.f32.mrf.mxu0
    %3056 = vmatprep.mubr.f32.mxu0 %v672
    %3057 = vmatmul.mubr.f32.gmra.mxu0 %v671
    %v3058 = vpop.f32.mrf.mxu0
    %v3059 = vadd.f32 %v2929, %v3058
    %v3060 = vpop.f32.mrf.mxu0
    %3061 = vmatprep.mubr.f32.mxu0 %v680
    %3062 = vmatmul.mubr.f32.gmra.mxu0 %v679
    %v3063 = vpop.f32.mrf.mxu0
    %v3064 = vadd.f32 %v2934, %v3063
    %v3065 = vpop.f32.mrf.mxu0
    %3066 = vmatprep.mubr.f32.mxu0 %v688
    %3067 = vmatmul.mubr.f32.gmra.mxu0 %v687
    %v3068 = vpop.f32.mrf.mxu0
    %v3069 = vadd.f32 %v2939, %v3068
    %v3070 = vpop.f32.mrf.mxu0
    %3071 = vmatprep.mubr.f32.mxu0 %v696
    %3072 = vmatmul.mubr.f32.gmra.mxu0 %v695
    %v3073 = vpop.f32.mrf.mxu0
    %v3074 = vadd.f32 %v2944, %v3073
    %v3075 = vpop.f32.mrf.mxu0
    %3076 = vmatprep.mubr.f32.mxu0 %v704
    %3077 = vmatmul.mubr.f32.gmra.mxu0 %v703
    %v3078 = vpop.f32.mrf.mxu0
    %v3079 = vadd.f32 %v2949, %v3078
    %v3080 = vpop.f32.mrf.mxu0
    %3081 = vmatprep.mubr.f32.mxu0 %v712
    %3082 = vmatmul.mubr.f32.gmra.mxu0 %v711
    %v3083 = vpop.f32.mrf.mxu0
    %v3084 = vadd.f32 %v2954, %v3083
    %v3085 = vpop.f32.mrf.mxu0
    %3086 = vmatprep.mubr.f32.mxu0 %v720
    %3087 = vmatmul.mubr.f32.gmra.mxu0 %v719
    %v3088 = vpop.f32.mrf.mxu0
    %v3089 = vadd.f32 %v2959, %v3088
    %v3090 = vpop.f32.mrf.mxu0
    %3091 = vmatprep.mubr.f32.mxu0 %v728
    %3092 = vmatmul.mubr.f32.gmra.mxu0 %v727
    %v3093 = vpop.f32.mrf.mxu0
    %v3094 = vadd.f32 %v2964, %v3093
    %v3095 = vpop.f32.mrf.mxu0
    %3096 = vmatprep.mubr.f32.mxu0 %v736
    %3097 = vmatmul.mubr.f32.gmra.mxu0 %v735
    %v3098 = vpop.f32.mrf.mxu0
    %v3099 = vadd.f32 %v2969, %v3098
    %v3100 = vpop.f32.mrf.mxu0
    %3101 = vmatprep.mubr.f32.mxu0 %v744
    %3102 = vmatmul.mubr.f32.gmra.mxu0 %v743
    %v3103 = vpop.f32.mrf.mxu0
    %v3104 = vadd.f32 %v2974, %v3103
    %v3105 = vpop.f32.mrf.mxu0
    %3106 = vdwg.mxu0
    %3107 = vmatprep.subr.mxu0 0.0
    %3108 = vmatpush1.msra.mxu0 %v2798
    %3109 = vmatprep.subr.mxu0 0.0
    %3110 = vmatpush1.msra.mxu0 %v2797
    %3111 = vmatprep.subr.mxu0 0.0
    %3112 = vmatpush1.msra.mxu0 %v2796
    %3113 = vmatprep.subr.mxu0 0.0
    %3114 = vmatpush1.msra.mxu0 %v2795
    %3115 = vmatprep.subr.mxu0 0.0
    %3116 = vmatpush1.msra.mxu0 %v2794
    %3117 = vmatprep.subr.mxu0 0.0
    %3118 = vmatpush1.msra.mxu0 %v2793
    %3119 = vmatprep.subr.mxu0 0.0
    %3120 = vmatpush1.msra.mxu0 %v2792
    %3121 = vmatprep.subr.mxu0 0.0
    %3122 = vmatpush1.msra.mxu0 %v2791
    %3123 = vmatprep.subr.mxu0 0.0
    %3124 = vmatpush1.msra.mxu0 %v2790
    %3125 = vmatprep.subr.mxu0 0.0
    %3126 = vmatpush1.msra.mxu0 %v2789
    %3127 = vmatprep.subr.mxu0 0.0
    %3128 = vmatpush1.msra.mxu0 %v2788
    %3129 = vmatprep.subr.mxu0 0.0
    %3130 = vmatpush1.msra.mxu0 %v2787
    %3131 = vmatprep.subr.mxu0 0.0
    %3132 = vmatpush1.msra.mxu0 %v2786
    %3133 = vmatprep.subr.mxu0 0.0
    %3134 = vmatpush1.msra.mxu0 %v2785
    %3135 = vmatprep.subr.mxu0 0.0
    %3136 = vmatpush1.msra.mxu0 %v2784
    %3137 = vmatprep.subr.mxu0 0.0
    %3138 = vmatpush1.msra.mxu0 %v2783
    %3139 = vmatprep.subr.mxu0 0.0
    %3140 = vmatpush2.msra.mxu0 %v2814
    %3141 = vmatprep.subr.mxu0 0.0
    %3142 = vmatpush2.msra.mxu0 %v2813
    %3143 = vmatprep.subr.mxu0 0.0
    %3144 = vmatpush2.msra.mxu0 %v2812
    %3145 = vmatprep.subr.mxu0 0.0
    %3146 = vmatpush2.msra.mxu0 %v2811
    %3147 = vmatprep.subr.mxu0 0.0
    %3148 = vmatpush2.msra.mxu0 %v2810
    %3149 = vmatprep.subr.mxu0 0.0
    %3150 = vmatpush2.msra.mxu0 %v2809
    %3151 = vmatprep.subr.mxu0 0.0
    %3152 = vmatpush2.msra.mxu0 %v2808
    %3153 = vmatprep.subr.mxu0 0.0
    %3154 = vmatpush2.msra.mxu0 %v2807
    %3155 = vmatprep.subr.mxu0 0.0
    %3156 = vmatpush2.msra.mxu0 %v2806
    %3157 = vmatprep.subr.mxu0 0.0
    %3158 = vmatpush2.msra.mxu0 %v2805
    %3159 = vmatprep.subr.mxu0 0.0
    %3160 = vmatpush2.msra.mxu0 %v2804
    %3161 = vmatprep.subr.mxu0 0.0
    %3162 = vmatpush2.msra.mxu0 %v2803
    %3163 = vmatprep.subr.mxu0 0.0
    %3164 = vmatpush2.msra.mxu0 %v2802
    %3165 = vmatprep.subr.mxu0 0.0
    %3166 = vmatpush2.msra.mxu0 %v2801
    %3167 = vmatprep.subr.mxu0 0.0
    %3168 = vmatpush2.msra.mxu0 %v2800
    %3169 = vmatprep.subr.mxu0 0.0
    %3170 = vmatpush2.msra.mxu0 %v2799
    %3171 = vmatprep.mubr.f32.mxu0 %v650
    %3172 = vmatmul.mubr.f32.gmra.mxu0 %v649
    %v3173 = vpop.f32.mrf.mxu0
    %v3174 = vadd.f32 %v3044, %v3173
    %v3175 = vpop.f32.mrf.mxu0
    %3176 = vmatprep.mubr.f32.mxu0 %v658
    %3177 = vmatmul.mubr.f32.gmra.mxu0 %v657
    %v3178 = vpop.f32.mrf.mxu0
    %v3179 = vadd.f32 %v3049, %v3178
    %v3180 = vpop.f32.mrf.mxu0
    %3181 = vmatprep.mubr.f32.mxu0 %v666
    %3182 = vmatmul.mubr.f32.gmra.mxu0 %v665
    %v3183 = vpop.f32.mrf.mxu0
    %v3184 = vadd.f32 %v3054, %v3183
    %v3185 = vpop.f32.mrf.mxu0
    %3186 = vmatprep.mubr.f32.mxu0 %v674
    %3187 = vmatmul.mubr.f32.gmra.mxu0 %v673
    %v3188 = vpop.f32.mrf.mxu0
    %v3189 = vadd.f32 %v3059, %v3188
    %v3190 = vpop.f32.mrf.mxu0
    %3191 = vmatprep.mubr.f32.mxu0 %v682
    %3192 = vmatmul.mubr.f32.gmra.mxu0 %v681
    %v3193 = vpop.f32.mrf.mxu0
    %v3194 = vadd.f32 %v3064, %v3193
    %v3195 = vpop.f32.mrf.mxu0
    %3196 = vmatprep.mubr.f32.mxu0 %v690
    %3197 = vmatmul.mubr.f32.gmra.mxu0 %v689
    %v3198 = vpop.f32.mrf.mxu0
    %v3199 = vadd.f32 %v3069, %v3198
    %v3200 = vpop.f32.mrf.mxu0
    %3201 = vmatprep.mubr.f32.mxu0 %v698
    %3202 = vmatmul.mubr.f32.gmra.mxu0 %v697
    %v3203 = vpop.f32.mrf.mxu0
    %v3204 = vadd.f32 %v3074, %v3203
    %v3205 = vpop.f32.mrf.mxu0
    %3206 = vmatprep.mubr.f32.mxu0 %v706
    %3207 = vmatmul.mubr.f32.gmra.mxu0 %v705
    %v3208 = vpop.f32.mrf.mxu0
    %v3209 = vadd.f32 %v3079, %v3208
    %v3210 = vpop.f32.mrf.mxu0
    %3211 = vmatprep.mubr.f32.mxu0 %v714
    %3212 = vmatmul.mubr.f32.gmra.mxu0 %v713
    %v3213 = vpop.f32.mrf.mxu0
    %v3214 = vadd.f32 %v3084, %v3213
    %v3215 = vpop.f32.mrf.mxu0
    %3216 = vmatprep.mubr.f32.mxu0 %v722
    %3217 = vmatmul.mubr.f32.gmra.mxu0 %v721
    %v3218 = vpop.f32.mrf.mxu0
    %v3219 = vadd.f32 %v3089, %v3218
    %v3220 = vpop.f32.mrf.mxu0
    %3221 = vmatprep.mubr.f32.mxu0 %v730
    %3222 = vmatmul.mubr.f32.gmra.mxu0 %v729
    %v3223 = vpop.f32.mrf.mxu0
    %v3224 = vadd.f32 %v3094, %v3223
    %v3225 = vpop.f32.mrf.mxu0
    %3226 = vmatprep.mubr.f32.mxu0 %v738
    %3227 = vmatmul.mubr.f32.gmra.mxu0 %v737
    %v3228 = vpop.f32.mrf.mxu0
    %v3229 = vadd.f32 %v3099, %v3228
    %v3230 = vpop.f32.mrf.mxu0
    %3231 = vmatprep.mubr.f32.mxu0 %v746
    %3232 = vmatmul.mubr.f32.gmra.mxu0 %v745
    %v3233 = vpop.f32.mrf.mxu0
    %v3234 = vadd.f32 %v3104, %v3233
    %v3235 = vpop.f32.mrf.mxu0
    %3236 = vdwg.mxu0
    %3237 = vmatprep.subr.mxu0 0.0
    %3238 = vmatpush1.msra.mxu0 %v2830
    %3239 = vmatprep.subr.mxu0 0.0
    %3240 = vmatpush1.msra.mxu0 %v2829
    %3241 = vmatprep.subr.mxu0 0.0
    %3242 = vmatpush1.msra.mxu0 %v2828
    %3243 = vmatprep.subr.mxu0 0.0
    %3244 = vmatpush1.msra.mxu0 %v2827
    %3245 = vmatprep.subr.mxu0 0.0
    %3246 = vmatpush1.msra.mxu0 %v2826
    %3247 = vmatprep.subr.mxu0 0.0
    %3248 = vmatpush1.msra.mxu0 %v2825
    %3249 = vmatprep.subr.mxu0 0.0
    %3250 = vmatpush1.msra.mxu0 %v2824
    %3251 = vmatprep.subr.mxu0 0.0
    %3252 = vmatpush1.msra.mxu0 %v2823
    %3253 = vmatprep.subr.mxu0 0.0
    %3254 = vmatpush1.msra.mxu0 %v2822
    %3255 = vmatprep.subr.mxu0 0.0
    %3256 = vmatpush1.msra.mxu0 %v2821
    %3257 = vmatprep.subr.mxu0 0.0
    %3258 = vmatpush1.msra.mxu0 %v2820
    %3259 = vmatprep.subr.mxu0 0.0
    %3260 = vmatpush1.msra.mxu0 %v2819
    %3261 = vmatprep.subr.mxu0 0.0
    %3262 = vmatpush1.msra.mxu0 %v2818
    %3263 = vmatprep.subr.mxu0 0.0
    %3264 = vmatpush1.msra.mxu0 %v2817
    %3265 = vmatprep.subr.mxu0 0.0
    %3266 = vmatpush1.msra.mxu0 %v2816
    %3267 = vmatprep.subr.mxu0 0.0
    %3268 = vmatpush1.msra.mxu0 %v2815
    %3269 = vmatprep.subr.mxu0 0.0
    %3270 = vmatpush2.msra.mxu0 %v2846
    %3271 = vmatprep.subr.mxu0 0.0
    %3272 = vmatpush2.msra.mxu0 %v2845
    %3273 = vmatprep.subr.mxu0 0.0
    %3274 = vmatpush2.msra.mxu0 %v2844
    %3275 = vmatprep.subr.mxu0 0.0
    %3276 = vmatpush2.msra.mxu0 %v2843
    %3277 = vmatprep.subr.mxu0 0.0
    %3278 = vmatpush2.msra.mxu0 %v2842
    %3279 = vmatprep.subr.mxu0 0.0
    %3280 = vmatpush2.msra.mxu0 %v2841
    %3281 = vmatprep.subr.mxu0 0.0
    %3282 = vmatpush2.msra.mxu0 %v2840
    %3283 = vmatprep.subr.mxu0 0.0
    %3284 = vmatpush2.msra.mxu0 %v2839
    %3285 = vmatprep.subr.mxu0 0.0
    %3286 = vmatpush2.msra.mxu0 %v2838
    %3287 = vmatprep.subr.mxu0 0.0
    %3288 = vmatpush2.msra.mxu0 %v2837
    %3289 = vmatprep.subr.mxu0 0.0
    %3290 = vmatpush2.msra.mxu0 %v2836
    %3291 = vmatprep.subr.mxu0 0.0
    %3292 = vmatpush2.msra.mxu0 %v2835
    %3293 = vmatprep.subr.mxu0 0.0
    %3294 = vmatpush2.msra.mxu0 %v2834
    %3295 = vmatprep.subr.mxu0 0.0
    %3296 = vmatpush2.msra.mxu0 %v2833
    %3297 = vmatprep.subr.mxu0 0.0
    %3298 = vmatpush2.msra.mxu0 %v2832
    %3299 = vmatprep.subr.mxu0 0.0
    %3300 = vmatpush2.msra.mxu0 %v2831
    %3301 = vmatprep.mubr.f32.mxu0 %v652
    %3302 = vmatmul.mubr.f32.gmra.mxu0 %v651
    %v3303 = vpop.f32.mrf.mxu0
    %v3304 = vadd.f32 %v3174, %v3303
    %v3305 = vpop.f32.mrf.mxu0
    %3306 = vmatprep.mubr.f32.mxu0 %v660
    %3307 = vmatmul.mubr.f32.gmra.mxu0 %v659
    %v3308 = vpop.f32.mrf.mxu0
    %v3309 = vadd.f32 %v3179, %v3308
    %v3310 = vpop.f32.mrf.mxu0
    %3311 = vmatprep.mubr.f32.mxu0 %v668
    %3312 = vmatmul.mubr.f32.gmra.mxu0 %v667
    %v3313 = vpop.f32.mrf.mxu0
    %v3314 = vadd.f32 %v3184, %v3313
    %v3315 = vpop.f32.mrf.mxu0
    %3316 = vmatprep.mubr.f32.mxu0 %v676
    %3317 = vmatmul.mubr.f32.gmra.mxu0 %v675
    %v3318 = vpop.f32.mrf.mxu0
    %v3319 = vadd.f32 %v3189, %v3318
    %v3320 = vpop.f32.mrf.mxu0
    %3321 = vmatprep.mubr.f32.mxu0 %v684
    %3322 = vmatmul.mubr.f32.gmra.mxu0 %v683
    %v3323 = vpop.f32.mrf.mxu0
    %v3324 = vadd.f32 %v3194, %v3323
    %v3325 = vpop.f32.mrf.mxu0
    %3326 = vmatprep.mubr.f32.mxu0 %v692
    %3327 = vmatmul.mubr.f32.gmra.mxu0 %v691
    %v3328 = vpop.f32.mrf.mxu0
    %v3329 = vadd.f32 %v3199, %v3328
    %v3330 = vpop.f32.mrf.mxu0
    %3331 = vmatprep.mubr.f32.mxu0 %v700
    %3332 = vmatmul.mubr.f32.gmra.mxu0 %v699
    %v3333 = vpop.f32.mrf.mxu0
    %v3334 = vadd.f32 %v3204, %v3333
    %v3335 = vpop.f32.mrf.mxu0
    %3336 = vmatprep.mubr.f32.mxu0 %v708
    %3337 = vmatmul.mubr.f32.gmra.mxu0 %v707
    %v3338 = vpop.f32.mrf.mxu0
    %v3339 = vadd.f32 %v3209, %v3338
    %v3340 = vpop.f32.mrf.mxu0
    %3341 = vmatprep.mubr.f32.mxu0 %v716
    %3342 = vmatmul.mubr.f32.gmra.mxu0 %v715
    %v3343 = vpop.f32.mrf.mxu0
    %v3344 = vadd.f32 %v3214, %v3343
    %v3345 = vpop.f32.mrf.mxu0
    %3346 = vmatprep.mubr.f32.mxu0 %v724
    %3347 = vmatmul.mubr.f32.gmra.mxu0 %v723
    %v3348 = vpop.f32.mrf.mxu0
    %v3349 = vadd.f32 %v3219, %v3348
    %v3350 = vpop.f32.mrf.mxu0
    %3351 = vmatprep.mubr.f32.mxu0 %v732
    %3352 = vmatmul.mubr.f32.gmra.mxu0 %v731
    %v3353 = vpop.f32.mrf.mxu0
    %v3354 = vadd.f32 %v3224, %v3353
    %v3355 = vpop.f32.mrf.mxu0
    %3356 = vmatprep.mubr.f32.mxu0 %v740
    %3357 = vmatmul.mubr.f32.gmra.mxu0 %v739
    %v3358 = vpop.f32.mrf.mxu0
    %v3359 = vadd.f32 %v3229, %v3358
    %v3360 = vpop.f32.mrf.mxu0
    %3361 = vmatprep.mubr.f32.mxu0 %v748
    %3362 = vmatmul.mubr.f32.gmra.mxu0 %v747
    %v3363 = vpop.f32.mrf.mxu0
    %v3364 = vadd.f32 %v3234, %v3363
    %v3365 = vpop.f32.mrf.mxu0
    %3366 = vdwg.mxu0
    %v3367 = vmax.f32 %v2706, %v3304
    %v3368 = vmax.f32 %v2707, %v3309
    %v3369 = vmax.f32 %v2708, %v3314
    %v3370 = vmax.f32 %v2709, %v3319
    %v3371 = vmax.f32 %v2710, %v3324
    %v3372 = vmax.f32 %v2711, %v3329
    %v3373 = vmax.f32 %v2712, %v3334
    %v3374 = vmax.f32 %v2713, %v3339
    %v3375 = vmax.f32 %v2714, %v3344
    %v3376 = vmax.f32 %v2715, %v3349
    %v3377 = vmax.f32 %v2716, %v3354
    %v3378 = vmax.f32 %v2717, %v3359
    %v3379 = vmax.f32 %v2718, %v3364
    %v3380 = vld [vmem:[%s2] sm:$0x1]
    %v3382 = vlaneseq
    %v3383 = vshrl.u32 %v3382, 7
    %v3384 = vsub.s32 0, %v3383
    %v3385 = vrot.slane %v3380, %v3384
    %v3387 = vadd.f32 %v3367, %v3385
    %v3388 = vadd.f32 %v3368, %v3385
    %v3389 = vadd.f32 %v3369, %v3385
    %v3390 = vadd.f32 %v3370, %v3385
    %v3391 = vadd.f32 %v3371, %v3385
    %v3392 = vadd.f32 %v3372, %v3385
    %v3393 = vadd.f32 %v3373, %v3385
    %v3394 = vadd.f32 %v3374, %v3385
    %v3395 = vadd.f32 %v3375, %v3385
    %v3396 = vadd.f32 %v3376, %v3385
    %v3397 = vadd.f32 %v3377, %v3385
    %v3398 = vadd.f32 %v3378, %v3385
    %v3399 = vadd.f32 %v3379, %v3385
    %v3400 = vmax.f32 %v3387, 0.0
    %v3401 = vmax.f32 %v3388, 0.0
    %v3402 = vmax.f32 %v3389, 0.0
    %v3403 = vmax.f32 %v3390, 0.0
    %v3404 = vmax.f32 %v3391, 0.0
    %v3405 = vmax.f32 %v3392, 0.0
    %v3406 = vmax.f32 %v3393, 0.0
    %v3407 = vmax.f32 %v3394, 0.0
    %v3408 = vmax.f32 %v3395, 0.0
    %v3409 = vmax.f32 %v3396, 0.0
    %v3410 = vmax.f32 %v3397, 0.0
    %v3411 = vmax.f32 %v3398, 0.0
    %v3412 = vmax.f32 %v3399, 0.0
    %3413 = vst [vmem:[#allocation3] sm:$0xff] %v3400
    %3414 = vst [vmem:[#allocation3 + $0x8] sm:$0xff] %v3401
    %3415 = vst [vmem:[#allocation3 + $0x10] sm:$0xff] %v3402
    %3416 = vst [vmem:[#allocation3 + $0x18] sm:$0xff] %v3403
    %3417 = vst [vmem:[#allocation3 + $0x20] sm:$0xff] %v3404
    %3418 = vst [vmem:[#allocation3 + $0x28] sm:$0xff] %v3405
    %3419 = vst [vmem:[#allocation3 + $0x30] sm:$0xff] %v3406
    %3420 = vst [vmem:[#allocation3 + $0x38] sm:$0xff] %v3407
    %3421 = vst [vmem:[#allocation3 + $0x40] sm:$0xff] %v3408
    %3422 = vst [vmem:[#allocation3 + $0x48] sm:$0xff] %v3409
    %3423 = vst [vmem:[#allocation3 + $0x50] sm:$0xff] %v3410
    %3424 = vst [vmem:[#allocation3 + $0x58] sm:$0xff] %v3411
    %3425 = vst [vmem:[#allocation3 + $0x60] sm:$0x3] %v3412
    %v3426 = vld [vmem:[#allocation3] sm:$0x1f]
    %3427 = vst [vmem:[#allocation4] sm:$0x1f] %v3426
    %v3428 = vld [vmem:[#allocation3 + $0x1] sm:$0x1f]
    %3429 = vst [vmem:[#allocation4 + $0x8] sm:$0x1f] %v3428
    %v3430 = vld [vmem:[#allocation3 + $0x2] sm:$0x1f]
    %3431 = vst [vmem:[#allocation4 + $0x10] sm:$0x1f] %v3430
    %v3432 = vld [vmem:[#allocation3 + $0x7] sm:$0x1f]
    %3433 = vst [vmem:[#allocation4 + $0x18] sm:$0x1f] %v3432
    %v3434 = vld [vmem:[#allocation3 + $0x8] sm:$0x1f]
    %3435 = vst [vmem:[#allocation4 + $0x20] sm:$0x1f] %v3434
    %v3436 = vld [vmem:[#allocation3 + $0x9] sm:$0x1f]
    %3437 = vst [vmem:[#allocation4 + $0x28] sm:$0x1f] %v3436
    %v3438 = vld [vmem:[#allocation3 + $0xe] sm:$0x1f]
    %3439 = vst [vmem:[#allocation4 + $0x30] sm:$0x1f] %v3438
    %v3440 = vld [vmem:[#allocation3 + $0xf] sm:$0x1f]
    %3441 = vst [vmem:[#allocation4 + $0x38] sm:$0x1f] %v3440
    %v3442 = vld [vmem:[#allocation3 + $0x10] sm:$0x1f]
    %3443 = vst [vmem:[#allocation4 + $0x40] sm:$0x1f] %v3442
    %v3444 = vld [vmem:[#allocation3 + $0x7] sm:$0x1f]
    %v3446 = vrot.slane %v3444, 3
    %3448 = vst [vmem:[#allocation4] sm:$0xe0] %v3446
    %3449 = vst [vmem:[#allocation4 + $0x48] sm:$0x3] %v3446
    %v3450 = vld [vmem:[#allocation3 + $0x8] sm:$0x1f]
    %v3452 = vrot.slane %v3450, 3
    %3454 = vst [vmem:[#allocation4 + $0x8] sm:$0xe0] %v3452
    %3455 = vst [vmem:[#allocation4 + $0x50] sm:$0x3] %v3452
    %v3456 = vld [vmem:[#allocation3 + $0x9] sm:$0x1f]
    %v3458 = vrot.slane %v3456, 3
    %3460 = vst [vmem:[#allocation4 + $0x10] sm:$0xe0] %v3458
    %3461 = vst [vmem:[#allocation4 + $0x58] sm:$0x3] %v3458
    %v3462 = vld [vmem:[#allocation3 + $0xe] sm:$0x1f]
    %v3464 = vrot.slane %v3462, 3
    %3466 = vst [vmem:[#allocation4 + $0x18] sm:$0xe0] %v3464
    %3467 = vst [vmem:[#allocation4 + $0x60] sm:$0x3] %v3464
    %v3468 = vld [vmem:[#allocation3 + $0xf] sm:$0x1f]
    %v3470 = vrot.slane %v3468, 3
    %3472 = vst [vmem:[#allocation4 + $0x20] sm:$0xe0] %v3470
    %3473 = vst [vmem:[#allocation4 + $0x68] sm:$0x3] %v3470
    %v3474 = vld [vmem:[#allocation3 + $0x10] sm:$0x1f]
    %v3476 = vrot.slane %v3474, 3
    %3478 = vst [vmem:[#allocation4 + $0x28] sm:$0xe0] %v3476
    %3479 = vst [vmem:[#allocation4 + $0x70] sm:$0x3] %v3476
    %v3480 = vld [vmem:[#allocation3 + $0x15] sm:$0x1f]
    %v3482 = vrot.slane %v3480, 3
    %3484 = vst [vmem:[#allocation4 + $0x30] sm:$0xe0] %v3482
    %3485 = vst [vmem:[#allocation4 + $0x78] sm:$0x3] %v3482
    %v3486 = vld [vmem:[#allocation3 + $0x16] sm:$0x1f]
    %v3488 = vrot.slane %v3486, 3
    %3490 = vst [vmem:[#allocation4 + $0x38] sm:$0xe0] %v3488
    %3491 = vst [vmem:[#allocation4 + $0x80] sm:$0x3] %v3488
    %v3492 = vld [vmem:[#allocation3 + $0x17] sm:$0x1f]
    %v3494 = vrot.slane %v3492, 3
    %3496 = vst [vmem:[#allocation4 + $0x40] sm:$0xe0] %v3494
    %3497 = vst [vmem:[#allocation4 + $0x88] sm:$0x3] %v3494
    %v3498 = vld [vmem:[#allocation3 + $0xe] sm:$0x1f]
    %v3500 = vrot.slane %v3498, 6
    %3502 = vst [vmem:[#allocation4 + $0x48] sm:$0x7c] %v3500
    %v3503 = vld [vmem:[#allocation3 + $0xf] sm:$0x1f]
    %v3505 = vrot.slane %v3503, 6
    %3507 = vst [vmem:[#allocation4 + $0x50] sm:$0x7c] %v3505
    %v3508 = vld [vmem:[#allocation3 + $0x10] sm:$0x1f]
    %v3510 = vrot.slane %v3508, 6
    %3512 = vst [vmem:[#allocation4 + $0x58] sm:$0x7c] %v3510
    %v3513 = vld [vmem:[#allocation3 + $0x15] sm:$0x1f]
    %v3515 = vrot.slane %v3513, 6
    %3517 = vst [vmem:[#allocation4 + $0x60] sm:$0x7c] %v3515
    %v3518 = vld [vmem:[#allocation3 + $0x16] sm:$0x1f]
    %v3520 = vrot.slane %v3518, 6
    %3522 = vst [vmem:[#allocation4 + $0x68] sm:$0x7c] %v3520
    %v3523 = vld [vmem:[#allocation3 + $0x17] sm:$0x1f]
    %v3525 = vrot.slane %v3523, 6
    %3527 = vst [vmem:[#allocation4 + $0x70] sm:$0x7c] %v3525
    %v3528 = vld [vmem:[#allocation3 + $0x1c] sm:$0x1f]
    %v3530 = vrot.slane %v3528, 6
    %3532 = vst [vmem:[#allocation4 + $0x78] sm:$0x7c] %v3530
    %v3533 = vld [vmem:[#allocation3 + $0x1d] sm:$0x1f]
    %v3535 = vrot.slane %v3533, 6
    %3537 = vst [vmem:[#allocation4 + $0x80] sm:$0x7c] %v3535
    %v3538 = vld [vmem:[#allocation3 + $0x1e] sm:$0x1f]
    %v3540 = vrot.slane %v3538, 6
    %3542 = vst [vmem:[#allocation4 + $0x88] sm:$0x7c] %v3540
    %v3543 = vld [vmem:[#allocation3 + $0x15] sm:$0x1f]
    %v3545 = vrot.slane %v3543, 1
    %3547 = vst [vmem:[#allocation4 + $0x48] sm:$0x80] %v3545
    %3548 = vst [vmem:[#allocation4 + $0x90] sm:$0xf] %v3545
    %v3549 = vld [vmem:[#allocation3 + $0x16] sm:$0x1f]
    %v3551 = vrot.slane %v3549, 1
    %3553 = vst [vmem:[#allocation4 + $0x50] sm:$0x80] %v3551
    %3554 = vst [vmem:[#allocation4 + $0x98] sm:$0xf] %v3551
    %v3555 = vld [vmem:[#allocation3 + $0x17] sm:$0x1f]
    %v3557 = vrot.slane %v3555, 1
    %3559 = vst [vmem:[#allocation4 + $0x58] sm:$0x80] %v3557
    %3560 = vst [vmem:[#allocation4 + $0xa0] sm:$0xf] %v3557
    %v3561 = vld [vmem:[#allocation3 + $0x1c] sm:$0x1f]
    %v3563 = vrot.slane %v3561, 1
    %3565 = vst [vmem:[#allocation4 + $0x60] sm:$0x80] %v3563
    %3566 = vst [vmem:[#allocation4 + $0xa8] sm:$0xf] %v3563
    %v3567 = vld [vmem:[#allocation3 + $0x1d] sm:$0x1f]
    %v3569 = vrot.slane %v3567, 1
    %3571 = vst [vmem:[#allocation4 + $0x68] sm:$0x80] %v3569
    %3572 = vst [vmem:[#allocation4 + $0xb0] sm:$0xf] %v3569
    %v3573 = vld [vmem:[#allocation3 + $0x1e] sm:$0x1f]
    %v3575 = vrot.slane %v3573, 1
    %3577 = vst [vmem:[#allocation4 + $0x70] sm:$0x80] %v3575
    %3578 = vst [vmem:[#allocation4 + $0xb8] sm:$0xf] %v3575
    %v3579 = vld [vmem:[#allocation3 + $0x23] sm:$0x1f]
    %v3581 = vrot.slane %v3579, 1
    %3583 = vst [vmem:[#allocation4 + $0x78] sm:$0x80] %v3581
    %3584 = vst [vmem:[#allocation4 + $0xc0] sm:$0xf] %v3581
    %v3585 = vld [vmem:[#allocation3 + $0x24] sm:$0x1f]
    %v3587 = vrot.slane %v3585, 1
    %3589 = vst [vmem:[#allocation4 + $0x80] sm:$0x80] %v3587
    %3590 = vst [vmem:[#allocation4 + $0xc8] sm:$0xf] %v3587
    %v3591 = vld [vmem:[#allocation3 + $0x25] sm:$0x1f]
    %v3593 = vrot.slane %v3591, 1
    %3595 = vst [vmem:[#allocation4 + $0x88] sm:$0x80] %v3593
    %3596 = vst [vmem:[#allocation4 + $0xd0] sm:$0xf] %v3593
    %v3597 = vld [vmem:[#allocation3 + $0x1c] sm:$0x1f]
    %v3599 = vrot.slane %v3597, 4
    %3601 = vst [vmem:[#allocation4 + $0x90] sm:$0xf0] %v3599
    %3602 = vst [vmem:[#allocation4 + $0xd8] sm:$0x1] %v3599
    %v3603 = vld [vmem:[#allocation3 + $0x1d] sm:$0x1f]
    %v3605 = vrot.slane %v3603, 4
    %3607 = vst [vmem:[#allocation4 + $0x98] sm:$0xf0] %v3605
    %3608 = vst [vmem:[#allocation4 + $0xe0] sm:$0x1] %v3605
    %v3609 = vld [vmem:[#allocation3 + $0x1e] sm:$0x1f]
    %v3611 = vrot.slane %v3609, 4
    %3613 = vst [vmem:[#allocation4 + $0xa0] sm:$0xf0] %v3611
    %3614 = vst [vmem:[#allocation4 + $0xe8] sm:$0x1] %v3611
    %v3615 = vld [vmem:[#allocation3 + $0x23] sm:$0x1f]
    %v3617 = vrot.slane %v3615, 4
    %3619 = vst [vmem:[#allocation4 + $0xa8] sm:$0xf0] %v3617
    %3620 = vst [vmem:[#allocation4 + $0xf0] sm:$0x1] %v3617
    %v3621 = vld [vmem:[#allocation3 + $0x24] sm:$0x1f]
    %v3623 = vrot.slane %v3621, 4
    %3625 = vst [vmem:[#allocation4 + $0xb0] sm:$0xf0] %v3623
    %3626 = vst [vmem:[#allocation4 + $0xf8] sm:$0x1] %v3623
    %v3627 = vld [vmem:[#allocation3 + $0x25] sm:$0x1f]
    %v3629 = vrot.slane %v3627, 4
    %3631 = vst [vmem:[#allocation4 + $0xb8] sm:$0xf0] %v3629
    %3632 = vst [vmem:[#allocation4 + $0x100] sm:$0x1] %v3629
    %v3633 = vld [vmem:[#allocation3 + $0x2a] sm:$0x1f]
    %v3635 = vrot.slane %v3633, 4
    %3637 = vst [vmem:[#allocation4 + $0xc0] sm:$0xf0] %v3635
    %3638 = vst [vmem:[#allocation4 + $0x108] sm:$0x1] %v3635
    %v3639 = vld [vmem:[#allocation3 + $0x2b] sm:$0x1f]
    %v3641 = vrot.slane %v3639, 4
    %3643 = vst [vmem:[#allocation4 + $0xc8] sm:$0xf0] %v3641
    %3644 = vst [vmem:[#allocation4 + $0x110] sm:$0x1] %v3641
    %v3645 = vld [vmem:[#allocation3 + $0x2c] sm:$0x1f]
    %v3647 = vrot.slane %v3645, 4
    %3649 = vst [vmem:[#allocation4 + $0xd0] sm:$0xf0] %v3647
    %3650 = vst [vmem:[#allocation4 + $0x118] sm:$0x1] %v3647
    %v3651 = vld [vmem:[#allocation3 + $0x31] sm:$0x1f]
    %v3653 = vrot.slane %v3651, 7
    %3655 = vst [vmem:[#allocation4 + $0xd8] sm:$0x3e] %v3653
    %v3656 = vld [vmem:[#allocation3 + $0x32] sm:$0x1f]
    %v3658 = vrot.slane %v3656, 7
    %3660 = vst [vmem:[#allocation4 + $0xe0] sm:$0x3e] %v3658
    %v3661 = vld [vmem:[#allocation3 + $0x33] sm:$0x1f]
    %v3663 = vrot.slane %v3661, 7
    %3665 = vst [vmem:[#allocation4 + $0xe8] sm:$0x3e] %v3663
    %v3666 = vld [vmem:[#allocation3 + $0x38] sm:$0x1f]
    %v3668 = vrot.slane %v3666, 7
    %3670 = vst [vmem:[#allocation4 + $0xf0] sm:$0x3e] %v3668
    %v3671 = vld [vmem:[#allocation3 + $0x39] sm:$0x1f]
    %v3673 = vrot.slane %v3671, 7
    %3675 = vst [vmem:[#allocation4 + $0xf8] sm:$0x3e] %v3673
    %v3676 = vld [vmem:[#allocation3 + $0x3a] sm:$0x1f]
    %v3678 = vrot.slane %v3676, 7
    %3680 = vst [vmem:[#allocation4 + $0x100] sm:$0x3e] %v3678
    %v3681 = vld [vmem:[#allocation3 + $0x3f] sm:$0x1f]
    %v3683 = vrot.slane %v3681, 7
    %3685 = vst [vmem:[#allocation4 + $0x108] sm:$0x3e] %v3683
    %v3686 = vld [vmem:[#allocation3 + $0x40] sm:$0x1f]
    %v3688 = vrot.slane %v3686, 7
    %3690 = vst [vmem:[#allocation4 + $0x110] sm:$0x3e] %v3688
    %v3691 = vld [vmem:[#allocation3 + $0x41] sm:$0x1f]
    %v3693 = vrot.slane %v3691, 7
    %3695 = vst [vmem:[#allocation4 + $0x118] sm:$0x3e] %v3693
    %v3696 = vld [vmem:[#allocation3 + $0x38] sm:$0x1f]
    %v3698 = vrot.slane %v3696, 2
    %3700 = vst [vmem:[#allocation4 + $0xd8] sm:$0xc0] %v3698
    %3701 = vst [vmem:[#allocation4 + $0x120] sm:$0x7] %v3698
    %v3702 = vld [vmem:[#allocation3 + $0x39] sm:$0x1f]
    %v3704 = vrot.slane %v3702, 2
    %3706 = vst [vmem:[#allocation4 + $0xe0] sm:$0xc0] %v3704
    %3707 = vst [vmem:[#allocation4 + $0x128] sm:$0x7] %v3704
    %v3708 = vld [vmem:[#allocation3 + $0x3a] sm:$0x1f]
    %v3710 = vrot.slane %v3708, 2
    %3712 = vst [vmem:[#allocation4 + $0xe8] sm:$0xc0] %v3710
    %3713 = vst [vmem:[#allocation4 + $0x130] sm:$0x7] %v3710
    %v3714 = vld [vmem:[#allocation3 + $0x3f] sm:$0x1f]
    %v3716 = vrot.slane %v3714, 2
    %3718 = vst [vmem:[#allocation4 + $0xf0] sm:$0xc0] %v3716
    %3719 = vst [vmem:[#allocation4 + $0x138] sm:$0x7] %v3716
    %v3720 = vld [vmem:[#allocation3 + $0x40] sm:$0x1f]
    %v3722 = vrot.slane %v3720, 2
    %3724 = vst [vmem:[#allocation4 + $0xf8] sm:$0xc0] %v3722
    %3725 = vst [vmem:[#allocation4 + $0x140] sm:$0x7] %v3722
    %v3726 = vld [vmem:[#allocation3 + $0x41] sm:$0x1f]
    %v3728 = vrot.slane %v3726, 2
    %3730 = vst [vmem:[#allocation4 + $0x100] sm:$0xc0] %v3728
    %3731 = vst [vmem:[#allocation4 + $0x148] sm:$0x7] %v3728
    %v3732 = vld [vmem:[#allocation3 + $0x46] sm:$0x1f]
    %v3734 = vrot.slane %v3732, 2
    %3736 = vst [vmem:[#allocation4 + $0x108] sm:$0xc0] %v3734
    %3737 = vst [vmem:[#allocation4 + $0x150] sm:$0x7] %v3734
    %v3738 = vld [vmem:[#allocation3 + $0x47] sm:$0x1f]
    %v3740 = vrot.slane %v3738, 2
    %3742 = vst [vmem:[#allocation4 + $0x110] sm:$0xc0] %v3740
    %3743 = vst [vmem:[#allocation4 + $0x158] sm:$0x7] %v3740
    %v3744 = vld [vmem:[#allocation3 + $0x48] sm:$0x1f]
    %v3746 = vrot.slane %v3744, 2
    %3748 = vst [vmem:[#allocation4 + $0x118] sm:$0xc0] %v3746
    %3749 = vst [vmem:[#allocation4 + $0x160] sm:$0x7] %v3746
    %v3750 = vld [vmem:[#allocation3 + $0x3f] sm:$0x1f]
    %v3752 = vrot.slane %v3750, 5
    %3754 = vst [vmem:[#allocation4 + $0x120] sm:$0xf8] %v3752
    %v3755 = vld [vmem:[#allocation3 + $0x40] sm:$0x1f]
    %v3757 = vrot.slane %v3755, 5
    %3759 = vst [vmem:[#allocation4 + $0x128] sm:$0xf8] %v3757
    %v3760 = vld [vmem:[#allocation3 + $0x41] sm:$0x1f]
    %v3762 = vrot.slane %v3760, 5
    %3764 = vst [vmem:[#allocation4 + $0x130] sm:$0xf8] %v3762
    %v3765 = vld [vmem:[#allocation3 + $0x46] sm:$0x1f]
    %v3767 = vrot.slane %v3765, 5
    %3769 = vst [vmem:[#allocation4 + $0x138] sm:$0xf8] %v3767
    %v3770 = vld [vmem:[#allocation3 + $0x47] sm:$0x1f]
    %v3772 = vrot.slane %v3770, 5
    %3774 = vst [vmem:[#allocation4 + $0x140] sm:$0xf8] %v3772
    %v3775 = vld [vmem:[#allocation3 + $0x48] sm:$0x1f]
    %v3777 = vrot.slane %v3775, 5
    %3779 = vst [vmem:[#allocation4 + $0x148] sm:$0xf8] %v3777
    %v3780 = vld [vmem:[#allocation3 + $0x4d] sm:$0x1f]
    %v3782 = vrot.slane %v3780, 5
    %3784 = vst [vmem:[#allocation4 + $0x150] sm:$0xf8] %v3782
    %v3785 = vld [vmem:[#allocation3 + $0x4e] sm:$0x1f]
    %v3787 = vrot.slane %v3785, 5
    %3789 = vst [vmem:[#allocation4 + $0x158] sm:$0xf8] %v3787
    %v3790 = vld [vmem:[#allocation3 + $0x4f] sm:$0x1f]
    %v3792 = vrot.slane %v3790, 5
    %3794 = vst [vmem:[#allocation4 + $0x160] sm:$0xf8] %v3792
    %v3795 = vld [vmem:[#allocation3 + $0x46] sm:$0x1f]
    %3796 = vst [vmem:[#allocation4 + $0x168] sm:$0x1f] %v3795
    %v3797 = vld [vmem:[#allocation3 + $0x47] sm:$0x1f]
    %3798 = vst [vmem:[#allocation4 + $0x170] sm:$0x1f] %v3797
    %v3799 = vld [vmem:[#allocation3 + $0x48] sm:$0x1f]
    %3800 = vst [vmem:[#allocation4 + $0x178] sm:$0x1f] %v3799
    %v3801 = vld [vmem:[#allocation3 + $0x4d] sm:$0x1f]
    %3802 = vst [vmem:[#allocation4 + $0x180] sm:$0x1f] %v3801
    %v3803 = vld [vmem:[#allocation3 + $0x4e] sm:$0x1f]
    %3804 = vst [vmem:[#allocation4 + $0x188] sm:$0x1f] %v3803
    %v3805 = vld [vmem:[#allocation3 + $0x4f] sm:$0x1f]
    %3806 = vst [vmem:[#allocation4 + $0x190] sm:$0x1f] %v3805
    %v3807 = vld [vmem:[#allocation3 + $0x54] sm:$0x1f]
    %3808 = vst [vmem:[#allocation4 + $0x198] sm:$0x1f] %v3807
    %v3809 = vld [vmem:[#allocation3 + $0x55] sm:$0x1f]
    %3810 = vst [vmem:[#allocation4 + $0x1a0] sm:$0x1f] %v3809
    %v3811 = vld [vmem:[#allocation3 + $0x56] sm:$0x1f]
    %3812 = vst [vmem:[#allocation4 + $0x1a8] sm:$0x1f] %v3811
    %v3813 = vld [vmem:[#allocation3 + $0x4d] sm:$0x1f]
    %v3815 = vrot.slane %v3813, 3
    %3817 = vst [vmem:[#allocation4 + $0x168] sm:$0xe0] %v3815
    %3818 = vst [vmem:[#allocation4 + $0x1b0] sm:$0x3] %v3815
    %v3819 = vld [vmem:[#allocation3 + $0x4e] sm:$0x1f]
    %v3821 = vrot.slane %v3819, 3
    %3823 = vst [vmem:[#allocation4 + $0x170] sm:$0xe0] %v3821
    %3824 = vst [vmem:[#allocation4 + $0x1b8] sm:$0x3] %v3821
    %v3825 = vld [vmem:[#allocation3 + $0x4f] sm:$0x1f]
    %v3827 = vrot.slane %v3825, 3
    %3829 = vst [vmem:[#allocation4 + $0x178] sm:$0xe0] %v3827
    %3830 = vst [vmem:[#allocation4 + $0x1c0] sm:$0x3] %v3827
    %v3831 = vld [vmem:[#allocation3 + $0x54] sm:$0x1f]
    %v3833 = vrot.slane %v3831, 3
    %3835 = vst [vmem:[#allocation4 + $0x180] sm:$0xe0] %v3833
    %3836 = vst [vmem:[#allocation4 + $0x1c8] sm:$0x3] %v3833
    %v3837 = vld [vmem:[#allocation3 + $0x55] sm:$0x1f]
    %v3839 = vrot.slane %v3837, 3
    %3841 = vst [vmem:[#allocation4 + $0x188] sm:$0xe0] %v3839
    %3842 = vst [vmem:[#allocation4 + $0x1d0] sm:$0x3] %v3839
    %v3843 = vld [vmem:[#allocation3 + $0x56] sm:$0x1f]
    %v3845 = vrot.slane %v3843, 3
    %3847 = vst [vmem:[#allocation4 + $0x190] sm:$0xe0] %v3845
    %3848 = vst [vmem:[#allocation4 + $0x1d8] sm:$0x3] %v3845
    %v3849 = vld [vmem:[#allocation3 + $0x5b] sm:$0x1f]
    %v3851 = vrot.slane %v3849, 3
    %3853 = vst [vmem:[#allocation4 + $0x198] sm:$0xe0] %v3851
    %3854 = vst [vmem:[#allocation4 + $0x1e0] sm:$0x3] %v3851
    %v3855 = vld [vmem:[#allocation3 + $0x5c] sm:$0x1f]
    %v3857 = vrot.slane %v3855, 3
    %3859 = vst [vmem:[#allocation4 + $0x1a0] sm:$0xe0] %v3857
    %3860 = vst [vmem:[#allocation4 + $0x1e8] sm:$0x3] %v3857
    %v3861 = vld [vmem:[#allocation3 + $0x5d] sm:$0x1f]
    %v3863 = vrot.slane %v3861, 3
    %3865 = vst [vmem:[#allocation4 + $0x1a8] sm:$0xe0] %v3863
    %3866 = vst [vmem:[#allocation4 + $0x1f0] sm:$0x3] %v3863
    %v3867 = vld [vmem:[#allocation4] sm:$0xff]
    %v3868 = vld [vmem:[#allocation4 + $0x8] sm:$0xff]
    %v3869 = vld [vmem:[#allocation4 + $0x10] sm:$0xff]
    %v3870 = vld [vmem:[#allocation4 + $0x18] sm:$0xff]
    %v3871 = vld [vmem:[#allocation4 + $0x20] sm:$0xff]
    %v3872 = vld [vmem:[#allocation4 + $0x28] sm:$0xff]
    %v3873 = vld [vmem:[#allocation4 + $0x30] sm:$0xff]
    %v3874 = vld [vmem:[#allocation4 + $0x38] sm:$0xff]
    %v3875 = vld [vmem:[#allocation4 + $0x40] sm:$0xff]
    %v3876 = vld [vmem:[#allocation4 + $0x48] sm:$0xff]
    %v3877 = vld [vmem:[#allocation4 + $0x50] sm:$0xff]
    %v3878 = vld [vmem:[#allocation4 + $0x58] sm:$0xff]
    %v3879 = vld [vmem:[#allocation4 + $0x60] sm:$0xff]
    %v3880 = vld [vmem:[#allocation4 + $0x68] sm:$0xff]
    %v3881 = vld [vmem:[#allocation4 + $0x70] sm:$0xff]
    %v3882 = vld [vmem:[#allocation4 + $0x78] sm:$0xff]
    %v3883 = vld [vmem:[#allocation4 + $0x80] sm:$0xff]
    %v3884 = vld [vmem:[#allocation4 + $0x88] sm:$0xff]
    %v3885 = vld [vmem:[#allocation4 + $0x90] sm:$0xff]
    %v3886 = vld [vmem:[#allocation4 + $0x98] sm:$0xff]
    %v3887 = vld [vmem:[#allocation4 + $0xa0] sm:$0xff]
    %v3888 = vld [vmem:[#allocation4 + $0xa8] sm:$0xff]
    %v3889 = vld [vmem:[#allocation4 + $0xb0] sm:$0xff]
    %v3890 = vld [vmem:[#allocation4 + $0xb8] sm:$0xff]
    %v3891 = vld [vmem:[#allocation4 + $0xc0] sm:$0xff]
    %v3892 = vld [vmem:[#allocation4 + $0xc8] sm:$0xff]
    %v3893 = vld [vmem:[#allocation4 + $0xd0] sm:$0xff]
    %v3894 = vld [vmem:[#allocation4 + $0xd8] sm:$0xff]
    %v3895 = vld [vmem:[#allocation4 + $0xe0] sm:$0xff]
    %v3896 = vld [vmem:[#allocation4 + $0xe8] sm:$0xff]
    %v3897 = vld [vmem:[#allocation4 + $0xf0] sm:$0xff]
    %v3898 = vld [vmem:[#allocation4 + $0xf8] sm:$0xff]
    %v3899 = vld [vmem:[#allocation4 + $0x100] sm:$0xff]
    %v3900 = vld [vmem:[#allocation4 + $0x108] sm:$0xff]
    %v3901 = vld [vmem:[#allocation4 + $0x110] sm:$0xff]
    %v3902 = vld [vmem:[#allocation4 + $0x118] sm:$0xff]
    %v3903 = vld [vmem:[#allocation4 + $0x120] sm:$0xff]
    %v3904 = vld [vmem:[#allocation4 + $0x128] sm:$0xff]
    %v3905 = vld [vmem:[#allocation4 + $0x130] sm:$0xff]
    %v3906 = vld [vmem:[#allocation4 + $0x138] sm:$0xff]
    %v3907 = vld [vmem:[#allocation4 + $0x140] sm:$0xff]
    %v3908 = vld [vmem:[#allocation4 + $0x148] sm:$0xff]
    %v3909 = vld [vmem:[#allocation4 + $0x150] sm:$0xff]
    %v3910 = vld [vmem:[#allocation4 + $0x158] sm:$0xff]
    %v3911 = vld [vmem:[#allocation4 + $0x160] sm:$0xff]
    %v3912 = vld [vmem:[#allocation4 + $0x168] sm:$0xff]
    %v3913 = vld [vmem:[#allocation4 + $0x170] sm:$0xff]
    %v3914 = vld [vmem:[#allocation4 + $0x178] sm:$0xff]
    %v3915 = vld [vmem:[#allocation4 + $0x180] sm:$0xff]
    %v3916 = vld [vmem:[#allocation4 + $0x188] sm:$0xff]
    %v3917 = vld [vmem:[#allocation4 + $0x190] sm:$0xff]
    %v3918 = vld [vmem:[#allocation4 + $0x198] sm:$0xff]
    %v3919 = vld [vmem:[#allocation4 + $0x1a0] sm:$0xff]
    %v3920 = vld [vmem:[#allocation4 + $0x1a8] sm:$0xff]
    %v3921 = vld [vmem:[#allocation4 + $0x1b0] sm:$0x3]
    %v3922 = vld [vmem:[#allocation4 + $0x1b8] sm:$0x3]
    %v3923 = vld [vmem:[#allocation4 + $0x1c0] sm:$0x3]
    %v3924 = vld [vmem:[#allocation4 + $0x1c8] sm:$0x3]
    %v3925 = vld [vmem:[#allocation4 + $0x1d0] sm:$0x3]
    %v3926 = vld [vmem:[#allocation4 + $0x1d8] sm:$0x3]
    %v3927 = vld [vmem:[#allocation4 + $0x1e0] sm:$0x3]
    %v3928 = vld [vmem:[#allocation4 + $0x1e8] sm:$0x3]
    %v3929 = vld [vmem:[#allocation4 + $0x1f0] sm:$0x3]
    %v3930 = vld [vmem:[%s3] sm:$0xff]
    %v3931 = vld [vmem:[%s3 + $0x8] sm:$0xff]
    %v3932 = vld [vmem:[%s3 + $0x10] sm:$0xff]
    %v3933 = vld [vmem:[%s3 + $0x18] sm:$0xff]
    %v3934 = vld [vmem:[%s3 + $0x20] sm:$0xff]
    %v3935 = vld [vmem:[%s3 + $0x28] sm:$0xff]
    %v3936 = vld [vmem:[%s3 + $0x30] sm:$0xff]
    %v3937 = vld [vmem:[%s3 + $0x38] sm:$0xff]
    %v3938 = vld [vmem:[%s3 + $0x40] sm:$0xff]
    %v3939 = vld [vmem:[%s3 + $0x48] sm:$0xff]
    %v3940 = vld [vmem:[%s3 + $0x50] sm:$0xff]
    %v3941 = vld [vmem:[%s3 + $0x58] sm:$0xff]
    %v3942 = vld [vmem:[%s3 + $0x60] sm:$0xff]
    %v3943 = vld [vmem:[%s3 + $0x68] sm:$0xff]
    %v3944 = vld [vmem:[%s3 + $0x70] sm:$0xff]
    %v3945 = vld [vmem:[%s3 + $0x78] sm:$0xff]
    %v3946 = vld [vmem:[%s3 + $0x80] sm:$0xff]
    %v3947 = vld [vmem:[%s3 + $0x88] sm:$0xff]
    %v3948 = vld [vmem:[%s3 + $0x90] sm:$0xff]
    %v3949 = vld [vmem:[%s3 + $0x98] sm:$0xff]
    %v3950 = vld [vmem:[%s3 + $0xa0] sm:$0xff]
    %v3951 = vld [vmem:[%s3 + $0xa8] sm:$0xff]
    %v3952 = vld [vmem:[%s3 + $0xb0] sm:$0xff]
    %v3953 = vld [vmem:[%s3 + $0xb8] sm:$0xff]
    %v3954 = vld [vmem:[%s3 + $0xc0] sm:$0xff]
    %v3955 = vld [vmem:[%s3 + $0xc8] sm:$0xff]
    %v3956 = vld [vmem:[%s3 + $0xd0] sm:$0xff]
    %v3957 = vld [vmem:[%s3 + $0xd8] sm:$0xff]
    %v3958 = vld [vmem:[%s3 + $0xe0] sm:$0xff]
    %v3959 = vld [vmem:[%s3 + $0xe8] sm:$0xff]
    %v3960 = vld [vmem:[%s3 + $0xf0] sm:$0xff]
    %v3961 = vld [vmem:[%s3 + $0xf8] sm:$0xff]
    %v3962 = vld [vmem:[%s3 + $0x100] sm:$0xff]
    %v3963 = vld [vmem:[%s3 + $0x108] sm:$0xff]
    %v3964 = vld [vmem:[%s3 + $0x110] sm:$0xff]
    %v3965 = vld [vmem:[%s3 + $0x118] sm:$0xff]
    %v3966 = vld [vmem:[%s3 + $0x120] sm:$0xff]
    %v3967 = vld [vmem:[%s3 + $0x128] sm:$0xff]
    %v3968 = vld [vmem:[%s3 + $0x130] sm:$0xff]
    %v3969 = vld [vmem:[%s3 + $0x138] sm:$0xff]
    %v3970 = vld [vmem:[%s3 + $0x140] sm:$0xff]
    %v3971 = vld [vmem:[%s3 + $0x148] sm:$0xff]
    %v3972 = vld [vmem:[%s3 + $0x150] sm:$0xff]
    %v3973 = vld [vmem:[%s3 + $0x158] sm:$0xff]
    %v3974 = vld [vmem:[%s3 + $0x160] sm:$0xff]
    %v3975 = vld [vmem:[%s3 + $0x168] sm:$0xff]
    %v3976 = vld [vmem:[%s3 + $0x170] sm:$0xff]
    %v3977 = vld [vmem:[%s3 + $0x178] sm:$0xff]
    %v3978 = vld [vmem:[%s3 + $0x180] sm:$0xff]
    %v3979 = vld [vmem:[%s3 + $0x188] sm:$0xff]
    %v3980 = vld [vmem:[%s3 + $0x190] sm:$0xff]
    %v3981 = vld [vmem:[%s3 + $0x198] sm:$0xff]
    %v3982 = vld [vmem:[%s3 + $0x1a0] sm:$0xff]
    %v3983 = vld [vmem:[%s3 + $0x1a8] sm:$0xff]
    %v3984 = vld [vmem:[%s3 + $0x1b0] sm:$0xff]
    %v3985 = vld [vmem:[%s3 + $0x1b8] sm:$0xff]
    %v3986 = vld [vmem:[%s3 + $0x1c0] sm:$0xff]
    %v3987 = vld [vmem:[%s3 + $0x1c8] sm:$0xff]
    %v3988 = vld [vmem:[%s3 + $0x1d0] sm:$0xff]
    %v3989 = vld [vmem:[%s3 + $0x1d8] sm:$0xff]
    %v3990 = vld [vmem:[%s3 + $0x1e0] sm:$0xff]
    %v3991 = vld [vmem:[%s3 + $0x1e8] sm:$0xff]
    %v3992 = vld [vmem:[%s3 + $0x1f0] sm:$0xff]
    %v3993 = vld [vmem:[%s3 + $0x1f8] sm:$0xff]
    %v3994 = vld [vmem:[%s3 + $0x200] sm:$0xff]
    %v3995 = vld [vmem:[%s3 + $0x208] sm:$0xff]
    %v3996 = vld [vmem:[%s3 + $0x210] sm:$0xff]
    %v3997 = vld [vmem:[%s3 + $0x218] sm:$0xff]
    %v3998 = vld [vmem:[%s3 + $0x220] sm:$0xff]
    %v3999 = vld [vmem:[%s3 + $0x228] sm:$0xff]
    %v4000 = vld [vmem:[%s3 + $0x230] sm:$0xff]
    %v4001 = vld [vmem:[%s3 + $0x238] sm:$0xff]
    %v4002 = vld [vmem:[%s3 + $0x240] sm:$0xff]
    %v4003 = vld [vmem:[%s3 + $0x248] sm:$0xff]
    %v4004 = vld [vmem:[%s3 + $0x250] sm:$0xff]
    %v4005 = vld [vmem:[%s3 + $0x258] sm:$0xff]
    %v4006 = vld [vmem:[%s3 + $0x260] sm:$0xff]
    %v4007 = vld [vmem:[%s3 + $0x268] sm:$0xff]
    %v4008 = vld [vmem:[%s3 + $0x270] sm:$0xff]
    %v4009 = vld [vmem:[%s3 + $0x278] sm:$0xff]
    %v4010 = vld [vmem:[%s3 + $0x280] sm:$0xff]
    %v4011 = vld [vmem:[%s3 + $0x288] sm:$0xff]
    %v4012 = vld [vmem:[%s3 + $0x290] sm:$0xff]
    %v4013 = vld [vmem:[%s3 + $0x298] sm:$0xff]
    %v4014 = vld [vmem:[%s3 + $0x2a0] sm:$0xff]
    %v4015 = vld [vmem:[%s3 + $0x2a8] sm:$0xff]
    %v4016 = vld [vmem:[%s3 + $0x2b0] sm:$0xff]
    %v4017 = vld [vmem:[%s3 + $0x2b8] sm:$0xff]
    %v4018 = vld [vmem:[%s3 + $0x2c0] sm:$0xff]
    %v4019 = vld [vmem:[%s3 + $0x2c8] sm:$0xff]
    %v4020 = vld [vmem:[%s3 + $0x2d0] sm:$0xff]
    %v4021 = vld [vmem:[%s3 + $0x2d8] sm:$0xff]
    %v4022 = vld [vmem:[%s3 + $0x2e0] sm:$0xff]
    %v4023 = vld [vmem:[%s3 + $0x2e8] sm:$0xff]
    %v4024 = vld [vmem:[%s3 + $0x2f0] sm:$0xff]
    %v4025 = vld [vmem:[%s3 + $0x2f8] sm:$0xff]
    %v4026 = vld [vmem:[%s3 + $0x300] sm:$0xff]
    %v4027 = vld [vmem:[%s3 + $0x308] sm:$0xff]
    %v4028 = vld [vmem:[%s3 + $0x310] sm:$0xff]
    %v4029 = vld [vmem:[%s3 + $0x318] sm:$0xff]
    %v4030 = vld [vmem:[%s3 + $0x320] sm:$0xff]
    %v4031 = vld [vmem:[%s3 + $0x328] sm:$0xff]
    %v4032 = vld [vmem:[%s3 + $0x330] sm:$0xff]
    %v4033 = vld [vmem:[%s3 + $0x338] sm:$0xff]
    %v4034 = vld [vmem:[%s3 + $0x340] sm:$0xff]
    %v4035 = vld [vmem:[%s3 + $0x348] sm:$0xff]
    %v4036 = vld [vmem:[%s3 + $0x350] sm:$0xff]
    %v4037 = vld [vmem:[%s3 + $0x358] sm:$0xff]
    %v4038 = vld [vmem:[%s3 + $0x360] sm:$0xff]
    %v4039 = vld [vmem:[%s3 + $0x368] sm:$0xff]
    %v4040 = vld [vmem:[%s3 + $0x370] sm:$0xff]
    %v4041 = vld [vmem:[%s3 + $0x378] sm:$0xff]
    %v4042 = vld [vmem:[%s3 + $0x380] sm:$0xff]
    %v4043 = vld [vmem:[%s3 + $0x388] sm:$0xff]
    %v4044 = vld [vmem:[%s3 + $0x390] sm:$0xff]
    %v4045 = vld [vmem:[%s3 + $0x398] sm:$0xff]
    %v4046 = vld [vmem:[%s3 + $0x3a0] sm:$0xff]
    %v4047 = vld [vmem:[%s3 + $0x3a8] sm:$0xff]
    %v4048 = vld [vmem:[%s3 + $0x3b0] sm:$0xff]
    %v4049 = vld [vmem:[%s3 + $0x3b8] sm:$0xff]
    %v4050 = vld [vmem:[%s3 + $0x3c0] sm:$0xff]
    %v4051 = vld [vmem:[%s3 + $0x3c8] sm:$0xff]
    %v4052 = vld [vmem:[%s3 + $0x3d0] sm:$0xff]
    %v4053 = vld [vmem:[%s3 + $0x3d8] sm:$0xff]
    %v4054 = vld [vmem:[%s3 + $0x3e0] sm:$0xff]
    %v4055 = vld [vmem:[%s3 + $0x3e8] sm:$0xff]
    %v4056 = vld [vmem:[%s3 + $0x3f0] sm:$0xff]
    %v4057 = vld [vmem:[%s3 + $0x3f8] sm:$0xff]
    %v4058 = vld [vmem:[%s3 + $0x400] sm:$0xff]
    %v4059 = vld [vmem:[%s3 + $0x408] sm:$0xff]
    %v4060 = vld [vmem:[%s3 + $0x410] sm:$0xff]
    %v4061 = vld [vmem:[%s3 + $0x418] sm:$0xff]
    %v4062 = vld [vmem:[%s3 + $0x420] sm:$0xff]
    %v4063 = vld [vmem:[%s3 + $0x428] sm:$0xff]
    %v4064 = vld [vmem:[%s3 + $0x430] sm:$0xff]
    %v4065 = vld [vmem:[%s3 + $0x438] sm:$0xff]
    %v4066 = vld [vmem:[%s3 + $0x440] sm:$0xff]
    %v4067 = vld [vmem:[%s3 + $0x448] sm:$0xff]
    %v4068 = vld [vmem:[%s3 + $0x450] sm:$0xff]
    %v4069 = vld [vmem:[%s3 + $0x458] sm:$0xff]
    %v4070 = vld [vmem:[%s3 + $0x460] sm:$0xff]
    %v4071 = vld [vmem:[%s3 + $0x468] sm:$0xff]
    %v4072 = vld [vmem:[%s3 + $0x470] sm:$0xff]
    %v4073 = vld [vmem:[%s3 + $0x478] sm:$0xff]
    %v4074 = vld [vmem:[%s4] sm:$0x1]
    %v4076 = vlaneseq
    %v4077 = vshrl.u32 %v4076, 7
    %v4078 = vsub.s32 0, %v4077
    %v4079 = vrot.slane %v4074, %v4078
    %4081 = vmatprep.subr.mxu0 0.0
    %4082 = vmatpush1.msra.mxu0 %v3945
    %4083 = vmatprep.subr.mxu0 0.0
    %4084 = vmatpush1.msra.mxu0 %v3944
    %4085 = vmatprep.subr.mxu0 0.0
    %4086 = vmatpush1.msra.mxu0 %v3943
    %4087 = vmatprep.subr.mxu0 0.0
    %4088 = vmatpush1.msra.mxu0 %v3942
    %4089 = vmatprep.subr.mxu0 0.0
    %4090 = vmatpush1.msra.mxu0 %v3941
    %4091 = vmatprep.subr.mxu0 0.0
    %4092 = vmatpush1.msra.mxu0 %v3940
    %4093 = vmatprep.subr.mxu0 0.0
    %4094 = vmatpush1.msra.mxu0 %v3939
    %4095 = vmatprep.subr.mxu0 0.0
    %4096 = vmatpush1.msra.mxu0 %v3938
    %4097 = vmatprep.subr.mxu0 0.0
    %4098 = vmatpush1.msra.mxu0 %v3937
    %4099 = vmatprep.subr.mxu0 0.0
    %4100 = vmatpush1.msra.mxu0 %v3936
    %4101 = vmatprep.subr.mxu0 0.0
    %4102 = vmatpush1.msra.mxu0 %v3935
    %4103 = vmatprep.subr.mxu0 0.0
    %4104 = vmatpush1.msra.mxu0 %v3934
    %4105 = vmatprep.subr.mxu0 0.0
    %4106 = vmatpush1.msra.mxu0 %v3933
    %4107 = vmatprep.subr.mxu0 0.0
    %4108 = vmatpush1.msra.mxu0 %v3932
    %4109 = vmatprep.subr.mxu0 0.0
    %4110 = vmatpush1.msra.mxu0 %v3931
    %4111 = vmatprep.subr.mxu0 0.0
    %4112 = vmatpush1.msra.mxu0 %v3930
    %4113 = vmatprep.subr.mxu0 0.0
    %4114 = vmatpush2.msra.mxu0 %v3961
    %4115 = vmatprep.subr.mxu0 0.0
    %4116 = vmatpush2.msra.mxu0 %v3960
    %4117 = vmatprep.subr.mxu0 0.0
    %4118 = vmatpush2.msra.mxu0 %v3959
    %4119 = vmatprep.subr.mxu0 0.0
    %4120 = vmatpush2.msra.mxu0 %v3958
    %4121 = vmatprep.subr.mxu0 0.0
    %4122 = vmatpush2.msra.mxu0 %v3957
    %4123 = vmatprep.subr.mxu0 0.0
    %4124 = vmatpush2.msra.mxu0 %v3956
    %4125 = vmatprep.subr.mxu0 0.0
    %4126 = vmatpush2.msra.mxu0 %v3955
    %4127 = vmatprep.subr.mxu0 0.0
    %4128 = vmatpush2.msra.mxu0 %v3954
    %4129 = vmatprep.subr.mxu0 0.0
    %4130 = vmatpush2.msra.mxu0 %v3953
    %4131 = vmatprep.subr.mxu0 0.0
    %4132 = vmatpush2.msra.mxu0 %v3952
    %4133 = vmatprep.subr.mxu0 0.0
    %4134 = vmatpush2.msra.mxu0 %v3951
    %4135 = vmatprep.subr.mxu0 0.0
    %4136 = vmatpush2.msra.mxu0 %v3950
    %4137 = vmatprep.subr.mxu0 0.0
    %4138 = vmatpush2.msra.mxu0 %v3949
    %4139 = vmatprep.subr.mxu0 0.0
    %4140 = vmatpush2.msra.mxu0 %v3948
    %4141 = vmatprep.subr.mxu0 0.0
    %4142 = vmatpush2.msra.mxu0 %v3947
    %4143 = vmatprep.subr.mxu0 0.0
    %4144 = vmatpush2.msra.mxu0 %v3946
    %4145 = vmatprep.mubr.f32.mxu0 %v3868
    %4146 = vmatmul.mubr.f32.gmra.mxu0 %v3867
    %v4147 = vpop.f32.mrf.mxu0
    %v4148 = vadd.f32 %v4079, %v4147
    %v4149 = vpop.f32.mrf.mxu0
    %4150 = vmatprep.mubr.f32.mxu0 %v3877
    %4151 = vmatmul.mubr.f32.gmra.mxu0 %v3876
    %v4152 = vpop.f32.mrf.mxu0
    %v4153 = vadd.f32 %v4079, %v4152
    %v4154 = vpop.f32.mrf.mxu0
    %4155 = vmatprep.mubr.f32.mxu0 %v3886
    %4156 = vmatmul.mubr.f32.gmra.mxu0 %v3885
    %v4157 = vpop.f32.mrf.mxu0
    %v4158 = vadd.f32 %v4079, %v4157
    %v4159 = vpop.f32.mrf.mxu0
    %4160 = vmatprep.mubr.f32.mxu0 %v3895
    %4161 = vmatmul.mubr.f32.gmra.mxu0 %v3894
    %v4162 = vpop.f32.mrf.mxu0
    %v4163 = vadd.f32 %v4079, %v4162
    %v4164 = vpop.f32.mrf.mxu0
    %4165 = vmatprep.mubr.f32.mxu0 %v3904
    %4166 = vmatmul.mubr.f32.gmra.mxu0 %v3903
    %v4167 = vpop.f32.mrf.mxu0
    %v4168 = vadd.f32 %v4079, %v4167
    %v4169 = vpop.f32.mrf.mxu0
    %4170 = vmatprep.mubr.f32.mxu0 %v3913
    %4171 = vmatmul.mubr.f32.gmra.mxu0 %v3912
    %v4172 = vpop.f32.mrf.mxu0
    %v4173 = vadd.f32 %v4079, %v4172
    %v4174 = vpop.f32.mrf.mxu0
    %4175 = vmatprep.mubr.f32.mxu0 %v3922
    %4176 = vmatmul.mubr.f32.gmra.mxu0 %v3921
    %v4177 = vpop.f32.mrf.mxu0
    %v4178 = vadd.f32 %v4079, %v4177
    %v4179 = vpop.f32.mrf.mxu0
    %4180 = vdwg.mxu0
    %4181 = vmatprep.subr.mxu0 0.0
    %4182 = vmatpush1.msra.mxu0 %v3977
    %4183 = vmatprep.subr.mxu0 0.0
    %4184 = vmatpush1.msra.mxu0 %v3976
    %4185 = vmatprep.subr.mxu0 0.0
    %4186 = vmatpush1.msra.mxu0 %v3975
    %4187 = vmatprep.subr.mxu0 0.0
    %4188 = vmatpush1.msra.mxu0 %v3974
    %4189 = vmatprep.subr.mxu0 0.0
    %4190 = vmatpush1.msra.mxu0 %v3973
    %4191 = vmatprep.subr.mxu0 0.0
    %4192 = vmatpush1.msra.mxu0 %v3972
    %4193 = vmatprep.subr.mxu0 0.0
    %4194 = vmatpush1.msra.mxu0 %v3971
    %4195 = vmatprep.subr.mxu0 0.0
    %4196 = vmatpush1.msra.mxu0 %v3970
    %4197 = vmatprep.subr.mxu0 0.0
    %4198 = vmatpush1.msra.mxu0 %v3969
    %4199 = vmatprep.subr.mxu0 0.0
    %4200 = vmatpush1.msra.mxu0 %v3968
    %4201 = vmatprep.subr.mxu0 0.0
    %4202 = vmatpush1.msra.mxu0 %v3967
    %4203 = vmatprep.subr.mxu0 0.0
    %4204 = vmatpush1.msra.mxu0 %v3966
    %4205 = vmatprep.subr.mxu0 0.0
    %4206 = vmatpush1.msra.mxu0 %v3965
    %4207 = vmatprep.subr.mxu0 0.0
    %4208 = vmatpush1.msra.mxu0 %v3964
    %4209 = vmatprep.subr.mxu0 0.0
    %4210 = vmatpush1.msra.mxu0 %v3963
    %4211 = vmatprep.subr.mxu0 0.0
    %4212 = vmatpush1.msra.mxu0 %v3962
    %4213 = vmatprep.subr.mxu0 0.0
    %4214 = vmatpush2.msra.mxu0 %v3993
    %4215 = vmatprep.subr.mxu0 0.0
    %4216 = vmatpush2.msra.mxu0 %v3992
    %4217 = vmatprep.subr.mxu0 0.0
    %4218 = vmatpush2.msra.mxu0 %v3991
    %4219 = vmatprep.subr.mxu0 0.0
    %4220 = vmatpush2.msra.mxu0 %v3990
    %4221 = vmatprep.subr.mxu0 0.0
    %4222 = vmatpush2.msra.mxu0 %v3989
    %4223 = vmatprep.subr.mxu0 0.0
    %4224 = vmatpush2.msra.mxu0 %v3988
    %4225 = vmatprep.subr.mxu0 0.0
    %4226 = vmatpush2.msra.mxu0 %v3987
    %4227 = vmatprep.subr.mxu0 0.0
    %4228 = vmatpush2.msra.mxu0 %v3986
    %4229 = vmatprep.subr.mxu0 0.0
    %4230 = vmatpush2.msra.mxu0 %v3985
    %4231 = vmatprep.subr.mxu0 0.0
    %4232 = vmatpush2.msra.mxu0 %v3984
    %4233 = vmatprep.subr.mxu0 0.0
    %4234 = vmatpush2.msra.mxu0 %v3983
    %4235 = vmatprep.subr.mxu0 0.0
    %4236 = vmatpush2.msra.mxu0 %v3982
    %4237 = vmatprep.subr.mxu0 0.0
    %4238 = vmatpush2.msra.mxu0 %v3981
    %4239 = vmatprep.subr.mxu0 0.0
    %4240 = vmatpush2.msra.mxu0 %v3980
    %4241 = vmatprep.subr.mxu0 0.0
    %4242 = vmatpush2.msra.mxu0 %v3979
    %4243 = vmatprep.subr.mxu0 0.0
    %4244 = vmatpush2.msra.mxu0 %v3978
    %4245 = vmatprep.mubr.f32.mxu0 %v3870
    %4246 = vmatmul.mubr.f32.gmra.mxu0 %v3869
    %v4247 = vpop.f32.mrf.mxu0
    %v4248 = vadd.f32 %v4148, %v4247
    %v4249 = vpop.f32.mrf.mxu0
    %4250 = vmatprep.mubr.f32.mxu0 %v3879
    %4251 = vmatmul.mubr.f32.gmra.mxu0 %v3878
    %v4252 = vpop.f32.mrf.mxu0
    %v4253 = vadd.f32 %v4153, %v4252
    %v4254 = vpop.f32.mrf.mxu0
    %4255 = vmatprep.mubr.f32.mxu0 %v3888
    %4256 = vmatmul.mubr.f32.gmra.mxu0 %v3887
    %v4257 = vpop.f32.mrf.mxu0
    %v4258 = vadd.f32 %v4158, %v4257
    %v4259 = vpop.f32.mrf.mxu0
    %4260 = vmatprep.mubr.f32.mxu0 %v3897
    %4261 = vmatmul.mubr.f32.gmra.mxu0 %v3896
    %v4262 = vpop.f32.mrf.mxu0
    %v4263 = vadd.f32 %v4163, %v4262
    %v4264 = vpop.f32.mrf.mxu0
    %4265 = vmatprep.mubr.f32.mxu0 %v3906
    %4266 = vmatmul.mubr.f32.gmra.mxu0 %v3905
    %v4267 = vpop.f32.mrf.mxu0
    %v4268 = vadd.f32 %v4168, %v4267
    %v4269 = vpop.f32.mrf.mxu0
    %4270 = vmatprep.mubr.f32.mxu0 %v3915
    %4271 = vmatmul.mubr.f32.gmra.mxu0 %v3914
    %v4272 = vpop.f32.mrf.mxu0
    %v4273 = vadd.f32 %v4173, %v4272
    %v4274 = vpop.f32.mrf.mxu0
    %4275 = vmatprep.mubr.f32.mxu0 %v3924
    %4276 = vmatmul.mubr.f32.gmra.mxu0 %v3923
    %v4277 = vpop.f32.mrf.mxu0
    %v4278 = vadd.f32 %v4178, %v4277
    %v4279 = vpop.f32.mrf.mxu0
    %4280 = vdwg.mxu0
    %4281 = vmatprep.subr.mxu0 0.0
    %4282 = vmatpush1.msra.mxu0 %v4009
    %4283 = vmatprep.subr.mxu0 0.0
    %4284 = vmatpush1.msra.mxu0 %v4008
    %4285 = vmatprep.subr.mxu0 0.0
    %4286 = vmatpush1.msra.mxu0 %v4007
    %4287 = vmatprep.subr.mxu0 0.0
    %4288 = vmatpush1.msra.mxu0 %v4006
    %4289 = vmatprep.subr.mxu0 0.0
    %4290 = vmatpush1.msra.mxu0 %v4005
    %4291 = vmatprep.subr.mxu0 0.0
    %4292 = vmatpush1.msra.mxu0 %v4004
    %4293 = vmatprep.subr.mxu0 0.0
    %4294 = vmatpush1.msra.mxu0 %v4003
    %4295 = vmatprep.subr.mxu0 0.0
    %4296 = vmatpush1.msra.mxu0 %v4002
    %4297 = vmatprep.subr.mxu0 0.0
    %4298 = vmatpush1.msra.mxu0 %v4001
    %4299 = vmatprep.subr.mxu0 0.0
    %4300 = vmatpush1.msra.mxu0 %v4000
    %4301 = vmatprep.subr.mxu0 0.0
    %4302 = vmatpush1.msra.mxu0 %v3999
    %4303 = vmatprep.subr.mxu0 0.0
    %4304 = vmatpush1.msra.mxu0 %v3998
    %4305 = vmatprep.subr.mxu0 0.0
    %4306 = vmatpush1.msra.mxu0 %v3997
    %4307 = vmatprep.subr.mxu0 0.0
    %4308 = vmatpush1.msra.mxu0 %v3996
    %4309 = vmatprep.subr.mxu0 0.0
    %4310 = vmatpush1.msra.mxu0 %v3995
    %4311 = vmatprep.subr.mxu0 0.0
    %4312 = vmatpush1.msra.mxu0 %v3994
    %4313 = vmatprep.subr.mxu0 0.0
    %4314 = vmatpush2.msra.mxu0 %v4025
    %4315 = vmatprep.subr.mxu0 0.0
    %4316 = vmatpush2.msra.mxu0 %v4024
    %4317 = vmatprep.subr.mxu0 0.0
    %4318 = vmatpush2.msra.mxu0 %v4023
    %4319 = vmatprep.subr.mxu0 0.0
    %4320 = vmatpush2.msra.mxu0 %v4022
    %4321 = vmatprep.subr.mxu0 0.0
    %4322 = vmatpush2.msra.mxu0 %v4021
    %4323 = vmatprep.subr.mxu0 0.0
    %4324 = vmatpush2.msra.mxu0 %v4020
    %4325 = vmatprep.subr.mxu0 0.0
    %4326 = vmatpush2.msra.mxu0 %v4019
    %4327 = vmatprep.subr.mxu0 0.0
    %4328 = vmatpush2.msra.mxu0 %v4018
    %4329 = vmatprep.subr.mxu0 0.0
    %4330 = vmatpush2.msra.mxu0 %v4017
    %4331 = vmatprep.subr.mxu0 0.0
    %4332 = vmatpush2.msra.mxu0 %v4016
    %4333 = vmatprep.subr.mxu0 0.0
    %4334 = vmatpush2.msra.mxu0 %v4015
    %4335 = vmatprep.subr.mxu0 0.0
    %4336 = vmatpush2.msra.mxu0 %v4014
    %4337 = vmatprep.subr.mxu0 0.0
    %4338 = vmatpush2.msra.mxu0 %v4013
    %4339 = vmatprep.subr.mxu0 0.0
    %4340 = vmatpush2.msra.mxu0 %v4012
    %4341 = vmatprep.subr.mxu0 0.0
    %4342 = vmatpush2.msra.mxu0 %v4011
    %4343 = vmatprep.subr.mxu0 0.0
    %4344 = vmatpush2.msra.mxu0 %v4010
    %4345 = vmatprep.mubr.f32.mxu0 %v3872
    %4346 = vmatmul.mubr.f32.gmra.mxu0 %v3871
    %v4347 = vpop.f32.mrf.mxu0
    %v4348 = vadd.f32 %v4248, %v4347
    %v4349 = vpop.f32.mrf.mxu0
    %4350 = vmatprep.mubr.f32.mxu0 %v3881
    %4351 = vmatmul.mubr.f32.gmra.mxu0 %v3880
    %v4352 = vpop.f32.mrf.mxu0
    %v4353 = vadd.f32 %v4253, %v4352
    %v4354 = vpop.f32.mrf.mxu0
    %4355 = vmatprep.mubr.f32.mxu0 %v3890
    %4356 = vmatmul.mubr.f32.gmra.mxu0 %v3889
    %v4357 = vpop.f32.mrf.mxu0
    %v4358 = vadd.f32 %v4258, %v4357
    %v4359 = vpop.f32.mrf.mxu0
    %4360 = vmatprep.mubr.f32.mxu0 %v3899
    %4361 = vmatmul.mubr.f32.gmra.mxu0 %v3898
    %v4362 = vpop.f32.mrf.mxu0
    %v4363 = vadd.f32 %v4263, %v4362
    %v4364 = vpop.f32.mrf.mxu0
    %4365 = vmatprep.mubr.f32.mxu0 %v3908
    %4366 = vmatmul.mubr.f32.gmra.mxu0 %v3907
    %v4367 = vpop.f32.mrf.mxu0
    %v4368 = vadd.f32 %v4268, %v4367
    %v4369 = vpop.f32.mrf.mxu0
    %4370 = vmatprep.mubr.f32.mxu0 %v3917
    %4371 = vmatmul.mubr.f32.gmra.mxu0 %v3916
    %v4372 = vpop.f32.mrf.mxu0
    %v4373 = vadd.f32 %v4273, %v4372
    %v4374 = vpop.f32.mrf.mxu0
    %4375 = vmatprep.mubr.f32.mxu0 %v3926
    %4376 = vmatmul.mubr.f32.gmra.mxu0 %v3925
    %v4377 = vpop.f32.mrf.mxu0
    %v4378 = vadd.f32 %v4278, %v4377
    %v4379 = vpop.f32.mrf.mxu0
    %4380 = vdwg.mxu0
    %4381 = vmatprep.subr.mxu0 0.0
    %4382 = vmatpush1.msra.mxu0 %v4041
    %4383 = vmatprep.subr.mxu0 0.0
    %4384 = vmatpush1.msra.mxu0 %v4040
    %4385 = vmatprep.subr.mxu0 0.0
    %4386 = vmatpush1.msra.mxu0 %v4039
    %4387 = vmatprep.subr.mxu0 0.0
    %4388 = vmatpush1.msra.mxu0 %v4038
    %4389 = vmatprep.subr.mxu0 0.0
    %4390 = vmatpush1.msra.mxu0 %v4037
    %4391 = vmatprep.subr.mxu0 0.0
    %4392 = vmatpush1.msra.mxu0 %v4036
    %4393 = vmatprep.subr.mxu0 0.0
    %4394 = vmatpush1.msra.mxu0 %v4035
    %4395 = vmatprep.subr.mxu0 0.0
    %4396 = vmatpush1.msra.mxu0 %v4034
    %4397 = vmatprep.subr.mxu0 0.0
    %4398 = vmatpush1.msra.mxu0 %v4033
    %4399 = vmatprep.subr.mxu0 0.0
    %4400 = vmatpush1.msra.mxu0 %v4032
    %4401 = vmatprep.subr.mxu0 0.0
    %4402 = vmatpush1.msra.mxu0 %v4031
    %4403 = vmatprep.subr.mxu0 0.0
    %4404 = vmatpush1.msra.mxu0 %v4030
    %4405 = vmatprep.subr.mxu0 0.0
    %4406 = vmatpush1.msra.mxu0 %v4029
    %4407 = vmatprep.subr.mxu0 0.0
    %4408 = vmatpush1.msra.mxu0 %v4028
    %4409 = vmatprep.subr.mxu0 0.0
    %4410 = vmatpush1.msra.mxu0 %v4027
    %4411 = vmatprep.subr.mxu0 0.0
    %4412 = vmatpush1.msra.mxu0 %v4026
    %4413 = vmatprep.subr.mxu0 0.0
    %4414 = vmatpush2.msra.mxu0 %v4057
    %4415 = vmatprep.subr.mxu0 0.0
    %4416 = vmatpush2.msra.mxu0 %v4056
    %4417 = vmatprep.subr.mxu0 0.0
    %4418 = vmatpush2.msra.mxu0 %v4055
    %4419 = vmatprep.subr.mxu0 0.0
    %4420 = vmatpush2.msra.mxu0 %v4054
    %4421 = vmatprep.subr.mxu0 0.0
    %4422 = vmatpush2.msra.mxu0 %v4053
    %4423 = vmatprep.subr.mxu0 0.0
    %4424 = vmatpush2.msra.mxu0 %v4052
    %4425 = vmatprep.subr.mxu0 0.0
    %4426 = vmatpush2.msra.mxu0 %v4051
    %4427 = vmatprep.subr.mxu0 0.0
    %4428 = vmatpush2.msra.mxu0 %v4050
    %4429 = vmatprep.subr.mxu0 0.0
    %4430 = vmatpush2.msra.mxu0 %v4049
    %4431 = vmatprep.subr.mxu0 0.0
    %4432 = vmatpush2.msra.mxu0 %v4048
    %4433 = vmatprep.subr.mxu0 0.0
    %4434 = vmatpush2.msra.mxu0 %v4047
    %4435 = vmatprep.subr.mxu0 0.0
    %4436 = vmatpush2.msra.mxu0 %v4046
    %4437 = vmatprep.subr.mxu0 0.0
    %4438 = vmatpush2.msra.mxu0 %v4045
    %4439 = vmatprep.subr.mxu0 0.0
    %4440 = vmatpush2.msra.mxu0 %v4044
    %4441 = vmatprep.subr.mxu0 0.0
    %4442 = vmatpush2.msra.mxu0 %v4043
    %4443 = vmatprep.subr.mxu0 0.0
    %4444 = vmatpush2.msra.mxu0 %v4042
    %4445 = vmatprep.mubr.f32.mxu0 %v3874
    %4446 = vmatmul.mubr.f32.gmra.mxu0 %v3873
    %v4447 = vpop.f32.mrf.mxu0
    %v4448 = vadd.f32 %v4348, %v4447
    %v4449 = vpop.f32.mrf.mxu0
    %4450 = vmatprep.mubr.f32.mxu0 %v3883
    %4451 = vmatmul.mubr.f32.gmra.mxu0 %v3882
    %v4452 = vpop.f32.mrf.mxu0
    %v4453 = vadd.f32 %v4353, %v4452
    %v4454 = vpop.f32.mrf.mxu0
    %4455 = vmatprep.mubr.f32.mxu0 %v3892
    %4456 = vmatmul.mubr.f32.gmra.mxu0 %v3891
    %v4457 = vpop.f32.mrf.mxu0
    %v4458 = vadd.f32 %v4358, %v4457
    %v4459 = vpop.f32.mrf.mxu0
    %4460 = vmatprep.mubr.f32.mxu0 %v3901
    %4461 = vmatmul.mubr.f32.gmra.mxu0 %v3900
    %v4462 = vpop.f32.mrf.mxu0
    %v4463 = vadd.f32 %v4363, %v4462
    %v4464 = vpop.f32.mrf.mxu0
    %4465 = vmatprep.mubr.f32.mxu0 %v3910
    %4466 = vmatmul.mubr.f32.gmra.mxu0 %v3909
    %v4467 = vpop.f32.mrf.mxu0
    %v4468 = vadd.f32 %v4368, %v4467
    %v4469 = vpop.f32.mrf.mxu0
    %4470 = vmatprep.mubr.f32.mxu0 %v3919
    %4471 = vmatmul.mubr.f32.gmra.mxu0 %v3918
    %v4472 = vpop.f32.mrf.mxu0
    %v4473 = vadd.f32 %v4373, %v4472
    %v4474 = vpop.f32.mrf.mxu0
    %4475 = vmatprep.mubr.f32.mxu0 %v3928
    %4476 = vmatmul.mubr.f32.gmra.mxu0 %v3927
    %v4477 = vpop.f32.mrf.mxu0
    %v4478 = vadd.f32 %v4378, %v4477
    %v4479 = vpop.f32.mrf.mxu0
    %4480 = vdwg.mxu0
    %4481 = vmatprep.subr.mxu0 0.0
    %4482 = vmatpush1.msra.mxu0 %v4073
    %4483 = vmatprep.subr.mxu0 0.0
    %4484 = vmatpush1.msra.mxu0 %v4072
    %4485 = vmatprep.subr.mxu0 0.0
    %4486 = vmatpush1.msra.mxu0 %v4071
    %4487 = vmatprep.subr.mxu0 0.0
    %4488 = vmatpush1.msra.mxu0 %v4070
    %4489 = vmatprep.subr.mxu0 0.0
    %4490 = vmatpush1.msra.mxu0 %v4069
    %4491 = vmatprep.subr.mxu0 0.0
    %4492 = vmatpush1.msra.mxu0 %v4068
    %4493 = vmatprep.subr.mxu0 0.0
    %4494 = vmatpush1.msra.mxu0 %v4067
    %4495 = vmatprep.subr.mxu0 0.0
    %4496 = vmatpush1.msra.mxu0 %v4066
    %4497 = vmatprep.subr.mxu0 0.0
    %4498 = vmatpush1.msra.mxu0 %v4065
    %4499 = vmatprep.subr.mxu0 0.0
    %4500 = vmatpush1.msra.mxu0 %v4064
    %4501 = vmatprep.subr.mxu0 0.0
    %4502 = vmatpush1.msra.mxu0 %v4063
    %4503 = vmatprep.subr.mxu0 0.0
    %4504 = vmatpush1.msra.mxu0 %v4062
    %4505 = vmatprep.subr.mxu0 0.0
    %4506 = vmatpush1.msra.mxu0 %v4061
    %4507 = vmatprep.subr.mxu0 0.0
    %4508 = vmatpush1.msra.mxu0 %v4060
    %4509 = vmatprep.subr.mxu0 0.0
    %4510 = vmatpush1.msra.mxu0 %v4059
    %4511 = vmatprep.subr.mxu0 0.0
    %4512 = vmatpush1.msra.mxu0 %v4058
    %4513 = vmatprep.subr.mxu0 0.0
    %4514 = vmatpush2.msra.mxu0 0.0
    %4515 = vmatprep.subr.mxu0 0.0
    %4516 = vmatpush2.msra.mxu0 0.0
    %4517 = vmatprep.subr.mxu0 0.0
    %4518 = vmatpush2.msra.mxu0 0.0
    %4519 = vmatprep.subr.mxu0 0.0
    %4520 = vmatpush2.msra.mxu0 0.0
    %4521 = vmatprep.subr.mxu0 0.0
    %4522 = vmatpush2.msra.mxu0 0.0
    %4523 = vmatprep.subr.mxu0 0.0
    %4524 = vmatpush2.msra.mxu0 0.0
    %4525 = vmatprep.subr.mxu0 0.0
    %4526 = vmatpush2.msra.mxu0 0.0
    %4527 = vmatprep.subr.mxu0 0.0
    %4528 = vmatpush2.msra.mxu0 0.0
    %4529 = vmatprep.subr.mxu0 0.0
    %4530 = vmatpush2.msra.mxu0 0.0
    %4531 = vmatprep.subr.mxu0 0.0
    %4532 = vmatpush2.msra.mxu0 0.0
    %4533 = vmatprep.subr.mxu0 0.0
    %4534 = vmatpush2.msra.mxu0 0.0
    %4535 = vmatprep.subr.mxu0 0.0
    %4536 = vmatpush2.msra.mxu0 0.0
    %4537 = vmatprep.subr.mxu0 0.0
    %4538 = vmatpush2.msra.mxu0 0.0
    %4539 = vmatprep.subr.mxu0 0.0
    %4540 = vmatpush2.msra.mxu0 0.0
    %4541 = vmatprep.subr.mxu0 0.0
    %4542 = vmatpush2.msra.mxu0 0.0
    %4543 = vmatprep.subr.mxu0 0.0
    %4544 = vmatpush2.msra.mxu0 0.0
    %4545 = vmatprep.mubr.f32.mxu0 0.0
    %4546 = vmatmul.mubr.f32.gmra.mxu0 %v3875
    %v4547 = vpop.f32.mrf.mxu0
    %v4548 = vadd.f32 %v4448, %v4547
    %v4549 = vpop.f32.mrf.mxu0
    %4550 = vmatprep.mubr.f32.mxu0 0.0
    %4551 = vmatmul.mubr.f32.gmra.mxu0 %v3884
    %v4552 = vpop.f32.mrf.mxu0
    %v4553 = vadd.f32 %v4453, %v4552
    %v4554 = vpop.f32.mrf.mxu0
    %4555 = vmatprep.mubr.f32.mxu0 0.0
    %4556 = vmatmul.mubr.f32.gmra.mxu0 %v3893
    %v4557 = vpop.f32.mrf.mxu0
    %v4558 = vadd.f32 %v4458, %v4557
    %v4559 = vpop.f32.mrf.mxu0
    %4560 = vmatprep.mubr.f32.mxu0 0.0
    %4561 = vmatmul.mubr.f32.gmra.mxu0 %v3902
    %v4562 = vpop.f32.mrf.mxu0
    %v4563 = vadd.f32 %v4463, %v4562
    %v4564 = vpop.f32.mrf.mxu0
    %4565 = vmatprep.mubr.f32.mxu0 0.0
    %4566 = vmatmul.mubr.f32.gmra.mxu0 %v3911
    %v4567 = vpop.f32.mrf.mxu0
    %v4568 = vadd.f32 %v4468, %v4567
    %v4569 = vpop.f32.mrf.mxu0
    %4570 = vmatprep.mubr.f32.mxu0 0.0
    %4571 = vmatmul.mubr.f32.gmra.mxu0 %v3920
    %v4572 = vpop.f32.mrf.mxu0
    %v4573 = vadd.f32 %v4473, %v4572
    %v4574 = vpop.f32.mrf.mxu0
    %4575 = vmatprep.mubr.f32.mxu0 0.0
    %4576 = vmatmul.mubr.f32.gmra.mxu0 %v3929
    %v4577 = vpop.f32.mrf.mxu0
    %v4578 = vadd.f32 %v4478, %v4577
    %v4579 = vpop.f32.mrf.mxu0
    %4580 = vdwg.mxu0
    %v4581 = vmax.f32 %v4548, 0.0
    %v4582 = vmax.f32 %v4553, 0.0
    %v4583 = vmax.f32 %v4558, 0.0
    %v4584 = vmax.f32 %v4563, 0.0
    %v4585 = vmax.f32 %v4568, 0.0
    %v4586 = vmax.f32 %v4573, 0.0
    %v4587 = vmax.f32 %v4578, 0.0
    %4588 = vst [vmem:[#allocation5] sm:$0xff] %v4581
    %4589 = vst [vmem:[#allocation5 + $0x8] sm:$0xff] %v4582
    %4590 = vst [vmem:[#allocation5 + $0x10] sm:$0xff] %v4583
    %4591 = vst [vmem:[#allocation5 + $0x18] sm:$0xff] %v4584
    %4592 = vst [vmem:[#allocation5 + $0x20] sm:$0xff] %v4585
    %4593 = vst [vmem:[#allocation5 + $0x28] sm:$0xff] %v4586
    %4594 = vst [vmem:[#allocation5 + $0x30] sm:$0x3] %v4587
    %v4595 = vld [vmem:[#allocation5] sm:$0x3]
    %v4596 = vld [vmem:[#allocation5 + $0x5] sm:$0x3]
    %v4597 = vmax.f32 %v4595, %v4596
    %vm4598 = vcmask 1041408
    %v4599 = vsel %vm4598, %v4597, -inf
    %v4600 = vrot.slane %v4599, 4
    %v4601 = vmax.f32 %v4599, %v4600
    %v4602 = vrot.slane %v4601, 2
    %v4603 = vmax.f32 %v4601, %v4602
    %v4604 = vrot.slane %v4603, 1
    %v4605 = vmax.f32 %v4603, %v4604
    %4606 = vst [vmem:[#allocation6] sm:$0x1] %v4605
    %v4607 = vld [vmem:[#allocation5 + $0x2] sm:$0x3]
    %v4608 = vld [vmem:[#allocation5 + $0x7] sm:$0x3]
    %v4609 = vmax.f32 %v4607, %v4608
    %v4610 = vsel %vm4598, %v4609, -inf
    %v4611 = vrot.slane %v4610, 4
    %v4612 = vmax.f32 %v4610, %v4611
    %v4613 = vrot.slane %v4612, 2
    %v4614 = vmax.f32 %v4612, %v4613
    %v4615 = vrot.slane %v4614, 1
    %v4616 = vmax.f32 %v4614, %v4615
    %4617 = vst [vmem:[#allocation6 + $0x2] sm:$0x1] %v4616
    %v4618 = vld [vmem:[#allocation5 + $0xa] sm:$0x3]
    %v4619 = vld [vmem:[#allocation5 + $0xf] sm:$0x3]
    %v4620 = vmax.f32 %v4618, %v4619
    %v4621 = vsel %vm4598, %v4620, -inf
    %v4622 = vrot.slane %v4621, 4
    %v4623 = vmax.f32 %v4621, %v4622
    %v4624 = vrot.slane %v4623, 2
    %v4625 = vmax.f32 %v4623, %v4624
    %v4626 = vrot.slane %v4625, 1
    %v4627 = vmax.f32 %v4625, %v4626
    %4628 = vst [vmem:[#allocation6 + $0x4] sm:$0x1] %v4627
    %v4629 = vld [vmem:[#allocation5 + $0xc] sm:$0x3]
    %v4630 = vld [vmem:[#allocation5 + $0x11] sm:$0x3]
    %v4631 = vmax.f32 %v4629, %v4630
    %v4632 = vsel %vm4598, %v4631, -inf
    %v4633 = vrot.slane %v4632, 4
    %v4634 = vmax.f32 %v4632, %v4633
    %v4635 = vrot.slane %v4634, 2
    %v4636 = vmax.f32 %v4634, %v4635
    %v4637 = vrot.slane %v4636, 1
    %v4638 = vmax.f32 %v4636, %v4637
    %4639 = vst [vmem:[#allocation6 + $0x6] sm:$0x1] %v4638
    %v4640 = vld [vmem:[#allocation5 + $0x19] sm:$0x3]
    %v4641 = vld [vmem:[#allocation5 + $0x1e] sm:$0x3]
    %v4642 = vmax.f32 %v4640, %v4641
    %v4643 = vsel %vm4598, %v4642, -inf
    %v4644 = vrot.slane %v4643, 4
    %v4645 = vmax.f32 %v4643, %v4644
    %v4646 = vrot.slane %v4645, 2
    %v4647 = vmax.f32 %v4645, %v4646
    %v4648 = vrot.slane %v4647, 1
    %v4649 = vmax.f32 %v4647, %v4648
    %4650 = vst [vmem:[#allocation6 + $0x1] sm:$0x1] %v4649
    %v4651 = vld [vmem:[#allocation5 + $0x1b] sm:$0x3]
    %v4652 = vld [vmem:[#allocation5 + $0x20] sm:$0x3]
    %v4653 = vmax.f32 %v4651, %v4652
    %v4654 = vsel %vm4598, %v4653, -inf
    %v4655 = vrot.slane %v4654, 4
    %v4656 = vmax.f32 %v4654, %v4655
    %v4657 = vrot.slane %v4656, 2
    %v4658 = vmax.f32 %v4656, %v4657
    %v4659 = vrot.slane %v4658, 1
    %v4660 = vmax.f32 %v4658, %v4659
    %4661 = vst [vmem:[#allocation6 + $0x3] sm:$0x1] %v4660
    %v4662 = vld [vmem:[#allocation5 + $0x23] sm:$0x3]
    %v4663 = vld [vmem:[#allocation5 + $0x28] sm:$0x3]
    %v4664 = vmax.f32 %v4662, %v4663
    %v4665 = vsel %vm4598, %v4664, -inf
    %v4666 = vrot.slane %v4665, 4
    %v4667 = vmax.f32 %v4665, %v4666
    %v4668 = vrot.slane %v4667, 2
    %v4669 = vmax.f32 %v4667, %v4668
    %v4670 = vrot.slane %v4669, 1
    %v4671 = vmax.f32 %v4669, %v4670
    %4672 = vst [vmem:[#allocation6 + $0x5] sm:$0x1] %v4671
    %v4673 = vld [vmem:[#allocation5 + $0x25] sm:$0x3]
    %v4674 = vld [vmem:[#allocation5 + $0x2a] sm:$0x3]
    %v4675 = vmax.f32 %v4673, %v4674
    %v4676 = vsel %vm4598, %v4675, -inf
    %v4677 = vrot.slane %v4676, 4
    %v4678 = vmax.f32 %v4676, %v4677
    %v4679 = vrot.slane %v4678, 2
    %v4680 = vmax.f32 %v4678, %v4679
    %v4681 = vrot.slane %v4680, 1
    %v4682 = vmax.f32 %v4680, %v4681
    %4683 = vst [vmem:[#allocation6 + $0x7] sm:$0x1] %v4682
    %v4684 = vld [vmem:[#allocation6] sm:$0xff]
    %v4685 = vld [vmem:[%s5] sm:$0xff]
    %v4686 = vld [vmem:[%s5 + $0x8] sm:$0xff]
    %v4687 = vld [vmem:[%s5 + $0x10] sm:$0xff]
    %v4688 = vld [vmem:[%s5 + $0x18] sm:$0xff]
    %v4689 = vld [vmem:[%s5 + $0x20] sm:$0xff]
    %v4690 = vld [vmem:[%s5 + $0x28] sm:$0xff]
    %v4691 = vld [vmem:[%s5 + $0x30] sm:$0xff]
    %v4692 = vld [vmem:[%s5 + $0x38] sm:$0xff]
    %v4693 = vld [vmem:[%s5 + $0x40] sm:$0xff]
    %v4694 = vld [vmem:[%s5 + $0x48] sm:$0xff]
    %v4695 = vld [vmem:[%s5 + $0x50] sm:$0xff]
    %v4696 = vld [vmem:[%s5 + $0x58] sm:$0xff]
    %v4697 = vld [vmem:[%s5 + $0x60] sm:$0xff]
    %v4698 = vld [vmem:[%s5 + $0x68] sm:$0xff]
    %v4699 = vld [vmem:[%s5 + $0x70] sm:$0xff]
    %v4700 = vld [vmem:[%s5 + $0x78] sm:$0xff]
    %v4701 = vld [vmem:[%s5 + $0x80] sm:$0xff]
    %v4702 = vld [vmem:[%s5 + $0x88] sm:$0xff]
    %v4703 = vld [vmem:[%s5 + $0x90] sm:$0xff]
    %v4704 = vld [vmem:[%s5 + $0x98] sm:$0xff]
    %v4705 = vld [vmem:[%s5 + $0xa0] sm:$0xff]
    %v4706 = vld [vmem:[%s5 + $0xa8] sm:$0xff]
    %v4707 = vld [vmem:[%s5 + $0xb0] sm:$0xff]
    %v4708 = vld [vmem:[%s5 + $0xb8] sm:$0xff]
    %v4709 = vld [vmem:[%s5 + $0xc0] sm:$0xff]
    %v4710 = vld [vmem:[%s5 + $0xc8] sm:$0xff]
    %v4711 = vld [vmem:[%s5 + $0xd0] sm:$0xff]
    %v4712 = vld [vmem:[%s5 + $0xd8] sm:$0xff]
    %v4713 = vld [vmem:[%s5 + $0xe0] sm:$0xff]
    %v4714 = vld [vmem:[%s5 + $0xe8] sm:$0xff]
    %v4715 = vld [vmem:[%s5 + $0xf0] sm:$0xff]
    %v4716 = vld [vmem:[%s5 + $0xf8] sm:$0xff]
    %v4717 = vld [vmem:[%s5 + $0x100] sm:$0xff]
    %v4718 = vld [vmem:[%s5 + $0x108] sm:$0xff]
    %v4719 = vld [vmem:[%s5 + $0x110] sm:$0xff]
    %v4720 = vld [vmem:[%s5 + $0x118] sm:$0xff]
    %v4721 = vld [vmem:[%s5 + $0x120] sm:$0xff]
    %v4722 = vld [vmem:[%s5 + $0x128] sm:$0xff]
    %v4723 = vld [vmem:[%s5 + $0x130] sm:$0xff]
    %v4724 = vld [vmem:[%s5 + $0x138] sm:$0xff]
    %v4725 = vld [vmem:[%s5 + $0x140] sm:$0xff]
    %v4726 = vld [vmem:[%s5 + $0x148] sm:$0xff]
    %v4727 = vld [vmem:[%s5 + $0x150] sm:$0xff]
    %v4728 = vld [vmem:[%s5 + $0x158] sm:$0xff]
    %v4729 = vld [vmem:[%s5 + $0x160] sm:$0xff]
    %v4730 = vld [vmem:[%s5 + $0x168] sm:$0xff]
    %v4731 = vld [vmem:[%s5 + $0x170] sm:$0xff]
    %v4732 = vld [vmem:[%s5 + $0x178] sm:$0xff]
    %v4733 = vld [vmem:[%s5 + $0x180] sm:$0xff]
    %v4734 = vld [vmem:[%s5 + $0x188] sm:$0xff]
    %v4735 = vld [vmem:[%s5 + $0x190] sm:$0xff]
    %v4736 = vld [vmem:[%s5 + $0x198] sm:$0xff]
    %v4737 = vld [vmem:[%s5 + $0x1a0] sm:$0xff]
    %v4738 = vld [vmem:[%s5 + $0x1a8] sm:$0xff]
    %v4739 = vld [vmem:[%s5 + $0x1b0] sm:$0xff]
    %v4740 = vld [vmem:[%s5 + $0x1b8] sm:$0xff]
    %v4741 = vld [vmem:[%s5 + $0x1c0] sm:$0xff]
    %v4742 = vld [vmem:[%s5 + $0x1c8] sm:$0xff]
    %v4743 = vld [vmem:[%s5 + $0x1d0] sm:$0xff]
    %v4744 = vld [vmem:[%s5 + $0x1d8] sm:$0xff]
    %v4745 = vld [vmem:[%s5 + $0x1e0] sm:$0xff]
    %v4746 = vld [vmem:[%s5 + $0x1e8] sm:$0xff]
    %v4747 = vld [vmem:[%s5 + $0x1f0] sm:$0xff]
    %v4748 = vld [vmem:[%s5 + $0x1f8] sm:$0xff]
    %v4749 = vld [vmem:[%s5 + $0x200] sm:$0xff]
    %v4750 = vld [vmem:[%s5 + $0x208] sm:$0xff]
    %v4751 = vld [vmem:[%s5 + $0x210] sm:$0xff]
    %v4752 = vld [vmem:[%s5 + $0x218] sm:$0xff]
    %v4753 = vld [vmem:[%s5 + $0x220] sm:$0xff]
    %v4754 = vld [vmem:[%s5 + $0x228] sm:$0xff]
    %v4755 = vld [vmem:[%s5 + $0x230] sm:$0xff]
    %v4756 = vld [vmem:[%s5 + $0x238] sm:$0xff]
    %v4757 = vld [vmem:[%s5 + $0x240] sm:$0xff]
    %v4758 = vld [vmem:[%s5 + $0x248] sm:$0xff]
    %v4759 = vld [vmem:[%s5 + $0x250] sm:$0xff]
    %v4760 = vld [vmem:[%s5 + $0x258] sm:$0xff]
    %v4761 = vld [vmem:[%s5 + $0x260] sm:$0xff]
    %v4762 = vld [vmem:[%s5 + $0x268] sm:$0xff]
    %v4763 = vld [vmem:[%s5 + $0x270] sm:$0xff]
    %v4764 = vld [vmem:[%s5 + $0x278] sm:$0xff]
    %v4765 = vld [vmem:[%s5 + $0x280] sm:$0xff]
    %v4766 = vld [vmem:[%s5 + $0x288] sm:$0xff]
    %v4767 = vld [vmem:[%s5 + $0x290] sm:$0xff]
    %v4768 = vld [vmem:[%s5 + $0x298] sm:$0xff]
    %v4769 = vld [vmem:[%s5 + $0x2a0] sm:$0xff]
    %v4770 = vld [vmem:[%s5 + $0x2a8] sm:$0xff]
    %v4771 = vld [vmem:[%s5 + $0x2b0] sm:$0xff]
    %v4772 = vld [vmem:[%s5 + $0x2b8] sm:$0xff]
    %v4773 = vld [vmem:[%s5 + $0x2c0] sm:$0xff]
    %v4774 = vld [vmem:[%s5 + $0x2c8] sm:$0xff]
    %v4775 = vld [vmem:[%s5 + $0x2d0] sm:$0xff]
    %v4776 = vld [vmem:[%s5 + $0x2d8] sm:$0xff]
    %v4777 = vld [vmem:[%s5 + $0x2e0] sm:$0xff]
    %v4778 = vld [vmem:[%s5 + $0x2e8] sm:$0xff]
    %v4779 = vld [vmem:[%s5 + $0x2f0] sm:$0xff]
    %v4780 = vld [vmem:[%s5 + $0x2f8] sm:$0xff]
    %v4781 = vld [vmem:[%s5 + $0x300] sm:$0xff]
    %v4782 = vld [vmem:[%s5 + $0x308] sm:$0xff]
    %v4783 = vld [vmem:[%s5 + $0x310] sm:$0xff]
    %v4784 = vld [vmem:[%s5 + $0x318] sm:$0xff]
    %v4785 = vld [vmem:[%s5 + $0x320] sm:$0xff]
    %v4786 = vld [vmem:[%s5 + $0x328] sm:$0xff]
    %v4787 = vld [vmem:[%s5 + $0x330] sm:$0xff]
    %v4788 = vld [vmem:[%s5 + $0x338] sm:$0xff]
    %v4789 = vld [vmem:[%s5 + $0x340] sm:$0xff]
    %v4790 = vld [vmem:[%s5 + $0x348] sm:$0xff]
    %v4791 = vld [vmem:[%s5 + $0x350] sm:$0xff]
    %v4792 = vld [vmem:[%s5 + $0x358] sm:$0xff]
    %v4793 = vld [vmem:[%s5 + $0x360] sm:$0xff]
    %v4794 = vld [vmem:[%s5 + $0x368] sm:$0xff]
    %v4795 = vld [vmem:[%s5 + $0x370] sm:$0xff]
    %v4796 = vld [vmem:[%s5 + $0x378] sm:$0xff]
    %v4797 = vld [vmem:[%s5 + $0x380] sm:$0xff]
    %v4798 = vld [vmem:[%s5 + $0x388] sm:$0xff]
    %v4799 = vld [vmem:[%s5 + $0x390] sm:$0xff]
    %v4800 = vld [vmem:[%s5 + $0x398] sm:$0xff]
    %v4801 = vld [vmem:[%s5 + $0x3a0] sm:$0xff]
    %v4802 = vld [vmem:[%s5 + $0x3a8] sm:$0xff]
    %v4803 = vld [vmem:[%s5 + $0x3b0] sm:$0xff]
    %v4804 = vld [vmem:[%s5 + $0x3b8] sm:$0xff]
    %v4805 = vld [vmem:[%s5 + $0x3c0] sm:$0xff]
    %v4806 = vld [vmem:[%s5 + $0x3c8] sm:$0xff]
    %v4807 = vld [vmem:[%s5 + $0x3d0] sm:$0xff]
    %v4808 = vld [vmem:[%s5 + $0x3d8] sm:$0xff]
    %v4809 = vld [vmem:[%s5 + $0x3e0] sm:$0xff]
    %v4810 = vld [vmem:[%s5 + $0x3e8] sm:$0xff]
    %v4811 = vld [vmem:[%s5 + $0x3f0] sm:$0xff]
    %v4812 = vld [vmem:[%s5 + $0x3f8] sm:$0xff]
    %v4813 = vld [vmem:[%s5 + $0x400] sm:$0xff]
    %v4814 = vld [vmem:[%s5 + $0x408] sm:$0xff]
    %v4815 = vld [vmem:[%s5 + $0x410] sm:$0xff]
    %v4816 = vld [vmem:[%s5 + $0x418] sm:$0xff]
    %v4817 = vld [vmem:[%s5 + $0x420] sm:$0xff]
    %v4818 = vld [vmem:[%s5 + $0x428] sm:$0xff]
    %v4819 = vld [vmem:[%s5 + $0x430] sm:$0xff]
    %v4820 = vld [vmem:[%s5 + $0x438] sm:$0xff]
    %v4821 = vld [vmem:[%s5 + $0x440] sm:$0xff]
    %v4822 = vld [vmem:[%s5 + $0x448] sm:$0xff]
    %v4823 = vld [vmem:[%s5 + $0x450] sm:$0xff]
    %v4824 = vld [vmem:[%s5 + $0x458] sm:$0xff]
    %v4825 = vld [vmem:[%s5 + $0x460] sm:$0xff]
    %v4826 = vld [vmem:[%s5 + $0x468] sm:$0xff]
    %v4827 = vld [vmem:[%s5 + $0x470] sm:$0xff]
    %v4828 = vld [vmem:[%s5 + $0x478] sm:$0xff]
    %v4829 = vld [vmem:[%s5 + $0x480] sm:$0xff]
    %v4830 = vld [vmem:[%s5 + $0x488] sm:$0xff]
    %v4831 = vld [vmem:[%s5 + $0x490] sm:$0xff]
    %v4832 = vld [vmem:[%s5 + $0x498] sm:$0xff]
    %v4833 = vld [vmem:[%s5 + $0x4a0] sm:$0xff]
    %v4834 = vld [vmem:[%s5 + $0x4a8] sm:$0xff]
    %v4835 = vld [vmem:[%s5 + $0x4b0] sm:$0xff]
    %v4836 = vld [vmem:[%s5 + $0x4b8] sm:$0xff]
    %v4837 = vld [vmem:[%s5 + $0x4c0] sm:$0xff]
    %v4838 = vld [vmem:[%s5 + $0x4c8] sm:$0xff]
    %v4839 = vld [vmem:[%s5 + $0x4d0] sm:$0xff]
    %v4840 = vld [vmem:[%s5 + $0x4d8] sm:$0xff]
    %v4841 = vld [vmem:[%s5 + $0x4e0] sm:$0xff]
    %v4842 = vld [vmem:[%s5 + $0x4e8] sm:$0xff]
    %v4843 = vld [vmem:[%s5 + $0x4f0] sm:$0xff]
    %v4844 = vld [vmem:[%s5 + $0x4f8] sm:$0xff]
    %v4845 = vld [vmem:[%s5 + $0x500] sm:$0xff]
    %v4846 = vld [vmem:[%s5 + $0x508] sm:$0xff]
    %v4847 = vld [vmem:[%s5 + $0x510] sm:$0xff]
    %v4848 = vld [vmem:[%s5 + $0x518] sm:$0xff]
    %v4849 = vld [vmem:[%s5 + $0x520] sm:$0xff]
    %v4850 = vld [vmem:[%s5 + $0x528] sm:$0xff]
    %v4851 = vld [vmem:[%s5 + $0x530] sm:$0xff]
    %v4852 = vld [vmem:[%s5 + $0x538] sm:$0xff]
    %v4853 = vld [vmem:[%s5 + $0x540] sm:$0xff]
    %v4854 = vld [vmem:[%s5 + $0x548] sm:$0xff]
    %v4855 = vld [vmem:[%s5 + $0x550] sm:$0xff]
    %v4856 = vld [vmem:[%s5 + $0x558] sm:$0xff]
    %v4857 = vld [vmem:[%s5 + $0x560] sm:$0xff]
    %v4858 = vld [vmem:[%s5 + $0x568] sm:$0xff]
    %v4859 = vld [vmem:[%s5 + $0x570] sm:$0xff]
    %v4860 = vld [vmem:[%s5 + $0x578] sm:$0xff]
    %v4861 = vld [vmem:[%s5 + $0x580] sm:$0xff]
    %v4862 = vld [vmem:[%s5 + $0x588] sm:$0xff]
    %v4863 = vld [vmem:[%s5 + $0x590] sm:$0xff]
    %v4864 = vld [vmem:[%s5 + $0x598] sm:$0xff]
    %v4865 = vld [vmem:[%s5 + $0x5a0] sm:$0xff]
    %v4866 = vld [vmem:[%s5 + $0x5a8] sm:$0xff]
    %v4867 = vld [vmem:[%s5 + $0x5b0] sm:$0xff]
    %v4868 = vld [vmem:[%s5 + $0x5b8] sm:$0xff]
    %v4869 = vld [vmem:[%s5 + $0x5c0] sm:$0xff]
    %v4870 = vld [vmem:[%s5 + $0x5c8] sm:$0xff]
    %v4871 = vld [vmem:[%s5 + $0x5d0] sm:$0xff]
    %v4872 = vld [vmem:[%s5 + $0x5d8] sm:$0xff]
    %v4873 = vld [vmem:[%s5 + $0x5e0] sm:$0xff]
    %v4874 = vld [vmem:[%s5 + $0x5e8] sm:$0xff]
    %v4875 = vld [vmem:[%s5 + $0x5f0] sm:$0xff]
    %v4876 = vld [vmem:[%s5 + $0x5f8] sm:$0xff]
    %v4877 = vld [vmem:[%s5 + $0x600] sm:$0xff]
    %v4878 = vld [vmem:[%s5 + $0x608] sm:$0xff]
    %v4879 = vld [vmem:[%s5 + $0x610] sm:$0xff]
    %v4880 = vld [vmem:[%s5 + $0x618] sm:$0xff]
    %v4881 = vld [vmem:[%s5 + $0x620] sm:$0xff]
    %v4882 = vld [vmem:[%s5 + $0x628] sm:$0xff]
    %v4883 = vld [vmem:[%s5 + $0x630] sm:$0xff]
    %v4884 = vld [vmem:[%s5 + $0x638] sm:$0xff]
    %v4885 = vld [vmem:[%s5 + $0x640] sm:$0xff]
    %v4886 = vld [vmem:[%s5 + $0x648] sm:$0xff]
    %v4887 = vld [vmem:[%s5 + $0x650] sm:$0xff]
    %v4888 = vld [vmem:[%s5 + $0x658] sm:$0xff]
    %v4889 = vld [vmem:[%s5 + $0x660] sm:$0xff]
    %v4890 = vld [vmem:[%s5 + $0x668] sm:$0xff]
    %v4891 = vld [vmem:[%s5 + $0x670] sm:$0xff]
    %v4892 = vld [vmem:[%s5 + $0x678] sm:$0xff]
    %v4893 = vld [vmem:[%s5 + $0x680] sm:$0xff]
    %v4894 = vld [vmem:[%s5 + $0x688] sm:$0xff]
    %v4895 = vld [vmem:[%s5 + $0x690] sm:$0xff]
    %v4896 = vld [vmem:[%s5 + $0x698] sm:$0xff]
    %v4897 = vld [vmem:[%s5 + $0x6a0] sm:$0xff]
    %v4898 = vld [vmem:[%s5 + $0x6a8] sm:$0xff]
    %v4899 = vld [vmem:[%s5 + $0x6b0] sm:$0xff]
    %v4900 = vld [vmem:[%s5 + $0x6b8] sm:$0xff]
    %v4901 = vld [vmem:[%s5 + $0x6c0] sm:$0xff]
    %v4902 = vld [vmem:[%s5 + $0x6c8] sm:$0xff]
    %v4903 = vld [vmem:[%s5 + $0x6d0] sm:$0xff]
    %v4904 = vld [vmem:[%s5 + $0x6d8] sm:$0xff]
    %v4905 = vld [vmem:[%s5 + $0x6e0] sm:$0xff]
    %v4906 = vld [vmem:[%s5 + $0x6e8] sm:$0xff]
    %v4907 = vld [vmem:[%s5 + $0x6f0] sm:$0xff]
    %v4908 = vld [vmem:[%s5 + $0x6f8] sm:$0xff]
    %v4909 = vld [vmem:[%s5 + $0x700] sm:$0xff]
    %v4910 = vld [vmem:[%s5 + $0x708] sm:$0xff]
    %v4911 = vld [vmem:[%s5 + $0x710] sm:$0xff]
    %v4912 = vld [vmem:[%s5 + $0x718] sm:$0xff]
    %v4913 = vld [vmem:[%s5 + $0x720] sm:$0xff]
    %v4914 = vld [vmem:[%s5 + $0x728] sm:$0xff]
    %v4915 = vld [vmem:[%s5 + $0x730] sm:$0xff]
    %v4916 = vld [vmem:[%s5 + $0x738] sm:$0xff]
    %v4917 = vld [vmem:[%s5 + $0x740] sm:$0xff]
    %v4918 = vld [vmem:[%s5 + $0x748] sm:$0xff]
    %v4919 = vld [vmem:[%s5 + $0x750] sm:$0xff]
    %v4920 = vld [vmem:[%s5 + $0x758] sm:$0xff]
    %v4921 = vld [vmem:[%s5 + $0x760] sm:$0xff]
    %v4922 = vld [vmem:[%s5 + $0x768] sm:$0xff]
    %v4923 = vld [vmem:[%s5 + $0x770] sm:$0xff]
    %v4924 = vld [vmem:[%s5 + $0x778] sm:$0xff]
    %v4925 = vld [vmem:[%s5 + $0x780] sm:$0xff]
    %v4926 = vld [vmem:[%s5 + $0x788] sm:$0xff]
    %v4927 = vld [vmem:[%s5 + $0x790] sm:$0xff]
    %v4928 = vld [vmem:[%s5 + $0x798] sm:$0xff]
    %v4929 = vld [vmem:[%s5 + $0x7a0] sm:$0xff]
    %v4930 = vld [vmem:[%s5 + $0x7a8] sm:$0xff]
    %v4931 = vld [vmem:[%s5 + $0x7b0] sm:$0xff]
    %v4932 = vld [vmem:[%s5 + $0x7b8] sm:$0xff]
    %v4933 = vld [vmem:[%s5 + $0x7c0] sm:$0xff]
    %v4934 = vld [vmem:[%s5 + $0x7c8] sm:$0xff]
    %v4935 = vld [vmem:[%s5 + $0x7d0] sm:$0xff]
    %v4936 = vld [vmem:[%s5 + $0x7d8] sm:$0xff]
    %v4937 = vld [vmem:[%s5 + $0x7e0] sm:$0xff]
    %v4938 = vld [vmem:[%s5 + $0x7e8] sm:$0xff]
    %v4939 = vld [vmem:[%s5 + $0x7f0] sm:$0xff]
    %v4940 = vld [vmem:[%s5 + $0x7f8] sm:$0xff]
    %v4941 = vld [vmem:[%s6] sm:$0xf]
    %v4943 = vlaneseq
    %v4944 = vshrl.u32 %v4943, 7
    %v4945 = vsub.s32 0, %v4944
    %v4946 = vrot.slane %v4941, %v4945
    %v4947 = vlaneseq
    %v4948 = vshrl.u32 %v4947, 7
    %v4949 = vsub.s32 1, %v4948
    %v4950 = vrot.slane %v4941, %v4949
    %v4951 = vlaneseq
    %v4952 = vshrl.u32 %v4951, 7
    %v4953 = vsub.s32 2, %v4952
    %v4954 = vrot.slane %v4941, %v4953
    %v4955 = vlaneseq
    %v4956 = vshrl.u32 %v4955, 7
    %v4957 = vsub.s32 3, %v4956
    %v4958 = vrot.slane %v4941, %v4957
    %v4964 = vcombine.high %v4684, %v4684
    %v4966 = vunpack.c.l.s4 1983009808
    %v4967 = vunpack.c.0.s8 %v4966
    %v4968 = vlaneseq
    %v4969 = vshrl.u32 %v4968, 7
    %v4970 = vsub.s32 %v4967, %v4969
    %v4971 = vrot.slane %v4684, %v4970
    %v4973 = vunpack.c.l.s4 1983009808
    %v4974 = vunpack.c.0.s8 %v4973
    %v4975 = vlaneseq
    %v4976 = vshrl.u32 %v4975, 7
    %v4977 = vsub.s32 %v4974, %v4976
    %v4978 = vrot.slane %v4964, %v4977
    %v4979 = vcombine.high %v4971, %v4971
    %v4980 = vcombine.high %v4978, %v4978
    %4985 = vmatprep.subr.mxu0 %v4746
    %4986 = vmatpush1.msra.mxu0 %v4745
    %4987 = vmatprep.subr.mxu0 %v4742
    %4988 = vmatpush1.msra.mxu0 %v4741
    %4989 = vmatprep.subr.mxu0 %v4738
    %4990 = vmatpush1.msra.mxu0 %v4737
    %4991 = vmatprep.subr.mxu0 %v4734
    %4992 = vmatpush1.msra.mxu0 %v4733
    %4993 = vmatprep.subr.mxu0 %v4730
    %4994 = vmatpush1.msra.mxu0 %v4729
    %4995 = vmatprep.subr.mxu0 %v4726
    %4996 = vmatpush1.msra.mxu0 %v4725
    %4997 = vmatprep.subr.mxu0 %v4722
    %4998 = vmatpush1.msra.mxu0 %v4721
    %4999 = vmatprep.subr.mxu0 %v4718
    %5000 = vmatpush1.msra.mxu0 %v4717
    %5001 = vmatprep.subr.mxu0 %v4714
    %5002 = vmatpush1.msra.mxu0 %v4713
    %5003 = vmatprep.subr.mxu0 %v4710
    %5004 = vmatpush1.msra.mxu0 %v4709
    %5005 = vmatprep.subr.mxu0 %v4706
    %5006 = vmatpush1.msra.mxu0 %v4705
    %5007 = vmatprep.subr.mxu0 %v4702
    %5008 = vmatpush1.msra.mxu0 %v4701
    %5009 = vmatprep.subr.mxu0 %v4698
    %5010 = vmatpush1.msra.mxu0 %v4697
    %5011 = vmatprep.subr.mxu0 %v4694
    %5012 = vmatpush1.msra.mxu0 %v4693
    %5013 = vmatprep.subr.mxu0 %v4690
    %5014 = vmatpush1.msra.mxu0 %v4689
    %5015 = vmatprep.subr.mxu0 %v4686
    %5016 = vmatpush1.msra.mxu0 %v4685
    %5017 = vmatprep.subr.mxu0 %v4810
    %5018 = vmatpush2.msra.mxu0 %v4809
    %5019 = vmatprep.subr.mxu0 %v4806
    %5020 = vmatpush2.msra.mxu0 %v4805
    %5021 = vmatprep.subr.mxu0 %v4802
    %5022 = vmatpush2.msra.mxu0 %v4801
    %5023 = vmatprep.subr.mxu0 %v4798
    %5024 = vmatpush2.msra.mxu0 %v4797
    %5025 = vmatprep.subr.mxu0 %v4794
    %5026 = vmatpush2.msra.mxu0 %v4793
    %5027 = vmatprep.subr.mxu0 %v4790
    %5028 = vmatpush2.msra.mxu0 %v4789
    %5029 = vmatprep.subr.mxu0 %v4786
    %5030 = vmatpush2.msra.mxu0 %v4785
    %5031 = vmatprep.subr.mxu0 %v4782
    %5032 = vmatpush2.msra.mxu0 %v4781
    %5033 = vmatprep.subr.mxu0 %v4778
    %5034 = vmatpush2.msra.mxu0 %v4777
    %5035 = vmatprep.subr.mxu0 %v4774
    %5036 = vmatpush2.msra.mxu0 %v4773
    %5037 = vmatprep.subr.mxu0 %v4770
    %5038 = vmatpush2.msra.mxu0 %v4769
    %5039 = vmatprep.subr.mxu0 %v4766
    %5040 = vmatpush2.msra.mxu0 %v4765
    %5041 = vmatprep.subr.mxu0 %v4762
    %5042 = vmatpush2.msra.mxu0 %v4761
    %5043 = vmatprep.subr.mxu0 %v4758
    %5044 = vmatpush2.msra.mxu0 %v4757
    %5045 = vmatprep.subr.mxu0 %v4754
    %5046 = vmatpush2.msra.mxu0 %v4753
    %5047 = vmatprep.subr.mxu0 %v4750
    %5048 = vmatpush2.msra.mxu0 %v4749
    %5049 = vmatprep.mubr.f32.mxu0 %v4979
    %5050 = vmatmul.mubr.f32.gmra.mxu0 %v4971
    %v5051 = vpop.f32.mrf.mxu0
    %v5052 = vadd.f32 %v4946, %v5051
    %v5053 = vpop.f32.mrf.mxu0
    %v5054 = vadd.f32 %v4950, %v5053
    %5055 = vdwg.mxu0
    %5056 = vmatprep.subr.mxu0 %v4874
    %5057 = vmatpush1.msra.mxu0 %v4873
    %5058 = vmatprep.subr.mxu0 %v4870
    %5059 = vmatpush1.msra.mxu0 %v4869
    %5060 = vmatprep.subr.mxu0 %v4866
    %5061 = vmatpush1.msra.mxu0 %v4865
    %5062 = vmatprep.subr.mxu0 %v4862
    %5063 = vmatpush1.msra.mxu0 %v4861
    %5064 = vmatprep.subr.mxu0 %v4858
    %5065 = vmatpush1.msra.mxu0 %v4857
    %5066 = vmatprep.subr.mxu0 %v4854
    %5067 = vmatpush1.msra.mxu0 %v4853
    %5068 = vmatprep.subr.mxu0 %v4850
    %5069 = vmatpush1.msra.mxu0 %v4849
    %5070 = vmatprep.subr.mxu0 %v4846
    %5071 = vmatpush1.msra.mxu0 %v4845
    %5072 = vmatprep.subr.mxu0 %v4842
    %5073 = vmatpush1.msra.mxu0 %v4841
    %5074 = vmatprep.subr.mxu0 %v4838
    %5075 = vmatpush1.msra.mxu0 %v4837
    %5076 = vmatprep.subr.mxu0 %v4834
    %5077 = vmatpush1.msra.mxu0 %v4833
    %5078 = vmatprep.subr.mxu0 %v4830
    %5079 = vmatpush1.msra.mxu0 %v4829
    %5080 = vmatprep.subr.mxu0 %v4826
    %5081 = vmatpush1.msra.mxu0 %v4825
    %5082 = vmatprep.subr.mxu0 %v4822
    %5083 = vmatpush1.msra.mxu0 %v4821
    %5084 = vmatprep.subr.mxu0 %v4818
    %5085 = vmatpush1.msra.mxu0 %v4817
    %5086 = vmatprep.subr.mxu0 %v4814
    %5087 = vmatpush1.msra.mxu0 %v4813
    %5088 = vmatprep.subr.mxu0 %v4938
    %5089 = vmatpush2.msra.mxu0 %v4937
    %5090 = vmatprep.subr.mxu0 %v4934
    %5091 = vmatpush2.msra.mxu0 %v4933
    %5092 = vmatprep.subr.mxu0 %v4930
    %5093 = vmatpush2.msra.mxu0 %v4929
    %5094 = vmatprep.subr.mxu0 %v4926
    %5095 = vmatpush2.msra.mxu0 %v4925
    %5096 = vmatprep.subr.mxu0 %v4922
    %5097 = vmatpush2.msra.mxu0 %v4921
    %5098 = vmatprep.subr.mxu0 %v4918
    %5099 = vmatpush2.msra.mxu0 %v4917
    %5100 = vmatprep.subr.mxu0 %v4914
    %5101 = vmatpush2.msra.mxu0 %v4913
    %5102 = vmatprep.subr.mxu0 %v4910
    %5103 = vmatpush2.msra.mxu0 %v4909
    %5104 = vmatprep.subr.mxu0 %v4906
    %5105 = vmatpush2.msra.mxu0 %v4905
    %5106 = vmatprep.subr.mxu0 %v4902
    %5107 = vmatpush2.msra.mxu0 %v4901
    %5108 = vmatprep.subr.mxu0 %v4898
    %5109 = vmatpush2.msra.mxu0 %v4897
    %5110 = vmatprep.subr.mxu0 %v4894
    %5111 = vmatpush2.msra.mxu0 %v4893
    %5112 = vmatprep.subr.mxu0 %v4890
    %5113 = vmatpush2.msra.mxu0 %v4889
    %5114 = vmatprep.subr.mxu0 %v4886
    %5115 = vmatpush2.msra.mxu0 %v4885
    %5116 = vmatprep.subr.mxu0 %v4882
    %5117 = vmatpush2.msra.mxu0 %v4881
    %5118 = vmatprep.subr.mxu0 %v4878
    %5119 = vmatpush2.msra.mxu0 %v4877
    %5120 = vmatprep.mubr.f32.mxu0 %v4980
    %5121 = vmatmul.mubr.f32.gmra.mxu0 %v4978
    %v5122 = vpop.f32.mrf.mxu0
    %v5123 = vadd.f32 %v5052, %v5122
    %v5124 = vpop.f32.mrf.mxu0
    %v5125 = vadd.f32 %v5054, %v5124
    %5126 = vdwg.mxu0
    %5127 = vmatprep.subr.mxu0 %v4748
    %5128 = vmatpush1.msra.mxu0 %v4747
    %5129 = vmatprep.subr.mxu0 %v4744
    %5130 = vmatpush1.msra.mxu0 %v4743
    %5131 = vmatprep.subr.mxu0 %v4740
    %5132 = vmatpush1.msra.mxu0 %v4739
    %5133 = vmatprep.subr.mxu0 %v4736
    %5134 = vmatpush1.msra.mxu0 %v4735
    %5135 = vmatprep.subr.mxu0 %v4732
    %5136 = vmatpush1.msra.mxu0 %v4731
    %5137 = vmatprep.subr.mxu0 %v4728
    %5138 = vmatpush1.msra.mxu0 %v4727
    %5139 = vmatprep.subr.mxu0 %v4724
    %5140 = vmatpush1.msra.mxu0 %v4723
    %5141 = vmatprep.subr.mxu0 %v4720
    %5142 = vmatpush1.msra.mxu0 %v4719
    %5143 = vmatprep.subr.mxu0 %v4716
    %5144 = vmatpush1.msra.mxu0 %v4715
    %5145 = vmatprep.subr.mxu0 %v4712
    %5146 = vmatpush1.msra.mxu0 %v4711
    %5147 = vmatprep.subr.mxu0 %v4708
    %5148 = vmatpush1.msra.mxu0 %v4707
    %5149 = vmatprep.subr.mxu0 %v4704
    %5150 = vmatpush1.msra.mxu0 %v4703
    %5151 = vmatprep.subr.mxu0 %v4700
    %5152 = vmatpush1.msra.mxu0 %v4699
    %5153 = vmatprep.subr.mxu0 %v4696
    %5154 = vmatpush1.msra.mxu0 %v4695
    %5155 = vmatprep.subr.mxu0 %v4692
    %5156 = vmatpush1.msra.mxu0 %v4691
    %5157 = vmatprep.subr.mxu0 %v4688
    %5158 = vmatpush1.msra.mxu0 %v4687
    %5159 = vmatprep.subr.mxu0 %v4812
    %5160 = vmatpush2.msra.mxu0 %v4811
    %5161 = vmatprep.subr.mxu0 %v4808
    %5162 = vmatpush2.msra.mxu0 %v4807
    %5163 = vmatprep.subr.mxu0 %v4804
    %5164 = vmatpush2.msra.mxu0 %v4803
    %5165 = vmatprep.subr.mxu0 %v4800
    %5166 = vmatpush2.msra.mxu0 %v4799
    %5167 = vmatprep.subr.mxu0 %v4796
    %5168 = vmatpush2.msra.mxu0 %v4795
    %5169 = vmatprep.subr.mxu0 %v4792
    %5170 = vmatpush2.msra.mxu0 %v4791
    %5171 = vmatprep.subr.mxu0 %v4788
    %5172 = vmatpush2.msra.mxu0 %v4787
    %5173 = vmatprep.subr.mxu0 %v4784
    %5174 = vmatpush2.msra.mxu0 %v4783
    %5175 = vmatprep.subr.mxu0 %v4780
    %5176 = vmatpush2.msra.mxu0 %v4779
    %5177 = vmatprep.subr.mxu0 %v4776
    %5178 = vmatpush2.msra.mxu0 %v4775
    %5179 = vmatprep.subr.mxu0 %v4772
    %5180 = vmatpush2.msra.mxu0 %v4771
    %5181 = vmatprep.subr.mxu0 %v4768
    %5182 = vmatpush2.msra.mxu0 %v4767
    %5183 = vmatprep.subr.mxu0 %v4764
    %5184 = vmatpush2.msra.mxu0 %v4763
    %5185 = vmatprep.subr.mxu0 %v4760
    %5186 = vmatpush2.msra.mxu0 %v4759
    %5187 = vmatprep.subr.mxu0 %v4756
    %5188 = vmatpush2.msra.mxu0 %v4755
    %5189 = vmatprep.subr.mxu0 %v4752
    %5190 = vmatpush2.msra.mxu0 %v4751
    %5191 = vmatprep.mubr.f32.mxu0 %v4979
    %5192 = vmatmul.mubr.f32.gmra.mxu0 %v4971
    %v5193 = vpop.f32.mrf.mxu0
    %v5194 = vadd.f32 %v4954, %v5193
    %v5195 = vpop.f32.mrf.mxu0
    %v5196 = vadd.f32 %v4958, %v5195
    %5197 = vdwg.mxu0
    %5198 = vmatprep.subr.mxu0 %v4876
    %5199 = vmatpush1.msra.mxu0 %v4875
    %5200 = vmatprep.subr.mxu0 %v4872
    %5201 = vmatpush1.msra.mxu0 %v4871
    %5202 = vmatprep.subr.mxu0 %v4868
    %5203 = vmatpush1.msra.mxu0 %v4867
    %5204 = vmatprep.subr.mxu0 %v4864
    %5205 = vmatpush1.msra.mxu0 %v4863
    %5206 = vmatprep.subr.mxu0 %v4860
    %5207 = vmatpush1.msra.mxu0 %v4859
    %5208 = vmatprep.subr.mxu0 %v4856
    %5209 = vmatpush1.msra.mxu0 %v4855
    %5210 = vmatprep.subr.mxu0 %v4852
    %5211 = vmatpush1.msra.mxu0 %v4851
    %5212 = vmatprep.subr.mxu0 %v4848
    %5213 = vmatpush1.msra.mxu0 %v4847
    %5214 = vmatprep.subr.mxu0 %v4844
    %5215 = vmatpush1.msra.mxu0 %v4843
    %5216 = vmatprep.subr.mxu0 %v4840
    %5217 = vmatpush1.msra.mxu0 %v4839
    %5218 = vmatprep.subr.mxu0 %v4836
    %5219 = vmatpush1.msra.mxu0 %v4835
    %5220 = vmatprep.subr.mxu0 %v4832
    %5221 = vmatpush1.msra.mxu0 %v4831
    %5222 = vmatprep.subr.mxu0 %v4828
    %5223 = vmatpush1.msra.mxu0 %v4827
    %5224 = vmatprep.subr.mxu0 %v4824
    %5225 = vmatpush1.msra.mxu0 %v4823
    %5226 = vmatprep.subr.mxu0 %v4820
    %5227 = vmatpush1.msra.mxu0 %v4819
    %5228 = vmatprep.subr.mxu0 %v4816
    %5229 = vmatpush1.msra.mxu0 %v4815
    %5230 = vmatprep.subr.mxu0 %v4940
    %5231 = vmatpush2.msra.mxu0 %v4939
    %5232 = vmatprep.subr.mxu0 %v4936
    %5233 = vmatpush2.msra.mxu0 %v4935
    %5234 = vmatprep.subr.mxu0 %v4932
    %5235 = vmatpush2.msra.mxu0 %v4931
    %5236 = vmatprep.subr.mxu0 %v4928
    %5237 = vmatpush2.msra.mxu0 %v4927
    %5238 = vmatprep.subr.mxu0 %v4924
    %5239 = vmatpush2.msra.mxu0 %v4923
    %5240 = vmatprep.subr.mxu0 %v4920
    %5241 = vmatpush2.msra.mxu0 %v4919
    %5242 = vmatprep.subr.mxu0 %v4916
    %5243 = vmatpush2.msra.mxu0 %v4915
    %5244 = vmatprep.subr.mxu0 %v4912
    %5245 = vmatpush2.msra.mxu0 %v4911
    %5246 = vmatprep.subr.mxu0 %v4908
    %5247 = vmatpush2.msra.mxu0 %v4907
    %5248 = vmatprep.subr.mxu0 %v4904
    %5249 = vmatpush2.msra.mxu0 %v4903
    %5250 = vmatprep.subr.mxu0 %v4900
    %5251 = vmatpush2.msra.mxu0 %v4899
    %5252 = vmatprep.subr.mxu0 %v4896
    %5253 = vmatpush2.msra.mxu0 %v4895
    %5254 = vmatprep.subr.mxu0 %v4892
    %5255 = vmatpush2.msra.mxu0 %v4891
    %5256 = vmatprep.subr.mxu0 %v4888
    %5257 = vmatpush2.msra.mxu0 %v4887
    %5258 = vmatprep.subr.mxu0 %v4884
    %5259 = vmatpush2.msra.mxu0 %v4883
    %5260 = vmatprep.subr.mxu0 %v4880
    %5261 = vmatpush2.msra.mxu0 %v4879
    %5262 = vmatprep.mubr.f32.mxu0 %v4980
    %5263 = vmatmul.mubr.f32.gmra.mxu0 %v4978
    %v5264 = vpop.f32.mrf.mxu0
    %v5265 = vadd.f32 %v5194, %v5264
    %v5266 = vpop.f32.mrf.mxu0
    %v5267 = vadd.f32 %v5196, %v5266
    %5268 = vdwg.mxu0
    %v5269 = vmax.f32 %v5123, 0.0
    %v5270 = vmax.f32 %v5125, 0.0
    %v5271 = vmax.f32 %v5265, 0.0
    %v5272 = vmax.f32 %v5267, 0.0
    %v5273 = vld [vmem:[%s7] sm:$0xff]
    %v5274 = vld [vmem:[%s7 + $0x8] sm:$0xff]
    %v5275 = vld [vmem:[%s7 + $0x10] sm:$0xff]
    %v5276 = vld [vmem:[%s7 + $0x18] sm:$0xff]
    %v5277 = vld [vmem:[%s7 + $0x20] sm:$0xff]
    %v5278 = vld [vmem:[%s7 + $0x28] sm:$0xff]
    %v5279 = vld [vmem:[%s7 + $0x30] sm:$0xff]
    %v5280 = vld [vmem:[%s7 + $0x38] sm:$0xff]
    %v5281 = vld [vmem:[%s7 + $0x40] sm:$0xff]
    %v5282 = vld [vmem:[%s7 + $0x48] sm:$0xff]
    %v5283 = vld [vmem:[%s7 + $0x50] sm:$0xff]
    %v5284 = vld [vmem:[%s7 + $0x58] sm:$0xff]
    %v5285 = vld [vmem:[%s7 + $0x60] sm:$0xff]
    %v5286 = vld [vmem:[%s7 + $0x68] sm:$0xff]
    %v5287 = vld [vmem:[%s7 + $0x70] sm:$0xff]
    %v5288 = vld [vmem:[%s7 + $0x78] sm:$0xff]
    %v5289 = vld [vmem:[%s7 + $0x80] sm:$0xff]
    %v5290 = vld [vmem:[%s7 + $0x88] sm:$0xff]
    %v5291 = vld [vmem:[%s7 + $0x90] sm:$0xff]
    %v5292 = vld [vmem:[%s7 + $0x98] sm:$0xff]
    %v5293 = vld [vmem:[%s7 + $0xa0] sm:$0xff]
    %v5294 = vld [vmem:[%s7 + $0xa8] sm:$0xff]
    %v5295 = vld [vmem:[%s7 + $0xb0] sm:$0xff]
    %v5296 = vld [vmem:[%s7 + $0xb8] sm:$0xff]
    %v5297 = vld [vmem:[%s7 + $0xc0] sm:$0xff]
    %v5298 = vld [vmem:[%s7 + $0xc8] sm:$0xff]
    %v5299 = vld [vmem:[%s7 + $0xd0] sm:$0xff]
    %v5300 = vld [vmem:[%s7 + $0xd8] sm:$0xff]
    %v5301 = vld [vmem:[%s7 + $0xe0] sm:$0xff]
    %v5302 = vld [vmem:[%s7 + $0xe8] sm:$0xff]
    %v5303 = vld [vmem:[%s7 + $0xf0] sm:$0xff]
    %v5304 = vld [vmem:[%s7 + $0xf8] sm:$0xff]
    %v5305 = vld [vmem:[%s7 + $0x100] sm:$0xff]
    %v5306 = vld [vmem:[%s7 + $0x108] sm:$0xff]
    %v5307 = vld [vmem:[%s7 + $0x110] sm:$0xff]
    %v5308 = vld [vmem:[%s7 + $0x118] sm:$0xff]
    %v5309 = vld [vmem:[%s7 + $0x120] sm:$0xff]
    %v5310 = vld [vmem:[%s7 + $0x128] sm:$0xff]
    %v5311 = vld [vmem:[%s7 + $0x130] sm:$0xff]
    %v5312 = vld [vmem:[%s7 + $0x138] sm:$0xff]
    %v5313 = vld [vmem:[%s7 + $0x140] sm:$0xff]
    %v5314 = vld [vmem:[%s7 + $0x148] sm:$0xff]
    %v5315 = vld [vmem:[%s7 + $0x150] sm:$0xff]
    %v5316 = vld [vmem:[%s7 + $0x158] sm:$0xff]
    %v5317 = vld [vmem:[%s7 + $0x160] sm:$0xff]
    %v5318 = vld [vmem:[%s7 + $0x168] sm:$0xff]
    %v5319 = vld [vmem:[%s7 + $0x170] sm:$0xff]
    %v5320 = vld [vmem:[%s7 + $0x178] sm:$0xff]
    %v5321 = vld [vmem:[%s7 + $0x180] sm:$0xff]
    %v5322 = vld [vmem:[%s7 + $0x188] sm:$0xff]
    %v5323 = vld [vmem:[%s8] sm:$0x1]
    %v5325 = vlaneseq
    %v5326 = vshrl.u32 %v5325, 7
    %v5327 = vsub.s32 0, %v5326
    %v5328 = vrot.slane %v5323, %v5327
    %vm5330 = vcmask 130048
    %v5332 = vsel %vm5330, %v5272, 0
    %5334 = vmatprep.subr.mxu0 0.0
    %5335 = vmatpush1.msra.mxu0 %v5288
    %5336 = vmatprep.subr.mxu0 0.0
    %5337 = vmatpush1.msra.mxu0 %v5287
    %5338 = vmatprep.subr.mxu0 0.0
    %5339 = vmatpush1.msra.mxu0 %v5286
    %5340 = vmatprep.subr.mxu0 0.0
    %5341 = vmatpush1.msra.mxu0 %v5285
    %5342 = vmatprep.subr.mxu0 0.0
    %5343 = vmatpush1.msra.mxu0 %v5284
    %5344 = vmatprep.subr.mxu0 0.0
    %5345 = vmatpush1.msra.mxu0 %v5283
    %5346 = vmatprep.subr.mxu0 0.0
    %5347 = vmatpush1.msra.mxu0 %v5282
    %5348 = vmatprep.subr.mxu0 0.0
    %5349 = vmatpush1.msra.mxu0 %v5281
    %5350 = vmatprep.subr.mxu0 0.0
    %5351 = vmatpush1.msra.mxu0 %v5280
    %5352 = vmatprep.subr.mxu0 0.0
    %5353 = vmatpush1.msra.mxu0 %v5279
    %5354 = vmatprep.subr.mxu0 0.0
    %5355 = vmatpush1.msra.mxu0 %v5278
    %5356 = vmatprep.subr.mxu0 0.0
    %5357 = vmatpush1.msra.mxu0 %v5277
    %5358 = vmatprep.subr.mxu0 0.0
    %5359 = vmatpush1.msra.mxu0 %v5276
    %5360 = vmatprep.subr.mxu0 0.0
    %5361 = vmatpush1.msra.mxu0 %v5275
    %5362 = vmatprep.subr.mxu0 0.0
    %5363 = vmatpush1.msra.mxu0 %v5274
    %5364 = vmatprep.subr.mxu0 0.0
    %5365 = vmatpush1.msra.mxu0 %v5273
    %5366 = vmatprep.subr.mxu0 0.0
    %5367 = vmatpush2.msra.mxu0 %v5304
    %5368 = vmatprep.subr.mxu0 0.0
    %5369 = vmatpush2.msra.mxu0 %v5303
    %5370 = vmatprep.subr.mxu0 0.0
    %5371 = vmatpush2.msra.mxu0 %v5302
    %5372 = vmatprep.subr.mxu0 0.0
    %5373 = vmatpush2.msra.mxu0 %v5301
    %5374 = vmatprep.subr.mxu0 0.0
    %5375 = vmatpush2.msra.mxu0 %v5300
    %5376 = vmatprep.subr.mxu0 0.0
    %5377 = vmatpush2.msra.mxu0 %v5299
    %5378 = vmatprep.subr.mxu0 0.0
    %5379 = vmatpush2.msra.mxu0 %v5298
    %5380 = vmatprep.subr.mxu0 0.0
    %5381 = vmatpush2.msra.mxu0 %v5297
    %5382 = vmatprep.subr.mxu0 0.0
    %5383 = vmatpush2.msra.mxu0 %v5296
    %5384 = vmatprep.subr.mxu0 0.0
    %5385 = vmatpush2.msra.mxu0 %v5295
    %5386 = vmatprep.subr.mxu0 0.0
    %5387 = vmatpush2.msra.mxu0 %v5294
    %5388 = vmatprep.subr.mxu0 0.0
    %5389 = vmatpush2.msra.mxu0 %v5293
    %5390 = vmatprep.subr.mxu0 0.0
    %5391 = vmatpush2.msra.mxu0 %v5292
    %5392 = vmatprep.subr.mxu0 0.0
    %5393 = vmatpush2.msra.mxu0 %v5291
    %5394 = vmatprep.subr.mxu0 0.0
    %5395 = vmatpush2.msra.mxu0 %v5290
    %5396 = vmatprep.subr.mxu0 0.0
    %5397 = vmatpush2.msra.mxu0 %v5289
    %5398 = vmatprep.mubr.f32.mxu0 %v5270
    %5399 = vmatmul.mubr.f32.gmra.mxu0 %v5269
    %v5400 = vpop.f32.mrf.mxu0
    %v5401 = vadd.f32 %v5328, %v5400
    %v5402 = vpop.f32.mrf.mxu0
    %5403 = vdwg.mxu0
    %5404 = vmatprep.subr.mxu0 0.0
    %5405 = vmatpush1.msra.mxu0 %v5320
    %5406 = vmatprep.subr.mxu0 0.0
    %5407 = vmatpush1.msra.mxu0 %v5319
    %5408 = vmatprep.subr.mxu0 0.0
    %5409 = vmatpush1.msra.mxu0 %v5318
    %5410 = vmatprep.subr.mxu0 0.0
    %5411 = vmatpush1.msra.mxu0 %v5317
    %5412 = vmatprep.subr.mxu0 0.0
    %5413 = vmatpush1.msra.mxu0 %v5316
    %5414 = vmatprep.subr.mxu0 0.0
    %5415 = vmatpush1.msra.mxu0 %v5315
    %5416 = vmatprep.subr.mxu0 0.0
    %5417 = vmatpush1.msra.mxu0 %v5314
    %5418 = vmatprep.subr.mxu0 0.0
    %5419 = vmatpush1.msra.mxu0 %v5313
    %5420 = vmatprep.subr.mxu0 0.0
    %5421 = vmatpush1.msra.mxu0 %v5312
    %5422 = vmatprep.subr.mxu0 0.0
    %5423 = vmatpush1.msra.mxu0 %v5311
    %5424 = vmatprep.subr.mxu0 0.0
    %5425 = vmatpush1.msra.mxu0 %v5310
    %5426 = vmatprep.subr.mxu0 0.0
    %5427 = vmatpush1.msra.mxu0 %v5309
    %5428 = vmatprep.subr.mxu0 0.0
    %5429 = vmatpush1.msra.mxu0 %v5308
    %5430 = vmatprep.subr.mxu0 0.0
    %5431 = vmatpush1.msra.mxu0 %v5307
    %5432 = vmatprep.subr.mxu0 0.0
    %5433 = vmatpush1.msra.mxu0 %v5306
    %5434 = vmatprep.subr.mxu0 0.0
    %5435 = vmatpush1.msra.mxu0 %v5305
    %5436 = vmatprep.subr.mxu0 0.0
    %5437 = vmatpush2.msra.mxu0 0.0
    %5438 = vmatprep.subr.mxu0 0.0
    %5439 = vmatpush2.msra.mxu0 0.0
    %5440 = vmatprep.subr.mxu0 0.0
    %5441 = vmatpush2.msra.mxu0 0.0
    %5442 = vmatprep.subr.mxu0 0.0
    %5443 = vmatpush2.msra.mxu0 0.0
    %5444 = vmatprep.subr.mxu0 0.0
    %5445 = vmatpush2.msra.mxu0 0.0
    %5446 = vmatprep.subr.mxu0 0.0
    %5447 = vmatpush2.msra.mxu0 0.0
    %5448 = vmatprep.subr.mxu0 0.0
    %5449 = vmatpush2.msra.mxu0 0.0
    %5450 = vmatprep.subr.mxu0 0.0
    %5451 = vmatpush2.msra.mxu0 0.0
    %5452 = vmatprep.subr.mxu0 0.0
    %5453 = vmatpush2.msra.mxu0 0.0
    %5454 = vmatprep.subr.mxu0 0.0
    %5455 = vmatpush2.msra.mxu0 0.0
    %5456 = vmatprep.subr.mxu0 0.0
    %5457 = vmatpush2.msra.mxu0 0.0
    %5458 = vmatprep.subr.mxu0 0.0
    %5459 = vmatpush2.msra.mxu0 0.0
    %5460 = vmatprep.subr.mxu0 0.0
    %5461 = vmatpush2.msra.mxu0 0.0
    %5462 = vmatprep.subr.mxu0 0.0
    %5463 = vmatpush2.msra.mxu0 0.0
    %5464 = vmatprep.subr.mxu0 0.0
    %5465 = vmatpush2.msra.mxu0 %v5322
    %5466 = vmatprep.subr.mxu0 0.0
    %5467 = vmatpush2.msra.mxu0 %v5321
    %5468 = vmatprep.mubr.f32.mxu0 %v5332
    %5469 = vmatmul.mubr.f32.gmra.mxu0 %v5271
    %v5470 = vpop.f32.mrf.mxu0
    %v5471 = vadd.f32 %v5401, %v5470
    %v5472 = vpop.f32.mrf.mxu0
    %5473 = vdwg.mxu0
    %vm5474 = vcmask 41984
    %5475 = vst.msk [vmem:[#allocation7] sm:$0x3] %vm5474, %v5471
    // Predicated region
    $region38: #{_lambda_.1} parent=1 // pred_check
      _
    $region39: #{_lambda_.1} parent=1 // pred_check_branch
      %5477 = sbr.rel (0) target = $region41
    $region40: #{_lambda_.1} parent=1 // pred_region
      %s5479 = ssub.s32 32, 32
      %5480 = vsyncadd [#allocation8], %s5479
      %s5482 = sshll.u32 [#allocation7], 4
      %s5483 = int_to_ptr.vmem [resolvable:$true] %s5482
      %5485 = dma.vmem_to_hbm [thread:$0]  %s5483, 32, %s9, [#allocation8]
    $region41: #{_lambda_.1} parent=1 // pred_fallthru
      _
    // Predicated region
    $region42: #{_lambda_.1} parent=1 // pred_check
      _
    $region43: #{_lambda_.1} parent=1 // pred_check_branch
      %5487 = sbr.rel (0) target = $region45
    $region44: #{_lambda_.1} parent=1 // pred_region
      %5488 = dma.done [#allocation8], 32
    $region45: #{_lambda_.1} parent=1 // pred_fallthru
      _
    %5489 = vsyncpa [#allocation8], 1

</llo_original>
